<compile_context>
chip_gen: v7x
topology: tpu7x:2x2x1
jax: 0.10.0
libtpu: 0.0.40
codegen_flags: <defaults>
</compile_context>

<pallas_src>
import jax
import jax.numpy as jnp
from jax.experimental import pallas as pl
from jax.experimental.pallas import tpu as pltpu


_NEG_SLOPE = 0.2


def _leaky(x):
    return jnp.where(x >= 0.0, x, _NEG_SLOPE * x)


# ---------------------------------------------------------------------------
# Fully fused forward kernel
# ---------------------------------------------------------------------------
def _disc_kernel(
    yemb_ref, x_ref,                    # (B,16) f32 label feats / (B*S,4) bf16 image rows
    wp_ref, bp_ref,                     # projection per pixel: (S,64) f32 / (S,4) f32
    wx_ref, wy_ref, bin_ref,            # 1x1 input conv: (4,C) bf16, (4,C) f32, (1,C) f32
    p1_ref, w1_ref, b1_ref,             # down block 1: selection / weight / bias
    p2_ref, w2_ref, b2_ref,
    p3_ref, w3_ref, b3_ref,
    p4_ref, w4_ref, b4_ref,
    wout_ref, bout_ref,                 # final linear: (1,16C) f32 / (1,1) f32
    out_ref,                            # (B,1) f32
):
    f32 = jnp.float32
    bf16 = jnp.bfloat16

    B = yemb_ref.shape[0]
    S = wp_ref.shape[0]                 # 16*16 spatial positions
    C = wx_ref.shape[1]

    ye = yemb_ref[...]                  # (B,16) f32
    wp = wp_ref[...]                    # (S,64) f32, columns grouped (c, k)
    bp = bp_ref[...]                    # (S,4)  f32
    wx = wx_ref[...]                    # (4,C)  bf16
    wy = wy_ref[...]                    # (4,C)  f32
    b_in = bin_ref[...]                 # (1,C)  f32

    # ---- projection + channel concat + 1x1 input conv, per batch element ----
    parts = []
    for b in range(B):
        ye_b = ye[b:b + 1, :]                                    # (1,16)
        y_contrib = jnp.zeros((S, C), f32)
        for c in range(4):
            wpc = wp[:, c * 16:(c + 1) * 16]                     # (S,16)
            yc = jnp.sum(ye_b * wpc, axis=1, keepdims=True)      # (S,1) Linear
            yc = _leaky(yc + bp[:, c:c + 1])                     # LeakyReLU(0.2)
            y_contrib = y_contrib + yc * wy[c:c + 1, :]          # (S,C)
        xb = x_ref[b * S:(b + 1) * S, :]                         # (S,4) bf16
        x_contrib = jnp.dot(xb, wx, preferred_element_type=f32)  # (S,C)
        parts.append(_leaky(x_contrib + y_contrib + b_in))
    h = jnp.concatenate(parts, axis=0)                           # (B*S, C) f32

    # ---- 4x DownConvBlock: 2x2 stride-2 conv + LeakyReLU(0.2) ----
    # out = leaky( sum_j (P_j @ act) @ W_j + bias ),  j = kh*2 + kw
    for p_ref, w_ref, b_ref in ((p1_ref, w1_ref, b1_ref),
                                (p2_ref, w2_ref, b2_ref),
                                (p3_ref, w3_ref, b3_ref),
                                (p4_ref, w4_ref, b4_ref)):
        rout = p_ref.shape[0] // 4
        cin = w_ref.shape[0] // 4
        cout = w_ref.shape[1]
        act = h.astype(bf16)
        acc = jnp.zeros((rout, cout), f32)
        for j in range(4):
            pj = p_ref[j * rout:(j + 1) * rout, :]               # (Rout, Rin) bf16
            wj = w_ref[j * cin:(j + 1) * cin, :]                 # (Cin, Cout) bf16
            sel = jnp.dot(pj, act, preferred_element_type=f32)   # row gather (Rout, Cin)
            acc = acc + jnp.dot(sel.astype(bf16), wj,
                                preferred_element_type=f32)      # (Rout, Cout)
        h = _leaky(acc + b_ref[...])

    # ---- final Linear(16C -> 1) as a VPU lane reduction (no activation) ----
    out = jnp.sum(h * wout_ref[...], axis=1, keepdims=True) + bout_ref[...]
    out_ref[...] = out.astype(out_ref.dtype)


# ---------------------------------------------------------------------------
# Parameter construction (deterministic, synthetic, kernel-final layout)
# ---------------------------------------------------------------------------
def _make_selection(batch, hw, dtype):
    """0/1 matrices gathering the 4 (kh,kw) phases of a 2x2 stride-2 conv.

    Returns (4 * batch*ho*wo, batch*hw*hw); row block j = kh*2+kw maps output
    row (b, ho, wo) to input row (b, 2*ho+kh, 2*wo+kw) of the (b,h,w)-ordered
    activation matrix.
    """
    ho = hw // 2
    rows = batch * ho * ho
    cols = batch * hw * hw
    o = jnp.arange(rows)
    b = o // (ho * ho)
    rem = o % (ho * ho)
    oh = rem // ho
    ow = rem % ho
    blocks = []
    for kh in range(2):
        for kw in range(2):
            src = b * hw * hw + (2 * oh + kh) * hw + (2 * ow + kw)
            blocks.append(
                (src[:, None] == jnp.arange(cols)[None, :]).astype(dtype))
    return jnp.concatenate(blocks, axis=0)


def init_params(key, base_channels, batch):
    C = base_channels

    def nxt():
        nonlocal key
        key, sub = jax.random.split(key)
        return sub

    def w(shape, scale=0.05, dtype=jnp.float32):
        return (scale * jax.random.normal(nxt(), shape)).astype(dtype)

    params = {
        # embeddings: 8->4, 6->3, 7->3
        "emb0": w((8, 4), 1.0),
        "emb1": w((6, 3), 1.0),
        "emb2": w((7, 3), 1.0),
        # projection Linear(16 -> 16*16*4), stored per pixel: (S, 4*16) / (S, 4)
        "wp": w((256, 4 * 16)),
        "bp": w((256, 4), 0.01),
        # input 1x1 conv (8 -> C) split into its x-half and y-half
        "wx": w((4, C), 0.05, jnp.bfloat16),
        "wy": w((4, C)),
        "bin": w((1, C), 0.01),
        # final Linear(16C -> 1) stored as a (1, 16C) row for a VPU reduction
        "wout": w((1, 16 * C)),
        "bout": w((1, 1), 0.01),
    }

    wd, bd, pm = [], [], []
    cin, hw = C, 16
    for _ in range(4):
        cout = 2 * cin
        wd.append(w((4 * cin, cout), 0.05, jnp.bfloat16))   # (kh,kw,cin) x cout
        bd.append(w((1, cout), 0.01))
        pm.append(_make_selection(batch, hw, jnp.bfloat16))
        cin, hw = cout, hw // 2
    params["wd"], params["bd"], params["p"] = wd, bd, pm
    return params


# ---------------------------------------------------------------------------
# Forward pass wrapper (one pallas_call)
# ---------------------------------------------------------------------------
def discriminator_forward(params, x_nchw, label):
    """x_nchw: (B,4,16,16) f32, label: (B,9) int32 -> (B,1) f32."""
    B = x_nchw.shape[0]

    # TODO(synk): nn.Embedding gathers have no clean Pallas equivalent at this
    # size; the label lookup stays as plain-JAX glue feeding the fused kernel.
    lf = label.astype(jnp.float32)
    y_emb = jnp.concatenate(
        [
            params["emb0"][label[:, 0]],     # (B,4)
            lf[:, 1:4] / 255.0,              # (B,3)
            params["emb1"][label[:, 4]],     # (B,3)
            params["emb2"][label[:, 5]],     # (B,3)
            lf[:, 6:9] / 255.0,              # (B,3)
        ],
        axis=1,
    )                                        # (B,16) f32

    # NCHW -> NHWC rows (b,h,w) x channels; cast MXU operand to bf16.
    x_flat = x_nchw.transpose(0, 2, 3, 1).reshape(B * 256, 4).astype(jnp.bfloat16)

    args = (
        y_emb, x_flat,
        params["wp"], params["bp"],
        params["wx"], params["wy"], params["bin"],
        params["p"][0], params["wd"][0], params["bd"][0],
        params["p"][1], params["wd"][1], params["bd"][1],
        params["p"][2], params["wd"][2], params["bd"][2],
        params["p"][3], params["wd"][3], params["bd"][3],
        params["wout"], params["bout"],
    )

    return pl.pallas_call(
        _disc_kernel,
        out_shape=jax.ShapeDtypeStruct((B, 1), jnp.float32),
        grid=(1,),
        in_specs=[pl.BlockSpec(a.shape, lambda i: (0, 0)) for a in args],
        out_specs=pl.BlockSpec((B, 1), lambda i: (0, 0)),
        compiler_params=pltpu.CompilerParams(
            dimension_semantics=("arbitrary",)),
    )(*args)


# ---------------------------------------------------------------------------
if __name__ == "__main__":
    BASE_CHANNELS = 32          # small, consistent with the module structure
    B = 2

    key = jax.random.PRNGKey(0)
    k_param, k_x, k_lab = jax.random.split(key, 3)

    params = init_params(k_param, BASE_CHANNELS, B)

    x = jax.random.normal(k_x, (B, 4, 16, 16), dtype=jnp.float32)

    # label columns: 0 -> [0,8), 4 -> [0,6), 5 -> [0,7), others raw 0..255
    lk = jax.random.split(k_lab, 4)
    label = jnp.zeros((B, 9), dtype=jnp.int32)
    label = label.at[:, 0].set(jax.random.randint(lk[0], (B,), 0, 8))
    label = label.at[:, 4].set(jax.random.randint(lk[1], (B,), 0, 6))
    label = label.at[:, 5].set(jax.random.randint(lk[2], (B,), 0, 7))
    other = jax.random.randint(lk[3], (B, 6), 0, 256)
    label = label.at[:, 1:4].set(other[:, :3])
    label = label.at[:, 6:9].set(other[:, 3:])

    fwd = jax.jit(discriminator_forward)
    out = fwd(params, x, label)
    out = jax.block_until_ready(out)
    assert out.shape == (B, 1), out.shape
    print("KERNEL_OK")
</pallas_src>

<mosaic_0001>
module attributes {stable_mosaic.version = 11 : i64} {
  func.func @_disc_kernel(%arg0: i32, %arg1: memref<2x16xf32, #tpu.memory_space<vmem>>, %arg2: memref<512x4xbf16, #tpu.memory_space<vmem>>, %arg3: memref<256x64xf32, #tpu.memory_space<vmem>>, %arg4: memref<256x4xf32, #tpu.memory_space<vmem>>, %arg5: memref<4x32xbf16, #tpu.memory_space<vmem>>, %arg6: memref<4x32xf32, #tpu.memory_space<vmem>>, %arg7: memref<1x32xf32, #tpu.memory_space<vmem>>, %arg8: memref<512x512xbf16, #tpu.memory_space<vmem>>, %arg9: memref<128x64xbf16, #tpu.memory_space<vmem>>, %arg10: memref<1x64xf32, #tpu.memory_space<vmem>>, %arg11: memref<128x128xbf16, #tpu.memory_space<vmem>>, %arg12: memref<256x128xbf16, #tpu.memory_space<vmem>>, %arg13: memref<1x128xf32, #tpu.memory_space<vmem>>, %arg14: memref<32x32xbf16, #tpu.memory_space<vmem>>, %arg15: memref<512x256xbf16, #tpu.memory_space<vmem>>, %arg16: memref<1x256xf32, #tpu.memory_space<vmem>>, %arg17: memref<8x8xbf16, #tpu.memory_space<vmem>>, %arg18: memref<1024x512xbf16, #tpu.memory_space<vmem>>, %arg19: memref<1x512xf32, #tpu.memory_space<vmem>>, %arg20: memref<1x512xf32, #tpu.memory_space<vmem>>, %arg21: memref<1x1xf32, #tpu.memory_space<vmem>>, %arg22: memref<2x1xf32, #tpu.memory_space<vmem>>) attributes {dimension_semantics = [#tpu.dimension_semantics<arbitrary>], iteration_bounds = array<i64: 1>, scalar_prefetch = 0 : i64, scratch_operands = 0 : i64, tpu.core_type = #tpu.core_type<tc>, window_params = [{pipeline_mode = #tpu.pipeline_mode<synchronous>, transform_indices = @transform_0, window_bounds = array<i64: 2, 16>}, {pipeline_mode = #tpu.pipeline_mode<synchronous>, transform_indices = @transform_1, window_bounds = array<i64: 512, 4>}, {pipeline_mode = #tpu.pipeline_mode<synchronous>, transform_indices = @transform_2, window_bounds = array<i64: 256, 64>}, {pipeline_mode = #tpu.pipeline_mode<synchronous>, transform_indices = @transform_3, window_bounds = array<i64: 256, 4>}, {pipeline_mode = #tpu.pipeline_mode<synchronous>, transform_indices = @transform_4, window_bounds = array<i64: 4, 32>}, {pipeline_mode = #tpu.pipeline_mode<synchronous>, transform_indices = @transform_5, window_bounds = array<i64: 4, 32>}, {pipeline_mode = #tpu.pipeline_mode<synchronous>, transform_indices = @transform_6, window_bounds = array<i64: 1, 32>}, {pipeline_mode = #tpu.pipeline_mode<synchronous>, transform_indices = @transform_7, window_bounds = array<i64: 512, 512>}, {pipeline_mode = #tpu.pipeline_mode<synchronous>, transform_indices = @transform_8, window_bounds = array<i64: 128, 64>}, {pipeline_mode = #tpu.pipeline_mode<synchronous>, transform_indices = @transform_9, window_bounds = array<i64: 1, 64>}, {pipeline_mode = #tpu.pipeline_mode<synchronous>, transform_indices = @transform_10, window_bounds = array<i64: 128, 128>}, {pipeline_mode = #tpu.pipeline_mode<synchronous>, transform_indices = @transform_11, window_bounds = array<i64: 256, 128>}, {pipeline_mode = #tpu.pipeline_mode<synchronous>, transform_indices = @transform_12, window_bounds = array<i64: 1, 128>}, {pipeline_mode = #tpu.pipeline_mode<synchronous>, transform_indices = @transform_13, window_bounds = array<i64: 32, 32>}, {pipeline_mode = #tpu.pipeline_mode<synchronous>, transform_indices = @transform_14, window_bounds = array<i64: 512, 256>}, {pipeline_mode = #tpu.pipeline_mode<synchronous>, transform_indices = @transform_15, window_bounds = array<i64: 1, 256>}, {pipeline_mode = #tpu.pipeline_mode<synchronous>, transform_indices = @transform_16, window_bounds = array<i64: 8, 8>}, {pipeline_mode = #tpu.pipeline_mode<synchronous>, transform_indices = @transform_17, window_bounds = array<i64: 1024, 512>}, {pipeline_mode = #tpu.pipeline_mode<synchronous>, transform_indices = @transform_18, window_bounds = array<i64: 1, 512>}, {pipeline_mode = #tpu.pipeline_mode<synchronous>, transform_indices = @transform_19, window_bounds = array<i64: 1, 512>}, {pipeline_mode = #tpu.pipeline_mode<synchronous>, transform_indices = @transform_20, window_bounds = array<i64: 1, 1>}, {pipeline_mode = #tpu.pipeline_mode<synchronous>, transform_indices = @transform_21, window_bounds = array<i64: 2, 1>}]} {
    %c0 = arith.constant 0 : index
    %c0_0 = arith.constant 0 : index
    %0 = vector.load %arg1[%c0, %c0_0] : memref<2x16xf32, #tpu.memory_space<vmem>>, vector<2x16xf32>
    %c0_1 = arith.constant 0 : index
    %c0_2 = arith.constant 0 : index
    %1 = vector.load %arg3[%c0_1, %c0_2] : memref<256x64xf32, #tpu.memory_space<vmem>>, vector<256x64xf32>
    %c0_3 = arith.constant 0 : index
    %c0_4 = arith.constant 0 : index
    %2 = vector.load %arg4[%c0_3, %c0_4] : memref<256x4xf32, #tpu.memory_space<vmem>>, vector<256x4xf32>
    %c0_5 = arith.constant 0 : index
    %c0_6 = arith.constant 0 : index
    %3 = vector.load %arg5[%c0_5, %c0_6] : memref<4x32xbf16, #tpu.memory_space<vmem>>, vector<4x32xbf16>
    %c0_7 = arith.constant 0 : index
    %c0_8 = arith.constant 0 : index
    %4 = vector.load %arg6[%c0_7, %c0_8] : memref<4x32xf32, #tpu.memory_space<vmem>>, vector<4x32xf32>
    %c0_9 = arith.constant 0 : index
    %c0_10 = arith.constant 0 : index
    %5 = vector.load %arg7[%c0_9, %c0_10] : memref<1x32xf32, #tpu.memory_space<vmem>>, vector<1x32xf32>
    %6 = vector.extract_strided_slice %0 {offsets = [0, 0], sizes = [1, 16], strides = [1, 1]} : vector<2x16xf32> to vector<1x16xf32>
    %cst = arith.constant 0.000000e+00 : f32
    %7 = vector.broadcast %cst : f32 to vector<256x32xf32>
    %8 = vector.extract_strided_slice %1 {offsets = [0, 0], sizes = [256, 16], strides = [1, 1]} : vector<256x64xf32> to vector<256x16xf32>
    %9 = vector.broadcast %6 : vector<1x16xf32> to vector<256x16xf32>
    %10 = arith.mulf %9, %8 : vector<256x16xf32>
    %cst_11 = arith.constant dense<0.000000e+00> : vector<256xf32>
    %11 = vector.multi_reduction <add>, %10, %cst_11 [1] : vector<256x16xf32> to vector<256xf32>
    %12 = vector.shape_cast %11 : vector<256xf32> to vector<256x1xf32>
    %13 = vector.extract_strided_slice %2 {offsets = [0, 0], sizes = [256, 1], strides = [1, 1]} : vector<256x4xf32> to vector<256x1xf32>
    %14 = arith.addf %12, %13 : vector<256x1xf32>
    %cst_12 = arith.constant 0.000000e+00 : f32
    %15 = vector.broadcast %cst_12 : f32 to vector<256x1xf32>
    %16 = arith.cmpf oge, %14, %15 : vector<256x1xf32>
    %cst_13 = arith.constant 2.000000e-01 : f32
    %17 = vector.broadcast %cst_13 : f32 to vector<256x1xf32>
    %18 = arith.mulf %17, %14 : vector<256x1xf32>
    %19 = arith.select %16, %14, %18 : vector<256x1xi1>, vector<256x1xf32>
    %20 = vector.extract_strided_slice %4 {offsets = [0, 0], sizes = [1, 32], strides = [1, 1]} : vector<4x32xf32> to vector<1x32xf32>
    %21 = vector.broadcast %19 : vector<256x1xf32> to vector<256x32xf32>
    %22 = vector.broadcast %20 : vector<1x32xf32> to vector<256x32xf32>
    %23 = arith.mulf %21, %22 : vector<256x32xf32>
    %24 = arith.addf %7, %23 : vector<256x32xf32>
    %25 = vector.extract_strided_slice %1 {offsets = [0, 16], sizes = [256, 16], strides = [1, 1]} : vector<256x64xf32> to vector<256x16xf32>
    %26 = vector.broadcast %6 : vector<1x16xf32> to vector<256x16xf32>
    %27 = arith.mulf %26, %25 : vector<256x16xf32>
    %cst_14 = arith.constant dense<0.000000e+00> : vector<256xf32>
    %28 = vector.multi_reduction <add>, %27, %cst_14 [1] : vector<256x16xf32> to vector<256xf32>
    %29 = vector.shape_cast %28 : vector<256xf32> to vector<256x1xf32>
    %30 = vector.extract_strided_slice %2 {offsets = [0, 1], sizes = [256, 1], strides = [1, 1]} : vector<256x4xf32> to vector<256x1xf32>
    %31 = arith.addf %29, %30 : vector<256x1xf32>
    %cst_15 = arith.constant 0.000000e+00 : f32
    %32 = vector.broadcast %cst_15 : f32 to vector<256x1xf32>
    %33 = arith.cmpf oge, %31, %32 : vector<256x1xf32>
    %cst_16 = arith.constant 2.000000e-01 : f32
    %34 = vector.broadcast %cst_16 : f32 to vector<256x1xf32>
    %35 = arith.mulf %34, %31 : vector<256x1xf32>
    %36 = arith.select %33, %31, %35 : vector<256x1xi1>, vector<256x1xf32>
    %37 = vector.extract_strided_slice %4 {offsets = [1, 0], sizes = [1, 32], strides = [1, 1]} : vector<4x32xf32> to vector<1x32xf32>
    %38 = vector.broadcast %36 : vector<256x1xf32> to vector<256x32xf32>
    %39 = vector.broadcast %37 : vector<1x32xf32> to vector<256x32xf32>
    %40 = arith.mulf %38, %39 : vector<256x32xf32>
    %41 = arith.addf %24, %40 : vector<256x32xf32>
    %42 = vector.extract_strided_slice %1 {offsets = [0, 32], sizes = [256, 16], strides = [1, 1]} : vector<256x64xf32> to vector<256x16xf32>
    %43 = vector.broadcast %6 : vector<1x16xf32> to vector<256x16xf32>
    %44 = arith.mulf %43, %42 : vector<256x16xf32>
    %cst_17 = arith.constant dense<0.000000e+00> : vector<256xf32>
    %45 = vector.multi_reduction <add>, %44, %cst_17 [1] : vector<256x16xf32> to vector<256xf32>
    %46 = vector.shape_cast %45 : vector<256xf32> to vector<256x1xf32>
    %47 = vector.extract_strided_slice %2 {offsets = [0, 2], sizes = [256, 1], strides = [1, 1]} : vector<256x4xf32> to vector<256x1xf32>
    %48 = arith.addf %46, %47 : vector<256x1xf32>
    %cst_18 = arith.constant 0.000000e+00 : f32
    %49 = vector.broadcast %cst_18 : f32 to vector<256x1xf32>
    %50 = arith.cmpf oge, %48, %49 : vector<256x1xf32>
    %cst_19 = arith.constant 2.000000e-01 : f32
    %51 = vector.broadcast %cst_19 : f32 to vector<256x1xf32>
    %52 = arith.mulf %51, %48 : vector<256x1xf32>
    %53 = arith.select %50, %48, %52 : vector<256x1xi1>, vector<256x1xf32>
    %54 = vector.extract_strided_slice %4 {offsets = [2, 0], sizes = [1, 32], strides = [1, 1]} : vector<4x32xf32> to vector<1x32xf32>
    %55 = vector.broadcast %53 : vector<256x1xf32> to vector<256x32xf32>
    %56 = vector.broadcast %54 : vector<1x32xf32> to vector<256x32xf32>
    %57 = arith.mulf %55, %56 : vector<256x32xf32>
    %58 = arith.addf %41, %57 : vector<256x32xf32>
    %59 = vector.extract_strided_slice %1 {offsets = [0, 48], sizes = [256, 16], strides = [1, 1]} : vector<256x64xf32> to vector<256x16xf32>
    %60 = vector.broadcast %6 : vector<1x16xf32> to vector<256x16xf32>
    %61 = arith.mulf %60, %59 : vector<256x16xf32>
    %cst_20 = arith.constant dense<0.000000e+00> : vector<256xf32>
    %62 = vector.multi_reduction <add>, %61, %cst_20 [1] : vector<256x16xf32> to vector<256xf32>
    %63 = vector.shape_cast %62 : vector<256xf32> to vector<256x1xf32>
    %64 = vector.extract_strided_slice %2 {offsets = [0, 3], sizes = [256, 1], strides = [1, 1]} : vector<256x4xf32> to vector<256x1xf32>
    %65 = arith.addf %63, %64 : vector<256x1xf32>
    %cst_21 = arith.constant 0.000000e+00 : f32
    %66 = vector.broadcast %cst_21 : f32 to vector<256x1xf32>
    %67 = arith.cmpf oge, %65, %66 : vector<256x1xf32>
    %cst_22 = arith.constant 2.000000e-01 : f32
    %68 = vector.broadcast %cst_22 : f32 to vector<256x1xf32>
    %69 = arith.mulf %68, %65 : vector<256x1xf32>
    %70 = arith.select %67, %65, %69 : vector<256x1xi1>, vector<256x1xf32>
    %71 = vector.extract_strided_slice %4 {offsets = [3, 0], sizes = [1, 32], strides = [1, 1]} : vector<4x32xf32> to vector<1x32xf32>
    %72 = vector.broadcast %70 : vector<256x1xf32> to vector<256x32xf32>
    %73 = vector.broadcast %71 : vector<1x32xf32> to vector<256x32xf32>
    %74 = arith.mulf %72, %73 : vector<256x32xf32>
    %75 = arith.addf %58, %74 : vector<256x32xf32>
    %c0_23 = arith.constant 0 : index
    %c0_24 = arith.constant 0 : index
    %76 = vector.load %arg2[%c0_23, %c0_24] : memref<512x4xbf16, #tpu.memory_space<vmem>>, vector<256x4xbf16>
    %cst_25 = arith.constant dense<0.000000e+00> : vector<256x32xf32>
    %77 = tpu.matmul %76, %3, %cst_25 {dimension_numbers = #tpu.dot_dimension_numbers<[1], [0], [0], [1], [0, 0, 1, 1], [], []>} : vector<256x4xbf16>, vector<4x32xbf16>, vector<256x32xf32> -> vector<256x32xf32>
    %78 = arith.addf %77, %75 : vector<256x32xf32>
    %79 = vector.broadcast %5 : vector<1x32xf32> to vector<256x32xf32>
    %80 = arith.addf %78, %79 : vector<256x32xf32>
    %cst_26 = arith.constant 0.000000e+00 : f32
    %81 = vector.broadcast %cst_26 : f32 to vector<256x32xf32>
    %82 = arith.cmpf oge, %80, %81 : vector<256x32xf32>
    %cst_27 = arith.constant 2.000000e-01 : f32
    %83 = vector.broadcast %cst_27 : f32 to vector<256x32xf32>
    %84 = arith.mulf %83, %80 : vector<256x32xf32>
    %85 = arith.select %82, %80, %84 : vector<256x32xi1>, vector<256x32xf32>
    %86 = vector.extract_strided_slice %0 {offsets = [1, 0], sizes = [1, 16], strides = [1, 1]} : vector<2x16xf32> to vector<1x16xf32>
    %cst_28 = arith.constant 0.000000e+00 : f32
    %87 = vector.broadcast %cst_28 : f32 to vector<256x32xf32>
    %88 = vector.extract_strided_slice %1 {offsets = [0, 0], sizes = [256, 16], strides = [1, 1]} : vector<256x64xf32> to vector<256x16xf32>
    %89 = vector.broadcast %86 : vector<1x16xf32> to vector<256x16xf32>
    %90 = arith.mulf %89, %88 : vector<256x16xf32>
    %cst_29 = arith.constant dense<0.000000e+00> : vector<256xf32>
    %91 = vector.multi_reduction <add>, %90, %cst_29 [1] : vector<256x16xf32> to vector<256xf32>
    %92 = vector.shape_cast %91 : vector<256xf32> to vector<256x1xf32>
    %93 = vector.extract_strided_slice %2 {offsets = [0, 0], sizes = [256, 1], strides = [1, 1]} : vector<256x4xf32> to vector<256x1xf32>
    %94 = arith.addf %92, %93 : vector<256x1xf32>
    %cst_30 = arith.constant 0.000000e+00 : f32
    %95 = vector.broadcast %cst_30 : f32 to vector<256x1xf32>
    %96 = arith.cmpf oge, %94, %95 : vector<256x1xf32>
    %cst_31 = arith.constant 2.000000e-01 : f32
    %97 = vector.broadcast %cst_31 : f32 to vector<256x1xf32>
    %98 = arith.mulf %97, %94 : vector<256x1xf32>
    %99 = arith.select %96, %94, %98 : vector<256x1xi1>, vector<256x1xf32>
    %100 = vector.extract_strided_slice %4 {offsets = [0, 0], sizes = [1, 32], strides = [1, 1]} : vector<4x32xf32> to vector<1x32xf32>
    %101 = vector.broadcast %99 : vector<256x1xf32> to vector<256x32xf32>
    %102 = vector.broadcast %100 : vector<1x32xf32> to vector<256x32xf32>
    %103 = arith.mulf %101, %102 : vector<256x32xf32>
    %104 = arith.addf %87, %103 : vector<256x32xf32>
    %105 = vector.extract_strided_slice %1 {offsets = [0, 16], sizes = [256, 16], strides = [1, 1]} : vector<256x64xf32> to vector<256x16xf32>
    %106 = vector.broadcast %86 : vector<1x16xf32> to vector<256x16xf32>
    %107 = arith.mulf %106, %105 : vector<256x16xf32>
    %cst_32 = arith.constant dense<0.000000e+00> : vector<256xf32>
    %108 = vector.multi_reduction <add>, %107, %cst_32 [1] : vector<256x16xf32> to vector<256xf32>
    %109 = vector.shape_cast %108 : vector<256xf32> to vector<256x1xf32>
    %110 = vector.extract_strided_slice %2 {offsets = [0, 1], sizes = [256, 1], strides = [1, 1]} : vector<256x4xf32> to vector<256x1xf32>
    %111 = arith.addf %109, %110 : vector<256x1xf32>
    %cst_33 = arith.constant 0.000000e+00 : f32
    %112 = vector.broadcast %cst_33 : f32 to vector<256x1xf32>
    %113 = arith.cmpf oge, %111, %112 : vector<256x1xf32>
    %cst_34 = arith.constant 2.000000e-01 : f32
    %114 = vector.broadcast %cst_34 : f32 to vector<256x1xf32>
    %115 = arith.mulf %114, %111 : vector<256x1xf32>
    %116 = arith.select %113, %111, %115 : vector<256x1xi1>, vector<256x1xf32>
    %117 = vector.extract_strided_slice %4 {offsets = [1, 0], sizes = [1, 32], strides = [1, 1]} : vector<4x32xf32> to vector<1x32xf32>
    %118 = vector.broadcast %116 : vector<256x1xf32> to vector<256x32xf32>
    %119 = vector.broadcast %117 : vector<1x32xf32> to vector<256x32xf32>
    %120 = arith.mulf %118, %119 : vector<256x32xf32>
    %121 = arith.addf %104, %120 : vector<256x32xf32>
    %122 = vector.extract_strided_slice %1 {offsets = [0, 32], sizes = [256, 16], strides = [1, 1]} : vector<256x64xf32> to vector<256x16xf32>
    %123 = vector.broadcast %86 : vector<1x16xf32> to vector<256x16xf32>
    %124 = arith.mulf %123, %122 : vector<256x16xf32>
    %cst_35 = arith.constant dense<0.000000e+00> : vector<256xf32>
    %125 = vector.multi_reduction <add>, %124, %cst_35 [1] : vector<256x16xf32> to vector<256xf32>
    %126 = vector.shape_cast %125 : vector<256xf32> to vector<256x1xf32>
    %127 = vector.extract_strided_slice %2 {offsets = [0, 2], sizes = [256, 1], strides = [1, 1]} : vector<256x4xf32> to vector<256x1xf32>
    %128 = arith.addf %126, %127 : vector<256x1xf32>
    %cst_36 = arith.constant 0.000000e+00 : f32
    %129 = vector.broadcast %cst_36 : f32 to vector<256x1xf32>
    %130 = arith.cmpf oge, %128, %129 : vector<256x1xf32>
    %cst_37 = arith.constant 2.000000e-01 : f32
    %131 = vector.broadcast %cst_37 : f32 to vector<256x1xf32>
    %132 = arith.mulf %131, %128 : vector<256x1xf32>
    %133 = arith.select %130, %128, %132 : vector<256x1xi1>, vector<256x1xf32>
    %134 = vector.extract_strided_slice %4 {offsets = [2, 0], sizes = [1, 32], strides = [1, 1]} : vector<4x32xf32> to vector<1x32xf32>
    %135 = vector.broadcast %133 : vector<256x1xf32> to vector<256x32xf32>
    %136 = vector.broadcast %134 : vector<1x32xf32> to vector<256x32xf32>
    %137 = arith.mulf %135, %136 : vector<256x32xf32>
    %138 = arith.addf %121, %137 : vector<256x32xf32>
    %139 = vector.extract_strided_slice %1 {offsets = [0, 48], sizes = [256, 16], strides = [1, 1]} : vector<256x64xf32> to vector<256x16xf32>
    %140 = vector.broadcast %86 : vector<1x16xf32> to vector<256x16xf32>
    %141 = arith.mulf %140, %139 : vector<256x16xf32>
    %cst_38 = arith.constant dense<0.000000e+00> : vector<256xf32>
    %142 = vector.multi_reduction <add>, %141, %cst_38 [1] : vector<256x16xf32> to vector<256xf32>
    %143 = vector.shape_cast %142 : vector<256xf32> to vector<256x1xf32>
    %144 = vector.extract_strided_slice %2 {offsets = [0, 3], sizes = [256, 1], strides = [1, 1]} : vector<256x4xf32> to vector<256x1xf32>
    %145 = arith.addf %143, %144 : vector<256x1xf32>
    %cst_39 = arith.constant 0.000000e+00 : f32
    %146 = vector.broadcast %cst_39 : f32 to vector<256x1xf32>
    %147 = arith.cmpf oge, %145, %146 : vector<256x1xf32>
    %cst_40 = arith.constant 2.000000e-01 : f32
    %148 = vector.broadcast %cst_40 : f32 to vector<256x1xf32>
    %149 = arith.mulf %148, %145 : vector<256x1xf32>
    %150 = arith.select %147, %145, %149 : vector<256x1xi1>, vector<256x1xf32>
    %151 = vector.extract_strided_slice %4 {offsets = [3, 0], sizes = [1, 32], strides = [1, 1]} : vector<4x32xf32> to vector<1x32xf32>
    %152 = vector.broadcast %150 : vector<256x1xf32> to vector<256x32xf32>
    %153 = vector.broadcast %151 : vector<1x32xf32> to vector<256x32xf32>
    %154 = arith.mulf %152, %153 : vector<256x32xf32>
    %155 = arith.addf %138, %154 : vector<256x32xf32>
    %c256 = arith.constant 256 : index
    %c0_41 = arith.constant 0 : index
    %156 = vector.load %arg2[%c256, %c0_41] : memref<512x4xbf16, #tpu.memory_space<vmem>>, vector<256x4xbf16>
    %cst_42 = arith.constant dense<0.000000e+00> : vector<256x32xf32>
    %157 = tpu.matmul %156, %3, %cst_42 {dimension_numbers = #tpu.dot_dimension_numbers<[1], [0], [0], [1], [0, 0, 1, 1], [], []>} : vector<256x4xbf16>, vector<4x32xbf16>, vector<256x32xf32> -> vector<256x32xf32>
    %158 = arith.addf %157, %155 : vector<256x32xf32>
    %159 = vector.broadcast %5 : vector<1x32xf32> to vector<256x32xf32>
    %160 = arith.addf %158, %159 : vector<256x32xf32>
    %cst_43 = arith.constant 0.000000e+00 : f32
    %161 = vector.broadcast %cst_43 : f32 to vector<256x32xf32>
    %162 = arith.cmpf oge, %160, %161 : vector<256x32xf32>
    %cst_44 = arith.constant 2.000000e-01 : f32
    %163 = vector.broadcast %cst_44 : f32 to vector<256x32xf32>
    %164 = arith.mulf %163, %160 : vector<256x32xf32>
    %165 = arith.select %162, %160, %164 : vector<256x32xi1>, vector<256x32xf32>
    %166 = tpu.concatenate %85, %165 in 0 : vector<256x32xf32>, vector<256x32xf32> -> vector<512x32xf32>
    %167 = arith.truncf %166 : vector<512x32xf32> to vector<512x32xbf16>
    %cst_45 = arith.constant 0.000000e+00 : f32
    %168 = vector.broadcast %cst_45 : f32 to vector<128x64xf32>
    %c0_46 = arith.constant 0 : index
    %c0_47 = arith.constant 0 : index
    %169 = vector.load %arg8[%c0_46, %c0_47] : memref<512x512xbf16, #tpu.memory_space<vmem>>, vector<128x512xbf16>
    %c0_48 = arith.constant 0 : index
    %c0_49 = arith.constant 0 : index
    %170 = vector.load %arg9[%c0_48, %c0_49] : memref<128x64xbf16, #tpu.memory_space<vmem>>, vector<32x64xbf16>
    %cst_50 = arith.constant dense<0.000000e+00> : vector<128x32xf32>
    %171 = tpu.matmul %169, %167, %cst_50 {dimension_numbers = #tpu.dot_dimension_numbers<[1], [0], [0], [1], [0, 0, 1, 1], [], []>} : vector<128x512xbf16>, vector<512x32xbf16>, vector<128x32xf32> -> vector<128x32xf32>
    %172 = arith.truncf %171 : vector<128x32xf32> to vector<128x32xbf16>
    %cst_51 = arith.constant dense<0.000000e+00> : vector<128x64xf32>
    %173 = tpu.matmul %172, %170, %cst_51 {dimension_numbers = #tpu.dot_dimension_numbers<[1], [0], [0], [1], [0, 0, 1, 1], [], []>} : vector<128x32xbf16>, vector<32x64xbf16>, vector<128x64xf32> -> vector<128x64xf32>
    %174 = arith.addf %168, %173 : vector<128x64xf32>
    %c128 = arith.constant 128 : index
    %c0_52 = arith.constant 0 : index
    %175 = vector.load %arg8[%c128, %c0_52] : memref<512x512xbf16, #tpu.memory_space<vmem>>, vector<128x512xbf16>
    %c32 = arith.constant 32 : index
    %c0_53 = arith.constant 0 : index
    %176 = vector.load %arg9[%c32, %c0_53] : memref<128x64xbf16, #tpu.memory_space<vmem>>, vector<32x64xbf16>
    %cst_54 = arith.constant dense<0.000000e+00> : vector<128x32xf32>
    %177 = tpu.matmul %175, %167, %cst_54 {dimension_numbers = #tpu.dot_dimension_numbers<[1], [0], [0], [1], [0, 0, 1, 1], [], []>} : vector<128x512xbf16>, vector<512x32xbf16>, vector<128x32xf32> -> vector<128x32xf32>
    %178 = arith.truncf %177 : vector<128x32xf32> to vector<128x32xbf16>
    %cst_55 = arith.constant dense<0.000000e+00> : vector<128x64xf32>
    %179 = tpu.matmul %178, %176, %cst_55 {dimension_numbers = #tpu.dot_dimension_numbers<[1], [0], [0], [1], [0, 0, 1, 1], [], []>} : vector<128x32xbf16>, vector<32x64xbf16>, vector<128x64xf32> -> vector<128x64xf32>
    %180 = arith.addf %174, %179 : vector<128x64xf32>
    %c256_56 = arith.constant 256 : index
    %c0_57 = arith.constant 0 : index
    %181 = vector.load %arg8[%c256_56, %c0_57] : memref<512x512xbf16, #tpu.memory_space<vmem>>, vector<128x512xbf16>
    %c64 = arith.constant 64 : index
    %c0_58 = arith.constant 0 : index
    %182 = vector.load %arg9[%c64, %c0_58] : memref<128x64xbf16, #tpu.memory_space<vmem>>, vector<32x64xbf16>
    %cst_59 = arith.constant dense<0.000000e+00> : vector<128x32xf32>
    %183 = tpu.matmul %181, %167, %cst_59 {dimension_numbers = #tpu.dot_dimension_numbers<[1], [0], [0], [1], [0, 0, 1, 1], [], []>} : vector<128x512xbf16>, vector<512x32xbf16>, vector<128x32xf32> -> vector<128x32xf32>
    %184 = arith.truncf %183 : vector<128x32xf32> to vector<128x32xbf16>
    %cst_60 = arith.constant dense<0.000000e+00> : vector<128x64xf32>
    %185 = tpu.matmul %184, %182, %cst_60 {dimension_numbers = #tpu.dot_dimension_numbers<[1], [0], [0], [1], [0, 0, 1, 1], [], []>} : vector<128x32xbf16>, vector<32x64xbf16>, vector<128x64xf32> -> vector<128x64xf32>
    %186 = arith.addf %180, %185 : vector<128x64xf32>
    %c384 = arith.constant 384 : index
    %c0_61 = arith.constant 0 : index
    %187 = vector.load %arg8[%c384, %c0_61] : memref<512x512xbf16, #tpu.memory_space<vmem>>, vector<128x512xbf16>
    %c96 = arith.constant 96 : index
    %c0_62 = arith.constant 0 : index
    %188 = vector.load %arg9[%c96, %c0_62] : memref<128x64xbf16, #tpu.memory_space<vmem>>, vector<32x64xbf16>
    %cst_63 = arith.constant dense<0.000000e+00> : vector<128x32xf32>
    %189 = tpu.matmul %187, %167, %cst_63 {dimension_numbers = #tpu.dot_dimension_numbers<[1], [0], [0], [1], [0, 0, 1, 1], [], []>} : vector<128x512xbf16>, vector<512x32xbf16>, vector<128x32xf32> -> vector<128x32xf32>
    %190 = arith.truncf %189 : vector<128x32xf32> to vector<128x32xbf16>
    %cst_64 = arith.constant dense<0.000000e+00> : vector<128x64xf32>
    %191 = tpu.matmul %190, %188, %cst_64 {dimension_numbers = #tpu.dot_dimension_numbers<[1], [0], [0], [1], [0, 0, 1, 1], [], []>} : vector<128x32xbf16>, vector<32x64xbf16>, vector<128x64xf32> -> vector<128x64xf32>
    %192 = arith.addf %186, %191 : vector<128x64xf32>
    %c0_65 = arith.constant 0 : index
    %c0_66 = arith.constant 0 : index
    %193 = vector.load %arg10[%c0_65, %c0_66] : memref<1x64xf32, #tpu.memory_space<vmem>>, vector<1x64xf32>
    %194 = vector.broadcast %193 : vector<1x64xf32> to vector<128x64xf32>
    %195 = arith.addf %192, %194 : vector<128x64xf32>
    %cst_67 = arith.constant 0.000000e+00 : f32
    %196 = vector.broadcast %cst_67 : f32 to vector<128x64xf32>
    %197 = arith.cmpf oge, %195, %196 : vector<128x64xf32>
    %cst_68 = arith.constant 2.000000e-01 : f32
    %198 = vector.broadcast %cst_68 : f32 to vector<128x64xf32>
    %199 = arith.mulf %198, %195 : vector<128x64xf32>
    %200 = arith.select %197, %195, %199 : vector<128x64xi1>, vector<128x64xf32>
    %201 = arith.truncf %200 : vector<128x64xf32> to vector<128x64xbf16>
    %cst_69 = arith.constant 0.000000e+00 : f32
    %202 = vector.broadcast %cst_69 : f32 to vector<32x128xf32>
    %c0_70 = arith.constant 0 : index
    %c0_71 = arith.constant 0 : index
    %203 = vector.load %arg11[%c0_70, %c0_71] : memref<128x128xbf16, #tpu.memory_space<vmem>>, vector<32x128xbf16>
    %c0_72 = arith.constant 0 : index
    %c0_73 = arith.constant 0 : index
    %204 = vector.load %arg12[%c0_72, %c0_73] : memref<256x128xbf16, #tpu.memory_space<vmem>>, vector<64x128xbf16>
    %cst_74 = arith.constant dense<0.000000e+00> : vector<32x64xf32>
    %205 = tpu.matmul %203, %201, %cst_74 {dimension_numbers = #tpu.dot_dimension_numbers<[1], [0], [0], [1], [0, 0, 1, 1], [], []>} : vector<32x128xbf16>, vector<128x64xbf16>, vector<32x64xf32> -> vector<32x64xf32>
    %206 = arith.truncf %205 : vector<32x64xf32> to vector<32x64xbf16>
    %cst_75 = arith.constant dense<0.000000e+00> : vector<32x128xf32>
    %207 = tpu.matmul %206, %204, %cst_75 {dimension_numbers = #tpu.dot_dimension_numbers<[1], [0], [0], [1], [0, 0, 1, 1], [], []>} : vector<32x64xbf16>, vector<64x128xbf16>, vector<32x128xf32> -> vector<32x128xf32>
    %208 = arith.addf %202, %207 : vector<32x128xf32>
    %c32_76 = arith.constant 32 : index
    %c0_77 = arith.constant 0 : index
    %209 = vector.load %arg11[%c32_76, %c0_77] : memref<128x128xbf16, #tpu.memory_space<vmem>>, vector<32x128xbf16>
    %c64_78 = arith.constant 64 : index
    %c0_79 = arith.constant 0 : index
    %210 = vector.load %arg12[%c64_78, %c0_79] : memref<256x128xbf16, #tpu.memory_space<vmem>>, vector<64x128xbf16>
    %cst_80 = arith.constant dense<0.000000e+00> : vector<32x64xf32>
    %211 = tpu.matmul %209, %201, %cst_80 {dimension_numbers = #tpu.dot_dimension_numbers<[1], [0], [0], [1], [0, 0, 1, 1], [], []>} : vector<32x128xbf16>, vector<128x64xbf16>, vector<32x64xf32> -> vector<32x64xf32>
    %212 = arith.truncf %211 : vector<32x64xf32> to vector<32x64xbf16>
    %cst_81 = arith.constant dense<0.000000e+00> : vector<32x128xf32>
    %213 = tpu.matmul %212, %210, %cst_81 {dimension_numbers = #tpu.dot_dimension_numbers<[1], [0], [0], [1], [0, 0, 1, 1], [], []>} : vector<32x64xbf16>, vector<64x128xbf16>, vector<32x128xf32> -> vector<32x128xf32>
    %214 = arith.addf %208, %213 : vector<32x128xf32>
    %c64_82 = arith.constant 64 : index
    %c0_83 = arith.constant 0 : index
    %215 = vector.load %arg11[%c64_82, %c0_83] : memref<128x128xbf16, #tpu.memory_space<vmem>>, vector<32x128xbf16>
    %c128_84 = arith.constant 128 : index
    %c0_85 = arith.constant 0 : index
    %216 = vector.load %arg12[%c128_84, %c0_85] : memref<256x128xbf16, #tpu.memory_space<vmem>>, vector<64x128xbf16>
    %cst_86 = arith.constant dense<0.000000e+00> : vector<32x64xf32>
    %217 = tpu.matmul %215, %201, %cst_86 {dimension_numbers = #tpu.dot_dimension_numbers<[1], [0], [0], [1], [0, 0, 1, 1], [], []>} : vector<32x128xbf16>, vector<128x64xbf16>, vector<32x64xf32> -> vector<32x64xf32>
    %218 = arith.truncf %217 : vector<32x64xf32> to vector<32x64xbf16>
    %cst_87 = arith.constant dense<0.000000e+00> : vector<32x128xf32>
    %219 = tpu.matmul %218, %216, %cst_87 {dimension_numbers = #tpu.dot_dimension_numbers<[1], [0], [0], [1], [0, 0, 1, 1], [], []>} : vector<32x64xbf16>, vector<64x128xbf16>, vector<32x128xf32> -> vector<32x128xf32>
    %220 = arith.addf %214, %219 : vector<32x128xf32>
    %c96_88 = arith.constant 96 : index
    %c0_89 = arith.constant 0 : index
    %221 = vector.load %arg11[%c96_88, %c0_89] : memref<128x128xbf16, #tpu.memory_space<vmem>>, vector<32x128xbf16>
    %c192 = arith.constant 192 : index
    %c0_90 = arith.constant 0 : index
    %222 = vector.load %arg12[%c192, %c0_90] : memref<256x128xbf16, #tpu.memory_space<vmem>>, vector<64x128xbf16>
    %cst_91 = arith.constant dense<0.000000e+00> : vector<32x64xf32>
    %223 = tpu.matmul %221, %201, %cst_91 {dimension_numbers = #tpu.dot_dimension_numbers<[1], [0], [0], [1], [0, 0, 1, 1], [], []>} : vector<32x128xbf16>, vector<128x64xbf16>, vector<32x64xf32> -> vector<32x64xf32>
    %224 = arith.truncf %223 : vector<32x64xf32> to vector<32x64xbf16>
    %cst_92 = arith.constant dense<0.000000e+00> : vector<32x128xf32>
    %225 = tpu.matmul %224, %222, %cst_92 {dimension_numbers = #tpu.dot_dimension_numbers<[1], [0], [0], [1], [0, 0, 1, 1], [], []>} : vector<32x64xbf16>, vector<64x128xbf16>, vector<32x128xf32> -> vector<32x128xf32>
    %226 = arith.addf %220, %225 : vector<32x128xf32>
    %c0_93 = arith.constant 0 : index
    %c0_94 = arith.constant 0 : index
    %227 = vector.load %arg13[%c0_93, %c0_94] : memref<1x128xf32, #tpu.memory_space<vmem>>, vector<1x128xf32>
    %228 = vector.broadcast %227 : vector<1x128xf32> to vector<32x128xf32>
    %229 = arith.addf %226, %228 : vector<32x128xf32>
    %cst_95 = arith.constant 0.000000e+00 : f32
    %230 = vector.broadcast %cst_95 : f32 to vector<32x128xf32>
    %231 = arith.cmpf oge, %229, %230 : vector<32x128xf32>
    %cst_96 = arith.constant 2.000000e-01 : f32
    %232 = vector.broadcast %cst_96 : f32 to vector<32x128xf32>
    %233 = arith.mulf %232, %229 : vector<32x128xf32>
    %234 = arith.select %231, %229, %233 : vector<32x128xi1>, vector<32x128xf32>
    %235 = arith.truncf %234 : vector<32x128xf32> to vector<32x128xbf16>
    %cst_97 = arith.constant 0.000000e+00 : f32
    %236 = vector.broadcast %cst_97 : f32 to vector<8x256xf32>
    %c0_98 = arith.constant 0 : index
    %c0_99 = arith.constant 0 : index
    %237 = vector.load %arg14[%c0_98, %c0_99] : memref<32x32xbf16, #tpu.memory_space<vmem>>, vector<8x32xbf16>
    %c0_100 = arith.constant 0 : index
    %c0_101 = arith.constant 0 : index
    %238 = vector.load %arg15[%c0_100, %c0_101] : memref<512x256xbf16, #tpu.memory_space<vmem>>, vector<128x256xbf16>
    %cst_102 = arith.constant dense<0.000000e+00> : vector<8x128xf32>
    %239 = tpu.matmul %237, %235, %cst_102 {dimension_numbers = #tpu.dot_dimension_numbers<[1], [0], [0], [1], [0, 0, 1, 1], [], []>} : vector<8x32xbf16>, vector<32x128xbf16>, vector<8x128xf32> -> vector<8x128xf32>
    %240 = arith.truncf %239 : vector<8x128xf32> to vector<8x128xbf16>
    %cst_103 = arith.constant dense<0.000000e+00> : vector<8x256xf32>
    %241 = tpu.matmul %240, %238, %cst_103 {dimension_numbers = #tpu.dot_dimension_numbers<[1], [0], [0], [1], [0, 0, 1, 1], [], []>} : vector<8x128xbf16>, vector<128x256xbf16>, vector<8x256xf32> -> vector<8x256xf32>
    %242 = arith.addf %236, %241 : vector<8x256xf32>
    %c8 = arith.constant 8 : index
    %c0_104 = arith.constant 0 : index
    %243 = vector.load %arg14[%c8, %c0_104] : memref<32x32xbf16, #tpu.memory_space<vmem>>, vector<8x32xbf16>
    %c128_105 = arith.constant 128 : index
    %c0_106 = arith.constant 0 : index
    %244 = vector.load %arg15[%c128_105, %c0_106] : memref<512x256xbf16, #tpu.memory_space<vmem>>, vector<128x256xbf16>
    %cst_107 = arith.constant dense<0.000000e+00> : vector<8x128xf32>
    %245 = tpu.matmul %243, %235, %cst_107 {dimension_numbers = #tpu.dot_dimension_numbers<[1], [0], [0], [1], [0, 0, 1, 1], [], []>} : vector<8x32xbf16>, vector<32x128xbf16>, vector<8x128xf32> -> vector<8x128xf32>
    %246 = arith.truncf %245 : vector<8x128xf32> to vector<8x128xbf16>
    %cst_108 = arith.constant dense<0.000000e+00> : vector<8x256xf32>
    %247 = tpu.matmul %246, %244, %cst_108 {dimension_numbers = #tpu.dot_dimension_numbers<[1], [0], [0], [1], [0, 0, 1, 1], [], []>} : vector<8x128xbf16>, vector<128x256xbf16>, vector<8x256xf32> -> vector<8x256xf32>
    %248 = arith.addf %242, %247 : vector<8x256xf32>
    %c16 = arith.constant 16 : index
    %c0_109 = arith.constant 0 : index
    %249 = vector.load %arg14[%c16, %c0_109] : memref<32x32xbf16, #tpu.memory_space<vmem>>, vector<8x32xbf16>
    %c256_110 = arith.constant 256 : index
    %c0_111 = arith.constant 0 : index
    %250 = vector.load %arg15[%c256_110, %c0_111] : memref<512x256xbf16, #tpu.memory_space<vmem>>, vector<128x256xbf16>
    %cst_112 = arith.constant dense<0.000000e+00> : vector<8x128xf32>
    %251 = tpu.matmul %249, %235, %cst_112 {dimension_numbers = #tpu.dot_dimension_numbers<[1], [0], [0], [1], [0, 0, 1, 1], [], []>} : vector<8x32xbf16>, vector<32x128xbf16>, vector<8x128xf32> -> vector<8x128xf32>
    %252 = arith.truncf %251 : vector<8x128xf32> to vector<8x128xbf16>
    %cst_113 = arith.constant dense<0.000000e+00> : vector<8x256xf32>
    %253 = tpu.matmul %252, %250, %cst_113 {dimension_numbers = #tpu.dot_dimension_numbers<[1], [0], [0], [1], [0, 0, 1, 1], [], []>} : vector<8x128xbf16>, vector<128x256xbf16>, vector<8x256xf32> -> vector<8x256xf32>
    %254 = arith.addf %248, %253 : vector<8x256xf32>
    %c24 = arith.constant 24 : index
    %c0_114 = arith.constant 0 : index
    %255 = vector.load %arg14[%c24, %c0_114] : memref<32x32xbf16, #tpu.memory_space<vmem>>, vector<8x32xbf16>
    %c384_115 = arith.constant 384 : index
    %c0_116 = arith.constant 0 : index
    %256 = vector.load %arg15[%c384_115, %c0_116] : memref<512x256xbf16, #tpu.memory_space<vmem>>, vector<128x256xbf16>
    %cst_117 = arith.constant dense<0.000000e+00> : vector<8x128xf32>
    %257 = tpu.matmul %255, %235, %cst_117 {dimension_numbers = #tpu.dot_dimension_numbers<[1], [0], [0], [1], [0, 0, 1, 1], [], []>} : vector<8x32xbf16>, vector<32x128xbf16>, vector<8x128xf32> -> vector<8x128xf32>
    %258 = arith.truncf %257 : vector<8x128xf32> to vector<8x128xbf16>
    %cst_118 = arith.constant dense<0.000000e+00> : vector<8x256xf32>
    %259 = tpu.matmul %258, %256, %cst_118 {dimension_numbers = #tpu.dot_dimension_numbers<[1], [0], [0], [1], [0, 0, 1, 1], [], []>} : vector<8x128xbf16>, vector<128x256xbf16>, vector<8x256xf32> -> vector<8x256xf32>
    %260 = arith.addf %254, %259 : vector<8x256xf32>
    %c0_119 = arith.constant 0 : index
    %c0_120 = arith.constant 0 : index
    %261 = vector.load %arg16[%c0_119, %c0_120] : memref<1x256xf32, #tpu.memory_space<vmem>>, vector<1x256xf32>
    %262 = vector.broadcast %261 : vector<1x256xf32> to vector<8x256xf32>
    %263 = arith.addf %260, %262 : vector<8x256xf32>
    %cst_121 = arith.constant 0.000000e+00 : f32
    %264 = vector.broadcast %cst_121 : f32 to vector<8x256xf32>
    %265 = arith.cmpf oge, %263, %264 : vector<8x256xf32>
    %cst_122 = arith.constant 2.000000e-01 : f32
    %266 = vector.broadcast %cst_122 : f32 to vector<8x256xf32>
    %267 = arith.mulf %266, %263 : vector<8x256xf32>
    %268 = arith.select %265, %263, %267 : vector<8x256xi1>, vector<8x256xf32>
    %269 = arith.truncf %268 : vector<8x256xf32> to vector<8x256xbf16>
    %cst_123 = arith.constant 0.000000e+00 : f32
    %270 = vector.broadcast %cst_123 : f32 to vector<2x512xf32>
    %c0_124 = arith.constant 0 : index
    %c0_125 = arith.constant 0 : index
    %271 = vector.load %arg17[%c0_124, %c0_125] : memref<8x8xbf16, #tpu.memory_space<vmem>>, vector<2x8xbf16>
    %c0_126 = arith.constant 0 : index
    %c0_127 = arith.constant 0 : index
    %272 = vector.load %arg18[%c0_126, %c0_127] : memref<1024x512xbf16, #tpu.memory_space<vmem>>, vector<256x512xbf16>
    %cst_128 = arith.constant dense<0.000000e+00> : vector<2x256xf32>
    %273 = tpu.matmul %271, %269, %cst_128 {dimension_numbers = #tpu.dot_dimension_numbers<[1], [0], [0], [1], [0, 0, 1, 1], [], []>} : vector<2x8xbf16>, vector<8x256xbf16>, vector<2x256xf32> -> vector<2x256xf32>
    %274 = arith.truncf %273 : vector<2x256xf32> to vector<2x256xbf16>
    %cst_129 = arith.constant dense<0.000000e+00> : vector<2x512xf32>
    %275 = tpu.matmul %274, %272, %cst_129 {dimension_numbers = #tpu.dot_dimension_numbers<[1], [0], [0], [1], [0, 0, 1, 1], [], []>} : vector<2x256xbf16>, vector<256x512xbf16>, vector<2x512xf32> -> vector<2x512xf32>
    %276 = arith.addf %270, %275 : vector<2x512xf32>
    %c2 = arith.constant 2 : index
    %c0_130 = arith.constant 0 : index
    %277 = vector.load %arg17[%c2, %c0_130] : memref<8x8xbf16, #tpu.memory_space<vmem>>, vector<2x8xbf16>
    %c256_131 = arith.constant 256 : index
    %c0_132 = arith.constant 0 : index
    %278 = vector.load %arg18[%c256_131, %c0_132] : memref<1024x512xbf16, #tpu.memory_space<vmem>>, vector<256x512xbf16>
    %cst_133 = arith.constant dense<0.000000e+00> : vector<2x256xf32>
    %279 = tpu.matmul %277, %269, %cst_133 {dimension_numbers = #tpu.dot_dimension_numbers<[1], [0], [0], [1], [0, 0, 1, 1], [], []>} : vector<2x8xbf16>, vector<8x256xbf16>, vector<2x256xf32> -> vector<2x256xf32>
    %280 = arith.truncf %279 : vector<2x256xf32> to vector<2x256xbf16>
    %cst_134 = arith.constant dense<0.000000e+00> : vector<2x512xf32>
    %281 = tpu.matmul %280, %278, %cst_134 {dimension_numbers = #tpu.dot_dimension_numbers<[1], [0], [0], [1], [0, 0, 1, 1], [], []>} : vector<2x256xbf16>, vector<256x512xbf16>, vector<2x512xf32> -> vector<2x512xf32>
    %282 = arith.addf %276, %281 : vector<2x512xf32>
    %c4 = arith.constant 4 : index
    %c0_135 = arith.constant 0 : index
    %283 = vector.load %arg17[%c4, %c0_135] : memref<8x8xbf16, #tpu.memory_space<vmem>>, vector<2x8xbf16>
    %c512 = arith.constant 512 : index
    %c0_136 = arith.constant 0 : index
    %284 = vector.load %arg18[%c512, %c0_136] : memref<1024x512xbf16, #tpu.memory_space<vmem>>, vector<256x512xbf16>
    %cst_137 = arith.constant dense<0.000000e+00> : vector<2x256xf32>
    %285 = tpu.matmul %283, %269, %cst_137 {dimension_numbers = #tpu.dot_dimension_numbers<[1], [0], [0], [1], [0, 0, 1, 1], [], []>} : vector<2x8xbf16>, vector<8x256xbf16>, vector<2x256xf32> -> vector<2x256xf32>
    %286 = arith.truncf %285 : vector<2x256xf32> to vector<2x256xbf16>
    %cst_138 = arith.constant dense<0.000000e+00> : vector<2x512xf32>
    %287 = tpu.matmul %286, %284, %cst_138 {dimension_numbers = #tpu.dot_dimension_numbers<[1], [0], [0], [1], [0, 0, 1, 1], [], []>} : vector<2x256xbf16>, vector<256x512xbf16>, vector<2x512xf32> -> vector<2x512xf32>
    %288 = arith.addf %282, %287 : vector<2x512xf32>
    %c6 = arith.constant 6 : index
    %c0_139 = arith.constant 0 : index
    %289 = vector.load %arg17[%c6, %c0_139] : memref<8x8xbf16, #tpu.memory_space<vmem>>, vector<2x8xbf16>
    %c768 = arith.constant 768 : index
    %c0_140 = arith.constant 0 : index
    %290 = vector.load %arg18[%c768, %c0_140] : memref<1024x512xbf16, #tpu.memory_space<vmem>>, vector<256x512xbf16>
    %cst_141 = arith.constant dense<0.000000e+00> : vector<2x256xf32>
    %291 = tpu.matmul %289, %269, %cst_141 {dimension_numbers = #tpu.dot_dimension_numbers<[1], [0], [0], [1], [0, 0, 1, 1], [], []>} : vector<2x8xbf16>, vector<8x256xbf16>, vector<2x256xf32> -> vector<2x256xf32>
    %292 = arith.truncf %291 : vector<2x256xf32> to vector<2x256xbf16>
    %cst_142 = arith.constant dense<0.000000e+00> : vector<2x512xf32>
    %293 = tpu.matmul %292, %290, %cst_142 {dimension_numbers = #tpu.dot_dimension_numbers<[1], [0], [0], [1], [0, 0, 1, 1], [], []>} : vector<2x256xbf16>, vector<256x512xbf16>, vector<2x512xf32> -> vector<2x512xf32>
    %294 = arith.addf %288, %293 : vector<2x512xf32>
    %c0_143 = arith.constant 0 : index
    %c0_144 = arith.constant 0 : index
    %295 = vector.load %arg19[%c0_143, %c0_144] : memref<1x512xf32, #tpu.memory_space<vmem>>, vector<1x512xf32>
    %296 = vector.broadcast %295 : vector<1x512xf32> to vector<2x512xf32>
    %297 = arith.addf %294, %296 : vector<2x512xf32>
    %cst_145 = arith.constant 0.000000e+00 : f32
    %298 = vector.broadcast %cst_145 : f32 to vector<2x512xf32>
    %299 = arith.cmpf oge, %297, %298 : vector<2x512xf32>
    %cst_146 = arith.constant 2.000000e-01 : f32
    %300 = vector.broadcast %cst_146 : f32 to vector<2x512xf32>
    %301 = arith.mulf %300, %297 : vector<2x512xf32>
    %302 = arith.select %299, %297, %301 : vector<2x512xi1>, vector<2x512xf32>
    %c0_147 = arith.constant 0 : index
    %c0_148 = arith.constant 0 : index
    %303 = vector.load %arg20[%c0_147, %c0_148] : memref<1x512xf32, #tpu.memory_space<vmem>>, vector<1x512xf32>
    %304 = vector.broadcast %303 : vector<1x512xf32> to vector<2x512xf32>
    %305 = arith.mulf %302, %304 : vector<2x512xf32>
    %cst_149 = arith.constant dense<0.000000e+00> : vector<2xf32>
    %306 = vector.multi_reduction <add>, %305, %cst_149 [1] : vector<2x512xf32> to vector<2xf32>
    %307 = vector.shape_cast %306 : vector<2xf32> to vector<2x1xf32>
    %c0_150 = arith.constant 0 : index
    %c0_151 = arith.constant 0 : index
    %308 = vector.load %arg21[%c0_150, %c0_151] : memref<1x1xf32, #tpu.memory_space<vmem>>, vector<1x1xf32>
    %309 = vector.broadcast %308 : vector<1x1xf32> to vector<2x1xf32>
    %310 = arith.addf %307, %309 : vector<2x1xf32>
    %c0_152 = arith.constant 0 : index
    %c0_153 = arith.constant 0 : index
    %311 = vector.load %arg22[%c0_152, %c0_153] : memref<2x1xf32, #tpu.memory_space<vmem>>, vector<2x1xf32>
    tpu.vector_store %arg22[%c0_152, %c0_153], %310 {strides = array<i32>} : memref<2x1xf32, #tpu.memory_space<vmem>>, vector<2x1xf32>,
    return
  }
  func.func @transform_0(%arg0: i32) -> (i32, i32) {
    %c0_i32 = arith.constant 0 : i32
    %c0_i32_0 = arith.constant 0 : i32
    %c0_i32_1 = arith.constant 0 : i32
    return %c0_i32, %c0_i32_0 : i32, i32
  }
  func.func @transform_1(%arg0: i32) -> (i32, i32) {
    %c0_i32 = arith.constant 0 : i32
    %c0_i32_0 = arith.constant 0 : i32
    %c0_i32_1 = arith.constant 0 : i32
    return %c0_i32, %c0_i32_0 : i32, i32
  }
  func.func @transform_2(%arg0: i32) -> (i32, i32) {
    %c0_i32 = arith.constant 0 : i32
    %c0_i32_0 = arith.constant 0 : i32
    %c0_i32_1 = arith.constant 0 : i32
    return %c0_i32, %c0_i32_0 : i32, i32
  }
  func.func @transform_3(%arg0: i32) -> (i32, i32) {
    %c0_i32 = arith.constant 0 : i32
    %c0_i32_0 = arith.constant 0 : i32
    %c0_i32_1 = arith.constant 0 : i32
    return %c0_i32, %c0_i32_0 : i32, i32
  }
  func.func @transform_4(%arg0: i32) -> (i32, i32) {
    %c0_i32 = arith.constant 0 : i32
    %c0_i32_0 = arith.constant 0 : i32
    %c0_i32_1 = arith.constant 0 : i32
    return %c0_i32, %c0_i32_0 : i32, i32
  }
  func.func @transform_5(%arg0: i32) -> (i32, i32) {
    %c0_i32 = arith.constant 0 : i32
    %c0_i32_0 = arith.constant 0 : i32
    %c0_i32_1 = arith.constant 0 : i32
    return %c0_i32, %c0_i32_0 : i32, i32
  }
  func.func @transform_6(%arg0: i32) -> (i32, i32) {
    %c0_i32 = arith.constant 0 : i32
    %c0_i32_0 = arith.constant 0 : i32
    %c0_i32_1 = arith.constant 0 : i32
    return %c0_i32, %c0_i32_0 : i32, i32
  }
  func.func @transform_7(%arg0: i32) -> (i32, i32) {
    %c0_i32 = arith.constant 0 : i32
    %c0_i32_0 = arith.constant 0 : i32
    %c0_i32_1 = arith.constant 0 : i32
    return %c0_i32, %c0_i32_0 : i32, i32
  }
  func.func @transform_8(%arg0: i32) -> (i32, i32) {
    %c0_i32 = arith.constant 0 : i32
    %c0_i32_0 = arith.constant 0 : i32
    %c0_i32_1 = arith.constant 0 : i32
    return %c0_i32, %c0_i32_0 : i32, i32
  }
  func.func @transform_9(%arg0: i32) -> (i32, i32) {
    %c0_i32 = arith.constant 0 : i32
    %c0_i32_0 = arith.constant 0 : i32
    %c0_i32_1 = arith.constant 0 : i32
    return %c0_i32, %c0_i32_0 : i32, i32
  }
  func.func @transform_10(%arg0: i32) -> (i32, i32) {
    %c0_i32 = arith.constant 0 : i32
    %c0_i32_0 = arith.constant 0 : i32
    %c0_i32_1 = arith.constant 0 : i32
    return %c0_i32, %c0_i32_0 : i32, i32
  }
  func.func @transform_11(%arg0: i32) -> (i32, i32) {
    %c0_i32 = arith.constant 0 : i32
    %c0_i32_0 = arith.constant 0 : i32
    %c0_i32_1 = arith.constant 0 : i32
    return %c0_i32, %c0_i32_0 : i32, i32
  }
  func.func @transform_12(%arg0: i32) -> (i32, i32) {
    %c0_i32 = arith.constant 0 : i32
    %c0_i32_0 = arith.constant 0 : i32
    %c0_i32_1 = arith.constant 0 : i32
    return %c0_i32, %c0_i32_0 : i32, i32
  }
  func.func @transform_13(%arg0: i32) -> (i32, i32) {
    %c0_i32 = arith.constant 0 : i32
    %c0_i32_0 = arith.constant 0 : i32
    %c0_i32_1 = arith.constant 0 : i32
    return %c0_i32, %c0_i32_0 : i32, i32
  }
  func.func @transform_14(%arg0: i32) -> (i32, i32) {
    %c0_i32 = arith.constant 0 : i32
    %c0_i32_0 = arith.constant 0 : i32
    %c0_i32_1 = arith.constant 0 : i32
    return %c0_i32, %c0_i32_0 : i32, i32
  }
  func.func @transform_15(%arg0: i32) -> (i32, i32) {
    %c0_i32 = arith.constant 0 : i32
    %c0_i32_0 = arith.constant 0 : i32
    %c0_i32_1 = arith.constant 0 : i32
    return %c0_i32, %c0_i32_0 : i32, i32
  }
  func.func @transform_16(%arg0: i32) -> (i32, i32) {
    %c0_i32 = arith.constant 0 : i32
    %c0_i32_0 = arith.constant 0 : i32
    %c0_i32_1 = arith.constant 0 : i32
    return %c0_i32, %c0_i32_0 : i32, i32
  }
  func.func @transform_17(%arg0: i32) -> (i32, i32) {
    %c0_i32 = arith.constant 0 : i32
    %c0_i32_0 = arith.constant 0 : i32
    %c0_i32_1 = arith.constant 0 : i32
    return %c0_i32, %c0_i32_0 : i32, i32
  }
  func.func @transform_18(%arg0: i32) -> (i32, i32) {
    %c0_i32 = arith.constant 0 : i32
    %c0_i32_0 = arith.constant 0 : i32
    %c0_i32_1 = arith.constant 0 : i32
    return %c0_i32, %c0_i32_0 : i32, i32
  }
  func.func @transform_19(%arg0: i32) -> (i32, i32) {
    %c0_i32 = arith.constant 0 : i32
    %c0_i32_0 = arith.constant 0 : i32
    %c0_i32_1 = arith.constant 0 : i32
    return %c0_i32, %c0_i32_0 : i32, i32
  }
  func.func @transform_20(%arg0: i32) -> (i32, i32) {
    %c0_i32 = arith.constant 0 : i32
    %c0_i32_0 = arith.constant 0 : i32
    %c0_i32_1 = arith.constant 0 : i32
    return %c0_i32, %c0_i32_0 : i32, i32
  }
  func.func @transform_21(%arg0: i32) -> (i32, i32) {
    %c0_i32 = arith.constant 0 : i32
    %c0_i32_0 = arith.constant 0 : i32
    %c0_i32_1 = arith.constant 0 : i32
    return %c0_i32, %c0_i32_0 : i32, i32
  }
}

</mosaic_0001>

<llo_original>
// kernel: discriminator_forward.1
$region0: #{discriminator_forward.1}
  #allocation0 [shape = 'u32[]', space=smem, size = 0x4, offset = 0x4, fixed_abs, tag = 'smem constant byte address 0x4 - core index']
  #allocation1 [shape = 'u32[144,128]{1,0:T(1,128)}', space=vmem, size = 0x12000, scoped, tag = 'internal scratch']
  #allocation2 [shape = 'f32[1,1]{1,0:T(1,128)S(1)}', space=vmem, size = 0x200, scoped, tag = 'scoped memory for discriminator_forward.1']
  %s0 = inlined_call_operand.vmem [shape: f32[2,16], index: 0, kind: input, shape index: {}]
  %s1 = inlined_call_operand.vmem [shape: bf16[512,4], index: 1, kind: input, shape index: {}]
  %s2 = inlined_call_operand.vmem [shape: f32[256,64], index: 2, kind: input, shape index: {}]
  %s3 = inlined_call_operand.vmem [shape: f32[256,4], index: 3, kind: input, shape index: {}]
  %s4 = inlined_call_operand.vmem [shape: bf16[4,32], index: 4, kind: input, shape index: {}]
  %s5 = inlined_call_operand.vmem [shape: f32[4,32], index: 5, kind: input, shape index: {}]
  %s6 = inlined_call_operand.hbm [shape: f32[1,32], index: 6, kind: input, shape index: {}]
  %s7 = inlined_call_operand.vmem [shape: bf16[512,512], index: 7, kind: input, shape index: {}]
  %s8 = inlined_call_operand.vmem [shape: bf16[128,64], index: 8, kind: input, shape index: {}]
  %s9 = inlined_call_operand.hbm [shape: f32[1,64], index: 9, kind: input, shape index: {}]
  %s10 = inlined_call_operand.vmem [shape: bf16[128,128], index: 10, kind: input, shape index: {}]
  %s11 = inlined_call_operand.vmem [shape: bf16[256,128], index: 11, kind: input, shape index: {}]
  %s12 = inlined_call_operand.hbm [shape: f32[1,128], index: 12, kind: input, shape index: {}]
  %s13 = inlined_call_operand.hbm [shape: bf16[32,32], index: 13, kind: input, shape index: {}]
  %s14 = inlined_call_operand.hbm [shape: bf16[512,256], index: 14, kind: input, shape index: {}]
  %s15 = inlined_call_operand.hbm [shape: f32[1,256], index: 15, kind: input, shape index: {}]
  %s16 = inlined_call_operand.vmem [shape: bf16[8,8], index: 16, kind: input, shape index: {}]
  %s17 = inlined_call_operand.hbm [shape: bf16[1024,512], index: 17, kind: input, shape index: {}]
  %s18 = inlined_call_operand.hbm [shape: f32[1,512], index: 18, kind: input, shape index: {}]
  %s19 = inlined_call_operand.vmem [shape: f32[1,512], index: 19, kind: input, shape index: {}]
  %s20 = inlined_call_operand.<no memory space> [shape: f32[1,1], index: 20, kind: input, shape index: {}]
  %s21 = inlined_call_operand.vmem [shape: f32[2,1], index: 21, kind: output, shape index: {}]
  %s22 = sld [smem:[#allocation0]]
  $region126: #{discriminator_forward.1} parent=0
    _
  %s24 = ssub.s32 1, %s22
  %s25 = scalar_select 0, %s24, %s22
  %v26 = vstv %s20
  %27 = vst [vmem:[#allocation2] sm:$0x1] %v26
  $region1: #{discriminator_forward.1} parent=0
    #allocation3 [shape = 'u8[512]{0}', space=vmem, size = 0x400, scoped, tag = 'input window, operand 6, single buffered']
    #allocation4 [shape = 's32[1]{0}', space=sflag, size = 0x4, scoped, tag = 'scoped memory for discriminator_forward.1']
    #allocation5 [shape = 'u8[512]{0}', space=vmem, size = 0x400, scoped, tag = 'input window, operand 9, single buffered']
    #allocation6 [shape = 's32[1]{0}', space=sflag, size = 0x4, scoped, tag = 'scoped memory for discriminator_forward.1']
    #allocation7 [shape = 'u8[512]{0}', space=vmem, size = 0x400, scoped, tag = 'input window, operand 12, single buffered']
    #allocation8 [shape = 'u8[8192]{0}', space=vmem, size = 0x2000, scoped, tag = 'input window, operand 13, single buffered']
    #allocation9 [shape = 's32[1]{0}', space=sflag, size = 0x4, scoped, tag = 'scoped memory for discriminator_forward.1']
    #allocation10 [shape = 'u8[262144]{0}', space=vmem, size = 0x40000, scoped, tag = 'input window, operand 14, single buffered']
    #allocation11 [shape = 'u8[1024]{0}', space=vmem, size = 0x400, scoped, tag = 'input window, operand 15, single buffered']
    #allocation12 [shape = 's32[1]{0}', space=sflag, size = 0x4, scoped, tag = 'scoped memory for discriminator_forward.1']
    #allocation13 [shape = 'u8[1048576]{0}', space=vmem, size = 0x100000, scoped, tag = 'input window, operand 17, single buffered']
    #allocation14 [shape = 'u8[2048]{0}', space=vmem, size = 0x800, scoped, tag = 'input window, operand 18, single buffered']
    #allocation15 [shape = 's32[1]{0}', space=sflag, size = 0x4, scoped, tag = 'scoped memory for discriminator_forward.1']
    %28 = vsyncpa [#allocation4], 0
    %29 = vsyncpa [#allocation6], 0
    %30 = vsyncpa [#allocation9], 0
    %31 = vsyncpa [#allocation12], 0
    %32 = vsyncpa [#allocation15], 0
    // Predicated region
    $region2: #{discriminator_forward.1} parent=1 // pred_check
      _
    $region3: #{discriminator_forward.1} parent=1 // pred_check_branch
      %34 = sbr.rel (0) target = $region5
    $region4: #{discriminator_forward.1} parent=1 // pred_region
      _
    $region5: #{discriminator_forward.1} parent=1 // pred_fallthru
      _
    // Predicated region
    $region6: #{discriminator_forward.1} parent=1 // pred_check
      _
    $region7: #{discriminator_forward.1} parent=1 // pred_check_branch
      %36 = sbr.rel (0) target = $region9
    $region8: #{discriminator_forward.1} parent=1 // pred_region
      _
    $region9: #{discriminator_forward.1} parent=1 // pred_fallthru
      _
    // Predicated region
    $region10: #{discriminator_forward.1} parent=1 // pred_check
      _
    $region11: #{discriminator_forward.1} parent=1 // pred_check_branch
      %38 = sbr.rel (0) target = $region13
    $region12: #{discriminator_forward.1} parent=1 // pred_region
      _
    $region13: #{discriminator_forward.1} parent=1 // pred_fallthru
      _
    // Predicated region
    $region14: #{discriminator_forward.1} parent=1 // pred_check
      _
    $region15: #{discriminator_forward.1} parent=1 // pred_check_branch
      %40 = sbr.rel (0) target = $region17
    $region16: #{discriminator_forward.1} parent=1 // pred_region
      _
    $region17: #{discriminator_forward.1} parent=1 // pred_fallthru
      _
    // Predicated region
    $region18: #{discriminator_forward.1} parent=1 // pred_check
      _
    $region19: #{discriminator_forward.1} parent=1 // pred_check_branch
      %42 = sbr.rel (0) target = $region21
    $region20: #{discriminator_forward.1} parent=1 // pred_region
      _
    $region21: #{discriminator_forward.1} parent=1 // pred_fallthru
      _
    // Predicated region
    $region22: #{discriminator_forward.1} parent=1 // pred_check
      _
    $region23: #{discriminator_forward.1} parent=1 // pred_check_branch
      %44 = sbr.rel (0) target = $region25
    $region24: #{discriminator_forward.1} parent=1 // pred_region
      _
    $region25: #{discriminator_forward.1} parent=1 // pred_fallthru
      _
    // Predicated region
    $region26: #{discriminator_forward.1} parent=1 // pred_check
      _
    $region27: #{discriminator_forward.1} parent=1 // pred_check_branch
      %46 = sbr.rel (0) target = $region29
    $region28: #{discriminator_forward.1} parent=1 // pred_region
      %s48 = ssub.s32 16, 16
      %49 = vsyncadd [#allocation4], %s48
      %s51 = sshll.u32 [#allocation3], 4
      %s52 = int_to_ptr.vmem [resolvable:$true] %s51
      %54 = dma.hbm_to_vmem [thread:$0]  %s6, 16, %s52, [#allocation4]
    $region29: #{discriminator_forward.1} parent=1 // pred_fallthru
      _
    // Predicated region
    $region30: #{discriminator_forward.1} parent=1 // pred_check
      _
    $region31: #{discriminator_forward.1} parent=1 // pred_check_branch
      %56 = sbr.rel (0) target = $region33
    $region32: #{discriminator_forward.1} parent=1 // pred_region
      _
    $region33: #{discriminator_forward.1} parent=1 // pred_fallthru
      _
    // Predicated region
    $region34: #{discriminator_forward.1} parent=1 // pred_check
      _
    $region35: #{discriminator_forward.1} parent=1 // pred_check_branch
      %58 = sbr.rel (0) target = $region37
    $region36: #{discriminator_forward.1} parent=1 // pred_region
      _
    $region37: #{discriminator_forward.1} parent=1 // pred_fallthru
      _
    // Predicated region
    $region38: #{discriminator_forward.1} parent=1 // pred_check
      _
    $region39: #{discriminator_forward.1} parent=1 // pred_check_branch
      %60 = sbr.rel (0) target = $region41
    $region40: #{discriminator_forward.1} parent=1 // pred_region
      %s62 = ssub.s32 16, 16
      %63 = vsyncadd [#allocation6], %s62
      %s65 = sshll.u32 [#allocation5], 4
      %s66 = int_to_ptr.vmem [resolvable:$true] %s65
      %68 = dma.hbm_to_vmem [thread:$0]  %s9, 16, %s66, [#allocation6]
    $region41: #{discriminator_forward.1} parent=1 // pred_fallthru
      _
    // Predicated region
    $region42: #{discriminator_forward.1} parent=1 // pred_check
      _
    $region43: #{discriminator_forward.1} parent=1 // pred_check_branch
      %70 = sbr.rel (0) target = $region45
    $region44: #{discriminator_forward.1} parent=1 // pred_region
      _
    $region45: #{discriminator_forward.1} parent=1 // pred_fallthru
      _
    // Predicated region
    $region46: #{discriminator_forward.1} parent=1 // pred_check
      _
    $region47: #{discriminator_forward.1} parent=1 // pred_check_branch
      %72 = sbr.rel (0) target = $region49
    $region48: #{discriminator_forward.1} parent=1 // pred_region
      _
    $region49: #{discriminator_forward.1} parent=1 // pred_fallthru
      _
    // Predicated region
    $region50: #{discriminator_forward.1} parent=1 // pred_check
      _
    $region51: #{discriminator_forward.1} parent=1 // pred_check_branch
      %74 = sbr.rel (0) target = $region53
    $region52: #{discriminator_forward.1} parent=1 // pred_region
      %s76 = ssub.s32 16, 16
      %77 = vsyncadd [#allocation6], %s76
      %s79 = sshll.u32 [#allocation7], 4
      %s80 = int_to_ptr.vmem [resolvable:$true] %s79
      %82 = dma.hbm_to_vmem [thread:$0]  %s12, 16, %s80, [#allocation6]
    $region53: #{discriminator_forward.1} parent=1 // pred_fallthru
      _
    // Predicated region
    $region54: #{discriminator_forward.1} parent=1 // pred_check
      _
    $region55: #{discriminator_forward.1} parent=1 // pred_check_branch
      %84 = sbr.rel (0) target = $region57
    $region56: #{discriminator_forward.1} parent=1 // pred_region
      %s86 = ssub.s32 256, 256
      %87 = vsyncadd [#allocation9], %s86
      %s88 = sshll.u32 [#allocation8], 4
      %s89 = int_to_ptr.vmem [resolvable:$true] %s88
      %94 = dma.hbm_to_vmem [thread:$0]  %s13, 256, %s89, [#allocation9], 64, 64, 4
    $region57: #{discriminator_forward.1} parent=1 // pred_fallthru
      _
    // Predicated region
    $region58: #{discriminator_forward.1} parent=1 // pred_check
      _
    $region59: #{discriminator_forward.1} parent=1 // pred_check_branch
      %96 = sbr.rel (0) target = $region61
    $region60: #{discriminator_forward.1} parent=1 // pred_region
      %s98 = ssub.s32 8192, 8192
      %99 = vsyncadd [#allocation9], %s98
      %s100 = sshll.u32 [#allocation10], 4
      %s101 = int_to_ptr.vmem [resolvable:$true] %s100
      %106 = dma.hbm_to_vmem [thread:$0]  %s14, 8192, %s101, [#allocation9], 128, 128, 8
    $region61: #{discriminator_forward.1} parent=1 // pred_fallthru
      _
    // Predicated region
    $region62: #{discriminator_forward.1} parent=1 // pred_check
      _
    $region63: #{discriminator_forward.1} parent=1 // pred_check_branch
      %108 = sbr.rel (0) target = $region65
    $region64: #{discriminator_forward.1} parent=1 // pred_region
      %s110 = ssub.s32 32, 32
      %111 = vsyncadd [#allocation12], %s110
      %s113 = sshll.u32 [#allocation11], 4
      %s114 = int_to_ptr.vmem [resolvable:$true] %s113
      %116 = dma.hbm_to_vmem [thread:$0]  %s15, 32, %s114, [#allocation12]
    $region65: #{discriminator_forward.1} parent=1 // pred_fallthru
      _
    // Predicated region
    $region66: #{discriminator_forward.1} parent=1 // pred_check
      _
    $region67: #{discriminator_forward.1} parent=1 // pred_check_branch
      %118 = sbr.rel (0) target = $region69
    $region68: #{discriminator_forward.1} parent=1 // pred_region
      _
    $region69: #{discriminator_forward.1} parent=1 // pred_fallthru
      _
    // Predicated region
    $region70: #{discriminator_forward.1} parent=1 // pred_check
      _
    $region71: #{discriminator_forward.1} parent=1 // pred_check_branch
      %120 = sbr.rel (0) target = $region73
    $region72: #{discriminator_forward.1} parent=1 // pred_region
      %s122 = ssub.s32 32768, 32768
      %123 = vsyncadd [#allocation12], %s122
      %s124 = sshll.u32 [#allocation13], 4
      %s125 = int_to_ptr.vmem [resolvable:$true] %s124
      %130 = dma.hbm_to_vmem [thread:$0]  %s17, 32768, %s125, [#allocation12], 256, 256, 16
    $region73: #{discriminator_forward.1} parent=1 // pred_fallthru
      _
    // Predicated region
    $region74: #{discriminator_forward.1} parent=1 // pred_check
      _
    $region75: #{discriminator_forward.1} parent=1 // pred_check_branch
      %132 = sbr.rel (0) target = $region77
    $region76: #{discriminator_forward.1} parent=1 // pred_region
      %s134 = ssub.s32 64, 64
      %135 = vsyncadd [#allocation15], %s134
      %s137 = sshll.u32 [#allocation14], 4
      %s138 = int_to_ptr.vmem [resolvable:$true] %s137
      %140 = dma.hbm_to_vmem [thread:$0]  %s18, 64, %s138, [#allocation15]
    $region77: #{discriminator_forward.1} parent=1 // pred_fallthru
      _
    // Predicated region
    $region78: #{discriminator_forward.1} parent=1 // pred_check
      _
    $region79: #{discriminator_forward.1} parent=1 // pred_check_branch
      %142 = sbr.rel (0) target = $region81
    $region80: #{discriminator_forward.1} parent=1 // pred_region
      _
    $region81: #{discriminator_forward.1} parent=1 // pred_fallthru
      _
    // Predicated region
    $region82: #{discriminator_forward.1} parent=1 // pred_check
      _
    $region83: #{discriminator_forward.1} parent=1 // pred_check_branch
      %144 = sbr.rel (0) target = $region85
    $region84: #{discriminator_forward.1} parent=1 // pred_region
      _
    $region85: #{discriminator_forward.1} parent=1 // pred_fallthru
      _
    // Predicated region
    $region86: #{discriminator_forward.1} parent=1 // pred_check
      _
    $region87: #{discriminator_forward.1} parent=1 // pred_check_branch
      %146 = sbr.rel (0) target = $region89
    $region88: #{discriminator_forward.1} parent=1 // pred_region
      %147 = dma.done [#allocation4], 16
    $region89: #{discriminator_forward.1} parent=1 // pred_fallthru
      _
    // Predicated region
    $region90: #{discriminator_forward.1} parent=1 // pred_check
      _
    $region91: #{discriminator_forward.1} parent=1 // pred_check_branch
      %149 = sbr.rel (0) target = $region93
    $region92: #{discriminator_forward.1} parent=1 // pred_region
      %150 = dma.done [#allocation6], 16
    $region93: #{discriminator_forward.1} parent=1 // pred_fallthru
      _
    // Predicated region
    $region94: #{discriminator_forward.1} parent=1 // pred_check
      _
    $region95: #{discriminator_forward.1} parent=1 // pred_check_branch
      %152 = sbr.rel (0) target = $region97
    $region96: #{discriminator_forward.1} parent=1 // pred_region
      %153 = dma.done [#allocation6], 16
    $region97: #{discriminator_forward.1} parent=1 // pred_fallthru
      _
    // Predicated region
    $region98: #{discriminator_forward.1} parent=1 // pred_check
      _
    $region99: #{discriminator_forward.1} parent=1 // pred_check_branch
      %155 = sbr.rel (0) target = $region101
    $region100: #{discriminator_forward.1} parent=1 // pred_region
      %156 = dma.done [#allocation9], 256
    $region101: #{discriminator_forward.1} parent=1 // pred_fallthru
      _
    // Predicated region
    $region102: #{discriminator_forward.1} parent=1 // pred_check
      _
    $region103: #{discriminator_forward.1} parent=1 // pred_check_branch
      %158 = sbr.rel (0) target = $region105
    $region104: #{discriminator_forward.1} parent=1 // pred_region
      %159 = dma.done [#allocation9], 8192
    $region105: #{discriminator_forward.1} parent=1 // pred_fallthru
      _
    // Predicated region
    $region106: #{discriminator_forward.1} parent=1 // pred_check
      _
    $region107: #{discriminator_forward.1} parent=1 // pred_check_branch
      %161 = sbr.rel (0) target = $region109
    $region108: #{discriminator_forward.1} parent=1 // pred_region
      %162 = dma.done [#allocation12], 32
    $region109: #{discriminator_forward.1} parent=1 // pred_fallthru
      _
    // Predicated region
    $region110: #{discriminator_forward.1} parent=1 // pred_check
      _
    $region111: #{discriminator_forward.1} parent=1 // pred_check_branch
      %164 = sbr.rel (0) target = $region113
    $region112: #{discriminator_forward.1} parent=1 // pred_region
      %165 = dma.done [#allocation12], 32768
    $region113: #{discriminator_forward.1} parent=1 // pred_fallthru
      _
    // Predicated region
    $region114: #{discriminator_forward.1} parent=1 // pred_check
      _
    $region115: #{discriminator_forward.1} parent=1 // pred_check_branch
      %167 = sbr.rel (0) target = $region117
    $region116: #{discriminator_forward.1} parent=1 // pred_region
      %168 = dma.done [#allocation15], 64
    $region117: #{discriminator_forward.1} parent=1 // pred_fallthru
      _
    %v170 = vld [vmem:[%s0] sm:$0x3]
    %v171 = vld [vmem:[%s2] sm:$0xff]
    %v172 = vld [vmem:[%s2 + $0x8] sm:$0xff]
    %v173 = vld [vmem:[%s2 + $0x10] sm:$0xff]
    %v174 = vld [vmem:[%s2 + $0x18] sm:$0xff]
    %v175 = vld [vmem:[%s2 + $0x20] sm:$0xff]
    %v176 = vld [vmem:[%s2 + $0x28] sm:$0xff]
    %v177 = vld [vmem:[%s2 + $0x30] sm:$0xff]
    %v178 = vld [vmem:[%s2 + $0x38] sm:$0xff]
    %v179 = vld [vmem:[%s2 + $0x40] sm:$0xff]
    %v180 = vld [vmem:[%s2 + $0x48] sm:$0xff]
    %v181 = vld [vmem:[%s2 + $0x50] sm:$0xff]
    %v182 = vld [vmem:[%s2 + $0x58] sm:$0xff]
    %v183 = vld [vmem:[%s2 + $0x60] sm:$0xff]
    %v184 = vld [vmem:[%s2 + $0x68] sm:$0xff]
    %v185 = vld [vmem:[%s2 + $0x70] sm:$0xff]
    %v186 = vld [vmem:[%s2 + $0x78] sm:$0xff]
    %v187 = vld [vmem:[%s2 + $0x80] sm:$0xff]
    %v188 = vld [vmem:[%s2 + $0x88] sm:$0xff]
    %v189 = vld [vmem:[%s2 + $0x90] sm:$0xff]
    %v190 = vld [vmem:[%s2 + $0x98] sm:$0xff]
    %v191 = vld [vmem:[%s2 + $0xa0] sm:$0xff]
    %v192 = vld [vmem:[%s2 + $0xa8] sm:$0xff]
    %v193 = vld [vmem:[%s2 + $0xb0] sm:$0xff]
    %v194 = vld [vmem:[%s2 + $0xb8] sm:$0xff]
    %v195 = vld [vmem:[%s2 + $0xc0] sm:$0xff]
    %v196 = vld [vmem:[%s2 + $0xc8] sm:$0xff]
    %v197 = vld [vmem:[%s2 + $0xd0] sm:$0xff]
    %v198 = vld [vmem:[%s2 + $0xd8] sm:$0xff]
    %v199 = vld [vmem:[%s2 + $0xe0] sm:$0xff]
    %v200 = vld [vmem:[%s2 + $0xe8] sm:$0xff]
    %v201 = vld [vmem:[%s2 + $0xf0] sm:$0xff]
    %v202 = vld [vmem:[%s2 + $0xf8] sm:$0xff]
    %v203 = vld [vmem:[%s3] sm:$0xff]
    %v204 = vld [vmem:[%s3 + $0x8] sm:$0xff]
    %v205 = vld [vmem:[%s3 + $0x10] sm:$0xff]
    %v206 = vld [vmem:[%s3 + $0x18] sm:$0xff]
    %v207 = vld [vmem:[%s3 + $0x20] sm:$0xff]
    %v208 = vld [vmem:[%s3 + $0x28] sm:$0xff]
    %v209 = vld [vmem:[%s3 + $0x30] sm:$0xff]
    %v210 = vld [vmem:[%s3 + $0x38] sm:$0xff]
    %v211 = vld [vmem:[%s3 + $0x40] sm:$0xff]
    %v212 = vld [vmem:[%s3 + $0x48] sm:$0xff]
    %v213 = vld [vmem:[%s3 + $0x50] sm:$0xff]
    %v214 = vld [vmem:[%s3 + $0x58] sm:$0xff]
    %v215 = vld [vmem:[%s3 + $0x60] sm:$0xff]
    %v216 = vld [vmem:[%s3 + $0x68] sm:$0xff]
    %v217 = vld [vmem:[%s3 + $0x70] sm:$0xff]
    %v218 = vld [vmem:[%s3 + $0x78] sm:$0xff]
    %v219 = vld [vmem:[%s3 + $0x80] sm:$0xff]
    %v220 = vld [vmem:[%s3 + $0x88] sm:$0xff]
    %v221 = vld [vmem:[%s3 + $0x90] sm:$0xff]
    %v222 = vld [vmem:[%s3 + $0x98] sm:$0xff]
    %v223 = vld [vmem:[%s3 + $0xa0] sm:$0xff]
    %v224 = vld [vmem:[%s3 + $0xa8] sm:$0xff]
    %v225 = vld [vmem:[%s3 + $0xb0] sm:$0xff]
    %v226 = vld [vmem:[%s3 + $0xb8] sm:$0xff]
    %v227 = vld [vmem:[%s3 + $0xc0] sm:$0xff]
    %v228 = vld [vmem:[%s3 + $0xc8] sm:$0xff]
    %v229 = vld [vmem:[%s3 + $0xd0] sm:$0xff]
    %v230 = vld [vmem:[%s3 + $0xd8] sm:$0xff]
    %v231 = vld [vmem:[%s3 + $0xe0] sm:$0xff]
    %v232 = vld [vmem:[%s3 + $0xe8] sm:$0xff]
    %v233 = vld [vmem:[%s3 + $0xf0] sm:$0xff]
    %v234 = vld [vmem:[%s3 + $0xf8] sm:$0xff]
    %v235 = vld [vmem:[%s4] sm:$0x3]
    %v236 = vld [vmem:[%s5] sm:$0xf]
    %v237 = vld [vmem:[#allocation3] sm:$0x1]
    %v238 = vlaneseq
    %v239 = vshrl.u32 %v238, 7
    %v240 = vsub.s32 0, %v239
    %v241 = vrot.slane %v170, %v240
    %v242 = vmul.f32 %v241, %v171
    %v243 = vmul.f32 %v241, %v172
    %v244 = vmul.f32 %v241, %v173
    %v245 = vmul.f32 %v241, %v174
    %v246 = vmul.f32 %v241, %v175
    %v247 = vmul.f32 %v241, %v176
    %v248 = vmul.f32 %v241, %v177
    %v249 = vmul.f32 %v241, %v178
    %v250 = vmul.f32 %v241, %v179
    %v251 = vmul.f32 %v241, %v180
    %v252 = vmul.f32 %v241, %v181
    %v253 = vmul.f32 %v241, %v182
    %v254 = vmul.f32 %v241, %v183
    %v255 = vmul.f32 %v241, %v184
    %v256 = vmul.f32 %v241, %v185
    %v257 = vmul.f32 %v241, %v186
    %v258 = vmul.f32 %v241, %v187
    %v259 = vmul.f32 %v241, %v188
    %v260 = vmul.f32 %v241, %v189
    %v261 = vmul.f32 %v241, %v190
    %v262 = vmul.f32 %v241, %v191
    %v263 = vmul.f32 %v241, %v192
    %v264 = vmul.f32 %v241, %v193
    %v265 = vmul.f32 %v241, %v194
    %v266 = vmul.f32 %v241, %v195
    %v267 = vmul.f32 %v241, %v196
    %v268 = vmul.f32 %v241, %v197
    %v269 = vmul.f32 %v241, %v198
    %v270 = vmul.f32 %v241, %v199
    %v271 = vmul.f32 %v241, %v200
    %v272 = vmul.f32 %v241, %v201
    %v273 = vmul.f32 %v241, %v202
    %vm274 = vcmask 130048
    %v275 = vsel %vm274, %v242, 0.0
    %276 = vadd.xlane.f32.xlu0 %v275
    %v277 = vpop.xlane.xlu0 %276
    %v278 = vsel %vm274, %v243, 0.0
    %279 = vadd.xlane.f32.xlu0 %v278
    %v280 = vpop.xlane.xlu0 %279
    %v281 = vsel %vm274, %v244, 0.0
    %282 = vadd.xlane.f32.xlu0 %v281
    %v283 = vpop.xlane.xlu0 %282
    %v284 = vsel %vm274, %v245, 0.0
    %285 = vadd.xlane.f32.xlu0 %v284
    %v286 = vpop.xlane.xlu0 %285
    %v287 = vsel %vm274, %v246, 0.0
    %288 = vadd.xlane.f32.xlu0 %v287
    %v289 = vpop.xlane.xlu0 %288
    %v290 = vsel %vm274, %v247, 0.0
    %291 = vadd.xlane.f32.xlu0 %v290
    %v292 = vpop.xlane.xlu0 %291
    %v293 = vsel %vm274, %v248, 0.0
    %294 = vadd.xlane.f32.xlu0 %v293
    %v295 = vpop.xlane.xlu0 %294
    %v296 = vsel %vm274, %v249, 0.0
    %297 = vadd.xlane.f32.xlu0 %v296
    %v298 = vpop.xlane.xlu0 %297
    %v299 = vsel %vm274, %v250, 0.0
    %300 = vadd.xlane.f32.xlu0 %v299
    %v301 = vpop.xlane.xlu0 %300
    %v302 = vsel %vm274, %v251, 0.0
    %303 = vadd.xlane.f32.xlu0 %v302
    %v304 = vpop.xlane.xlu0 %303
    %v305 = vsel %vm274, %v252, 0.0
    %306 = vadd.xlane.f32.xlu0 %v305
    %v307 = vpop.xlane.xlu0 %306
    %v308 = vsel %vm274, %v253, 0.0
    %309 = vadd.xlane.f32.xlu0 %v308
    %v310 = vpop.xlane.xlu0 %309
    %v311 = vsel %vm274, %v254, 0.0
    %312 = vadd.xlane.f32.xlu0 %v311
    %v313 = vpop.xlane.xlu0 %312
    %v314 = vsel %vm274, %v255, 0.0
    %315 = vadd.xlane.f32.xlu0 %v314
    %v316 = vpop.xlane.xlu0 %315
    %v317 = vsel %vm274, %v256, 0.0
    %318 = vadd.xlane.f32.xlu0 %v317
    %v319 = vpop.xlane.xlu0 %318
    %v320 = vsel %vm274, %v257, 0.0
    %321 = vadd.xlane.f32.xlu0 %v320
    %v322 = vpop.xlane.xlu0 %321
    %v323 = vsel %vm274, %v258, 0.0
    %324 = vadd.xlane.f32.xlu0 %v323
    %v325 = vpop.xlane.xlu0 %324
    %v326 = vsel %vm274, %v259, 0.0
    %327 = vadd.xlane.f32.xlu0 %v326
    %v328 = vpop.xlane.xlu0 %327
    %v329 = vsel %vm274, %v260, 0.0
    %330 = vadd.xlane.f32.xlu0 %v329
    %v331 = vpop.xlane.xlu0 %330
    %v332 = vsel %vm274, %v261, 0.0
    %333 = vadd.xlane.f32.xlu0 %v332
    %v334 = vpop.xlane.xlu0 %333
    %v335 = vsel %vm274, %v262, 0.0
    %336 = vadd.xlane.f32.xlu0 %v335
    %v337 = vpop.xlane.xlu0 %336
    %v338 = vsel %vm274, %v263, 0.0
    %339 = vadd.xlane.f32.xlu0 %v338
    %v340 = vpop.xlane.xlu0 %339
    %v341 = vsel %vm274, %v264, 0.0
    %342 = vadd.xlane.f32.xlu0 %v341
    %v343 = vpop.xlane.xlu0 %342
    %v344 = vsel %vm274, %v265, 0.0
    %345 = vadd.xlane.f32.xlu0 %v344
    %v346 = vpop.xlane.xlu0 %345
    %v347 = vsel %vm274, %v266, 0.0
    %348 = vadd.xlane.f32.xlu0 %v347
    %v349 = vpop.xlane.xlu0 %348
    %v350 = vsel %vm274, %v267, 0.0
    %351 = vadd.xlane.f32.xlu0 %v350
    %v352 = vpop.xlane.xlu0 %351
    %v353 = vsel %vm274, %v268, 0.0
    %354 = vadd.xlane.f32.xlu0 %v353
    %v355 = vpop.xlane.xlu0 %354
    %v356 = vsel %vm274, %v269, 0.0
    %357 = vadd.xlane.f32.xlu0 %v356
    %v358 = vpop.xlane.xlu0 %357
    %v359 = vsel %vm274, %v270, 0.0
    %360 = vadd.xlane.f32.xlu0 %v359
    %v361 = vpop.xlane.xlu0 %360
    %v362 = vsel %vm274, %v271, 0.0
    %363 = vadd.xlane.f32.xlu0 %v362
    %v364 = vpop.xlane.xlu0 %363
    %v365 = vsel %vm274, %v272, 0.0
    %366 = vadd.xlane.f32.xlu0 %v365
    %v367 = vpop.xlane.xlu0 %366
    %v368 = vsel %vm274, %v273, 0.0
    %369 = vadd.xlane.f32.xlu0 %v368
    %v370 = vpop.xlane.xlu0 %369
    %v371 = vadd.f32 %v277, %v203
    %v372 = vadd.f32 %v280, %v204
    %v373 = vadd.f32 %v283, %v205
    %v374 = vadd.f32 %v286, %v206
    %v375 = vadd.f32 %v289, %v207
    %v376 = vadd.f32 %v292, %v208
    %v377 = vadd.f32 %v295, %v209
    %v378 = vadd.f32 %v298, %v210
    %v379 = vadd.f32 %v301, %v211
    %v380 = vadd.f32 %v304, %v212
    %v381 = vadd.f32 %v307, %v213
    %v382 = vadd.f32 %v310, %v214
    %v383 = vadd.f32 %v313, %v215
    %v384 = vadd.f32 %v316, %v216
    %v385 = vadd.f32 %v319, %v217
    %v386 = vadd.f32 %v322, %v218
    %v387 = vadd.f32 %v325, %v219
    %v388 = vadd.f32 %v328, %v220
    %v389 = vadd.f32 %v331, %v221
    %v390 = vadd.f32 %v334, %v222
    %v391 = vadd.f32 %v337, %v223
    %v392 = vadd.f32 %v340, %v224
    %v393 = vadd.f32 %v343, %v225
    %v394 = vadd.f32 %v346, %v226
    %v395 = vadd.f32 %v349, %v227
    %v396 = vadd.f32 %v352, %v228
    %v397 = vadd.f32 %v355, %v229
    %v398 = vadd.f32 %v358, %v230
    %v399 = vadd.f32 %v361, %v231
    %v400 = vadd.f32 %v364, %v232
    %v401 = vadd.f32 %v367, %v233
    %v402 = vadd.f32 %v370, %v234
    %vm403 = vcmp.ge.f32.partialorder %v371, 0.0
    %vm404 = vcmp.ge.f32.partialorder %v372, 0.0
    %vm405 = vcmp.ge.f32.partialorder %v373, 0.0
    %vm406 = vcmp.ge.f32.partialorder %v374, 0.0
    %vm407 = vcmp.ge.f32.partialorder %v375, 0.0
    %vm408 = vcmp.ge.f32.partialorder %v376, 0.0
    %vm409 = vcmp.ge.f32.partialorder %v377, 0.0
    %vm410 = vcmp.ge.f32.partialorder %v378, 0.0
    %vm411 = vcmp.ge.f32.partialorder %v379, 0.0
    %vm412 = vcmp.ge.f32.partialorder %v380, 0.0
    %vm413 = vcmp.ge.f32.partialorder %v381, 0.0
    %vm414 = vcmp.ge.f32.partialorder %v382, 0.0
    %vm415 = vcmp.ge.f32.partialorder %v383, 0.0
    %vm416 = vcmp.ge.f32.partialorder %v384, 0.0
    %vm417 = vcmp.ge.f32.partialorder %v385, 0.0
    %vm418 = vcmp.ge.f32.partialorder %v386, 0.0
    %vm419 = vcmp.ge.f32.partialorder %v387, 0.0
    %vm420 = vcmp.ge.f32.partialorder %v388, 0.0
    %vm421 = vcmp.ge.f32.partialorder %v389, 0.0
    %vm422 = vcmp.ge.f32.partialorder %v390, 0.0
    %vm423 = vcmp.ge.f32.partialorder %v391, 0.0
    %vm424 = vcmp.ge.f32.partialorder %v392, 0.0
    %vm425 = vcmp.ge.f32.partialorder %v393, 0.0
    %vm426 = vcmp.ge.f32.partialorder %v394, 0.0
    %vm427 = vcmp.ge.f32.partialorder %v395, 0.0
    %vm428 = vcmp.ge.f32.partialorder %v396, 0.0
    %vm429 = vcmp.ge.f32.partialorder %v397, 0.0
    %vm430 = vcmp.ge.f32.partialorder %v398, 0.0
    %vm431 = vcmp.ge.f32.partialorder %v399, 0.0
    %vm432 = vcmp.ge.f32.partialorder %v400, 0.0
    %vm433 = vcmp.ge.f32.partialorder %v401, 0.0
    %vm434 = vcmp.ge.f32.partialorder %v402, 0.0
    %v435 = vmul.f32 %v371, 0.2
    %v436 = vmul.f32 %v372, 0.2
    %v437 = vmul.f32 %v373, 0.2
    %v438 = vmul.f32 %v374, 0.2
    %v439 = vmul.f32 %v375, 0.2
    %v440 = vmul.f32 %v376, 0.2
    %v441 = vmul.f32 %v377, 0.2
    %v442 = vmul.f32 %v378, 0.2
    %v443 = vmul.f32 %v379, 0.2
    %v444 = vmul.f32 %v380, 0.2
    %v445 = vmul.f32 %v381, 0.2
    %v446 = vmul.f32 %v382, 0.2
    %v447 = vmul.f32 %v383, 0.2
    %v448 = vmul.f32 %v384, 0.2
    %v449 = vmul.f32 %v385, 0.2
    %v450 = vmul.f32 %v386, 0.2
    %v451 = vmul.f32 %v387, 0.2
    %v452 = vmul.f32 %v388, 0.2
    %v453 = vmul.f32 %v389, 0.2
    %v454 = vmul.f32 %v390, 0.2
    %v455 = vmul.f32 %v391, 0.2
    %v456 = vmul.f32 %v392, 0.2
    %v457 = vmul.f32 %v393, 0.2
    %v458 = vmul.f32 %v394, 0.2
    %v459 = vmul.f32 %v395, 0.2
    %v460 = vmul.f32 %v396, 0.2
    %v461 = vmul.f32 %v397, 0.2
    %v462 = vmul.f32 %v398, 0.2
    %v463 = vmul.f32 %v399, 0.2
    %v464 = vmul.f32 %v400, 0.2
    %v465 = vmul.f32 %v401, 0.2
    %v466 = vmul.f32 %v402, 0.2
    %v467 = vsel %vm403, %v371, %v435
    %v468 = vsel %vm404, %v372, %v436
    %v469 = vsel %vm405, %v373, %v437
    %v470 = vsel %vm406, %v374, %v438
    %v471 = vsel %vm407, %v375, %v439
    %v472 = vsel %vm408, %v376, %v440
    %v473 = vsel %vm409, %v377, %v441
    %v474 = vsel %vm410, %v378, %v442
    %v475 = vsel %vm411, %v379, %v443
    %v476 = vsel %vm412, %v380, %v444
    %v477 = vsel %vm413, %v381, %v445
    %v478 = vsel %vm414, %v382, %v446
    %v479 = vsel %vm415, %v383, %v447
    %v480 = vsel %vm416, %v384, %v448
    %v481 = vsel %vm417, %v385, %v449
    %v482 = vsel %vm418, %v386, %v450
    %v483 = vsel %vm419, %v387, %v451
    %v484 = vsel %vm420, %v388, %v452
    %v485 = vsel %vm421, %v389, %v453
    %v486 = vsel %vm422, %v390, %v454
    %v487 = vsel %vm423, %v391, %v455
    %v488 = vsel %vm424, %v392, %v456
    %v489 = vsel %vm425, %v393, %v457
    %v490 = vsel %vm426, %v394, %v458
    %v491 = vsel %vm427, %v395, %v459
    %v492 = vsel %vm428, %v396, %v460
    %v493 = vsel %vm429, %v397, %v461
    %v494 = vsel %vm430, %v398, %v462
    %v495 = vsel %vm431, %v399, %v463
    %v496 = vsel %vm432, %v400, %v464
    %v497 = vsel %vm433, %v401, %v465
    %v498 = vsel %vm434, %v402, %v466
    %500 = vset.pattern.permute.xlu0 0
    %501 = vperm.xlu0 %500, %v467
    %v502 = vpop.permute.xlu0 %501
    %505 = vset.pattern.permute.xlu0 0
    %506 = vperm.xlu0 %505, %v468
    %v507 = vpop.permute.xlu0 %506
    %510 = vset.pattern.permute.xlu0 0
    %511 = vperm.xlu0 %510, %v469
    %v512 = vpop.permute.xlu0 %511
    %515 = vset.pattern.permute.xlu0 0
    %516 = vperm.xlu0 %515, %v470
    %v517 = vpop.permute.xlu0 %516
    %520 = vset.pattern.permute.xlu0 0
    %521 = vperm.xlu0 %520, %v471
    %v522 = vpop.permute.xlu0 %521
    %525 = vset.pattern.permute.xlu0 0
    %526 = vperm.xlu0 %525, %v472
    %v527 = vpop.permute.xlu0 %526
    %530 = vset.pattern.permute.xlu0 0
    %531 = vperm.xlu0 %530, %v473
    %v532 = vpop.permute.xlu0 %531
    %535 = vset.pattern.permute.xlu0 0
    %536 = vperm.xlu0 %535, %v474
    %v537 = vpop.permute.xlu0 %536
    %540 = vset.pattern.permute.xlu0 0
    %541 = vperm.xlu0 %540, %v475
    %v542 = vpop.permute.xlu0 %541
    %545 = vset.pattern.permute.xlu0 0
    %546 = vperm.xlu0 %545, %v476
    %v547 = vpop.permute.xlu0 %546
    %550 = vset.pattern.permute.xlu0 0
    %551 = vperm.xlu0 %550, %v477
    %v552 = vpop.permute.xlu0 %551
    %555 = vset.pattern.permute.xlu0 0
    %556 = vperm.xlu0 %555, %v478
    %v557 = vpop.permute.xlu0 %556
    %560 = vset.pattern.permute.xlu0 0
    %561 = vperm.xlu0 %560, %v479
    %v562 = vpop.permute.xlu0 %561
    %565 = vset.pattern.permute.xlu0 0
    %566 = vperm.xlu0 %565, %v480
    %v567 = vpop.permute.xlu0 %566
    %570 = vset.pattern.permute.xlu0 0
    %571 = vperm.xlu0 %570, %v481
    %v572 = vpop.permute.xlu0 %571
    %575 = vset.pattern.permute.xlu0 0
    %576 = vperm.xlu0 %575, %v482
    %v577 = vpop.permute.xlu0 %576
    %580 = vset.pattern.permute.xlu0 0
    %581 = vperm.xlu0 %580, %v483
    %v582 = vpop.permute.xlu0 %581
    %585 = vset.pattern.permute.xlu0 0
    %586 = vperm.xlu0 %585, %v484
    %v587 = vpop.permute.xlu0 %586
    %590 = vset.pattern.permute.xlu0 0
    %591 = vperm.xlu0 %590, %v485
    %v592 = vpop.permute.xlu0 %591
    %595 = vset.pattern.permute.xlu0 0
    %596 = vperm.xlu0 %595, %v486
    %v597 = vpop.permute.xlu0 %596
    %600 = vset.pattern.permute.xlu0 0
    %601 = vperm.xlu0 %600, %v487
    %v602 = vpop.permute.xlu0 %601
    %605 = vset.pattern.permute.xlu0 0
    %606 = vperm.xlu0 %605, %v488
    %v607 = vpop.permute.xlu0 %606
    %610 = vset.pattern.permute.xlu0 0
    %611 = vperm.xlu0 %610, %v489
    %v612 = vpop.permute.xlu0 %611
    %615 = vset.pattern.permute.xlu0 0
    %616 = vperm.xlu0 %615, %v490
    %v617 = vpop.permute.xlu0 %616
    %620 = vset.pattern.permute.xlu0 0
    %621 = vperm.xlu0 %620, %v491
    %v622 = vpop.permute.xlu0 %621
    %625 = vset.pattern.permute.xlu0 0
    %626 = vperm.xlu0 %625, %v492
    %v627 = vpop.permute.xlu0 %626
    %630 = vset.pattern.permute.xlu0 0
    %631 = vperm.xlu0 %630, %v493
    %v632 = vpop.permute.xlu0 %631
    %635 = vset.pattern.permute.xlu0 0
    %636 = vperm.xlu0 %635, %v494
    %v637 = vpop.permute.xlu0 %636
    %640 = vset.pattern.permute.xlu0 0
    %641 = vperm.xlu0 %640, %v495
    %v642 = vpop.permute.xlu0 %641
    %645 = vset.pattern.permute.xlu0 0
    %646 = vperm.xlu0 %645, %v496
    %v647 = vpop.permute.xlu0 %646
    %650 = vset.pattern.permute.xlu0 0
    %651 = vperm.xlu0 %650, %v497
    %v652 = vpop.permute.xlu0 %651
    %655 = vset.pattern.permute.xlu0 0
    %656 = vperm.xlu0 %655, %v498
    %v657 = vpop.permute.xlu0 %656
    %v659 = vlaneseq
    %v660 = vshrl.u32 %v659, 7
    %v661 = vsub.s32 0, %v660
    %v662 = vrot.slane %v236, %v661
    %v663 = vmul.f32 %v502, %v662
    %v664 = vmul.f32 %v507, %v662
    %v665 = vmul.f32 %v512, %v662
    %v666 = vmul.f32 %v517, %v662
    %v667 = vmul.f32 %v522, %v662
    %v668 = vmul.f32 %v527, %v662
    %v669 = vmul.f32 %v532, %v662
    %v670 = vmul.f32 %v537, %v662
    %v671 = vmul.f32 %v542, %v662
    %v672 = vmul.f32 %v547, %v662
    %v673 = vmul.f32 %v552, %v662
    %v674 = vmul.f32 %v557, %v662
    %v675 = vmul.f32 %v562, %v662
    %v676 = vmul.f32 %v567, %v662
    %v677 = vmul.f32 %v572, %v662
    %v678 = vmul.f32 %v577, %v662
    %v679 = vmul.f32 %v582, %v662
    %v680 = vmul.f32 %v587, %v662
    %v681 = vmul.f32 %v592, %v662
    %v682 = vmul.f32 %v597, %v662
    %v683 = vmul.f32 %v602, %v662
    %v684 = vmul.f32 %v607, %v662
    %v685 = vmul.f32 %v612, %v662
    %v686 = vmul.f32 %v617, %v662
    %v687 = vmul.f32 %v622, %v662
    %v688 = vmul.f32 %v627, %v662
    %v689 = vmul.f32 %v632, %v662
    %v690 = vmul.f32 %v637, %v662
    %v691 = vmul.f32 %v642, %v662
    %v692 = vmul.f32 %v647, %v662
    %v693 = vmul.f32 %v652, %v662
    %v694 = vmul.f32 %v657, %v662
    %v695 = vadd.f32 %v663, 0.0
    %v696 = vadd.f32 %v664, 0.0
    %v697 = vadd.f32 %v665, 0.0
    %v698 = vadd.f32 %v666, 0.0
    %v699 = vadd.f32 %v667, 0.0
    %v700 = vadd.f32 %v668, 0.0
    %v701 = vadd.f32 %v669, 0.0
    %v702 = vadd.f32 %v670, 0.0
    %v703 = vadd.f32 %v671, 0.0
    %v704 = vadd.f32 %v672, 0.0
    %v705 = vadd.f32 %v673, 0.0
    %v706 = vadd.f32 %v674, 0.0
    %v707 = vadd.f32 %v675, 0.0
    %v708 = vadd.f32 %v676, 0.0
    %v709 = vadd.f32 %v677, 0.0
    %v710 = vadd.f32 %v678, 0.0
    %v711 = vadd.f32 %v679, 0.0
    %v712 = vadd.f32 %v680, 0.0
    %v713 = vadd.f32 %v681, 0.0
    %v714 = vadd.f32 %v682, 0.0
    %v715 = vadd.f32 %v683, 0.0
    %v716 = vadd.f32 %v684, 0.0
    %v717 = vadd.f32 %v685, 0.0
    %v718 = vadd.f32 %v686, 0.0
    %v719 = vadd.f32 %v687, 0.0
    %v720 = vadd.f32 %v688, 0.0
    %v721 = vadd.f32 %v689, 0.0
    %v722 = vadd.f32 %v690, 0.0
    %v723 = vadd.f32 %v691, 0.0
    %v724 = vadd.f32 %v692, 0.0
    %v725 = vadd.f32 %v693, 0.0
    %v726 = vadd.f32 %v694, 0.0
    %759 = vrot.lane.b32.xlu0 %v171, 112
    %v760 = vpop.permute.xlu0 %759
    %761 = vrot.lane.b32.xlu0 %v172, 112
    %v762 = vpop.permute.xlu0 %761
    %763 = vrot.lane.b32.xlu0 %v173, 112
    %v764 = vpop.permute.xlu0 %763
    %765 = vrot.lane.b32.xlu0 %v174, 112
    %v766 = vpop.permute.xlu0 %765
    %767 = vrot.lane.b32.xlu0 %v175, 112
    %v768 = vpop.permute.xlu0 %767
    %769 = vrot.lane.b32.xlu0 %v176, 112
    %v770 = vpop.permute.xlu0 %769
    %771 = vrot.lane.b32.xlu0 %v177, 112
    %v772 = vpop.permute.xlu0 %771
    %773 = vrot.lane.b32.xlu0 %v178, 112
    %v774 = vpop.permute.xlu0 %773
    %775 = vrot.lane.b32.xlu0 %v179, 112
    %v776 = vpop.permute.xlu0 %775
    %777 = vrot.lane.b32.xlu0 %v180, 112
    %v778 = vpop.permute.xlu0 %777
    %779 = vrot.lane.b32.xlu0 %v181, 112
    %v780 = vpop.permute.xlu0 %779
    %781 = vrot.lane.b32.xlu0 %v182, 112
    %v782 = vpop.permute.xlu0 %781
    %783 = vrot.lane.b32.xlu0 %v183, 112
    %v784 = vpop.permute.xlu0 %783
    %785 = vrot.lane.b32.xlu0 %v184, 112
    %v786 = vpop.permute.xlu0 %785
    %787 = vrot.lane.b32.xlu0 %v185, 112
    %v788 = vpop.permute.xlu0 %787
    %789 = vrot.lane.b32.xlu0 %v186, 112
    %v790 = vpop.permute.xlu0 %789
    %791 = vrot.lane.b32.xlu0 %v187, 112
    %v792 = vpop.permute.xlu0 %791
    %793 = vrot.lane.b32.xlu0 %v188, 112
    %v794 = vpop.permute.xlu0 %793
    %795 = vrot.lane.b32.xlu0 %v189, 112
    %v796 = vpop.permute.xlu0 %795
    %797 = vrot.lane.b32.xlu0 %v190, 112
    %v798 = vpop.permute.xlu0 %797
    %799 = vrot.lane.b32.xlu0 %v191, 112
    %v800 = vpop.permute.xlu0 %799
    %801 = vrot.lane.b32.xlu0 %v192, 112
    %v802 = vpop.permute.xlu0 %801
    %803 = vrot.lane.b32.xlu0 %v193, 112
    %v804 = vpop.permute.xlu0 %803
    %805 = vrot.lane.b32.xlu0 %v194, 112
    %v806 = vpop.permute.xlu0 %805
    %807 = vrot.lane.b32.xlu0 %v195, 112
    %v808 = vpop.permute.xlu0 %807
    %809 = vrot.lane.b32.xlu0 %v196, 112
    %v810 = vpop.permute.xlu0 %809
    %811 = vrot.lane.b32.xlu0 %v197, 112
    %v812 = vpop.permute.xlu0 %811
    %813 = vrot.lane.b32.xlu0 %v198, 112
    %v814 = vpop.permute.xlu0 %813
    %815 = vrot.lane.b32.xlu0 %v199, 112
    %v816 = vpop.permute.xlu0 %815
    %817 = vrot.lane.b32.xlu0 %v200, 112
    %v818 = vpop.permute.xlu0 %817
    %819 = vrot.lane.b32.xlu0 %v201, 112
    %v820 = vpop.permute.xlu0 %819
    %821 = vrot.lane.b32.xlu0 %v202, 112
    %v822 = vpop.permute.xlu0 %821
    %v855 = vmul.f32 %v241, %v760
    %v856 = vmul.f32 %v241, %v762
    %v857 = vmul.f32 %v241, %v764
    %v858 = vmul.f32 %v241, %v766
    %v859 = vmul.f32 %v241, %v768
    %v860 = vmul.f32 %v241, %v770
    %v861 = vmul.f32 %v241, %v772
    %v862 = vmul.f32 %v241, %v774
    %v863 = vmul.f32 %v241, %v776
    %v864 = vmul.f32 %v241, %v778
    %v865 = vmul.f32 %v241, %v780
    %v866 = vmul.f32 %v241, %v782
    %v867 = vmul.f32 %v241, %v784
    %v868 = vmul.f32 %v241, %v786
    %v869 = vmul.f32 %v241, %v788
    %v870 = vmul.f32 %v241, %v790
    %v871 = vmul.f32 %v241, %v792
    %v872 = vmul.f32 %v241, %v794
    %v873 = vmul.f32 %v241, %v796
    %v874 = vmul.f32 %v241, %v798
    %v875 = vmul.f32 %v241, %v800
    %v876 = vmul.f32 %v241, %v802
    %v877 = vmul.f32 %v241, %v804
    %v878 = vmul.f32 %v241, %v806
    %v879 = vmul.f32 %v241, %v808
    %v880 = vmul.f32 %v241, %v810
    %v881 = vmul.f32 %v241, %v812
    %v882 = vmul.f32 %v241, %v814
    %v883 = vmul.f32 %v241, %v816
    %v884 = vmul.f32 %v241, %v818
    %v885 = vmul.f32 %v241, %v820
    %v886 = vmul.f32 %v241, %v822
    %v887 = vsel %vm274, %v855, 0.0
    %888 = vadd.xlane.f32.xlu0 %v887
    %v889 = vpop.xlane.xlu0 %888
    %v890 = vsel %vm274, %v856, 0.0
    %891 = vadd.xlane.f32.xlu0 %v890
    %v892 = vpop.xlane.xlu0 %891
    %v893 = vsel %vm274, %v857, 0.0
    %894 = vadd.xlane.f32.xlu0 %v893
    %v895 = vpop.xlane.xlu0 %894
    %v896 = vsel %vm274, %v858, 0.0
    %897 = vadd.xlane.f32.xlu0 %v896
    %v898 = vpop.xlane.xlu0 %897
    %v899 = vsel %vm274, %v859, 0.0
    %900 = vadd.xlane.f32.xlu0 %v899
    %v901 = vpop.xlane.xlu0 %900
    %v902 = vsel %vm274, %v860, 0.0
    %903 = vadd.xlane.f32.xlu0 %v902
    %v904 = vpop.xlane.xlu0 %903
    %v905 = vsel %vm274, %v861, 0.0
    %906 = vadd.xlane.f32.xlu0 %v905
    %v907 = vpop.xlane.xlu0 %906
    %v908 = vsel %vm274, %v862, 0.0
    %909 = vadd.xlane.f32.xlu0 %v908
    %v910 = vpop.xlane.xlu0 %909
    %v911 = vsel %vm274, %v863, 0.0
    %912 = vadd.xlane.f32.xlu0 %v911
    %v913 = vpop.xlane.xlu0 %912
    %v914 = vsel %vm274, %v864, 0.0
    %915 = vadd.xlane.f32.xlu0 %v914
    %v916 = vpop.xlane.xlu0 %915
    %v917 = vsel %vm274, %v865, 0.0
    %918 = vadd.xlane.f32.xlu0 %v917
    %v919 = vpop.xlane.xlu0 %918
    %v920 = vsel %vm274, %v866, 0.0
    %921 = vadd.xlane.f32.xlu0 %v920
    %v922 = vpop.xlane.xlu0 %921
    %v923 = vsel %vm274, %v867, 0.0
    %924 = vadd.xlane.f32.xlu0 %v923
    %v925 = vpop.xlane.xlu0 %924
    %v926 = vsel %vm274, %v868, 0.0
    %927 = vadd.xlane.f32.xlu0 %v926
    %v928 = vpop.xlane.xlu0 %927
    %v929 = vsel %vm274, %v869, 0.0
    %930 = vadd.xlane.f32.xlu0 %v929
    %v931 = vpop.xlane.xlu0 %930
    %v932 = vsel %vm274, %v870, 0.0
    %933 = vadd.xlane.f32.xlu0 %v932
    %v934 = vpop.xlane.xlu0 %933
    %v935 = vsel %vm274, %v871, 0.0
    %936 = vadd.xlane.f32.xlu0 %v935
    %v937 = vpop.xlane.xlu0 %936
    %v938 = vsel %vm274, %v872, 0.0
    %939 = vadd.xlane.f32.xlu0 %v938
    %v940 = vpop.xlane.xlu0 %939
    %v941 = vsel %vm274, %v873, 0.0
    %942 = vadd.xlane.f32.xlu0 %v941
    %v943 = vpop.xlane.xlu0 %942
    %v944 = vsel %vm274, %v874, 0.0
    %945 = vadd.xlane.f32.xlu0 %v944
    %v946 = vpop.xlane.xlu0 %945
    %v947 = vsel %vm274, %v875, 0.0
    %948 = vadd.xlane.f32.xlu0 %v947
    %v949 = vpop.xlane.xlu0 %948
    %v950 = vsel %vm274, %v876, 0.0
    %951 = vadd.xlane.f32.xlu0 %v950
    %v952 = vpop.xlane.xlu0 %951
    %v953 = vsel %vm274, %v877, 0.0
    %954 = vadd.xlane.f32.xlu0 %v953
    %v955 = vpop.xlane.xlu0 %954
    %v956 = vsel %vm274, %v878, 0.0
    %957 = vadd.xlane.f32.xlu0 %v956
    %v958 = vpop.xlane.xlu0 %957
    %v959 = vsel %vm274, %v879, 0.0
    %960 = vadd.xlane.f32.xlu0 %v959
    %v961 = vpop.xlane.xlu0 %960
    %v962 = vsel %vm274, %v880, 0.0
    %963 = vadd.xlane.f32.xlu0 %v962
    %v964 = vpop.xlane.xlu0 %963
    %v965 = vsel %vm274, %v881, 0.0
    %966 = vadd.xlane.f32.xlu0 %v965
    %v967 = vpop.xlane.xlu0 %966
    %v968 = vsel %vm274, %v882, 0.0
    %969 = vadd.xlane.f32.xlu0 %v968
    %v970 = vpop.xlane.xlu0 %969
    %v971 = vsel %vm274, %v883, 0.0
    %972 = vadd.xlane.f32.xlu0 %v971
    %v973 = vpop.xlane.xlu0 %972
    %v974 = vsel %vm274, %v884, 0.0
    %975 = vadd.xlane.f32.xlu0 %v974
    %v976 = vpop.xlane.xlu0 %975
    %v977 = vsel %vm274, %v885, 0.0
    %978 = vadd.xlane.f32.xlu0 %v977
    %v979 = vpop.xlane.xlu0 %978
    %v980 = vsel %vm274, %v886, 0.0
    %981 = vadd.xlane.f32.xlu0 %v980
    %v982 = vpop.xlane.xlu0 %981
    %v983 = vadd.f32 %v889, %v203
    %v984 = vadd.f32 %v892, %v204
    %v985 = vadd.f32 %v895, %v205
    %v986 = vadd.f32 %v898, %v206
    %v987 = vadd.f32 %v901, %v207
    %v988 = vadd.f32 %v904, %v208
    %v989 = vadd.f32 %v907, %v209
    %v990 = vadd.f32 %v910, %v210
    %v991 = vadd.f32 %v913, %v211
    %v992 = vadd.f32 %v916, %v212
    %v993 = vadd.f32 %v919, %v213
    %v994 = vadd.f32 %v922, %v214
    %v995 = vadd.f32 %v925, %v215
    %v996 = vadd.f32 %v928, %v216
    %v997 = vadd.f32 %v931, %v217
    %v998 = vadd.f32 %v934, %v218
    %v999 = vadd.f32 %v937, %v219
    %v1000 = vadd.f32 %v940, %v220
    %v1001 = vadd.f32 %v943, %v221
    %v1002 = vadd.f32 %v946, %v222
    %v1003 = vadd.f32 %v949, %v223
    %v1004 = vadd.f32 %v952, %v224
    %v1005 = vadd.f32 %v955, %v225
    %v1006 = vadd.f32 %v958, %v226
    %v1007 = vadd.f32 %v961, %v227
    %v1008 = vadd.f32 %v964, %v228
    %v1009 = vadd.f32 %v967, %v229
    %v1010 = vadd.f32 %v970, %v230
    %v1011 = vadd.f32 %v973, %v231
    %v1012 = vadd.f32 %v976, %v232
    %v1013 = vadd.f32 %v979, %v233
    %v1014 = vadd.f32 %v982, %v234
    %vm1015 = vcmp.ge.f32.partialorder %v983, 0.0
    %vm1016 = vcmp.ge.f32.partialorder %v984, 0.0
    %vm1017 = vcmp.ge.f32.partialorder %v985, 0.0
    %vm1018 = vcmp.ge.f32.partialorder %v986, 0.0
    %vm1019 = vcmp.ge.f32.partialorder %v987, 0.0
    %vm1020 = vcmp.ge.f32.partialorder %v988, 0.0
    %vm1021 = vcmp.ge.f32.partialorder %v989, 0.0
    %vm1022 = vcmp.ge.f32.partialorder %v990, 0.0
    %vm1023 = vcmp.ge.f32.partialorder %v991, 0.0
    %vm1024 = vcmp.ge.f32.partialorder %v992, 0.0
    %vm1025 = vcmp.ge.f32.partialorder %v993, 0.0
    %vm1026 = vcmp.ge.f32.partialorder %v994, 0.0
    %vm1027 = vcmp.ge.f32.partialorder %v995, 0.0
    %vm1028 = vcmp.ge.f32.partialorder %v996, 0.0
    %vm1029 = vcmp.ge.f32.partialorder %v997, 0.0
    %vm1030 = vcmp.ge.f32.partialorder %v998, 0.0
    %vm1031 = vcmp.ge.f32.partialorder %v999, 0.0
    %vm1032 = vcmp.ge.f32.partialorder %v1000, 0.0
    %vm1033 = vcmp.ge.f32.partialorder %v1001, 0.0
    %vm1034 = vcmp.ge.f32.partialorder %v1002, 0.0
    %vm1035 = vcmp.ge.f32.partialorder %v1003, 0.0
    %vm1036 = vcmp.ge.f32.partialorder %v1004, 0.0
    %vm1037 = vcmp.ge.f32.partialorder %v1005, 0.0
    %vm1038 = vcmp.ge.f32.partialorder %v1006, 0.0
    %vm1039 = vcmp.ge.f32.partialorder %v1007, 0.0
    %vm1040 = vcmp.ge.f32.partialorder %v1008, 0.0
    %vm1041 = vcmp.ge.f32.partialorder %v1009, 0.0
    %vm1042 = vcmp.ge.f32.partialorder %v1010, 0.0
    %vm1043 = vcmp.ge.f32.partialorder %v1011, 0.0
    %vm1044 = vcmp.ge.f32.partialorder %v1012, 0.0
    %vm1045 = vcmp.ge.f32.partialorder %v1013, 0.0
    %vm1046 = vcmp.ge.f32.partialorder %v1014, 0.0
    %v1047 = vmul.f32 %v983, 0.2
    %v1048 = vmul.f32 %v984, 0.2
    %v1049 = vmul.f32 %v985, 0.2
    %v1050 = vmul.f32 %v986, 0.2
    %v1051 = vmul.f32 %v987, 0.2
    %v1052 = vmul.f32 %v988, 0.2
    %v1053 = vmul.f32 %v989, 0.2
    %v1054 = vmul.f32 %v990, 0.2
    %v1055 = vmul.f32 %v991, 0.2
    %v1056 = vmul.f32 %v992, 0.2
    %v1057 = vmul.f32 %v993, 0.2
    %v1058 = vmul.f32 %v994, 0.2
    %v1059 = vmul.f32 %v995, 0.2
    %v1060 = vmul.f32 %v996, 0.2
    %v1061 = vmul.f32 %v997, 0.2
    %v1062 = vmul.f32 %v998, 0.2
    %v1063 = vmul.f32 %v999, 0.2
    %v1064 = vmul.f32 %v1000, 0.2
    %v1065 = vmul.f32 %v1001, 0.2
    %v1066 = vmul.f32 %v1002, 0.2
    %v1067 = vmul.f32 %v1003, 0.2
    %v1068 = vmul.f32 %v1004, 0.2
    %v1069 = vmul.f32 %v1005, 0.2
    %v1070 = vmul.f32 %v1006, 0.2
    %v1071 = vmul.f32 %v1007, 0.2
    %v1072 = vmul.f32 %v1008, 0.2
    %v1073 = vmul.f32 %v1009, 0.2
    %v1074 = vmul.f32 %v1010, 0.2
    %v1075 = vmul.f32 %v1011, 0.2
    %v1076 = vmul.f32 %v1012, 0.2
    %v1077 = vmul.f32 %v1013, 0.2
    %v1078 = vmul.f32 %v1014, 0.2
    %v1079 = vsel %vm1015, %v983, %v1047
    %v1080 = vsel %vm1016, %v984, %v1048
    %v1081 = vsel %vm1017, %v985, %v1049
    %v1082 = vsel %vm1018, %v986, %v1050
    %v1083 = vsel %vm1019, %v987, %v1051
    %v1084 = vsel %vm1020, %v988, %v1052
    %v1085 = vsel %vm1021, %v989, %v1053
    %v1086 = vsel %vm1022, %v990, %v1054
    %v1087 = vsel %vm1023, %v991, %v1055
    %v1088 = vsel %vm1024, %v992, %v1056
    %v1089 = vsel %vm1025, %v993, %v1057
    %v1090 = vsel %vm1026, %v994, %v1058
    %v1091 = vsel %vm1027, %v995, %v1059
    %v1092 = vsel %vm1028, %v996, %v1060
    %v1093 = vsel %vm1029, %v997, %v1061
    %v1094 = vsel %vm1030, %v998, %v1062
    %v1095 = vsel %vm1031, %v999, %v1063
    %v1096 = vsel %vm1032, %v1000, %v1064
    %v1097 = vsel %vm1033, %v1001, %v1065
    %v1098 = vsel %vm1034, %v1002, %v1066
    %v1099 = vsel %vm1035, %v1003, %v1067
    %v1100 = vsel %vm1036, %v1004, %v1068
    %v1101 = vsel %vm1037, %v1005, %v1069
    %v1102 = vsel %vm1038, %v1006, %v1070
    %v1103 = vsel %vm1039, %v1007, %v1071
    %v1104 = vsel %vm1040, %v1008, %v1072
    %v1105 = vsel %vm1041, %v1009, %v1073
    %v1106 = vsel %vm1042, %v1010, %v1074
    %v1107 = vsel %vm1043, %v1011, %v1075
    %v1108 = vsel %vm1044, %v1012, %v1076
    %v1109 = vsel %vm1045, %v1013, %v1077
    %v1110 = vsel %vm1046, %v1014, %v1078
    %1112 = vset.pattern.permute.xlu0 1
    %1113 = vperm.xlu0 %1112, %v1079
    %v1114 = vpop.permute.xlu0 %1113
    %1117 = vset.pattern.permute.xlu0 1
    %1118 = vperm.xlu0 %1117, %v1080
    %v1119 = vpop.permute.xlu0 %1118
    %1122 = vset.pattern.permute.xlu0 1
    %1123 = vperm.xlu0 %1122, %v1081
    %v1124 = vpop.permute.xlu0 %1123
    %1127 = vset.pattern.permute.xlu0 1
    %1128 = vperm.xlu0 %1127, %v1082
    %v1129 = vpop.permute.xlu0 %1128
    %1132 = vset.pattern.permute.xlu0 1
    %1133 = vperm.xlu0 %1132, %v1083
    %v1134 = vpop.permute.xlu0 %1133
    %1137 = vset.pattern.permute.xlu0 1
    %1138 = vperm.xlu0 %1137, %v1084
    %v1139 = vpop.permute.xlu0 %1138
    %1142 = vset.pattern.permute.xlu0 1
    %1143 = vperm.xlu0 %1142, %v1085
    %v1144 = vpop.permute.xlu0 %1143
    %1147 = vset.pattern.permute.xlu0 1
    %1148 = vperm.xlu0 %1147, %v1086
    %v1149 = vpop.permute.xlu0 %1148
    %1152 = vset.pattern.permute.xlu0 1
    %1153 = vperm.xlu0 %1152, %v1087
    %v1154 = vpop.permute.xlu0 %1153
    %1157 = vset.pattern.permute.xlu0 1
    %1158 = vperm.xlu0 %1157, %v1088
    %v1159 = vpop.permute.xlu0 %1158
    %1162 = vset.pattern.permute.xlu0 1
    %1163 = vperm.xlu0 %1162, %v1089
    %v1164 = vpop.permute.xlu0 %1163
    %1167 = vset.pattern.permute.xlu0 1
    %1168 = vperm.xlu0 %1167, %v1090
    %v1169 = vpop.permute.xlu0 %1168
    %1172 = vset.pattern.permute.xlu0 1
    %1173 = vperm.xlu0 %1172, %v1091
    %v1174 = vpop.permute.xlu0 %1173
    %1177 = vset.pattern.permute.xlu0 1
    %1178 = vperm.xlu0 %1177, %v1092
    %v1179 = vpop.permute.xlu0 %1178
    %1182 = vset.pattern.permute.xlu0 1
    %1183 = vperm.xlu0 %1182, %v1093
    %v1184 = vpop.permute.xlu0 %1183
    %1187 = vset.pattern.permute.xlu0 1
    %1188 = vperm.xlu0 %1187, %v1094
    %v1189 = vpop.permute.xlu0 %1188
    %1192 = vset.pattern.permute.xlu0 1
    %1193 = vperm.xlu0 %1192, %v1095
    %v1194 = vpop.permute.xlu0 %1193
    %1197 = vset.pattern.permute.xlu0 1
    %1198 = vperm.xlu0 %1197, %v1096
    %v1199 = vpop.permute.xlu0 %1198
    %1202 = vset.pattern.permute.xlu0 1
    %1203 = vperm.xlu0 %1202, %v1097
    %v1204 = vpop.permute.xlu0 %1203
    %1207 = vset.pattern.permute.xlu0 1
    %1208 = vperm.xlu0 %1207, %v1098
    %v1209 = vpop.permute.xlu0 %1208
    %1212 = vset.pattern.permute.xlu0 1
    %1213 = vperm.xlu0 %1212, %v1099
    %v1214 = vpop.permute.xlu0 %1213
    %1217 = vset.pattern.permute.xlu0 1
    %1218 = vperm.xlu0 %1217, %v1100
    %v1219 = vpop.permute.xlu0 %1218
    %1222 = vset.pattern.permute.xlu0 1
    %1223 = vperm.xlu0 %1222, %v1101
    %v1224 = vpop.permute.xlu0 %1223
    %1227 = vset.pattern.permute.xlu0 1
    %1228 = vperm.xlu0 %1227, %v1102
    %v1229 = vpop.permute.xlu0 %1228
    %1232 = vset.pattern.permute.xlu0 1
    %1233 = vperm.xlu0 %1232, %v1103
    %v1234 = vpop.permute.xlu0 %1233
    %1237 = vset.pattern.permute.xlu0 1
    %1238 = vperm.xlu0 %1237, %v1104
    %v1239 = vpop.permute.xlu0 %1238
    %1242 = vset.pattern.permute.xlu0 1
    %1243 = vperm.xlu0 %1242, %v1105
    %v1244 = vpop.permute.xlu0 %1243
    %1247 = vset.pattern.permute.xlu0 1
    %1248 = vperm.xlu0 %1247, %v1106
    %v1249 = vpop.permute.xlu0 %1248
    %1252 = vset.pattern.permute.xlu0 1
    %1253 = vperm.xlu0 %1252, %v1107
    %v1254 = vpop.permute.xlu0 %1253
    %1257 = vset.pattern.permute.xlu0 1
    %1258 = vperm.xlu0 %1257, %v1108
    %v1259 = vpop.permute.xlu0 %1258
    %1262 = vset.pattern.permute.xlu0 1
    %1263 = vperm.xlu0 %1262, %v1109
    %v1264 = vpop.permute.xlu0 %1263
    %1267 = vset.pattern.permute.xlu0 1
    %1268 = vperm.xlu0 %1267, %v1110
    %v1269 = vpop.permute.xlu0 %1268
    %v1271 = vlaneseq
    %v1272 = vshrl.u32 %v1271, 7
    %v1273 = vsub.s32 1, %v1272
    %v1274 = vrot.slane %v236, %v1273
    %v1275 = vmul.f32 %v1114, %v1274
    %v1276 = vmul.f32 %v1119, %v1274
    %v1277 = vmul.f32 %v1124, %v1274
    %v1278 = vmul.f32 %v1129, %v1274
    %v1279 = vmul.f32 %v1134, %v1274
    %v1280 = vmul.f32 %v1139, %v1274
    %v1281 = vmul.f32 %v1144, %v1274
    %v1282 = vmul.f32 %v1149, %v1274
    %v1283 = vmul.f32 %v1154, %v1274
    %v1284 = vmul.f32 %v1159, %v1274
    %v1285 = vmul.f32 %v1164, %v1274
    %v1286 = vmul.f32 %v1169, %v1274
    %v1287 = vmul.f32 %v1174, %v1274
    %v1288 = vmul.f32 %v1179, %v1274
    %v1289 = vmul.f32 %v1184, %v1274
    %v1290 = vmul.f32 %v1189, %v1274
    %v1291 = vmul.f32 %v1194, %v1274
    %v1292 = vmul.f32 %v1199, %v1274
    %v1293 = vmul.f32 %v1204, %v1274
    %v1294 = vmul.f32 %v1209, %v1274
    %v1295 = vmul.f32 %v1214, %v1274
    %v1296 = vmul.f32 %v1219, %v1274
    %v1297 = vmul.f32 %v1224, %v1274
    %v1298 = vmul.f32 %v1229, %v1274
    %v1299 = vmul.f32 %v1234, %v1274
    %v1300 = vmul.f32 %v1239, %v1274
    %v1301 = vmul.f32 %v1244, %v1274
    %v1302 = vmul.f32 %v1249, %v1274
    %v1303 = vmul.f32 %v1254, %v1274
    %v1304 = vmul.f32 %v1259, %v1274
    %v1305 = vmul.f32 %v1264, %v1274
    %v1306 = vmul.f32 %v1269, %v1274
    %v1307 = vadd.f32 %v695, %v1275
    %v1308 = vadd.f32 %v696, %v1276
    %v1309 = vadd.f32 %v697, %v1277
    %v1310 = vadd.f32 %v698, %v1278
    %v1311 = vadd.f32 %v699, %v1279
    %v1312 = vadd.f32 %v700, %v1280
    %v1313 = vadd.f32 %v701, %v1281
    %v1314 = vadd.f32 %v702, %v1282
    %v1315 = vadd.f32 %v703, %v1283
    %v1316 = vadd.f32 %v704, %v1284
    %v1317 = vadd.f32 %v705, %v1285
    %v1318 = vadd.f32 %v706, %v1286
    %v1319 = vadd.f32 %v707, %v1287
    %v1320 = vadd.f32 %v708, %v1288
    %v1321 = vadd.f32 %v709, %v1289
    %v1322 = vadd.f32 %v710, %v1290
    %v1323 = vadd.f32 %v711, %v1291
    %v1324 = vadd.f32 %v712, %v1292
    %v1325 = vadd.f32 %v713, %v1293
    %v1326 = vadd.f32 %v714, %v1294
    %v1327 = vadd.f32 %v715, %v1295
    %v1328 = vadd.f32 %v716, %v1296
    %v1329 = vadd.f32 %v717, %v1297
    %v1330 = vadd.f32 %v718, %v1298
    %v1331 = vadd.f32 %v719, %v1299
    %v1332 = vadd.f32 %v720, %v1300
    %v1333 = vadd.f32 %v721, %v1301
    %v1334 = vadd.f32 %v722, %v1302
    %v1335 = vadd.f32 %v723, %v1303
    %v1336 = vadd.f32 %v724, %v1304
    %v1337 = vadd.f32 %v725, %v1305
    %v1338 = vadd.f32 %v726, %v1306
    %1339 = vrot.lane.b32.xlu0 %v171, 96
    %v1340 = vpop.permute.xlu0 %1339
    %1341 = vrot.lane.b32.xlu0 %v172, 96
    %v1342 = vpop.permute.xlu0 %1341
    %1343 = vrot.lane.b32.xlu0 %v173, 96
    %v1344 = vpop.permute.xlu0 %1343
    %1345 = vrot.lane.b32.xlu0 %v174, 96
    %v1346 = vpop.permute.xlu0 %1345
    %1347 = vrot.lane.b32.xlu0 %v175, 96
    %v1348 = vpop.permute.xlu0 %1347
    %1349 = vrot.lane.b32.xlu0 %v176, 96
    %v1350 = vpop.permute.xlu0 %1349
    %1351 = vrot.lane.b32.xlu0 %v177, 96
    %v1352 = vpop.permute.xlu0 %1351
    %1353 = vrot.lane.b32.xlu0 %v178, 96
    %v1354 = vpop.permute.xlu0 %1353
    %1355 = vrot.lane.b32.xlu0 %v179, 96
    %v1356 = vpop.permute.xlu0 %1355
    %1357 = vrot.lane.b32.xlu0 %v180, 96
    %v1358 = vpop.permute.xlu0 %1357
    %1359 = vrot.lane.b32.xlu0 %v181, 96
    %v1360 = vpop.permute.xlu0 %1359
    %1361 = vrot.lane.b32.xlu0 %v182, 96
    %v1362 = vpop.permute.xlu0 %1361
    %1363 = vrot.lane.b32.xlu0 %v183, 96
    %v1364 = vpop.permute.xlu0 %1363
    %1365 = vrot.lane.b32.xlu0 %v184, 96
    %v1366 = vpop.permute.xlu0 %1365
    %1367 = vrot.lane.b32.xlu0 %v185, 96
    %v1368 = vpop.permute.xlu0 %1367
    %1369 = vrot.lane.b32.xlu0 %v186, 96
    %v1370 = vpop.permute.xlu0 %1369
    %1371 = vrot.lane.b32.xlu0 %v187, 96
    %v1372 = vpop.permute.xlu0 %1371
    %1373 = vrot.lane.b32.xlu0 %v188, 96
    %v1374 = vpop.permute.xlu0 %1373
    %1375 = vrot.lane.b32.xlu0 %v189, 96
    %v1376 = vpop.permute.xlu0 %1375
    %1377 = vrot.lane.b32.xlu0 %v190, 96
    %v1378 = vpop.permute.xlu0 %1377
    %1379 = vrot.lane.b32.xlu0 %v191, 96
    %v1380 = vpop.permute.xlu0 %1379
    %1381 = vrot.lane.b32.xlu0 %v192, 96
    %v1382 = vpop.permute.xlu0 %1381
    %1383 = vrot.lane.b32.xlu0 %v193, 96
    %v1384 = vpop.permute.xlu0 %1383
    %1385 = vrot.lane.b32.xlu0 %v194, 96
    %v1386 = vpop.permute.xlu0 %1385
    %1387 = vrot.lane.b32.xlu0 %v195, 96
    %v1388 = vpop.permute.xlu0 %1387
    %1389 = vrot.lane.b32.xlu0 %v196, 96
    %v1390 = vpop.permute.xlu0 %1389
    %1391 = vrot.lane.b32.xlu0 %v197, 96
    %v1392 = vpop.permute.xlu0 %1391
    %1393 = vrot.lane.b32.xlu0 %v198, 96
    %v1394 = vpop.permute.xlu0 %1393
    %1395 = vrot.lane.b32.xlu0 %v199, 96
    %v1396 = vpop.permute.xlu0 %1395
    %1397 = vrot.lane.b32.xlu0 %v200, 96
    %v1398 = vpop.permute.xlu0 %1397
    %1399 = vrot.lane.b32.xlu0 %v201, 96
    %v1400 = vpop.permute.xlu0 %1399
    %1401 = vrot.lane.b32.xlu0 %v202, 96
    %v1402 = vpop.permute.xlu0 %1401
    %v1435 = vmul.f32 %v241, %v1340
    %v1436 = vmul.f32 %v241, %v1342
    %v1437 = vmul.f32 %v241, %v1344
    %v1438 = vmul.f32 %v241, %v1346
    %v1439 = vmul.f32 %v241, %v1348
    %v1440 = vmul.f32 %v241, %v1350
    %v1441 = vmul.f32 %v241, %v1352
    %v1442 = vmul.f32 %v241, %v1354
    %v1443 = vmul.f32 %v241, %v1356
    %v1444 = vmul.f32 %v241, %v1358
    %v1445 = vmul.f32 %v241, %v1360
    %v1446 = vmul.f32 %v241, %v1362
    %v1447 = vmul.f32 %v241, %v1364
    %v1448 = vmul.f32 %v241, %v1366
    %v1449 = vmul.f32 %v241, %v1368
    %v1450 = vmul.f32 %v241, %v1370
    %v1451 = vmul.f32 %v241, %v1372
    %v1452 = vmul.f32 %v241, %v1374
    %v1453 = vmul.f32 %v241, %v1376
    %v1454 = vmul.f32 %v241, %v1378
    %v1455 = vmul.f32 %v241, %v1380
    %v1456 = vmul.f32 %v241, %v1382
    %v1457 = vmul.f32 %v241, %v1384
    %v1458 = vmul.f32 %v241, %v1386
    %v1459 = vmul.f32 %v241, %v1388
    %v1460 = vmul.f32 %v241, %v1390
    %v1461 = vmul.f32 %v241, %v1392
    %v1462 = vmul.f32 %v241, %v1394
    %v1463 = vmul.f32 %v241, %v1396
    %v1464 = vmul.f32 %v241, %v1398
    %v1465 = vmul.f32 %v241, %v1400
    %v1466 = vmul.f32 %v241, %v1402
    %v1467 = vsel %vm274, %v1435, 0.0
    %1468 = vadd.xlane.f32.xlu0 %v1467
    %v1469 = vpop.xlane.xlu0 %1468
    %v1470 = vsel %vm274, %v1436, 0.0
    %1471 = vadd.xlane.f32.xlu0 %v1470
    %v1472 = vpop.xlane.xlu0 %1471
    %v1473 = vsel %vm274, %v1437, 0.0
    %1474 = vadd.xlane.f32.xlu0 %v1473
    %v1475 = vpop.xlane.xlu0 %1474
    %v1476 = vsel %vm274, %v1438, 0.0
    %1477 = vadd.xlane.f32.xlu0 %v1476
    %v1478 = vpop.xlane.xlu0 %1477
    %v1479 = vsel %vm274, %v1439, 0.0
    %1480 = vadd.xlane.f32.xlu0 %v1479
    %v1481 = vpop.xlane.xlu0 %1480
    %v1482 = vsel %vm274, %v1440, 0.0
    %1483 = vadd.xlane.f32.xlu0 %v1482
    %v1484 = vpop.xlane.xlu0 %1483
    %v1485 = vsel %vm274, %v1441, 0.0
    %1486 = vadd.xlane.f32.xlu0 %v1485
    %v1487 = vpop.xlane.xlu0 %1486
    %v1488 = vsel %vm274, %v1442, 0.0
    %1489 = vadd.xlane.f32.xlu0 %v1488
    %v1490 = vpop.xlane.xlu0 %1489
    %v1491 = vsel %vm274, %v1443, 0.0
    %1492 = vadd.xlane.f32.xlu0 %v1491
    %v1493 = vpop.xlane.xlu0 %1492
    %v1494 = vsel %vm274, %v1444, 0.0
    %1495 = vadd.xlane.f32.xlu0 %v1494
    %v1496 = vpop.xlane.xlu0 %1495
    %v1497 = vsel %vm274, %v1445, 0.0
    %1498 = vadd.xlane.f32.xlu0 %v1497
    %v1499 = vpop.xlane.xlu0 %1498
    %v1500 = vsel %vm274, %v1446, 0.0
    %1501 = vadd.xlane.f32.xlu0 %v1500
    %v1502 = vpop.xlane.xlu0 %1501
    %v1503 = vsel %vm274, %v1447, 0.0
    %1504 = vadd.xlane.f32.xlu0 %v1503
    %v1505 = vpop.xlane.xlu0 %1504
    %v1506 = vsel %vm274, %v1448, 0.0
    %1507 = vadd.xlane.f32.xlu0 %v1506
    %v1508 = vpop.xlane.xlu0 %1507
    %v1509 = vsel %vm274, %v1449, 0.0
    %1510 = vadd.xlane.f32.xlu0 %v1509
    %v1511 = vpop.xlane.xlu0 %1510
    %v1512 = vsel %vm274, %v1450, 0.0
    %1513 = vadd.xlane.f32.xlu0 %v1512
    %v1514 = vpop.xlane.xlu0 %1513
    %v1515 = vsel %vm274, %v1451, 0.0
    %1516 = vadd.xlane.f32.xlu0 %v1515
    %v1517 = vpop.xlane.xlu0 %1516
    %v1518 = vsel %vm274, %v1452, 0.0
    %1519 = vadd.xlane.f32.xlu0 %v1518
    %v1520 = vpop.xlane.xlu0 %1519
    %v1521 = vsel %vm274, %v1453, 0.0
    %1522 = vadd.xlane.f32.xlu0 %v1521
    %v1523 = vpop.xlane.xlu0 %1522
    %v1524 = vsel %vm274, %v1454, 0.0
    %1525 = vadd.xlane.f32.xlu0 %v1524
    %v1526 = vpop.xlane.xlu0 %1525
    %v1527 = vsel %vm274, %v1455, 0.0
    %1528 = vadd.xlane.f32.xlu0 %v1527
    %v1529 = vpop.xlane.xlu0 %1528
    %v1530 = vsel %vm274, %v1456, 0.0
    %1531 = vadd.xlane.f32.xlu0 %v1530
    %v1532 = vpop.xlane.xlu0 %1531
    %v1533 = vsel %vm274, %v1457, 0.0
    %1534 = vadd.xlane.f32.xlu0 %v1533
    %v1535 = vpop.xlane.xlu0 %1534
    %v1536 = vsel %vm274, %v1458, 0.0
    %1537 = vadd.xlane.f32.xlu0 %v1536
    %v1538 = vpop.xlane.xlu0 %1537
    %v1539 = vsel %vm274, %v1459, 0.0
    %1540 = vadd.xlane.f32.xlu0 %v1539
    %v1541 = vpop.xlane.xlu0 %1540
    %v1542 = vsel %vm274, %v1460, 0.0
    %1543 = vadd.xlane.f32.xlu0 %v1542
    %v1544 = vpop.xlane.xlu0 %1543
    %v1545 = vsel %vm274, %v1461, 0.0
    %1546 = vadd.xlane.f32.xlu0 %v1545
    %v1547 = vpop.xlane.xlu0 %1546
    %v1548 = vsel %vm274, %v1462, 0.0
    %1549 = vadd.xlane.f32.xlu0 %v1548
    %v1550 = vpop.xlane.xlu0 %1549
    %v1551 = vsel %vm274, %v1463, 0.0
    %1552 = vadd.xlane.f32.xlu0 %v1551
    %v1553 = vpop.xlane.xlu0 %1552
    %v1554 = vsel %vm274, %v1464, 0.0
    %1555 = vadd.xlane.f32.xlu0 %v1554
    %v1556 = vpop.xlane.xlu0 %1555
    %v1557 = vsel %vm274, %v1465, 0.0
    %1558 = vadd.xlane.f32.xlu0 %v1557
    %v1559 = vpop.xlane.xlu0 %1558
    %v1560 = vsel %vm274, %v1466, 0.0
    %1561 = vadd.xlane.f32.xlu0 %v1560
    %v1562 = vpop.xlane.xlu0 %1561
    %v1563 = vadd.f32 %v1469, %v203
    %v1564 = vadd.f32 %v1472, %v204
    %v1565 = vadd.f32 %v1475, %v205
    %v1566 = vadd.f32 %v1478, %v206
    %v1567 = vadd.f32 %v1481, %v207
    %v1568 = vadd.f32 %v1484, %v208
    %v1569 = vadd.f32 %v1487, %v209
    %v1570 = vadd.f32 %v1490, %v210
    %v1571 = vadd.f32 %v1493, %v211
    %v1572 = vadd.f32 %v1496, %v212
    %v1573 = vadd.f32 %v1499, %v213
    %v1574 = vadd.f32 %v1502, %v214
    %v1575 = vadd.f32 %v1505, %v215
    %v1576 = vadd.f32 %v1508, %v216
    %v1577 = vadd.f32 %v1511, %v217
    %v1578 = vadd.f32 %v1514, %v218
    %v1579 = vadd.f32 %v1517, %v219
    %v1580 = vadd.f32 %v1520, %v220
    %v1581 = vadd.f32 %v1523, %v221
    %v1582 = vadd.f32 %v1526, %v222
    %v1583 = vadd.f32 %v1529, %v223
    %v1584 = vadd.f32 %v1532, %v224
    %v1585 = vadd.f32 %v1535, %v225
    %v1586 = vadd.f32 %v1538, %v226
    %v1587 = vadd.f32 %v1541, %v227
    %v1588 = vadd.f32 %v1544, %v228
    %v1589 = vadd.f32 %v1547, %v229
    %v1590 = vadd.f32 %v1550, %v230
    %v1591 = vadd.f32 %v1553, %v231
    %v1592 = vadd.f32 %v1556, %v232
    %v1593 = vadd.f32 %v1559, %v233
    %v1594 = vadd.f32 %v1562, %v234
    %vm1595 = vcmp.ge.f32.partialorder %v1563, 0.0
    %vm1596 = vcmp.ge.f32.partialorder %v1564, 0.0
    %vm1597 = vcmp.ge.f32.partialorder %v1565, 0.0
    %vm1598 = vcmp.ge.f32.partialorder %v1566, 0.0
    %vm1599 = vcmp.ge.f32.partialorder %v1567, 0.0
    %vm1600 = vcmp.ge.f32.partialorder %v1568, 0.0
    %vm1601 = vcmp.ge.f32.partialorder %v1569, 0.0
    %vm1602 = vcmp.ge.f32.partialorder %v1570, 0.0
    %vm1603 = vcmp.ge.f32.partialorder %v1571, 0.0
    %vm1604 = vcmp.ge.f32.partialorder %v1572, 0.0
    %vm1605 = vcmp.ge.f32.partialorder %v1573, 0.0
    %vm1606 = vcmp.ge.f32.partialorder %v1574, 0.0
    %vm1607 = vcmp.ge.f32.partialorder %v1575, 0.0
    %vm1608 = vcmp.ge.f32.partialorder %v1576, 0.0
    %vm1609 = vcmp.ge.f32.partialorder %v1577, 0.0
    %vm1610 = vcmp.ge.f32.partialorder %v1578, 0.0
    %vm1611 = vcmp.ge.f32.partialorder %v1579, 0.0
    %vm1612 = vcmp.ge.f32.partialorder %v1580, 0.0
    %vm1613 = vcmp.ge.f32.partialorder %v1581, 0.0
    %vm1614 = vcmp.ge.f32.partialorder %v1582, 0.0
    %vm1615 = vcmp.ge.f32.partialorder %v1583, 0.0
    %vm1616 = vcmp.ge.f32.partialorder %v1584, 0.0
    %vm1617 = vcmp.ge.f32.partialorder %v1585, 0.0
    %vm1618 = vcmp.ge.f32.partialorder %v1586, 0.0
    %vm1619 = vcmp.ge.f32.partialorder %v1587, 0.0
    %vm1620 = vcmp.ge.f32.partialorder %v1588, 0.0
    %vm1621 = vcmp.ge.f32.partialorder %v1589, 0.0
    %vm1622 = vcmp.ge.f32.partialorder %v1590, 0.0
    %vm1623 = vcmp.ge.f32.partialorder %v1591, 0.0
    %vm1624 = vcmp.ge.f32.partialorder %v1592, 0.0
    %vm1625 = vcmp.ge.f32.partialorder %v1593, 0.0
    %vm1626 = vcmp.ge.f32.partialorder %v1594, 0.0
    %v1627 = vmul.f32 %v1563, 0.2
    %v1628 = vmul.f32 %v1564, 0.2
    %v1629 = vmul.f32 %v1565, 0.2
    %v1630 = vmul.f32 %v1566, 0.2
    %v1631 = vmul.f32 %v1567, 0.2
    %v1632 = vmul.f32 %v1568, 0.2
    %v1633 = vmul.f32 %v1569, 0.2
    %v1634 = vmul.f32 %v1570, 0.2
    %v1635 = vmul.f32 %v1571, 0.2
    %v1636 = vmul.f32 %v1572, 0.2
    %v1637 = vmul.f32 %v1573, 0.2
    %v1638 = vmul.f32 %v1574, 0.2
    %v1639 = vmul.f32 %v1575, 0.2
    %v1640 = vmul.f32 %v1576, 0.2
    %v1641 = vmul.f32 %v1577, 0.2
    %v1642 = vmul.f32 %v1578, 0.2
    %v1643 = vmul.f32 %v1579, 0.2
    %v1644 = vmul.f32 %v1580, 0.2
    %v1645 = vmul.f32 %v1581, 0.2
    %v1646 = vmul.f32 %v1582, 0.2
    %v1647 = vmul.f32 %v1583, 0.2
    %v1648 = vmul.f32 %v1584, 0.2
    %v1649 = vmul.f32 %v1585, 0.2
    %v1650 = vmul.f32 %v1586, 0.2
    %v1651 = vmul.f32 %v1587, 0.2
    %v1652 = vmul.f32 %v1588, 0.2
    %v1653 = vmul.f32 %v1589, 0.2
    %v1654 = vmul.f32 %v1590, 0.2
    %v1655 = vmul.f32 %v1591, 0.2
    %v1656 = vmul.f32 %v1592, 0.2
    %v1657 = vmul.f32 %v1593, 0.2
    %v1658 = vmul.f32 %v1594, 0.2
    %v1659 = vsel %vm1595, %v1563, %v1627
    %v1660 = vsel %vm1596, %v1564, %v1628
    %v1661 = vsel %vm1597, %v1565, %v1629
    %v1662 = vsel %vm1598, %v1566, %v1630
    %v1663 = vsel %vm1599, %v1567, %v1631
    %v1664 = vsel %vm1600, %v1568, %v1632
    %v1665 = vsel %vm1601, %v1569, %v1633
    %v1666 = vsel %vm1602, %v1570, %v1634
    %v1667 = vsel %vm1603, %v1571, %v1635
    %v1668 = vsel %vm1604, %v1572, %v1636
    %v1669 = vsel %vm1605, %v1573, %v1637
    %v1670 = vsel %vm1606, %v1574, %v1638
    %v1671 = vsel %vm1607, %v1575, %v1639
    %v1672 = vsel %vm1608, %v1576, %v1640
    %v1673 = vsel %vm1609, %v1577, %v1641
    %v1674 = vsel %vm1610, %v1578, %v1642
    %v1675 = vsel %vm1611, %v1579, %v1643
    %v1676 = vsel %vm1612, %v1580, %v1644
    %v1677 = vsel %vm1613, %v1581, %v1645
    %v1678 = vsel %vm1614, %v1582, %v1646
    %v1679 = vsel %vm1615, %v1583, %v1647
    %v1680 = vsel %vm1616, %v1584, %v1648
    %v1681 = vsel %vm1617, %v1585, %v1649
    %v1682 = vsel %vm1618, %v1586, %v1650
    %v1683 = vsel %vm1619, %v1587, %v1651
    %v1684 = vsel %vm1620, %v1588, %v1652
    %v1685 = vsel %vm1621, %v1589, %v1653
    %v1686 = vsel %vm1622, %v1590, %v1654
    %v1687 = vsel %vm1623, %v1591, %v1655
    %v1688 = vsel %vm1624, %v1592, %v1656
    %v1689 = vsel %vm1625, %v1593, %v1657
    %v1690 = vsel %vm1626, %v1594, %v1658
    %1692 = vset.pattern.permute.xlu0 2
    %1693 = vperm.xlu0 %1692, %v1659
    %v1694 = vpop.permute.xlu0 %1693
    %1697 = vset.pattern.permute.xlu0 2
    %1698 = vperm.xlu0 %1697, %v1660
    %v1699 = vpop.permute.xlu0 %1698
    %1702 = vset.pattern.permute.xlu0 2
    %1703 = vperm.xlu0 %1702, %v1661
    %v1704 = vpop.permute.xlu0 %1703
    %1707 = vset.pattern.permute.xlu0 2
    %1708 = vperm.xlu0 %1707, %v1662
    %v1709 = vpop.permute.xlu0 %1708
    %1712 = vset.pattern.permute.xlu0 2
    %1713 = vperm.xlu0 %1712, %v1663
    %v1714 = vpop.permute.xlu0 %1713
    %1717 = vset.pattern.permute.xlu0 2
    %1718 = vperm.xlu0 %1717, %v1664
    %v1719 = vpop.permute.xlu0 %1718
    %1722 = vset.pattern.permute.xlu0 2
    %1723 = vperm.xlu0 %1722, %v1665
    %v1724 = vpop.permute.xlu0 %1723
    %1727 = vset.pattern.permute.xlu0 2
    %1728 = vperm.xlu0 %1727, %v1666
    %v1729 = vpop.permute.xlu0 %1728
    %1732 = vset.pattern.permute.xlu0 2
    %1733 = vperm.xlu0 %1732, %v1667
    %v1734 = vpop.permute.xlu0 %1733
    %1737 = vset.pattern.permute.xlu0 2
    %1738 = vperm.xlu0 %1737, %v1668
    %v1739 = vpop.permute.xlu0 %1738
    %1742 = vset.pattern.permute.xlu0 2
    %1743 = vperm.xlu0 %1742, %v1669
    %v1744 = vpop.permute.xlu0 %1743
    %1747 = vset.pattern.permute.xlu0 2
    %1748 = vperm.xlu0 %1747, %v1670
    %v1749 = vpop.permute.xlu0 %1748
    %1752 = vset.pattern.permute.xlu0 2
    %1753 = vperm.xlu0 %1752, %v1671
    %v1754 = vpop.permute.xlu0 %1753
    %1757 = vset.pattern.permute.xlu0 2
    %1758 = vperm.xlu0 %1757, %v1672
    %v1759 = vpop.permute.xlu0 %1758
    %1762 = vset.pattern.permute.xlu0 2
    %1763 = vperm.xlu0 %1762, %v1673
    %v1764 = vpop.permute.xlu0 %1763
    %1767 = vset.pattern.permute.xlu0 2
    %1768 = vperm.xlu0 %1767, %v1674
    %v1769 = vpop.permute.xlu0 %1768
    %1772 = vset.pattern.permute.xlu0 2
    %1773 = vperm.xlu0 %1772, %v1675
    %v1774 = vpop.permute.xlu0 %1773
    %1777 = vset.pattern.permute.xlu0 2
    %1778 = vperm.xlu0 %1777, %v1676
    %v1779 = vpop.permute.xlu0 %1778
    %1782 = vset.pattern.permute.xlu0 2
    %1783 = vperm.xlu0 %1782, %v1677
    %v1784 = vpop.permute.xlu0 %1783
    %1787 = vset.pattern.permute.xlu0 2
    %1788 = vperm.xlu0 %1787, %v1678
    %v1789 = vpop.permute.xlu0 %1788
    %1792 = vset.pattern.permute.xlu0 2
    %1793 = vperm.xlu0 %1792, %v1679
    %v1794 = vpop.permute.xlu0 %1793
    %1797 = vset.pattern.permute.xlu0 2
    %1798 = vperm.xlu0 %1797, %v1680
    %v1799 = vpop.permute.xlu0 %1798
    %1802 = vset.pattern.permute.xlu0 2
    %1803 = vperm.xlu0 %1802, %v1681
    %v1804 = vpop.permute.xlu0 %1803
    %1807 = vset.pattern.permute.xlu0 2
    %1808 = vperm.xlu0 %1807, %v1682
    %v1809 = vpop.permute.xlu0 %1808
    %1812 = vset.pattern.permute.xlu0 2
    %1813 = vperm.xlu0 %1812, %v1683
    %v1814 = vpop.permute.xlu0 %1813
    %1817 = vset.pattern.permute.xlu0 2
    %1818 = vperm.xlu0 %1817, %v1684
    %v1819 = vpop.permute.xlu0 %1818
    %1822 = vset.pattern.permute.xlu0 2
    %1823 = vperm.xlu0 %1822, %v1685
    %v1824 = vpop.permute.xlu0 %1823
    %1827 = vset.pattern.permute.xlu0 2
    %1828 = vperm.xlu0 %1827, %v1686
    %v1829 = vpop.permute.xlu0 %1828
    %1832 = vset.pattern.permute.xlu0 2
    %1833 = vperm.xlu0 %1832, %v1687
    %v1834 = vpop.permute.xlu0 %1833
    %1837 = vset.pattern.permute.xlu0 2
    %1838 = vperm.xlu0 %1837, %v1688
    %v1839 = vpop.permute.xlu0 %1838
    %1842 = vset.pattern.permute.xlu0 2
    %1843 = vperm.xlu0 %1842, %v1689
    %v1844 = vpop.permute.xlu0 %1843
    %1847 = vset.pattern.permute.xlu0 2
    %1848 = vperm.xlu0 %1847, %v1690
    %v1849 = vpop.permute.xlu0 %1848
    %v1851 = vlaneseq
    %v1852 = vshrl.u32 %v1851, 7
    %v1853 = vsub.s32 2, %v1852
    %v1854 = vrot.slane %v236, %v1853
    %v1855 = vmul.f32 %v1694, %v1854
    %v1856 = vmul.f32 %v1699, %v1854
    %v1857 = vmul.f32 %v1704, %v1854
    %v1858 = vmul.f32 %v1709, %v1854
    %v1859 = vmul.f32 %v1714, %v1854
    %v1860 = vmul.f32 %v1719, %v1854
    %v1861 = vmul.f32 %v1724, %v1854
    %v1862 = vmul.f32 %v1729, %v1854
    %v1863 = vmul.f32 %v1734, %v1854
    %v1864 = vmul.f32 %v1739, %v1854
    %v1865 = vmul.f32 %v1744, %v1854
    %v1866 = vmul.f32 %v1749, %v1854
    %v1867 = vmul.f32 %v1754, %v1854
    %v1868 = vmul.f32 %v1759, %v1854
    %v1869 = vmul.f32 %v1764, %v1854
    %v1870 = vmul.f32 %v1769, %v1854
    %v1871 = vmul.f32 %v1774, %v1854
    %v1872 = vmul.f32 %v1779, %v1854
    %v1873 = vmul.f32 %v1784, %v1854
    %v1874 = vmul.f32 %v1789, %v1854
    %v1875 = vmul.f32 %v1794, %v1854
    %v1876 = vmul.f32 %v1799, %v1854
    %v1877 = vmul.f32 %v1804, %v1854
    %v1878 = vmul.f32 %v1809, %v1854
    %v1879 = vmul.f32 %v1814, %v1854
    %v1880 = vmul.f32 %v1819, %v1854
    %v1881 = vmul.f32 %v1824, %v1854
    %v1882 = vmul.f32 %v1829, %v1854
    %v1883 = vmul.f32 %v1834, %v1854
    %v1884 = vmul.f32 %v1839, %v1854
    %v1885 = vmul.f32 %v1844, %v1854
    %v1886 = vmul.f32 %v1849, %v1854
    %v1887 = vadd.f32 %v1307, %v1855
    %v1888 = vadd.f32 %v1308, %v1856
    %v1889 = vadd.f32 %v1309, %v1857
    %v1890 = vadd.f32 %v1310, %v1858
    %v1891 = vadd.f32 %v1311, %v1859
    %v1892 = vadd.f32 %v1312, %v1860
    %v1893 = vadd.f32 %v1313, %v1861
    %v1894 = vadd.f32 %v1314, %v1862
    %v1895 = vadd.f32 %v1315, %v1863
    %v1896 = vadd.f32 %v1316, %v1864
    %v1897 = vadd.f32 %v1317, %v1865
    %v1898 = vadd.f32 %v1318, %v1866
    %v1899 = vadd.f32 %v1319, %v1867
    %v1900 = vadd.f32 %v1320, %v1868
    %v1901 = vadd.f32 %v1321, %v1869
    %v1902 = vadd.f32 %v1322, %v1870
    %v1903 = vadd.f32 %v1323, %v1871
    %v1904 = vadd.f32 %v1324, %v1872
    %v1905 = vadd.f32 %v1325, %v1873
    %v1906 = vadd.f32 %v1326, %v1874
    %v1907 = vadd.f32 %v1327, %v1875
    %v1908 = vadd.f32 %v1328, %v1876
    %v1909 = vadd.f32 %v1329, %v1877
    %v1910 = vadd.f32 %v1330, %v1878
    %v1911 = vadd.f32 %v1331, %v1879
    %v1912 = vadd.f32 %v1332, %v1880
    %v1913 = vadd.f32 %v1333, %v1881
    %v1914 = vadd.f32 %v1334, %v1882
    %v1915 = vadd.f32 %v1335, %v1883
    %v1916 = vadd.f32 %v1336, %v1884
    %v1917 = vadd.f32 %v1337, %v1885
    %v1918 = vadd.f32 %v1338, %v1886
    %1919 = vrot.lane.b32.xlu0 %v171, 80
    %v1920 = vpop.permute.xlu0 %1919
    %1921 = vrot.lane.b32.xlu0 %v172, 80
    %v1922 = vpop.permute.xlu0 %1921
    %1923 = vrot.lane.b32.xlu0 %v173, 80
    %v1924 = vpop.permute.xlu0 %1923
    %1925 = vrot.lane.b32.xlu0 %v174, 80
    %v1926 = vpop.permute.xlu0 %1925
    %1927 = vrot.lane.b32.xlu0 %v175, 80
    %v1928 = vpop.permute.xlu0 %1927
    %1929 = vrot.lane.b32.xlu0 %v176, 80
    %v1930 = vpop.permute.xlu0 %1929
    %1931 = vrot.lane.b32.xlu0 %v177, 80
    %v1932 = vpop.permute.xlu0 %1931
    %1933 = vrot.lane.b32.xlu0 %v178, 80
    %v1934 = vpop.permute.xlu0 %1933
    %1935 = vrot.lane.b32.xlu0 %v179, 80
    %v1936 = vpop.permute.xlu0 %1935
    %1937 = vrot.lane.b32.xlu0 %v180, 80
    %v1938 = vpop.permute.xlu0 %1937
    %1939 = vrot.lane.b32.xlu0 %v181, 80
    %v1940 = vpop.permute.xlu0 %1939
    %1941 = vrot.lane.b32.xlu0 %v182, 80
    %v1942 = vpop.permute.xlu0 %1941
    %1943 = vrot.lane.b32.xlu0 %v183, 80
    %v1944 = vpop.permute.xlu0 %1943
    %1945 = vrot.lane.b32.xlu0 %v184, 80
    %v1946 = vpop.permute.xlu0 %1945
    %1947 = vrot.lane.b32.xlu0 %v185, 80
    %v1948 = vpop.permute.xlu0 %1947
    %1949 = vrot.lane.b32.xlu0 %v186, 80
    %v1950 = vpop.permute.xlu0 %1949
    %1951 = vrot.lane.b32.xlu0 %v187, 80
    %v1952 = vpop.permute.xlu0 %1951
    %1953 = vrot.lane.b32.xlu0 %v188, 80
    %v1954 = vpop.permute.xlu0 %1953
    %1955 = vrot.lane.b32.xlu0 %v189, 80
    %v1956 = vpop.permute.xlu0 %1955
    %1957 = vrot.lane.b32.xlu0 %v190, 80
    %v1958 = vpop.permute.xlu0 %1957
    %1959 = vrot.lane.b32.xlu0 %v191, 80
    %v1960 = vpop.permute.xlu0 %1959
    %1961 = vrot.lane.b32.xlu0 %v192, 80
    %v1962 = vpop.permute.xlu0 %1961
    %1963 = vrot.lane.b32.xlu0 %v193, 80
    %v1964 = vpop.permute.xlu0 %1963
    %1965 = vrot.lane.b32.xlu0 %v194, 80
    %v1966 = vpop.permute.xlu0 %1965
    %1967 = vrot.lane.b32.xlu0 %v195, 80
    %v1968 = vpop.permute.xlu0 %1967
    %1969 = vrot.lane.b32.xlu0 %v196, 80
    %v1970 = vpop.permute.xlu0 %1969
    %1971 = vrot.lane.b32.xlu0 %v197, 80
    %v1972 = vpop.permute.xlu0 %1971
    %1973 = vrot.lane.b32.xlu0 %v198, 80
    %v1974 = vpop.permute.xlu0 %1973
    %1975 = vrot.lane.b32.xlu0 %v199, 80
    %v1976 = vpop.permute.xlu0 %1975
    %1977 = vrot.lane.b32.xlu0 %v200, 80
    %v1978 = vpop.permute.xlu0 %1977
    %1979 = vrot.lane.b32.xlu0 %v201, 80
    %v1980 = vpop.permute.xlu0 %1979
    %1981 = vrot.lane.b32.xlu0 %v202, 80
    %v1982 = vpop.permute.xlu0 %1981
    %v2015 = vmul.f32 %v241, %v1920
    %v2016 = vmul.f32 %v241, %v1922
    %v2017 = vmul.f32 %v241, %v1924
    %v2018 = vmul.f32 %v241, %v1926
    %v2019 = vmul.f32 %v241, %v1928
    %v2020 = vmul.f32 %v241, %v1930
    %v2021 = vmul.f32 %v241, %v1932
    %v2022 = vmul.f32 %v241, %v1934
    %v2023 = vmul.f32 %v241, %v1936
    %v2024 = vmul.f32 %v241, %v1938
    %v2025 = vmul.f32 %v241, %v1940
    %v2026 = vmul.f32 %v241, %v1942
    %v2027 = vmul.f32 %v241, %v1944
    %v2028 = vmul.f32 %v241, %v1946
    %v2029 = vmul.f32 %v241, %v1948
    %v2030 = vmul.f32 %v241, %v1950
    %v2031 = vmul.f32 %v241, %v1952
    %v2032 = vmul.f32 %v241, %v1954
    %v2033 = vmul.f32 %v241, %v1956
    %v2034 = vmul.f32 %v241, %v1958
    %v2035 = vmul.f32 %v241, %v1960
    %v2036 = vmul.f32 %v241, %v1962
    %v2037 = vmul.f32 %v241, %v1964
    %v2038 = vmul.f32 %v241, %v1966
    %v2039 = vmul.f32 %v241, %v1968
    %v2040 = vmul.f32 %v241, %v1970
    %v2041 = vmul.f32 %v241, %v1972
    %v2042 = vmul.f32 %v241, %v1974
    %v2043 = vmul.f32 %v241, %v1976
    %v2044 = vmul.f32 %v241, %v1978
    %v2045 = vmul.f32 %v241, %v1980
    %v2046 = vmul.f32 %v241, %v1982
    %v2047 = vsel %vm274, %v2015, 0.0
    %2048 = vadd.xlane.f32.xlu0 %v2047
    %v2049 = vpop.xlane.xlu0 %2048
    %v2050 = vsel %vm274, %v2016, 0.0
    %2051 = vadd.xlane.f32.xlu0 %v2050
    %v2052 = vpop.xlane.xlu0 %2051
    %v2053 = vsel %vm274, %v2017, 0.0
    %2054 = vadd.xlane.f32.xlu0 %v2053
    %v2055 = vpop.xlane.xlu0 %2054
    %v2056 = vsel %vm274, %v2018, 0.0
    %2057 = vadd.xlane.f32.xlu0 %v2056
    %v2058 = vpop.xlane.xlu0 %2057
    %v2059 = vsel %vm274, %v2019, 0.0
    %2060 = vadd.xlane.f32.xlu0 %v2059
    %v2061 = vpop.xlane.xlu0 %2060
    %v2062 = vsel %vm274, %v2020, 0.0
    %2063 = vadd.xlane.f32.xlu0 %v2062
    %v2064 = vpop.xlane.xlu0 %2063
    %v2065 = vsel %vm274, %v2021, 0.0
    %2066 = vadd.xlane.f32.xlu0 %v2065
    %v2067 = vpop.xlane.xlu0 %2066
    %v2068 = vsel %vm274, %v2022, 0.0
    %2069 = vadd.xlane.f32.xlu0 %v2068
    %v2070 = vpop.xlane.xlu0 %2069
    %v2071 = vsel %vm274, %v2023, 0.0
    %2072 = vadd.xlane.f32.xlu0 %v2071
    %v2073 = vpop.xlane.xlu0 %2072
    %v2074 = vsel %vm274, %v2024, 0.0
    %2075 = vadd.xlane.f32.xlu0 %v2074
    %v2076 = vpop.xlane.xlu0 %2075
    %v2077 = vsel %vm274, %v2025, 0.0
    %2078 = vadd.xlane.f32.xlu0 %v2077
    %v2079 = vpop.xlane.xlu0 %2078
    %v2080 = vsel %vm274, %v2026, 0.0
    %2081 = vadd.xlane.f32.xlu0 %v2080
    %v2082 = vpop.xlane.xlu0 %2081
    %v2083 = vsel %vm274, %v2027, 0.0
    %2084 = vadd.xlane.f32.xlu0 %v2083
    %v2085 = vpop.xlane.xlu0 %2084
    %v2086 = vsel %vm274, %v2028, 0.0
    %2087 = vadd.xlane.f32.xlu0 %v2086
    %v2088 = vpop.xlane.xlu0 %2087
    %v2089 = vsel %vm274, %v2029, 0.0
    %2090 = vadd.xlane.f32.xlu0 %v2089
    %v2091 = vpop.xlane.xlu0 %2090
    %v2092 = vsel %vm274, %v2030, 0.0
    %2093 = vadd.xlane.f32.xlu0 %v2092
    %v2094 = vpop.xlane.xlu0 %2093
    %v2095 = vsel %vm274, %v2031, 0.0
    %2096 = vadd.xlane.f32.xlu0 %v2095
    %v2097 = vpop.xlane.xlu0 %2096
    %v2098 = vsel %vm274, %v2032, 0.0
    %2099 = vadd.xlane.f32.xlu0 %v2098
    %v2100 = vpop.xlane.xlu0 %2099
    %v2101 = vsel %vm274, %v2033, 0.0
    %2102 = vadd.xlane.f32.xlu0 %v2101
    %v2103 = vpop.xlane.xlu0 %2102
    %v2104 = vsel %vm274, %v2034, 0.0
    %2105 = vadd.xlane.f32.xlu0 %v2104
    %v2106 = vpop.xlane.xlu0 %2105
    %v2107 = vsel %vm274, %v2035, 0.0
    %2108 = vadd.xlane.f32.xlu0 %v2107
    %v2109 = vpop.xlane.xlu0 %2108
    %v2110 = vsel %vm274, %v2036, 0.0
    %2111 = vadd.xlane.f32.xlu0 %v2110
    %v2112 = vpop.xlane.xlu0 %2111
    %v2113 = vsel %vm274, %v2037, 0.0
    %2114 = vadd.xlane.f32.xlu0 %v2113
    %v2115 = vpop.xlane.xlu0 %2114
    %v2116 = vsel %vm274, %v2038, 0.0
    %2117 = vadd.xlane.f32.xlu0 %v2116
    %v2118 = vpop.xlane.xlu0 %2117
    %v2119 = vsel %vm274, %v2039, 0.0
    %2120 = vadd.xlane.f32.xlu0 %v2119
    %v2121 = vpop.xlane.xlu0 %2120
    %v2122 = vsel %vm274, %v2040, 0.0
    %2123 = vadd.xlane.f32.xlu0 %v2122
    %v2124 = vpop.xlane.xlu0 %2123
    %v2125 = vsel %vm274, %v2041, 0.0
    %2126 = vadd.xlane.f32.xlu0 %v2125
    %v2127 = vpop.xlane.xlu0 %2126
    %v2128 = vsel %vm274, %v2042, 0.0
    %2129 = vadd.xlane.f32.xlu0 %v2128
    %v2130 = vpop.xlane.xlu0 %2129
    %v2131 = vsel %vm274, %v2043, 0.0
    %2132 = vadd.xlane.f32.xlu0 %v2131
    %v2133 = vpop.xlane.xlu0 %2132
    %v2134 = vsel %vm274, %v2044, 0.0
    %2135 = vadd.xlane.f32.xlu0 %v2134
    %v2136 = vpop.xlane.xlu0 %2135
    %v2137 = vsel %vm274, %v2045, 0.0
    %2138 = vadd.xlane.f32.xlu0 %v2137
    %v2139 = vpop.xlane.xlu0 %2138
    %v2140 = vsel %vm274, %v2046, 0.0
    %2141 = vadd.xlane.f32.xlu0 %v2140
    %v2142 = vpop.xlane.xlu0 %2141
    %v2143 = vadd.f32 %v2049, %v203
    %v2144 = vadd.f32 %v2052, %v204
    %v2145 = vadd.f32 %v2055, %v205
    %v2146 = vadd.f32 %v2058, %v206
    %v2147 = vadd.f32 %v2061, %v207
    %v2148 = vadd.f32 %v2064, %v208
    %v2149 = vadd.f32 %v2067, %v209
    %v2150 = vadd.f32 %v2070, %v210
    %v2151 = vadd.f32 %v2073, %v211
    %v2152 = vadd.f32 %v2076, %v212
    %v2153 = vadd.f32 %v2079, %v213
    %v2154 = vadd.f32 %v2082, %v214
    %v2155 = vadd.f32 %v2085, %v215
    %v2156 = vadd.f32 %v2088, %v216
    %v2157 = vadd.f32 %v2091, %v217
    %v2158 = vadd.f32 %v2094, %v218
    %v2159 = vadd.f32 %v2097, %v219
    %v2160 = vadd.f32 %v2100, %v220
    %v2161 = vadd.f32 %v2103, %v221
    %v2162 = vadd.f32 %v2106, %v222
    %v2163 = vadd.f32 %v2109, %v223
    %v2164 = vadd.f32 %v2112, %v224
    %v2165 = vadd.f32 %v2115, %v225
    %v2166 = vadd.f32 %v2118, %v226
    %v2167 = vadd.f32 %v2121, %v227
    %v2168 = vadd.f32 %v2124, %v228
    %v2169 = vadd.f32 %v2127, %v229
    %v2170 = vadd.f32 %v2130, %v230
    %v2171 = vadd.f32 %v2133, %v231
    %v2172 = vadd.f32 %v2136, %v232
    %v2173 = vadd.f32 %v2139, %v233
    %v2174 = vadd.f32 %v2142, %v234
    %vm2175 = vcmp.ge.f32.partialorder %v2143, 0.0
    %vm2176 = vcmp.ge.f32.partialorder %v2144, 0.0
    %vm2177 = vcmp.ge.f32.partialorder %v2145, 0.0
    %vm2178 = vcmp.ge.f32.partialorder %v2146, 0.0
    %vm2179 = vcmp.ge.f32.partialorder %v2147, 0.0
    %vm2180 = vcmp.ge.f32.partialorder %v2148, 0.0
    %vm2181 = vcmp.ge.f32.partialorder %v2149, 0.0
    %vm2182 = vcmp.ge.f32.partialorder %v2150, 0.0
    %vm2183 = vcmp.ge.f32.partialorder %v2151, 0.0
    %vm2184 = vcmp.ge.f32.partialorder %v2152, 0.0
    %vm2185 = vcmp.ge.f32.partialorder %v2153, 0.0
    %vm2186 = vcmp.ge.f32.partialorder %v2154, 0.0
    %vm2187 = vcmp.ge.f32.partialorder %v2155, 0.0
    %vm2188 = vcmp.ge.f32.partialorder %v2156, 0.0
    %vm2189 = vcmp.ge.f32.partialorder %v2157, 0.0
    %vm2190 = vcmp.ge.f32.partialorder %v2158, 0.0
    %vm2191 = vcmp.ge.f32.partialorder %v2159, 0.0
    %vm2192 = vcmp.ge.f32.partialorder %v2160, 0.0
    %vm2193 = vcmp.ge.f32.partialorder %v2161, 0.0
    %vm2194 = vcmp.ge.f32.partialorder %v2162, 0.0
    %vm2195 = vcmp.ge.f32.partialorder %v2163, 0.0
    %vm2196 = vcmp.ge.f32.partialorder %v2164, 0.0
    %vm2197 = vcmp.ge.f32.partialorder %v2165, 0.0
    %vm2198 = vcmp.ge.f32.partialorder %v2166, 0.0
    %vm2199 = vcmp.ge.f32.partialorder %v2167, 0.0
    %vm2200 = vcmp.ge.f32.partialorder %v2168, 0.0
    %vm2201 = vcmp.ge.f32.partialorder %v2169, 0.0
    %vm2202 = vcmp.ge.f32.partialorder %v2170, 0.0
    %vm2203 = vcmp.ge.f32.partialorder %v2171, 0.0
    %vm2204 = vcmp.ge.f32.partialorder %v2172, 0.0
    %vm2205 = vcmp.ge.f32.partialorder %v2173, 0.0
    %vm2206 = vcmp.ge.f32.partialorder %v2174, 0.0
    %v2207 = vmul.f32 %v2143, 0.2
    %v2208 = vmul.f32 %v2144, 0.2
    %v2209 = vmul.f32 %v2145, 0.2
    %v2210 = vmul.f32 %v2146, 0.2
    %v2211 = vmul.f32 %v2147, 0.2
    %v2212 = vmul.f32 %v2148, 0.2
    %v2213 = vmul.f32 %v2149, 0.2
    %v2214 = vmul.f32 %v2150, 0.2
    %v2215 = vmul.f32 %v2151, 0.2
    %v2216 = vmul.f32 %v2152, 0.2
    %v2217 = vmul.f32 %v2153, 0.2
    %v2218 = vmul.f32 %v2154, 0.2
    %v2219 = vmul.f32 %v2155, 0.2
    %v2220 = vmul.f32 %v2156, 0.2
    %v2221 = vmul.f32 %v2157, 0.2
    %v2222 = vmul.f32 %v2158, 0.2
    %v2223 = vmul.f32 %v2159, 0.2
    %v2224 = vmul.f32 %v2160, 0.2
    %v2225 = vmul.f32 %v2161, 0.2
    %v2226 = vmul.f32 %v2162, 0.2
    %v2227 = vmul.f32 %v2163, 0.2
    %v2228 = vmul.f32 %v2164, 0.2
    %v2229 = vmul.f32 %v2165, 0.2
    %v2230 = vmul.f32 %v2166, 0.2
    %v2231 = vmul.f32 %v2167, 0.2
    %v2232 = vmul.f32 %v2168, 0.2
    %v2233 = vmul.f32 %v2169, 0.2
    %v2234 = vmul.f32 %v2170, 0.2
    %v2235 = vmul.f32 %v2171, 0.2
    %v2236 = vmul.f32 %v2172, 0.2
    %v2237 = vmul.f32 %v2173, 0.2
    %v2238 = vmul.f32 %v2174, 0.2
    %v2239 = vsel %vm2175, %v2143, %v2207
    %v2240 = vsel %vm2176, %v2144, %v2208
    %v2241 = vsel %vm2177, %v2145, %v2209
    %v2242 = vsel %vm2178, %v2146, %v2210
    %v2243 = vsel %vm2179, %v2147, %v2211
    %v2244 = vsel %vm2180, %v2148, %v2212
    %v2245 = vsel %vm2181, %v2149, %v2213
    %v2246 = vsel %vm2182, %v2150, %v2214
    %v2247 = vsel %vm2183, %v2151, %v2215
    %v2248 = vsel %vm2184, %v2152, %v2216
    %v2249 = vsel %vm2185, %v2153, %v2217
    %v2250 = vsel %vm2186, %v2154, %v2218
    %v2251 = vsel %vm2187, %v2155, %v2219
    %v2252 = vsel %vm2188, %v2156, %v2220
    %v2253 = vsel %vm2189, %v2157, %v2221
    %v2254 = vsel %vm2190, %v2158, %v2222
    %v2255 = vsel %vm2191, %v2159, %v2223
    %v2256 = vsel %vm2192, %v2160, %v2224
    %v2257 = vsel %vm2193, %v2161, %v2225
    %v2258 = vsel %vm2194, %v2162, %v2226
    %v2259 = vsel %vm2195, %v2163, %v2227
    %v2260 = vsel %vm2196, %v2164, %v2228
    %v2261 = vsel %vm2197, %v2165, %v2229
    %v2262 = vsel %vm2198, %v2166, %v2230
    %v2263 = vsel %vm2199, %v2167, %v2231
    %v2264 = vsel %vm2200, %v2168, %v2232
    %v2265 = vsel %vm2201, %v2169, %v2233
    %v2266 = vsel %vm2202, %v2170, %v2234
    %v2267 = vsel %vm2203, %v2171, %v2235
    %v2268 = vsel %vm2204, %v2172, %v2236
    %v2269 = vsel %vm2205, %v2173, %v2237
    %v2270 = vsel %vm2206, %v2174, %v2238
    %2272 = vset.pattern.permute.xlu0 3
    %2273 = vperm.xlu0 %2272, %v2239
    %v2274 = vpop.permute.xlu0 %2273
    %2277 = vset.pattern.permute.xlu0 3
    %2278 = vperm.xlu0 %2277, %v2240
    %v2279 = vpop.permute.xlu0 %2278
    %2282 = vset.pattern.permute.xlu0 3
    %2283 = vperm.xlu0 %2282, %v2241
    %v2284 = vpop.permute.xlu0 %2283
    %2287 = vset.pattern.permute.xlu0 3
    %2288 = vperm.xlu0 %2287, %v2242
    %v2289 = vpop.permute.xlu0 %2288
    %2292 = vset.pattern.permute.xlu0 3
    %2293 = vperm.xlu0 %2292, %v2243
    %v2294 = vpop.permute.xlu0 %2293
    %2297 = vset.pattern.permute.xlu0 3
    %2298 = vperm.xlu0 %2297, %v2244
    %v2299 = vpop.permute.xlu0 %2298
    %2302 = vset.pattern.permute.xlu0 3
    %2303 = vperm.xlu0 %2302, %v2245
    %v2304 = vpop.permute.xlu0 %2303
    %2307 = vset.pattern.permute.xlu0 3
    %2308 = vperm.xlu0 %2307, %v2246
    %v2309 = vpop.permute.xlu0 %2308
    %2312 = vset.pattern.permute.xlu0 3
    %2313 = vperm.xlu0 %2312, %v2247
    %v2314 = vpop.permute.xlu0 %2313
    %2317 = vset.pattern.permute.xlu0 3
    %2318 = vperm.xlu0 %2317, %v2248
    %v2319 = vpop.permute.xlu0 %2318
    %2322 = vset.pattern.permute.xlu0 3
    %2323 = vperm.xlu0 %2322, %v2249
    %v2324 = vpop.permute.xlu0 %2323
    %2327 = vset.pattern.permute.xlu0 3
    %2328 = vperm.xlu0 %2327, %v2250
    %v2329 = vpop.permute.xlu0 %2328
    %2332 = vset.pattern.permute.xlu0 3
    %2333 = vperm.xlu0 %2332, %v2251
    %v2334 = vpop.permute.xlu0 %2333
    %2337 = vset.pattern.permute.xlu0 3
    %2338 = vperm.xlu0 %2337, %v2252
    %v2339 = vpop.permute.xlu0 %2338
    %2342 = vset.pattern.permute.xlu0 3
    %2343 = vperm.xlu0 %2342, %v2253
    %v2344 = vpop.permute.xlu0 %2343
    %2347 = vset.pattern.permute.xlu0 3
    %2348 = vperm.xlu0 %2347, %v2254
    %v2349 = vpop.permute.xlu0 %2348
    %2352 = vset.pattern.permute.xlu0 3
    %2353 = vperm.xlu0 %2352, %v2255
    %v2354 = vpop.permute.xlu0 %2353
    %2357 = vset.pattern.permute.xlu0 3
    %2358 = vperm.xlu0 %2357, %v2256
    %v2359 = vpop.permute.xlu0 %2358
    %2362 = vset.pattern.permute.xlu0 3
    %2363 = vperm.xlu0 %2362, %v2257
    %v2364 = vpop.permute.xlu0 %2363
    %2367 = vset.pattern.permute.xlu0 3
    %2368 = vperm.xlu0 %2367, %v2258
    %v2369 = vpop.permute.xlu0 %2368
    %2372 = vset.pattern.permute.xlu0 3
    %2373 = vperm.xlu0 %2372, %v2259
    %v2374 = vpop.permute.xlu0 %2373
    %2377 = vset.pattern.permute.xlu0 3
    %2378 = vperm.xlu0 %2377, %v2260
    %v2379 = vpop.permute.xlu0 %2378
    %2382 = vset.pattern.permute.xlu0 3
    %2383 = vperm.xlu0 %2382, %v2261
    %v2384 = vpop.permute.xlu0 %2383
    %2387 = vset.pattern.permute.xlu0 3
    %2388 = vperm.xlu0 %2387, %v2262
    %v2389 = vpop.permute.xlu0 %2388
    %2392 = vset.pattern.permute.xlu0 3
    %2393 = vperm.xlu0 %2392, %v2263
    %v2394 = vpop.permute.xlu0 %2393
    %2397 = vset.pattern.permute.xlu0 3
    %2398 = vperm.xlu0 %2397, %v2264
    %v2399 = vpop.permute.xlu0 %2398
    %2402 = vset.pattern.permute.xlu0 3
    %2403 = vperm.xlu0 %2402, %v2265
    %v2404 = vpop.permute.xlu0 %2403
    %2407 = vset.pattern.permute.xlu0 3
    %2408 = vperm.xlu0 %2407, %v2266
    %v2409 = vpop.permute.xlu0 %2408
    %2412 = vset.pattern.permute.xlu0 3
    %2413 = vperm.xlu0 %2412, %v2267
    %v2414 = vpop.permute.xlu0 %2413
    %2417 = vset.pattern.permute.xlu0 3
    %2418 = vperm.xlu0 %2417, %v2268
    %v2419 = vpop.permute.xlu0 %2418
    %2422 = vset.pattern.permute.xlu0 3
    %2423 = vperm.xlu0 %2422, %v2269
    %v2424 = vpop.permute.xlu0 %2423
    %2427 = vset.pattern.permute.xlu0 3
    %2428 = vperm.xlu0 %2427, %v2270
    %v2429 = vpop.permute.xlu0 %2428
    %v2431 = vlaneseq
    %v2432 = vshrl.u32 %v2431, 7
    %v2433 = vsub.s32 3, %v2432
    %v2434 = vrot.slane %v236, %v2433
    %v2435 = vmul.f32 %v2274, %v2434
    %v2436 = vmul.f32 %v2279, %v2434
    %v2437 = vmul.f32 %v2284, %v2434
    %v2438 = vmul.f32 %v2289, %v2434
    %v2439 = vmul.f32 %v2294, %v2434
    %v2440 = vmul.f32 %v2299, %v2434
    %v2441 = vmul.f32 %v2304, %v2434
    %v2442 = vmul.f32 %v2309, %v2434
    %v2443 = vmul.f32 %v2314, %v2434
    %v2444 = vmul.f32 %v2319, %v2434
    %v2445 = vmul.f32 %v2324, %v2434
    %v2446 = vmul.f32 %v2329, %v2434
    %v2447 = vmul.f32 %v2334, %v2434
    %v2448 = vmul.f32 %v2339, %v2434
    %v2449 = vmul.f32 %v2344, %v2434
    %v2450 = vmul.f32 %v2349, %v2434
    %v2451 = vmul.f32 %v2354, %v2434
    %v2452 = vmul.f32 %v2359, %v2434
    %v2453 = vmul.f32 %v2364, %v2434
    %v2454 = vmul.f32 %v2369, %v2434
    %v2455 = vmul.f32 %v2374, %v2434
    %v2456 = vmul.f32 %v2379, %v2434
    %v2457 = vmul.f32 %v2384, %v2434
    %v2458 = vmul.f32 %v2389, %v2434
    %v2459 = vmul.f32 %v2394, %v2434
    %v2460 = vmul.f32 %v2399, %v2434
    %v2461 = vmul.f32 %v2404, %v2434
    %v2462 = vmul.f32 %v2409, %v2434
    %v2463 = vmul.f32 %v2414, %v2434
    %v2464 = vmul.f32 %v2419, %v2434
    %v2465 = vmul.f32 %v2424, %v2434
    %v2466 = vmul.f32 %v2429, %v2434
    %v2467 = vadd.f32 %v1887, %v2435
    %v2468 = vadd.f32 %v1888, %v2436
    %v2469 = vadd.f32 %v1889, %v2437
    %v2470 = vadd.f32 %v1890, %v2438
    %v2471 = vadd.f32 %v1891, %v2439
    %v2472 = vadd.f32 %v1892, %v2440
    %v2473 = vadd.f32 %v1893, %v2441
    %v2474 = vadd.f32 %v1894, %v2442
    %v2475 = vadd.f32 %v1895, %v2443
    %v2476 = vadd.f32 %v1896, %v2444
    %v2477 = vadd.f32 %v1897, %v2445
    %v2478 = vadd.f32 %v1898, %v2446
    %v2479 = vadd.f32 %v1899, %v2447
    %v2480 = vadd.f32 %v1900, %v2448
    %v2481 = vadd.f32 %v1901, %v2449
    %v2482 = vadd.f32 %v1902, %v2450
    %v2483 = vadd.f32 %v1903, %v2451
    %v2484 = vadd.f32 %v1904, %v2452
    %v2485 = vadd.f32 %v1905, %v2453
    %v2486 = vadd.f32 %v1906, %v2454
    %v2487 = vadd.f32 %v1907, %v2455
    %v2488 = vadd.f32 %v1908, %v2456
    %v2489 = vadd.f32 %v1909, %v2457
    %v2490 = vadd.f32 %v1910, %v2458
    %v2491 = vadd.f32 %v1911, %v2459
    %v2492 = vadd.f32 %v1912, %v2460
    %v2493 = vadd.f32 %v1913, %v2461
    %v2494 = vadd.f32 %v1914, %v2462
    %v2495 = vadd.f32 %v1915, %v2463
    %v2496 = vadd.f32 %v1916, %v2464
    %v2497 = vadd.f32 %v1917, %v2465
    %v2498 = vadd.f32 %v1918, %v2466
    %v2499 = vld [vmem:[%s1] sm:$0xf]
    %v2500 = vld [vmem:[%s1 + $0x4] sm:$0xf]
    %v2501 = vld [vmem:[%s1 + $0x8] sm:$0xf]
    %v2502 = vld [vmem:[%s1 + $0xc] sm:$0xf]
    %v2503 = vld [vmem:[%s1 + $0x10] sm:$0xf]
    %v2504 = vld [vmem:[%s1 + $0x14] sm:$0xf]
    %v2505 = vld [vmem:[%s1 + $0x18] sm:$0xf]
    %v2506 = vld [vmem:[%s1 + $0x1c] sm:$0xf]
    %v2507 = vld [vmem:[%s1 + $0x20] sm:$0xf]
    %v2508 = vld [vmem:[%s1 + $0x24] sm:$0xf]
    %v2509 = vld [vmem:[%s1 + $0x28] sm:$0xf]
    %v2510 = vld [vmem:[%s1 + $0x2c] sm:$0xf]
    %v2511 = vld [vmem:[%s1 + $0x30] sm:$0xf]
    %v2512 = vld [vmem:[%s1 + $0x34] sm:$0xf]
    %v2513 = vld [vmem:[%s1 + $0x38] sm:$0xf]
    %v2514 = vld [vmem:[%s1 + $0x3c] sm:$0xf]
    %v2515 = vld [vmem:[%s1 + $0x40] sm:$0xf]
    %v2516 = vld [vmem:[%s1 + $0x44] sm:$0xf]
    %v2517 = vld [vmem:[%s1 + $0x48] sm:$0xf]
    %v2518 = vld [vmem:[%s1 + $0x4c] sm:$0xf]
    %v2519 = vld [vmem:[%s1 + $0x50] sm:$0xf]
    %v2520 = vld [vmem:[%s1 + $0x54] sm:$0xf]
    %v2521 = vld [vmem:[%s1 + $0x58] sm:$0xf]
    %v2522 = vld [vmem:[%s1 + $0x5c] sm:$0xf]
    %v2523 = vld [vmem:[%s1 + $0x60] sm:$0xf]
    %v2524 = vld [vmem:[%s1 + $0x64] sm:$0xf]
    %v2525 = vld [vmem:[%s1 + $0x68] sm:$0xf]
    %v2526 = vld [vmem:[%s1 + $0x6c] sm:$0xf]
    %v2527 = vld [vmem:[%s1 + $0x70] sm:$0xf]
    %v2528 = vld [vmem:[%s1 + $0x74] sm:$0xf]
    %v2529 = vld [vmem:[%s1 + $0x78] sm:$0xf]
    %v2530 = vld [vmem:[%s1 + $0x7c] sm:$0xf]
    %v2563 = vunpack.c.l.b16 %v2499
    %v2564 = vunpack.c.l.b16 %v2500
    %v2565 = vunpack.c.l.b16 %v2501
    %v2566 = vunpack.c.l.b16 %v2502
    %v2567 = vunpack.c.l.b16 %v2503
    %v2568 = vunpack.c.l.b16 %v2504
    %v2569 = vunpack.c.l.b16 %v2505
    %v2570 = vunpack.c.l.b16 %v2506
    %v2571 = vunpack.c.l.b16 %v2507
    %v2572 = vunpack.c.l.b16 %v2508
    %v2573 = vunpack.c.l.b16 %v2509
    %v2574 = vunpack.c.l.b16 %v2510
    %v2575 = vunpack.c.l.b16 %v2511
    %v2576 = vunpack.c.l.b16 %v2512
    %v2577 = vunpack.c.l.b16 %v2513
    %v2578 = vunpack.c.l.b16 %v2514
    %v2579 = vunpack.c.l.b16 %v2515
    %v2580 = vunpack.c.l.b16 %v2516
    %v2581 = vunpack.c.l.b16 %v2517
    %v2582 = vunpack.c.l.b16 %v2518
    %v2583 = vunpack.c.l.b16 %v2519
    %v2584 = vunpack.c.l.b16 %v2520
    %v2585 = vunpack.c.l.b16 %v2521
    %v2586 = vunpack.c.l.b16 %v2522
    %v2587 = vunpack.c.l.b16 %v2523
    %v2588 = vunpack.c.l.b16 %v2524
    %v2589 = vunpack.c.l.b16 %v2525
    %v2590 = vunpack.c.l.b16 %v2526
    %v2591 = vunpack.c.l.b16 %v2527
    %v2592 = vunpack.c.l.b16 %v2528
    %v2593 = vunpack.c.l.b16 %v2529
    %v2594 = vunpack.c.l.b16 %v2530
    %v2595 = vpack.c.b16 %v2564, %v2563
    %v2596 = vpack.c.b16 %v2566, %v2565
    %v2597 = vpack.c.b16 %v2568, %v2567
    %v2598 = vpack.c.b16 %v2570, %v2569
    %v2599 = vpack.c.b16 %v2572, %v2571
    %v2600 = vpack.c.b16 %v2574, %v2573
    %v2601 = vpack.c.b16 %v2576, %v2575
    %v2602 = vpack.c.b16 %v2578, %v2577
    %v2603 = vpack.c.b16 %v2580, %v2579
    %v2604 = vpack.c.b16 %v2582, %v2581
    %v2605 = vpack.c.b16 %v2584, %v2583
    %v2606 = vpack.c.b16 %v2586, %v2585
    %v2607 = vpack.c.b16 %v2588, %v2587
    %v2608 = vpack.c.b16 %v2590, %v2589
    %v2609 = vpack.c.b16 %v2592, %v2591
    %v2610 = vpack.c.b16 %v2594, %v2593
    %vm2611 = vcmask 31744
    %v2613 = vsel %vm2611, %v2595, 0
    %v2616 = vsel %vm2611, %v2596, 0
    %v2619 = vsel %vm2611, %v2597, 0
    %v2622 = vsel %vm2611, %v2598, 0
    %v2625 = vsel %vm2611, %v2599, 0
    %v2628 = vsel %vm2611, %v2600, 0
    %v2631 = vsel %vm2611, %v2601, 0
    %v2634 = vsel %vm2611, %v2602, 0
    %v2637 = vsel %vm2611, %v2603, 0
    %v2640 = vsel %vm2611, %v2604, 0
    %v2643 = vsel %vm2611, %v2605, 0
    %v2646 = vsel %vm2611, %v2606, 0
    %v2649 = vsel %vm2611, %v2607, 0
    %v2652 = vsel %vm2611, %v2608, 0
    %v2655 = vsel %vm2611, %v2609, 0
    %v2658 = vsel %vm2611, %v2610, 0
    %vm2660 = vcmask 1041408
    %v2662 = vsel %vm2660, %v235, 0
    %2664 = vmatprep.subr.bf16.mxu0 0
    %2665 = vmatpush1.bf16.msra.mxu0 %v2662
    %2666 = vmatprep.subr.bf16.mxu0 0
    %2667 = vmatpush1.bf16.msra.mxu0 0
    %2668 = vmatprep.subr.bf16.mxu0 0
    %2669 = vmatpush1.bf16.msra.mxu0 0
    %2670 = vmatprep.subr.bf16.mxu0 0
    %2671 = vmatpush1.bf16.msra.mxu0 0
    %2672 = vmatprep.subr.bf16.mxu0 0
    %2673 = vmatpush1.bf16.msra.mxu0 0
    %2674 = vmatprep.subr.bf16.mxu0 0
    %2675 = vmatpush1.bf16.msra.mxu0 0
    %2676 = vmatprep.subr.bf16.mxu0 0
    %2677 = vmatpush1.bf16.msra.mxu0 0
    %2678 = vmatprep.subr.bf16.mxu0 0
    %2679 = vmatpush1.bf16.msra.mxu0 0
    %2680 = vmatprep.subr.bf16.mxu0 0
    %2681 = vmatpush1.bf16.msra.mxu0 0
    %2682 = vmatprep.subr.bf16.mxu0 0
    %2683 = vmatpush1.bf16.msra.mxu0 0
    %2684 = vmatprep.subr.bf16.mxu0 0
    %2685 = vmatpush1.bf16.msra.mxu0 0
    %2686 = vmatprep.subr.bf16.mxu0 0
    %2687 = vmatpush1.bf16.msra.mxu0 0
    %2688 = vmatprep.subr.bf16.mxu0 0
    %2689 = vmatpush1.bf16.msra.mxu0 0
    %2690 = vmatprep.subr.bf16.mxu0 0
    %2691 = vmatpush1.bf16.msra.mxu0 0
    %2692 = vmatprep.subr.bf16.mxu0 0
    %2693 = vmatpush1.bf16.msra.mxu0 0
    %2694 = vmatprep.subr.bf16.mxu0 0
    %2695 = vmatpush1.bf16.msra.mxu0 0
    %2696 = vmatprep.mubr.bf16.mxu0 0
    %2697 = vmatmul.mubr.bf16.gmra.mrb[0].mxu0 %v2613
    %v2698 = vpop.f32.mrb[0].mxu0
    %v2699 = vadd.f32 %v2467, %v2698
    %v2700 = vpop.f32.mrb[0].mxu0
    %v2701 = vpop.f32.mrb[0].mxu0
    %v2702 = vadd.f32 %v2468, %v2701
    %v2703 = vpop.f32.mrb[0].mxu0
    %2704 = vmatprep.mubr.bf16.mxu0 0
    %2705 = vmatmul.mubr.bf16.gmra.mrb[0].mxu0 %v2616
    %v2706 = vpop.f32.mrb[0].mxu0
    %v2707 = vadd.f32 %v2469, %v2706
    %v2708 = vpop.f32.mrb[0].mxu0
    %v2709 = vpop.f32.mrb[0].mxu0
    %v2710 = vadd.f32 %v2470, %v2709
    %v2711 = vpop.f32.mrb[0].mxu0
    %2712 = vmatprep.mubr.bf16.mxu0 0
    %2713 = vmatmul.mubr.bf16.gmra.mrb[0].mxu0 %v2619
    %v2714 = vpop.f32.mrb[0].mxu0
    %v2715 = vadd.f32 %v2471, %v2714
    %v2716 = vpop.f32.mrb[0].mxu0
    %v2717 = vpop.f32.mrb[0].mxu0
    %v2718 = vadd.f32 %v2472, %v2717
    %v2719 = vpop.f32.mrb[0].mxu0
    %2720 = vmatprep.mubr.bf16.mxu0 0
    %2721 = vmatmul.mubr.bf16.gmra.mrb[0].mxu0 %v2622
    %v2722 = vpop.f32.mrb[0].mxu0
    %v2723 = vadd.f32 %v2473, %v2722
    %v2724 = vpop.f32.mrb[0].mxu0
    %v2725 = vpop.f32.mrb[0].mxu0
    %v2726 = vadd.f32 %v2474, %v2725
    %v2727 = vpop.f32.mrb[0].mxu0
    %2728 = vmatprep.mubr.bf16.mxu0 0
    %2729 = vmatmul.mubr.bf16.gmra.mrb[0].mxu0 %v2625
    %v2730 = vpop.f32.mrb[0].mxu0
    %v2731 = vadd.f32 %v2475, %v2730
    %v2732 = vpop.f32.mrb[0].mxu0
    %v2733 = vpop.f32.mrb[0].mxu0
    %v2734 = vadd.f32 %v2476, %v2733
    %v2735 = vpop.f32.mrb[0].mxu0
    %2736 = vmatprep.mubr.bf16.mxu0 0
    %2737 = vmatmul.mubr.bf16.gmra.mrb[0].mxu0 %v2628
    %v2738 = vpop.f32.mrb[0].mxu0
    %v2739 = vadd.f32 %v2477, %v2738
    %v2740 = vpop.f32.mrb[0].mxu0
    %v2741 = vpop.f32.mrb[0].mxu0
    %v2742 = vadd.f32 %v2478, %v2741
    %v2743 = vpop.f32.mrb[0].mxu0
    %2744 = vmatprep.mubr.bf16.mxu0 0
    %2745 = vmatmul.mubr.bf16.gmra.mrb[0].mxu0 %v2631
    %v2746 = vpop.f32.mrb[0].mxu0
    %v2747 = vadd.f32 %v2479, %v2746
    %v2748 = vpop.f32.mrb[0].mxu0
    %v2749 = vpop.f32.mrb[0].mxu0
    %v2750 = vadd.f32 %v2480, %v2749
    %v2751 = vpop.f32.mrb[0].mxu0
    %2752 = vmatprep.mubr.bf16.mxu0 0
    %2753 = vmatmul.mubr.bf16.gmra.mrb[0].mxu0 %v2634
    %v2754 = vpop.f32.mrb[0].mxu0
    %v2755 = vadd.f32 %v2481, %v2754
    %v2756 = vpop.f32.mrb[0].mxu0
    %v2757 = vpop.f32.mrb[0].mxu0
    %v2758 = vadd.f32 %v2482, %v2757
    %v2759 = vpop.f32.mrb[0].mxu0
    %2760 = vmatprep.mubr.bf16.mxu0 0
    %2761 = vmatmul.mubr.bf16.gmra.mrb[0].mxu0 %v2637
    %v2762 = vpop.f32.mrb[0].mxu0
    %v2763 = vadd.f32 %v2483, %v2762
    %v2764 = vpop.f32.mrb[0].mxu0
    %v2765 = vpop.f32.mrb[0].mxu0
    %v2766 = vadd.f32 %v2484, %v2765
    %v2767 = vpop.f32.mrb[0].mxu0
    %2768 = vmatprep.mubr.bf16.mxu0 0
    %2769 = vmatmul.mubr.bf16.gmra.mrb[0].mxu0 %v2640
    %v2770 = vpop.f32.mrb[0].mxu0
    %v2771 = vadd.f32 %v2485, %v2770
    %v2772 = vpop.f32.mrb[0].mxu0
    %v2773 = vpop.f32.mrb[0].mxu0
    %v2774 = vadd.f32 %v2486, %v2773
    %v2775 = vpop.f32.mrb[0].mxu0
    %2776 = vmatprep.mubr.bf16.mxu0 0
    %2777 = vmatmul.mubr.bf16.gmra.mrb[0].mxu0 %v2643
    %v2778 = vpop.f32.mrb[0].mxu0
    %v2779 = vadd.f32 %v2487, %v2778
    %v2780 = vpop.f32.mrb[0].mxu0
    %v2781 = vpop.f32.mrb[0].mxu0
    %v2782 = vadd.f32 %v2488, %v2781
    %v2783 = vpop.f32.mrb[0].mxu0
    %2784 = vmatprep.mubr.bf16.mxu0 0
    %2785 = vmatmul.mubr.bf16.gmra.mrb[0].mxu0 %v2646
    %v2786 = vpop.f32.mrb[0].mxu0
    %v2787 = vadd.f32 %v2489, %v2786
    %v2788 = vpop.f32.mrb[0].mxu0
    %v2789 = vpop.f32.mrb[0].mxu0
    %v2790 = vadd.f32 %v2490, %v2789
    %v2791 = vpop.f32.mrb[0].mxu0
    %2792 = vmatprep.mubr.bf16.mxu0 0
    %2793 = vmatmul.mubr.bf16.gmra.mrb[0].mxu0 %v2649
    %v2794 = vpop.f32.mrb[0].mxu0
    %v2795 = vadd.f32 %v2491, %v2794
    %v2796 = vpop.f32.mrb[0].mxu0
    %v2797 = vpop.f32.mrb[0].mxu0
    %v2798 = vadd.f32 %v2492, %v2797
    %v2799 = vpop.f32.mrb[0].mxu0
    %2800 = vmatprep.mubr.bf16.mxu0 0
    %2801 = vmatmul.mubr.bf16.gmra.mrb[0].mxu0 %v2652
    %v2802 = vpop.f32.mrb[0].mxu0
    %v2803 = vadd.f32 %v2493, %v2802
    %v2804 = vpop.f32.mrb[0].mxu0
    %v2805 = vpop.f32.mrb[0].mxu0
    %v2806 = vadd.f32 %v2494, %v2805
    %v2807 = vpop.f32.mrb[0].mxu0
    %2808 = vmatprep.mubr.bf16.mxu0 0
    %2809 = vmatmul.mubr.bf16.gmra.mrb[0].mxu0 %v2655
    %v2810 = vpop.f32.mrb[0].mxu0
    %v2811 = vadd.f32 %v2495, %v2810
    %v2812 = vpop.f32.mrb[0].mxu0
    %v2813 = vpop.f32.mrb[0].mxu0
    %v2814 = vadd.f32 %v2496, %v2813
    %v2815 = vpop.f32.mrb[0].mxu0
    %2816 = vmatprep.mubr.bf16.mxu0 0
    %2817 = vmatmul.mubr.bf16.gmra.mrb[0].mxu0 %v2658
    %v2818 = vpop.f32.mrb[0].mxu0
    %v2819 = vadd.f32 %v2497, %v2818
    %v2820 = vpop.f32.mrb[0].mxu0
    %v2821 = vpop.f32.mrb[0].mxu0
    %v2822 = vadd.f32 %v2498, %v2821
    %v2823 = vpop.f32.mrb[0].mxu0
    %2824 = vdwg.mxu0
    %v2826 = vlaneseq
    %v2827 = vshrl.u32 %v2826, 7
    %v2828 = vsub.s32 0, %v2827
    %v2829 = vrot.slane %v237, %v2828
    %v2831 = vadd.f32 %v2699, %v2829
    %v2832 = vadd.f32 %v2702, %v2829
    %v2833 = vadd.f32 %v2707, %v2829
    %v2834 = vadd.f32 %v2710, %v2829
    %v2835 = vadd.f32 %v2715, %v2829
    %v2836 = vadd.f32 %v2718, %v2829
    %v2837 = vadd.f32 %v2723, %v2829
    %v2838 = vadd.f32 %v2726, %v2829
    %v2839 = vadd.f32 %v2731, %v2829
    %v2840 = vadd.f32 %v2734, %v2829
    %v2841 = vadd.f32 %v2739, %v2829
    %v2842 = vadd.f32 %v2742, %v2829
    %v2843 = vadd.f32 %v2747, %v2829
    %v2844 = vadd.f32 %v2750, %v2829
    %v2845 = vadd.f32 %v2755, %v2829
    %v2846 = vadd.f32 %v2758, %v2829
    %v2847 = vadd.f32 %v2763, %v2829
    %v2848 = vadd.f32 %v2766, %v2829
    %v2849 = vadd.f32 %v2771, %v2829
    %v2850 = vadd.f32 %v2774, %v2829
    %v2851 = vadd.f32 %v2779, %v2829
    %v2852 = vadd.f32 %v2782, %v2829
    %v2853 = vadd.f32 %v2787, %v2829
    %v2854 = vadd.f32 %v2790, %v2829
    %v2855 = vadd.f32 %v2795, %v2829
    %v2856 = vadd.f32 %v2798, %v2829
    %v2857 = vadd.f32 %v2803, %v2829
    %v2858 = vadd.f32 %v2806, %v2829
    %v2859 = vadd.f32 %v2811, %v2829
    %v2860 = vadd.f32 %v2814, %v2829
    %v2861 = vadd.f32 %v2819, %v2829
    %v2862 = vadd.f32 %v2822, %v2829
    %vm2863 = vcmp.ge.f32.partialorder %v2831, 0.0
    %vm2864 = vcmp.ge.f32.partialorder %v2832, 0.0
    %vm2865 = vcmp.ge.f32.partialorder %v2833, 0.0
    %vm2866 = vcmp.ge.f32.partialorder %v2834, 0.0
    %vm2867 = vcmp.ge.f32.partialorder %v2835, 0.0
    %vm2868 = vcmp.ge.f32.partialorder %v2836, 0.0
    %vm2869 = vcmp.ge.f32.partialorder %v2837, 0.0
    %vm2870 = vcmp.ge.f32.partialorder %v2838, 0.0
    %vm2871 = vcmp.ge.f32.partialorder %v2839, 0.0
    %vm2872 = vcmp.ge.f32.partialorder %v2840, 0.0
    %vm2873 = vcmp.ge.f32.partialorder %v2841, 0.0
    %vm2874 = vcmp.ge.f32.partialorder %v2842, 0.0
    %vm2875 = vcmp.ge.f32.partialorder %v2843, 0.0
    %vm2876 = vcmp.ge.f32.partialorder %v2844, 0.0
    %vm2877 = vcmp.ge.f32.partialorder %v2845, 0.0
    %vm2878 = vcmp.ge.f32.partialorder %v2846, 0.0
    %vm2879 = vcmp.ge.f32.partialorder %v2847, 0.0
    %vm2880 = vcmp.ge.f32.partialorder %v2848, 0.0
    %vm2881 = vcmp.ge.f32.partialorder %v2849, 0.0
    %vm2882 = vcmp.ge.f32.partialorder %v2850, 0.0
    %vm2883 = vcmp.ge.f32.partialorder %v2851, 0.0
    %vm2884 = vcmp.ge.f32.partialorder %v2852, 0.0
    %vm2885 = vcmp.ge.f32.partialorder %v2853, 0.0
    %vm2886 = vcmp.ge.f32.partialorder %v2854, 0.0
    %vm2887 = vcmp.ge.f32.partialorder %v2855, 0.0
    %vm2888 = vcmp.ge.f32.partialorder %v2856, 0.0
    %vm2889 = vcmp.ge.f32.partialorder %v2857, 0.0
    %vm2890 = vcmp.ge.f32.partialorder %v2858, 0.0
    %vm2891 = vcmp.ge.f32.partialorder %v2859, 0.0
    %vm2892 = vcmp.ge.f32.partialorder %v2860, 0.0
    %vm2893 = vcmp.ge.f32.partialorder %v2861, 0.0
    %vm2894 = vcmp.ge.f32.partialorder %v2862, 0.0
    %v2895 = vmul.f32 %v2831, 0.2
    %v2896 = vmul.f32 %v2832, 0.2
    %v2897 = vmul.f32 %v2833, 0.2
    %v2898 = vmul.f32 %v2834, 0.2
    %v2899 = vmul.f32 %v2835, 0.2
    %v2900 = vmul.f32 %v2836, 0.2
    %v2901 = vmul.f32 %v2837, 0.2
    %v2902 = vmul.f32 %v2838, 0.2
    %v2903 = vmul.f32 %v2839, 0.2
    %v2904 = vmul.f32 %v2840, 0.2
    %v2905 = vmul.f32 %v2841, 0.2
    %v2906 = vmul.f32 %v2842, 0.2
    %v2907 = vmul.f32 %v2843, 0.2
    %v2908 = vmul.f32 %v2844, 0.2
    %v2909 = vmul.f32 %v2845, 0.2
    %v2910 = vmul.f32 %v2846, 0.2
    %v2911 = vmul.f32 %v2847, 0.2
    %v2912 = vmul.f32 %v2848, 0.2
    %v2913 = vmul.f32 %v2849, 0.2
    %v2914 = vmul.f32 %v2850, 0.2
    %v2915 = vmul.f32 %v2851, 0.2
    %v2916 = vmul.f32 %v2852, 0.2
    %v2917 = vmul.f32 %v2853, 0.2
    %v2918 = vmul.f32 %v2854, 0.2
    %v2919 = vmul.f32 %v2855, 0.2
    %v2920 = vmul.f32 %v2856, 0.2
    %v2921 = vmul.f32 %v2857, 0.2
    %v2922 = vmul.f32 %v2858, 0.2
    %v2923 = vmul.f32 %v2859, 0.2
    %v2924 = vmul.f32 %v2860, 0.2
    %v2925 = vmul.f32 %v2861, 0.2
    %v2926 = vmul.f32 %v2862, 0.2
    %v2927 = vsel %vm2863, %v2831, %v2895
    %v2928 = vsel %vm2864, %v2832, %v2896
    %v2929 = vsel %vm2865, %v2833, %v2897
    %v2930 = vsel %vm2866, %v2834, %v2898
    %v2931 = vsel %vm2867, %v2835, %v2899
    %v2932 = vsel %vm2868, %v2836, %v2900
    %v2933 = vsel %vm2869, %v2837, %v2901
    %v2934 = vsel %vm2870, %v2838, %v2902
    %v2935 = vsel %vm2871, %v2839, %v2903
    %v2936 = vsel %vm2872, %v2840, %v2904
    %v2937 = vsel %vm2873, %v2841, %v2905
    %v2938 = vsel %vm2874, %v2842, %v2906
    %v2939 = vsel %vm2875, %v2843, %v2907
    %v2940 = vsel %vm2876, %v2844, %v2908
    %v2941 = vsel %vm2877, %v2845, %v2909
    %v2942 = vsel %vm2878, %v2846, %v2910
    %v2943 = vsel %vm2879, %v2847, %v2911
    %v2944 = vsel %vm2880, %v2848, %v2912
    %v2945 = vsel %vm2881, %v2849, %v2913
    %v2946 = vsel %vm2882, %v2850, %v2914
    %v2947 = vsel %vm2883, %v2851, %v2915
    %v2948 = vsel %vm2884, %v2852, %v2916
    %v2949 = vsel %vm2885, %v2853, %v2917
    %v2950 = vsel %vm2886, %v2854, %v2918
    %v2951 = vsel %vm2887, %v2855, %v2919
    %v2952 = vsel %vm2888, %v2856, %v2920
    %v2953 = vsel %vm2889, %v2857, %v2921
    %v2954 = vsel %vm2890, %v2858, %v2922
    %v2955 = vsel %vm2891, %v2859, %v2923
    %v2956 = vsel %vm2892, %v2860, %v2924
    %v2957 = vsel %vm2893, %v2861, %v2925
    %v2958 = vsel %vm2894, %v2862, %v2926
    %v2959 = vlaneseq
    %v2960 = vshrl.u32 %v2959, 7
    %v2961 = vsub.s32 1, %v2960
    %v2962 = vrot.slane %v170, %v2961
    %v2963 = vmul.f32 %v2962, %v171
    %v2964 = vmul.f32 %v2962, %v172
    %v2965 = vmul.f32 %v2962, %v173
    %v2966 = vmul.f32 %v2962, %v174
    %v2967 = vmul.f32 %v2962, %v175
    %v2968 = vmul.f32 %v2962, %v176
    %v2969 = vmul.f32 %v2962, %v177
    %v2970 = vmul.f32 %v2962, %v178
    %v2971 = vmul.f32 %v2962, %v179
    %v2972 = vmul.f32 %v2962, %v180
    %v2973 = vmul.f32 %v2962, %v181
    %v2974 = vmul.f32 %v2962, %v182
    %v2975 = vmul.f32 %v2962, %v183
    %v2976 = vmul.f32 %v2962, %v184
    %v2977 = vmul.f32 %v2962, %v185
    %v2978 = vmul.f32 %v2962, %v186
    %v2979 = vmul.f32 %v2962, %v187
    %v2980 = vmul.f32 %v2962, %v188
    %v2981 = vmul.f32 %v2962, %v189
    %v2982 = vmul.f32 %v2962, %v190
    %v2983 = vmul.f32 %v2962, %v191
    %v2984 = vmul.f32 %v2962, %v192
    %v2985 = vmul.f32 %v2962, %v193
    %v2986 = vmul.f32 %v2962, %v194
    %v2987 = vmul.f32 %v2962, %v195
    %v2988 = vmul.f32 %v2962, %v196
    %v2989 = vmul.f32 %v2962, %v197
    %v2990 = vmul.f32 %v2962, %v198
    %v2991 = vmul.f32 %v2962, %v199
    %v2992 = vmul.f32 %v2962, %v200
    %v2993 = vmul.f32 %v2962, %v201
    %v2994 = vmul.f32 %v2962, %v202
    %v2995 = vsel %vm274, %v2963, 0.0
    %2996 = vadd.xlane.f32.xlu0 %v2995
    %v2997 = vpop.xlane.xlu0 %2996
    %v2998 = vsel %vm274, %v2964, 0.0
    %2999 = vadd.xlane.f32.xlu0 %v2998
    %v3000 = vpop.xlane.xlu0 %2999
    %v3001 = vsel %vm274, %v2965, 0.0
    %3002 = vadd.xlane.f32.xlu0 %v3001
    %v3003 = vpop.xlane.xlu0 %3002
    %v3004 = vsel %vm274, %v2966, 0.0
    %3005 = vadd.xlane.f32.xlu0 %v3004
    %v3006 = vpop.xlane.xlu0 %3005
    %v3007 = vsel %vm274, %v2967, 0.0
    %3008 = vadd.xlane.f32.xlu0 %v3007
    %v3009 = vpop.xlane.xlu0 %3008
    %v3010 = vsel %vm274, %v2968, 0.0
    %3011 = vadd.xlane.f32.xlu0 %v3010
    %v3012 = vpop.xlane.xlu0 %3011
    %v3013 = vsel %vm274, %v2969, 0.0
    %3014 = vadd.xlane.f32.xlu0 %v3013
    %v3015 = vpop.xlane.xlu0 %3014
    %v3016 = vsel %vm274, %v2970, 0.0
    %3017 = vadd.xlane.f32.xlu0 %v3016
    %v3018 = vpop.xlane.xlu0 %3017
    %v3019 = vsel %vm274, %v2971, 0.0
    %3020 = vadd.xlane.f32.xlu0 %v3019
    %v3021 = vpop.xlane.xlu0 %3020
    %v3022 = vsel %vm274, %v2972, 0.0
    %3023 = vadd.xlane.f32.xlu0 %v3022
    %v3024 = vpop.xlane.xlu0 %3023
    %v3025 = vsel %vm274, %v2973, 0.0
    %3026 = vadd.xlane.f32.xlu0 %v3025
    %v3027 = vpop.xlane.xlu0 %3026
    %v3028 = vsel %vm274, %v2974, 0.0
    %3029 = vadd.xlane.f32.xlu0 %v3028
    %v3030 = vpop.xlane.xlu0 %3029
    %v3031 = vsel %vm274, %v2975, 0.0
    %3032 = vadd.xlane.f32.xlu0 %v3031
    %v3033 = vpop.xlane.xlu0 %3032
    %v3034 = vsel %vm274, %v2976, 0.0
    %3035 = vadd.xlane.f32.xlu0 %v3034
    %v3036 = vpop.xlane.xlu0 %3035
    %v3037 = vsel %vm274, %v2977, 0.0
    %3038 = vadd.xlane.f32.xlu0 %v3037
    %v3039 = vpop.xlane.xlu0 %3038
    %v3040 = vsel %vm274, %v2978, 0.0
    %3041 = vadd.xlane.f32.xlu0 %v3040
    %v3042 = vpop.xlane.xlu0 %3041
    %v3043 = vsel %vm274, %v2979, 0.0
    %3044 = vadd.xlane.f32.xlu0 %v3043
    %v3045 = vpop.xlane.xlu0 %3044
    %v3046 = vsel %vm274, %v2980, 0.0
    %3047 = vadd.xlane.f32.xlu0 %v3046
    %v3048 = vpop.xlane.xlu0 %3047
    %v3049 = vsel %vm274, %v2981, 0.0
    %3050 = vadd.xlane.f32.xlu0 %v3049
    %v3051 = vpop.xlane.xlu0 %3050
    %v3052 = vsel %vm274, %v2982, 0.0
    %3053 = vadd.xlane.f32.xlu0 %v3052
    %v3054 = vpop.xlane.xlu0 %3053
    %v3055 = vsel %vm274, %v2983, 0.0
    %3056 = vadd.xlane.f32.xlu0 %v3055
    %v3057 = vpop.xlane.xlu0 %3056
    %v3058 = vsel %vm274, %v2984, 0.0
    %3059 = vadd.xlane.f32.xlu0 %v3058
    %v3060 = vpop.xlane.xlu0 %3059
    %v3061 = vsel %vm274, %v2985, 0.0
    %3062 = vadd.xlane.f32.xlu0 %v3061
    %v3063 = vpop.xlane.xlu0 %3062
    %v3064 = vsel %vm274, %v2986, 0.0
    %3065 = vadd.xlane.f32.xlu0 %v3064
    %v3066 = vpop.xlane.xlu0 %3065
    %v3067 = vsel %vm274, %v2987, 0.0
    %3068 = vadd.xlane.f32.xlu0 %v3067
    %v3069 = vpop.xlane.xlu0 %3068
    %v3070 = vsel %vm274, %v2988, 0.0
    %3071 = vadd.xlane.f32.xlu0 %v3070
    %v3072 = vpop.xlane.xlu0 %3071
    %v3073 = vsel %vm274, %v2989, 0.0
    %3074 = vadd.xlane.f32.xlu0 %v3073
    %v3075 = vpop.xlane.xlu0 %3074
    %v3076 = vsel %vm274, %v2990, 0.0
    %3077 = vadd.xlane.f32.xlu0 %v3076
    %v3078 = vpop.xlane.xlu0 %3077
    %v3079 = vsel %vm274, %v2991, 0.0
    %3080 = vadd.xlane.f32.xlu0 %v3079
    %v3081 = vpop.xlane.xlu0 %3080
    %v3082 = vsel %vm274, %v2992, 0.0
    %3083 = vadd.xlane.f32.xlu0 %v3082
    %v3084 = vpop.xlane.xlu0 %3083
    %v3085 = vsel %vm274, %v2993, 0.0
    %3086 = vadd.xlane.f32.xlu0 %v3085
    %v3087 = vpop.xlane.xlu0 %3086
    %v3088 = vsel %vm274, %v2994, 0.0
    %3089 = vadd.xlane.f32.xlu0 %v3088
    %v3090 = vpop.xlane.xlu0 %3089
    %v3091 = vadd.f32 %v2997, %v203
    %v3092 = vadd.f32 %v3000, %v204
    %v3093 = vadd.f32 %v3003, %v205
    %v3094 = vadd.f32 %v3006, %v206
    %v3095 = vadd.f32 %v3009, %v207
    %v3096 = vadd.f32 %v3012, %v208
    %v3097 = vadd.f32 %v3015, %v209
    %v3098 = vadd.f32 %v3018, %v210
    %v3099 = vadd.f32 %v3021, %v211
    %v3100 = vadd.f32 %v3024, %v212
    %v3101 = vadd.f32 %v3027, %v213
    %v3102 = vadd.f32 %v3030, %v214
    %v3103 = vadd.f32 %v3033, %v215
    %v3104 = vadd.f32 %v3036, %v216
    %v3105 = vadd.f32 %v3039, %v217
    %v3106 = vadd.f32 %v3042, %v218
    %v3107 = vadd.f32 %v3045, %v219
    %v3108 = vadd.f32 %v3048, %v220
    %v3109 = vadd.f32 %v3051, %v221
    %v3110 = vadd.f32 %v3054, %v222
    %v3111 = vadd.f32 %v3057, %v223
    %v3112 = vadd.f32 %v3060, %v224
    %v3113 = vadd.f32 %v3063, %v225
    %v3114 = vadd.f32 %v3066, %v226
    %v3115 = vadd.f32 %v3069, %v227
    %v3116 = vadd.f32 %v3072, %v228
    %v3117 = vadd.f32 %v3075, %v229
    %v3118 = vadd.f32 %v3078, %v230
    %v3119 = vadd.f32 %v3081, %v231
    %v3120 = vadd.f32 %v3084, %v232
    %v3121 = vadd.f32 %v3087, %v233
    %v3122 = vadd.f32 %v3090, %v234
    %vm3123 = vcmp.ge.f32.partialorder %v3091, 0.0
    %vm3124 = vcmp.ge.f32.partialorder %v3092, 0.0
    %vm3125 = vcmp.ge.f32.partialorder %v3093, 0.0
    %vm3126 = vcmp.ge.f32.partialorder %v3094, 0.0
    %vm3127 = vcmp.ge.f32.partialorder %v3095, 0.0
    %vm3128 = vcmp.ge.f32.partialorder %v3096, 0.0
    %vm3129 = vcmp.ge.f32.partialorder %v3097, 0.0
    %vm3130 = vcmp.ge.f32.partialorder %v3098, 0.0
    %vm3131 = vcmp.ge.f32.partialorder %v3099, 0.0
    %vm3132 = vcmp.ge.f32.partialorder %v3100, 0.0
    %vm3133 = vcmp.ge.f32.partialorder %v3101, 0.0
    %vm3134 = vcmp.ge.f32.partialorder %v3102, 0.0
    %vm3135 = vcmp.ge.f32.partialorder %v3103, 0.0
    %vm3136 = vcmp.ge.f32.partialorder %v3104, 0.0
    %vm3137 = vcmp.ge.f32.partialorder %v3105, 0.0
    %vm3138 = vcmp.ge.f32.partialorder %v3106, 0.0
    %vm3139 = vcmp.ge.f32.partialorder %v3107, 0.0
    %vm3140 = vcmp.ge.f32.partialorder %v3108, 0.0
    %vm3141 = vcmp.ge.f32.partialorder %v3109, 0.0
    %vm3142 = vcmp.ge.f32.partialorder %v3110, 0.0
    %vm3143 = vcmp.ge.f32.partialorder %v3111, 0.0
    %vm3144 = vcmp.ge.f32.partialorder %v3112, 0.0
    %vm3145 = vcmp.ge.f32.partialorder %v3113, 0.0
    %vm3146 = vcmp.ge.f32.partialorder %v3114, 0.0
    %vm3147 = vcmp.ge.f32.partialorder %v3115, 0.0
    %vm3148 = vcmp.ge.f32.partialorder %v3116, 0.0
    %vm3149 = vcmp.ge.f32.partialorder %v3117, 0.0
    %vm3150 = vcmp.ge.f32.partialorder %v3118, 0.0
    %vm3151 = vcmp.ge.f32.partialorder %v3119, 0.0
    %vm3152 = vcmp.ge.f32.partialorder %v3120, 0.0
    %vm3153 = vcmp.ge.f32.partialorder %v3121, 0.0
    %vm3154 = vcmp.ge.f32.partialorder %v3122, 0.0
    %v3155 = vmul.f32 %v3091, 0.2
    %v3156 = vmul.f32 %v3092, 0.2
    %v3157 = vmul.f32 %v3093, 0.2
    %v3158 = vmul.f32 %v3094, 0.2
    %v3159 = vmul.f32 %v3095, 0.2
    %v3160 = vmul.f32 %v3096, 0.2
    %v3161 = vmul.f32 %v3097, 0.2
    %v3162 = vmul.f32 %v3098, 0.2
    %v3163 = vmul.f32 %v3099, 0.2
    %v3164 = vmul.f32 %v3100, 0.2
    %v3165 = vmul.f32 %v3101, 0.2
    %v3166 = vmul.f32 %v3102, 0.2
    %v3167 = vmul.f32 %v3103, 0.2
    %v3168 = vmul.f32 %v3104, 0.2
    %v3169 = vmul.f32 %v3105, 0.2
    %v3170 = vmul.f32 %v3106, 0.2
    %v3171 = vmul.f32 %v3107, 0.2
    %v3172 = vmul.f32 %v3108, 0.2
    %v3173 = vmul.f32 %v3109, 0.2
    %v3174 = vmul.f32 %v3110, 0.2
    %v3175 = vmul.f32 %v3111, 0.2
    %v3176 = vmul.f32 %v3112, 0.2
    %v3177 = vmul.f32 %v3113, 0.2
    %v3178 = vmul.f32 %v3114, 0.2
    %v3179 = vmul.f32 %v3115, 0.2
    %v3180 = vmul.f32 %v3116, 0.2
    %v3181 = vmul.f32 %v3117, 0.2
    %v3182 = vmul.f32 %v3118, 0.2
    %v3183 = vmul.f32 %v3119, 0.2
    %v3184 = vmul.f32 %v3120, 0.2
    %v3185 = vmul.f32 %v3121, 0.2
    %v3186 = vmul.f32 %v3122, 0.2
    %v3187 = vsel %vm3123, %v3091, %v3155
    %v3188 = vsel %vm3124, %v3092, %v3156
    %v3189 = vsel %vm3125, %v3093, %v3157
    %v3190 = vsel %vm3126, %v3094, %v3158
    %v3191 = vsel %vm3127, %v3095, %v3159
    %v3192 = vsel %vm3128, %v3096, %v3160
    %v3193 = vsel %vm3129, %v3097, %v3161
    %v3194 = vsel %vm3130, %v3098, %v3162
    %v3195 = vsel %vm3131, %v3099, %v3163
    %v3196 = vsel %vm3132, %v3100, %v3164
    %v3197 = vsel %vm3133, %v3101, %v3165
    %v3198 = vsel %vm3134, %v3102, %v3166
    %v3199 = vsel %vm3135, %v3103, %v3167
    %v3200 = vsel %vm3136, %v3104, %v3168
    %v3201 = vsel %vm3137, %v3105, %v3169
    %v3202 = vsel %vm3138, %v3106, %v3170
    %v3203 = vsel %vm3139, %v3107, %v3171
    %v3204 = vsel %vm3140, %v3108, %v3172
    %v3205 = vsel %vm3141, %v3109, %v3173
    %v3206 = vsel %vm3142, %v3110, %v3174
    %v3207 = vsel %vm3143, %v3111, %v3175
    %v3208 = vsel %vm3144, %v3112, %v3176
    %v3209 = vsel %vm3145, %v3113, %v3177
    %v3210 = vsel %vm3146, %v3114, %v3178
    %v3211 = vsel %vm3147, %v3115, %v3179
    %v3212 = vsel %vm3148, %v3116, %v3180
    %v3213 = vsel %vm3149, %v3117, %v3181
    %v3214 = vsel %vm3150, %v3118, %v3182
    %v3215 = vsel %vm3151, %v3119, %v3183
    %v3216 = vsel %vm3152, %v3120, %v3184
    %v3217 = vsel %vm3153, %v3121, %v3185
    %v3218 = vsel %vm3154, %v3122, %v3186
    %3220 = vset.pattern.permute.xlu0 0
    %3221 = vperm.xlu0 %3220, %v3187
    %v3222 = vpop.permute.xlu0 %3221
    %3225 = vset.pattern.permute.xlu0 0
    %3226 = vperm.xlu0 %3225, %v3188
    %v3227 = vpop.permute.xlu0 %3226
    %3230 = vset.pattern.permute.xlu0 0
    %3231 = vperm.xlu0 %3230, %v3189
    %v3232 = vpop.permute.xlu0 %3231
    %3235 = vset.pattern.permute.xlu0 0
    %3236 = vperm.xlu0 %3235, %v3190
    %v3237 = vpop.permute.xlu0 %3236
    %3240 = vset.pattern.permute.xlu0 0
    %3241 = vperm.xlu0 %3240, %v3191
    %v3242 = vpop.permute.xlu0 %3241
    %3245 = vset.pattern.permute.xlu0 0
    %3246 = vperm.xlu0 %3245, %v3192
    %v3247 = vpop.permute.xlu0 %3246
    %3250 = vset.pattern.permute.xlu0 0
    %3251 = vperm.xlu0 %3250, %v3193
    %v3252 = vpop.permute.xlu0 %3251
    %3255 = vset.pattern.permute.xlu0 0
    %3256 = vperm.xlu0 %3255, %v3194
    %v3257 = vpop.permute.xlu0 %3256
    %3260 = vset.pattern.permute.xlu0 0
    %3261 = vperm.xlu0 %3260, %v3195
    %v3262 = vpop.permute.xlu0 %3261
    %3265 = vset.pattern.permute.xlu0 0
    %3266 = vperm.xlu0 %3265, %v3196
    %v3267 = vpop.permute.xlu0 %3266
    %3270 = vset.pattern.permute.xlu0 0
    %3271 = vperm.xlu0 %3270, %v3197
    %v3272 = vpop.permute.xlu0 %3271
    %3275 = vset.pattern.permute.xlu0 0
    %3276 = vperm.xlu0 %3275, %v3198
    %v3277 = vpop.permute.xlu0 %3276
    %3280 = vset.pattern.permute.xlu0 0
    %3281 = vperm.xlu0 %3280, %v3199
    %v3282 = vpop.permute.xlu0 %3281
    %3285 = vset.pattern.permute.xlu0 0
    %3286 = vperm.xlu0 %3285, %v3200
    %v3287 = vpop.permute.xlu0 %3286
    %3290 = vset.pattern.permute.xlu0 0
    %3291 = vperm.xlu0 %3290, %v3201
    %v3292 = vpop.permute.xlu0 %3291
    %3295 = vset.pattern.permute.xlu0 0
    %3296 = vperm.xlu0 %3295, %v3202
    %v3297 = vpop.permute.xlu0 %3296
    %3300 = vset.pattern.permute.xlu0 0
    %3301 = vperm.xlu0 %3300, %v3203
    %v3302 = vpop.permute.xlu0 %3301
    %3305 = vset.pattern.permute.xlu0 0
    %3306 = vperm.xlu0 %3305, %v3204
    %v3307 = vpop.permute.xlu0 %3306
    %3310 = vset.pattern.permute.xlu0 0
    %3311 = vperm.xlu0 %3310, %v3205
    %v3312 = vpop.permute.xlu0 %3311
    %3315 = vset.pattern.permute.xlu0 0
    %3316 = vperm.xlu0 %3315, %v3206
    %v3317 = vpop.permute.xlu0 %3316
    %3320 = vset.pattern.permute.xlu0 0
    %3321 = vperm.xlu0 %3320, %v3207
    %v3322 = vpop.permute.xlu0 %3321
    %3325 = vset.pattern.permute.xlu0 0
    %3326 = vperm.xlu0 %3325, %v3208
    %v3327 = vpop.permute.xlu0 %3326
    %3330 = vset.pattern.permute.xlu0 0
    %3331 = vperm.xlu0 %3330, %v3209
    %v3332 = vpop.permute.xlu0 %3331
    %3335 = vset.pattern.permute.xlu0 0
    %3336 = vperm.xlu0 %3335, %v3210
    %v3337 = vpop.permute.xlu0 %3336
    %3340 = vset.pattern.permute.xlu0 0
    %3341 = vperm.xlu0 %3340, %v3211
    %v3342 = vpop.permute.xlu0 %3341
    %3345 = vset.pattern.permute.xlu0 0
    %3346 = vperm.xlu0 %3345, %v3212
    %v3347 = vpop.permute.xlu0 %3346
    %3350 = vset.pattern.permute.xlu0 0
    %3351 = vperm.xlu0 %3350, %v3213
    %v3352 = vpop.permute.xlu0 %3351
    %3355 = vset.pattern.permute.xlu0 0
    %3356 = vperm.xlu0 %3355, %v3214
    %v3357 = vpop.permute.xlu0 %3356
    %3360 = vset.pattern.permute.xlu0 0
    %3361 = vperm.xlu0 %3360, %v3215
    %v3362 = vpop.permute.xlu0 %3361
    %3365 = vset.pattern.permute.xlu0 0
    %3366 = vperm.xlu0 %3365, %v3216
    %v3367 = vpop.permute.xlu0 %3366
    %3370 = vset.pattern.permute.xlu0 0
    %3371 = vperm.xlu0 %3370, %v3217
    %v3372 = vpop.permute.xlu0 %3371
    %3375 = vset.pattern.permute.xlu0 0
    %3376 = vperm.xlu0 %3375, %v3218
    %v3377 = vpop.permute.xlu0 %3376
    %v3379 = vmul.f32 %v3222, %v662
    %v3380 = vmul.f32 %v3227, %v662
    %v3381 = vmul.f32 %v3232, %v662
    %v3382 = vmul.f32 %v3237, %v662
    %v3383 = vmul.f32 %v3242, %v662
    %v3384 = vmul.f32 %v3247, %v662
    %v3385 = vmul.f32 %v3252, %v662
    %v3386 = vmul.f32 %v3257, %v662
    %v3387 = vmul.f32 %v3262, %v662
    %v3388 = vmul.f32 %v3267, %v662
    %v3389 = vmul.f32 %v3272, %v662
    %v3390 = vmul.f32 %v3277, %v662
    %v3391 = vmul.f32 %v3282, %v662
    %v3392 = vmul.f32 %v3287, %v662
    %v3393 = vmul.f32 %v3292, %v662
    %v3394 = vmul.f32 %v3297, %v662
    %v3395 = vmul.f32 %v3302, %v662
    %v3396 = vmul.f32 %v3307, %v662
    %v3397 = vmul.f32 %v3312, %v662
    %v3398 = vmul.f32 %v3317, %v662
    %v3399 = vmul.f32 %v3322, %v662
    %v3400 = vmul.f32 %v3327, %v662
    %v3401 = vmul.f32 %v3332, %v662
    %v3402 = vmul.f32 %v3337, %v662
    %v3403 = vmul.f32 %v3342, %v662
    %v3404 = vmul.f32 %v3347, %v662
    %v3405 = vmul.f32 %v3352, %v662
    %v3406 = vmul.f32 %v3357, %v662
    %v3407 = vmul.f32 %v3362, %v662
    %v3408 = vmul.f32 %v3367, %v662
    %v3409 = vmul.f32 %v3372, %v662
    %v3410 = vmul.f32 %v3377, %v662
    %v3411 = vadd.f32 %v3379, 0.0
    %v3412 = vadd.f32 %v3380, 0.0
    %v3413 = vadd.f32 %v3381, 0.0
    %v3414 = vadd.f32 %v3382, 0.0
    %v3415 = vadd.f32 %v3383, 0.0
    %v3416 = vadd.f32 %v3384, 0.0
    %v3417 = vadd.f32 %v3385, 0.0
    %v3418 = vadd.f32 %v3386, 0.0
    %v3419 = vadd.f32 %v3387, 0.0
    %v3420 = vadd.f32 %v3388, 0.0
    %v3421 = vadd.f32 %v3389, 0.0
    %v3422 = vadd.f32 %v3390, 0.0
    %v3423 = vadd.f32 %v3391, 0.0
    %v3424 = vadd.f32 %v3392, 0.0
    %v3425 = vadd.f32 %v3393, 0.0
    %v3426 = vadd.f32 %v3394, 0.0
    %v3427 = vadd.f32 %v3395, 0.0
    %v3428 = vadd.f32 %v3396, 0.0
    %v3429 = vadd.f32 %v3397, 0.0
    %v3430 = vadd.f32 %v3398, 0.0
    %v3431 = vadd.f32 %v3399, 0.0
    %v3432 = vadd.f32 %v3400, 0.0
    %v3433 = vadd.f32 %v3401, 0.0
    %v3434 = vadd.f32 %v3402, 0.0
    %v3435 = vadd.f32 %v3403, 0.0
    %v3436 = vadd.f32 %v3404, 0.0
    %v3437 = vadd.f32 %v3405, 0.0
    %v3438 = vadd.f32 %v3406, 0.0
    %v3439 = vadd.f32 %v3407, 0.0
    %v3440 = vadd.f32 %v3408, 0.0
    %v3441 = vadd.f32 %v3409, 0.0
    %v3442 = vadd.f32 %v3410, 0.0
    %v3443 = vmul.f32 %v2962, %v760
    %v3444 = vmul.f32 %v2962, %v762
    %v3445 = vmul.f32 %v2962, %v764
    %v3446 = vmul.f32 %v2962, %v766
    %v3447 = vmul.f32 %v2962, %v768
    %v3448 = vmul.f32 %v2962, %v770
    %v3449 = vmul.f32 %v2962, %v772
    %v3450 = vmul.f32 %v2962, %v774
    %v3451 = vmul.f32 %v2962, %v776
    %v3452 = vmul.f32 %v2962, %v778
    %v3453 = vmul.f32 %v2962, %v780
    %v3454 = vmul.f32 %v2962, %v782
    %v3455 = vmul.f32 %v2962, %v784
    %v3456 = vmul.f32 %v2962, %v786
    %v3457 = vmul.f32 %v2962, %v788
    %v3458 = vmul.f32 %v2962, %v790
    %v3459 = vmul.f32 %v2962, %v792
    %v3460 = vmul.f32 %v2962, %v794
    %v3461 = vmul.f32 %v2962, %v796
    %v3462 = vmul.f32 %v2962, %v798
    %v3463 = vmul.f32 %v2962, %v800
    %v3464 = vmul.f32 %v2962, %v802
    %v3465 = vmul.f32 %v2962, %v804
    %v3466 = vmul.f32 %v2962, %v806
    %v3467 = vmul.f32 %v2962, %v808
    %v3468 = vmul.f32 %v2962, %v810
    %v3469 = vmul.f32 %v2962, %v812
    %v3470 = vmul.f32 %v2962, %v814
    %v3471 = vmul.f32 %v2962, %v816
    %v3472 = vmul.f32 %v2962, %v818
    %v3473 = vmul.f32 %v2962, %v820
    %v3474 = vmul.f32 %v2962, %v822
    %v3475 = vsel %vm274, %v3443, 0.0
    %3476 = vadd.xlane.f32.xlu0 %v3475
    %v3477 = vpop.xlane.xlu0 %3476
    %v3478 = vsel %vm274, %v3444, 0.0
    %3479 = vadd.xlane.f32.xlu0 %v3478
    %v3480 = vpop.xlane.xlu0 %3479
    %v3481 = vsel %vm274, %v3445, 0.0
    %3482 = vadd.xlane.f32.xlu0 %v3481
    %v3483 = vpop.xlane.xlu0 %3482
    %v3484 = vsel %vm274, %v3446, 0.0
    %3485 = vadd.xlane.f32.xlu0 %v3484
    %v3486 = vpop.xlane.xlu0 %3485
    %v3487 = vsel %vm274, %v3447, 0.0
    %3488 = vadd.xlane.f32.xlu0 %v3487
    %v3489 = vpop.xlane.xlu0 %3488
    %v3490 = vsel %vm274, %v3448, 0.0
    %3491 = vadd.xlane.f32.xlu0 %v3490
    %v3492 = vpop.xlane.xlu0 %3491
    %v3493 = vsel %vm274, %v3449, 0.0
    %3494 = vadd.xlane.f32.xlu0 %v3493
    %v3495 = vpop.xlane.xlu0 %3494
    %v3496 = vsel %vm274, %v3450, 0.0
    %3497 = vadd.xlane.f32.xlu0 %v3496
    %v3498 = vpop.xlane.xlu0 %3497
    %v3499 = vsel %vm274, %v3451, 0.0
    %3500 = vadd.xlane.f32.xlu0 %v3499
    %v3501 = vpop.xlane.xlu0 %3500
    %v3502 = vsel %vm274, %v3452, 0.0
    %3503 = vadd.xlane.f32.xlu0 %v3502
    %v3504 = vpop.xlane.xlu0 %3503
    %v3505 = vsel %vm274, %v3453, 0.0
    %3506 = vadd.xlane.f32.xlu0 %v3505
    %v3507 = vpop.xlane.xlu0 %3506
    %v3508 = vsel %vm274, %v3454, 0.0
    %3509 = vadd.xlane.f32.xlu0 %v3508
    %v3510 = vpop.xlane.xlu0 %3509
    %v3511 = vsel %vm274, %v3455, 0.0
    %3512 = vadd.xlane.f32.xlu0 %v3511
    %v3513 = vpop.xlane.xlu0 %3512
    %v3514 = vsel %vm274, %v3456, 0.0
    %3515 = vadd.xlane.f32.xlu0 %v3514
    %v3516 = vpop.xlane.xlu0 %3515
    %v3517 = vsel %vm274, %v3457, 0.0
    %3518 = vadd.xlane.f32.xlu0 %v3517
    %v3519 = vpop.xlane.xlu0 %3518
    %v3520 = vsel %vm274, %v3458, 0.0
    %3521 = vadd.xlane.f32.xlu0 %v3520
    %v3522 = vpop.xlane.xlu0 %3521
    %v3523 = vsel %vm274, %v3459, 0.0
    %3524 = vadd.xlane.f32.xlu0 %v3523
    %v3525 = vpop.xlane.xlu0 %3524
    %v3526 = vsel %vm274, %v3460, 0.0
    %3527 = vadd.xlane.f32.xlu0 %v3526
    %v3528 = vpop.xlane.xlu0 %3527
    %v3529 = vsel %vm274, %v3461, 0.0
    %3530 = vadd.xlane.f32.xlu0 %v3529
    %v3531 = vpop.xlane.xlu0 %3530
    %v3532 = vsel %vm274, %v3462, 0.0
    %3533 = vadd.xlane.f32.xlu0 %v3532
    %v3534 = vpop.xlane.xlu0 %3533
    %v3535 = vsel %vm274, %v3463, 0.0
    %3536 = vadd.xlane.f32.xlu0 %v3535
    %v3537 = vpop.xlane.xlu0 %3536
    %v3538 = vsel %vm274, %v3464, 0.0
    %3539 = vadd.xlane.f32.xlu0 %v3538
    %v3540 = vpop.xlane.xlu0 %3539
    %v3541 = vsel %vm274, %v3465, 0.0
    %3542 = vadd.xlane.f32.xlu0 %v3541
    %v3543 = vpop.xlane.xlu0 %3542
    %v3544 = vsel %vm274, %v3466, 0.0
    %3545 = vadd.xlane.f32.xlu0 %v3544
    %v3546 = vpop.xlane.xlu0 %3545
    %v3547 = vsel %vm274, %v3467, 0.0
    %3548 = vadd.xlane.f32.xlu0 %v3547
    %v3549 = vpop.xlane.xlu0 %3548
    %v3550 = vsel %vm274, %v3468, 0.0
    %3551 = vadd.xlane.f32.xlu0 %v3550
    %v3552 = vpop.xlane.xlu0 %3551
    %v3553 = vsel %vm274, %v3469, 0.0
    %3554 = vadd.xlane.f32.xlu0 %v3553
    %v3555 = vpop.xlane.xlu0 %3554
    %v3556 = vsel %vm274, %v3470, 0.0
    %3557 = vadd.xlane.f32.xlu0 %v3556
    %v3558 = vpop.xlane.xlu0 %3557
    %v3559 = vsel %vm274, %v3471, 0.0
    %3560 = vadd.xlane.f32.xlu0 %v3559
    %v3561 = vpop.xlane.xlu0 %3560
    %v3562 = vsel %vm274, %v3472, 0.0
    %3563 = vadd.xlane.f32.xlu0 %v3562
    %v3564 = vpop.xlane.xlu0 %3563
    %v3565 = vsel %vm274, %v3473, 0.0
    %3566 = vadd.xlane.f32.xlu0 %v3565
    %v3567 = vpop.xlane.xlu0 %3566
    %v3568 = vsel %vm274, %v3474, 0.0
    %3569 = vadd.xlane.f32.xlu0 %v3568
    %v3570 = vpop.xlane.xlu0 %3569
    %v3571 = vadd.f32 %v3477, %v203
    %v3572 = vadd.f32 %v3480, %v204
    %v3573 = vadd.f32 %v3483, %v205
    %v3574 = vadd.f32 %v3486, %v206
    %v3575 = vadd.f32 %v3489, %v207
    %v3576 = vadd.f32 %v3492, %v208
    %v3577 = vadd.f32 %v3495, %v209
    %v3578 = vadd.f32 %v3498, %v210
    %v3579 = vadd.f32 %v3501, %v211
    %v3580 = vadd.f32 %v3504, %v212
    %v3581 = vadd.f32 %v3507, %v213
    %v3582 = vadd.f32 %v3510, %v214
    %v3583 = vadd.f32 %v3513, %v215
    %v3584 = vadd.f32 %v3516, %v216
    %v3585 = vadd.f32 %v3519, %v217
    %v3586 = vadd.f32 %v3522, %v218
    %v3587 = vadd.f32 %v3525, %v219
    %v3588 = vadd.f32 %v3528, %v220
    %v3589 = vadd.f32 %v3531, %v221
    %v3590 = vadd.f32 %v3534, %v222
    %v3591 = vadd.f32 %v3537, %v223
    %v3592 = vadd.f32 %v3540, %v224
    %v3593 = vadd.f32 %v3543, %v225
    %v3594 = vadd.f32 %v3546, %v226
    %v3595 = vadd.f32 %v3549, %v227
    %v3596 = vadd.f32 %v3552, %v228
    %v3597 = vadd.f32 %v3555, %v229
    %v3598 = vadd.f32 %v3558, %v230
    %v3599 = vadd.f32 %v3561, %v231
    %v3600 = vadd.f32 %v3564, %v232
    %v3601 = vadd.f32 %v3567, %v233
    %v3602 = vadd.f32 %v3570, %v234
    %vm3603 = vcmp.ge.f32.partialorder %v3571, 0.0
    %vm3604 = vcmp.ge.f32.partialorder %v3572, 0.0
    %vm3605 = vcmp.ge.f32.partialorder %v3573, 0.0
    %vm3606 = vcmp.ge.f32.partialorder %v3574, 0.0
    %vm3607 = vcmp.ge.f32.partialorder %v3575, 0.0
    %vm3608 = vcmp.ge.f32.partialorder %v3576, 0.0
    %vm3609 = vcmp.ge.f32.partialorder %v3577, 0.0
    %vm3610 = vcmp.ge.f32.partialorder %v3578, 0.0
    %vm3611 = vcmp.ge.f32.partialorder %v3579, 0.0
    %vm3612 = vcmp.ge.f32.partialorder %v3580, 0.0
    %vm3613 = vcmp.ge.f32.partialorder %v3581, 0.0
    %vm3614 = vcmp.ge.f32.partialorder %v3582, 0.0
    %vm3615 = vcmp.ge.f32.partialorder %v3583, 0.0
    %vm3616 = vcmp.ge.f32.partialorder %v3584, 0.0
    %vm3617 = vcmp.ge.f32.partialorder %v3585, 0.0
    %vm3618 = vcmp.ge.f32.partialorder %v3586, 0.0
    %vm3619 = vcmp.ge.f32.partialorder %v3587, 0.0
    %vm3620 = vcmp.ge.f32.partialorder %v3588, 0.0
    %vm3621 = vcmp.ge.f32.partialorder %v3589, 0.0
    %vm3622 = vcmp.ge.f32.partialorder %v3590, 0.0
    %vm3623 = vcmp.ge.f32.partialorder %v3591, 0.0
    %vm3624 = vcmp.ge.f32.partialorder %v3592, 0.0
    %vm3625 = vcmp.ge.f32.partialorder %v3593, 0.0
    %vm3626 = vcmp.ge.f32.partialorder %v3594, 0.0
    %vm3627 = vcmp.ge.f32.partialorder %v3595, 0.0
    %vm3628 = vcmp.ge.f32.partialorder %v3596, 0.0
    %vm3629 = vcmp.ge.f32.partialorder %v3597, 0.0
    %vm3630 = vcmp.ge.f32.partialorder %v3598, 0.0
    %vm3631 = vcmp.ge.f32.partialorder %v3599, 0.0
    %vm3632 = vcmp.ge.f32.partialorder %v3600, 0.0
    %vm3633 = vcmp.ge.f32.partialorder %v3601, 0.0
    %vm3634 = vcmp.ge.f32.partialorder %v3602, 0.0
    %v3635 = vmul.f32 %v3571, 0.2
    %v3636 = vmul.f32 %v3572, 0.2
    %v3637 = vmul.f32 %v3573, 0.2
    %v3638 = vmul.f32 %v3574, 0.2
    %v3639 = vmul.f32 %v3575, 0.2
    %v3640 = vmul.f32 %v3576, 0.2
    %v3641 = vmul.f32 %v3577, 0.2
    %v3642 = vmul.f32 %v3578, 0.2
    %v3643 = vmul.f32 %v3579, 0.2
    %v3644 = vmul.f32 %v3580, 0.2
    %v3645 = vmul.f32 %v3581, 0.2
    %v3646 = vmul.f32 %v3582, 0.2
    %v3647 = vmul.f32 %v3583, 0.2
    %v3648 = vmul.f32 %v3584, 0.2
    %v3649 = vmul.f32 %v3585, 0.2
    %v3650 = vmul.f32 %v3586, 0.2
    %v3651 = vmul.f32 %v3587, 0.2
    %v3652 = vmul.f32 %v3588, 0.2
    %v3653 = vmul.f32 %v3589, 0.2
    %v3654 = vmul.f32 %v3590, 0.2
    %v3655 = vmul.f32 %v3591, 0.2
    %v3656 = vmul.f32 %v3592, 0.2
    %v3657 = vmul.f32 %v3593, 0.2
    %v3658 = vmul.f32 %v3594, 0.2
    %v3659 = vmul.f32 %v3595, 0.2
    %v3660 = vmul.f32 %v3596, 0.2
    %v3661 = vmul.f32 %v3597, 0.2
    %v3662 = vmul.f32 %v3598, 0.2
    %v3663 = vmul.f32 %v3599, 0.2
    %v3664 = vmul.f32 %v3600, 0.2
    %v3665 = vmul.f32 %v3601, 0.2
    %v3666 = vmul.f32 %v3602, 0.2
    %v3667 = vsel %vm3603, %v3571, %v3635
    %v3668 = vsel %vm3604, %v3572, %v3636
    %v3669 = vsel %vm3605, %v3573, %v3637
    %v3670 = vsel %vm3606, %v3574, %v3638
    %v3671 = vsel %vm3607, %v3575, %v3639
    %v3672 = vsel %vm3608, %v3576, %v3640
    %v3673 = vsel %vm3609, %v3577, %v3641
    %v3674 = vsel %vm3610, %v3578, %v3642
    %v3675 = vsel %vm3611, %v3579, %v3643
    %v3676 = vsel %vm3612, %v3580, %v3644
    %v3677 = vsel %vm3613, %v3581, %v3645
    %v3678 = vsel %vm3614, %v3582, %v3646
    %v3679 = vsel %vm3615, %v3583, %v3647
    %v3680 = vsel %vm3616, %v3584, %v3648
    %v3681 = vsel %vm3617, %v3585, %v3649
    %v3682 = vsel %vm3618, %v3586, %v3650
    %v3683 = vsel %vm3619, %v3587, %v3651
    %v3684 = vsel %vm3620, %v3588, %v3652
    %v3685 = vsel %vm3621, %v3589, %v3653
    %v3686 = vsel %vm3622, %v3590, %v3654
    %v3687 = vsel %vm3623, %v3591, %v3655
    %v3688 = vsel %vm3624, %v3592, %v3656
    %v3689 = vsel %vm3625, %v3593, %v3657
    %v3690 = vsel %vm3626, %v3594, %v3658
    %v3691 = vsel %vm3627, %v3595, %v3659
    %v3692 = vsel %vm3628, %v3596, %v3660
    %v3693 = vsel %vm3629, %v3597, %v3661
    %v3694 = vsel %vm3630, %v3598, %v3662
    %v3695 = vsel %vm3631, %v3599, %v3663
    %v3696 = vsel %vm3632, %v3600, %v3664
    %v3697 = vsel %vm3633, %v3601, %v3665
    %v3698 = vsel %vm3634, %v3602, %v3666
    %3700 = vset.pattern.permute.xlu0 1
    %3701 = vperm.xlu0 %3700, %v3667
    %v3702 = vpop.permute.xlu0 %3701
    %3705 = vset.pattern.permute.xlu0 1
    %3706 = vperm.xlu0 %3705, %v3668
    %v3707 = vpop.permute.xlu0 %3706
    %3710 = vset.pattern.permute.xlu0 1
    %3711 = vperm.xlu0 %3710, %v3669
    %v3712 = vpop.permute.xlu0 %3711
    %3715 = vset.pattern.permute.xlu0 1
    %3716 = vperm.xlu0 %3715, %v3670
    %v3717 = vpop.permute.xlu0 %3716
    %3720 = vset.pattern.permute.xlu0 1
    %3721 = vperm.xlu0 %3720, %v3671
    %v3722 = vpop.permute.xlu0 %3721
    %3725 = vset.pattern.permute.xlu0 1
    %3726 = vperm.xlu0 %3725, %v3672
    %v3727 = vpop.permute.xlu0 %3726
    %3730 = vset.pattern.permute.xlu0 1
    %3731 = vperm.xlu0 %3730, %v3673
    %v3732 = vpop.permute.xlu0 %3731
    %3735 = vset.pattern.permute.xlu0 1
    %3736 = vperm.xlu0 %3735, %v3674
    %v3737 = vpop.permute.xlu0 %3736
    %3740 = vset.pattern.permute.xlu0 1
    %3741 = vperm.xlu0 %3740, %v3675
    %v3742 = vpop.permute.xlu0 %3741
    %3745 = vset.pattern.permute.xlu0 1
    %3746 = vperm.xlu0 %3745, %v3676
    %v3747 = vpop.permute.xlu0 %3746
    %3750 = vset.pattern.permute.xlu0 1
    %3751 = vperm.xlu0 %3750, %v3677
    %v3752 = vpop.permute.xlu0 %3751
    %3755 = vset.pattern.permute.xlu0 1
    %3756 = vperm.xlu0 %3755, %v3678
    %v3757 = vpop.permute.xlu0 %3756
    %3760 = vset.pattern.permute.xlu0 1
    %3761 = vperm.xlu0 %3760, %v3679
    %v3762 = vpop.permute.xlu0 %3761
    %3765 = vset.pattern.permute.xlu0 1
    %3766 = vperm.xlu0 %3765, %v3680
    %v3767 = vpop.permute.xlu0 %3766
    %3770 = vset.pattern.permute.xlu0 1
    %3771 = vperm.xlu0 %3770, %v3681
    %v3772 = vpop.permute.xlu0 %3771
    %3775 = vset.pattern.permute.xlu0 1
    %3776 = vperm.xlu0 %3775, %v3682
    %v3777 = vpop.permute.xlu0 %3776
    %3780 = vset.pattern.permute.xlu0 1
    %3781 = vperm.xlu0 %3780, %v3683
    %v3782 = vpop.permute.xlu0 %3781
    %3785 = vset.pattern.permute.xlu0 1
    %3786 = vperm.xlu0 %3785, %v3684
    %v3787 = vpop.permute.xlu0 %3786
    %3790 = vset.pattern.permute.xlu0 1
    %3791 = vperm.xlu0 %3790, %v3685
    %v3792 = vpop.permute.xlu0 %3791
    %3795 = vset.pattern.permute.xlu0 1
    %3796 = vperm.xlu0 %3795, %v3686
    %v3797 = vpop.permute.xlu0 %3796
    %3800 = vset.pattern.permute.xlu0 1
    %3801 = vperm.xlu0 %3800, %v3687
    %v3802 = vpop.permute.xlu0 %3801
    %3805 = vset.pattern.permute.xlu0 1
    %3806 = vperm.xlu0 %3805, %v3688
    %v3807 = vpop.permute.xlu0 %3806
    %3810 = vset.pattern.permute.xlu0 1
    %3811 = vperm.xlu0 %3810, %v3689
    %v3812 = vpop.permute.xlu0 %3811
    %3815 = vset.pattern.permute.xlu0 1
    %3816 = vperm.xlu0 %3815, %v3690
    %v3817 = vpop.permute.xlu0 %3816
    %3820 = vset.pattern.permute.xlu0 1
    %3821 = vperm.xlu0 %3820, %v3691
    %v3822 = vpop.permute.xlu0 %3821
    %3825 = vset.pattern.permute.xlu0 1
    %3826 = vperm.xlu0 %3825, %v3692
    %v3827 = vpop.permute.xlu0 %3826
    %3830 = vset.pattern.permute.xlu0 1
    %3831 = vperm.xlu0 %3830, %v3693
    %v3832 = vpop.permute.xlu0 %3831
    %3835 = vset.pattern.permute.xlu0 1
    %3836 = vperm.xlu0 %3835, %v3694
    %v3837 = vpop.permute.xlu0 %3836
    %3840 = vset.pattern.permute.xlu0 1
    %3841 = vperm.xlu0 %3840, %v3695
    %v3842 = vpop.permute.xlu0 %3841
    %3845 = vset.pattern.permute.xlu0 1
    %3846 = vperm.xlu0 %3845, %v3696
    %v3847 = vpop.permute.xlu0 %3846
    %3850 = vset.pattern.permute.xlu0 1
    %3851 = vperm.xlu0 %3850, %v3697
    %v3852 = vpop.permute.xlu0 %3851
    %3855 = vset.pattern.permute.xlu0 1
    %3856 = vperm.xlu0 %3855, %v3698
    %v3857 = vpop.permute.xlu0 %3856
    %v3859 = vmul.f32 %v3702, %v1274
    %v3860 = vmul.f32 %v3707, %v1274
    %v3861 = vmul.f32 %v3712, %v1274
    %v3862 = vmul.f32 %v3717, %v1274
    %v3863 = vmul.f32 %v3722, %v1274
    %v3864 = vmul.f32 %v3727, %v1274
    %v3865 = vmul.f32 %v3732, %v1274
    %v3866 = vmul.f32 %v3737, %v1274
    %v3867 = vmul.f32 %v3742, %v1274
    %v3868 = vmul.f32 %v3747, %v1274
    %v3869 = vmul.f32 %v3752, %v1274
    %v3870 = vmul.f32 %v3757, %v1274
    %v3871 = vmul.f32 %v3762, %v1274
    %v3872 = vmul.f32 %v3767, %v1274
    %v3873 = vmul.f32 %v3772, %v1274
    %v3874 = vmul.f32 %v3777, %v1274
    %v3875 = vmul.f32 %v3782, %v1274
    %v3876 = vmul.f32 %v3787, %v1274
    %v3877 = vmul.f32 %v3792, %v1274
    %v3878 = vmul.f32 %v3797, %v1274
    %v3879 = vmul.f32 %v3802, %v1274
    %v3880 = vmul.f32 %v3807, %v1274
    %v3881 = vmul.f32 %v3812, %v1274
    %v3882 = vmul.f32 %v3817, %v1274
    %v3883 = vmul.f32 %v3822, %v1274
    %v3884 = vmul.f32 %v3827, %v1274
    %v3885 = vmul.f32 %v3832, %v1274
    %v3886 = vmul.f32 %v3837, %v1274
    %v3887 = vmul.f32 %v3842, %v1274
    %v3888 = vmul.f32 %v3847, %v1274
    %v3889 = vmul.f32 %v3852, %v1274
    %v3890 = vmul.f32 %v3857, %v1274
    %v3891 = vadd.f32 %v3411, %v3859
    %v3892 = vadd.f32 %v3412, %v3860
    %v3893 = vadd.f32 %v3413, %v3861
    %v3894 = vadd.f32 %v3414, %v3862
    %v3895 = vadd.f32 %v3415, %v3863
    %v3896 = vadd.f32 %v3416, %v3864
    %v3897 = vadd.f32 %v3417, %v3865
    %v3898 = vadd.f32 %v3418, %v3866
    %v3899 = vadd.f32 %v3419, %v3867
    %v3900 = vadd.f32 %v3420, %v3868
    %v3901 = vadd.f32 %v3421, %v3869
    %v3902 = vadd.f32 %v3422, %v3870
    %v3903 = vadd.f32 %v3423, %v3871
    %v3904 = vadd.f32 %v3424, %v3872
    %v3905 = vadd.f32 %v3425, %v3873
    %v3906 = vadd.f32 %v3426, %v3874
    %v3907 = vadd.f32 %v3427, %v3875
    %v3908 = vadd.f32 %v3428, %v3876
    %v3909 = vadd.f32 %v3429, %v3877
    %v3910 = vadd.f32 %v3430, %v3878
    %v3911 = vadd.f32 %v3431, %v3879
    %v3912 = vadd.f32 %v3432, %v3880
    %v3913 = vadd.f32 %v3433, %v3881
    %v3914 = vadd.f32 %v3434, %v3882
    %v3915 = vadd.f32 %v3435, %v3883
    %v3916 = vadd.f32 %v3436, %v3884
    %v3917 = vadd.f32 %v3437, %v3885
    %v3918 = vadd.f32 %v3438, %v3886
    %v3919 = vadd.f32 %v3439, %v3887
    %v3920 = vadd.f32 %v3440, %v3888
    %v3921 = vadd.f32 %v3441, %v3889
    %v3922 = vadd.f32 %v3442, %v3890
    %v3923 = vmul.f32 %v2962, %v1340
    %v3924 = vmul.f32 %v2962, %v1342
    %v3925 = vmul.f32 %v2962, %v1344
    %v3926 = vmul.f32 %v2962, %v1346
    %v3927 = vmul.f32 %v2962, %v1348
    %v3928 = vmul.f32 %v2962, %v1350
    %v3929 = vmul.f32 %v2962, %v1352
    %v3930 = vmul.f32 %v2962, %v1354
    %v3931 = vmul.f32 %v2962, %v1356
    %v3932 = vmul.f32 %v2962, %v1358
    %v3933 = vmul.f32 %v2962, %v1360
    %v3934 = vmul.f32 %v2962, %v1362
    %v3935 = vmul.f32 %v2962, %v1364
    %v3936 = vmul.f32 %v2962, %v1366
    %v3937 = vmul.f32 %v2962, %v1368
    %v3938 = vmul.f32 %v2962, %v1370
    %v3939 = vmul.f32 %v2962, %v1372
    %v3940 = vmul.f32 %v2962, %v1374
    %v3941 = vmul.f32 %v2962, %v1376
    %v3942 = vmul.f32 %v2962, %v1378
    %v3943 = vmul.f32 %v2962, %v1380
    %v3944 = vmul.f32 %v2962, %v1382
    %v3945 = vmul.f32 %v2962, %v1384
    %v3946 = vmul.f32 %v2962, %v1386
    %v3947 = vmul.f32 %v2962, %v1388
    %v3948 = vmul.f32 %v2962, %v1390
    %v3949 = vmul.f32 %v2962, %v1392
    %v3950 = vmul.f32 %v2962, %v1394
    %v3951 = vmul.f32 %v2962, %v1396
    %v3952 = vmul.f32 %v2962, %v1398
    %v3953 = vmul.f32 %v2962, %v1400
    %v3954 = vmul.f32 %v2962, %v1402
    %v3955 = vsel %vm274, %v3923, 0.0
    %3956 = vadd.xlane.f32.xlu0 %v3955
    %v3957 = vpop.xlane.xlu0 %3956
    %v3958 = vsel %vm274, %v3924, 0.0
    %3959 = vadd.xlane.f32.xlu0 %v3958
    %v3960 = vpop.xlane.xlu0 %3959
    %v3961 = vsel %vm274, %v3925, 0.0
    %3962 = vadd.xlane.f32.xlu0 %v3961
    %v3963 = vpop.xlane.xlu0 %3962
    %v3964 = vsel %vm274, %v3926, 0.0
    %3965 = vadd.xlane.f32.xlu0 %v3964
    %v3966 = vpop.xlane.xlu0 %3965
    %v3967 = vsel %vm274, %v3927, 0.0
    %3968 = vadd.xlane.f32.xlu0 %v3967
    %v3969 = vpop.xlane.xlu0 %3968
    %v3970 = vsel %vm274, %v3928, 0.0
    %3971 = vadd.xlane.f32.xlu0 %v3970
    %v3972 = vpop.xlane.xlu0 %3971
    %v3973 = vsel %vm274, %v3929, 0.0
    %3974 = vadd.xlane.f32.xlu0 %v3973
    %v3975 = vpop.xlane.xlu0 %3974
    %v3976 = vsel %vm274, %v3930, 0.0
    %3977 = vadd.xlane.f32.xlu0 %v3976
    %v3978 = vpop.xlane.xlu0 %3977
    %v3979 = vsel %vm274, %v3931, 0.0
    %3980 = vadd.xlane.f32.xlu0 %v3979
    %v3981 = vpop.xlane.xlu0 %3980
    %v3982 = vsel %vm274, %v3932, 0.0
    %3983 = vadd.xlane.f32.xlu0 %v3982
    %v3984 = vpop.xlane.xlu0 %3983
    %v3985 = vsel %vm274, %v3933, 0.0
    %3986 = vadd.xlane.f32.xlu0 %v3985
    %v3987 = vpop.xlane.xlu0 %3986
    %v3988 = vsel %vm274, %v3934, 0.0
    %3989 = vadd.xlane.f32.xlu0 %v3988
    %v3990 = vpop.xlane.xlu0 %3989
    %v3991 = vsel %vm274, %v3935, 0.0
    %3992 = vadd.xlane.f32.xlu0 %v3991
    %v3993 = vpop.xlane.xlu0 %3992
    %v3994 = vsel %vm274, %v3936, 0.0
    %3995 = vadd.xlane.f32.xlu0 %v3994
    %v3996 = vpop.xlane.xlu0 %3995
    %v3997 = vsel %vm274, %v3937, 0.0
    %3998 = vadd.xlane.f32.xlu0 %v3997
    %v3999 = vpop.xlane.xlu0 %3998
    %v4000 = vsel %vm274, %v3938, 0.0
    %4001 = vadd.xlane.f32.xlu0 %v4000
    %v4002 = vpop.xlane.xlu0 %4001
    %v4003 = vsel %vm274, %v3939, 0.0
    %4004 = vadd.xlane.f32.xlu0 %v4003
    %v4005 = vpop.xlane.xlu0 %4004
    %v4006 = vsel %vm274, %v3940, 0.0
    %4007 = vadd.xlane.f32.xlu0 %v4006
    %v4008 = vpop.xlane.xlu0 %4007
    %v4009 = vsel %vm274, %v3941, 0.0
    %4010 = vadd.xlane.f32.xlu0 %v4009
    %v4011 = vpop.xlane.xlu0 %4010
    %v4012 = vsel %vm274, %v3942, 0.0
    %4013 = vadd.xlane.f32.xlu0 %v4012
    %v4014 = vpop.xlane.xlu0 %4013
    %v4015 = vsel %vm274, %v3943, 0.0
    %4016 = vadd.xlane.f32.xlu0 %v4015
    %v4017 = vpop.xlane.xlu0 %4016
    %v4018 = vsel %vm274, %v3944, 0.0
    %4019 = vadd.xlane.f32.xlu0 %v4018
    %v4020 = vpop.xlane.xlu0 %4019
    %v4021 = vsel %vm274, %v3945, 0.0
    %4022 = vadd.xlane.f32.xlu0 %v4021
    %v4023 = vpop.xlane.xlu0 %4022
    %v4024 = vsel %vm274, %v3946, 0.0
    %4025 = vadd.xlane.f32.xlu0 %v4024
    %v4026 = vpop.xlane.xlu0 %4025
    %v4027 = vsel %vm274, %v3947, 0.0
    %4028 = vadd.xlane.f32.xlu0 %v4027
    %v4029 = vpop.xlane.xlu0 %4028
    %v4030 = vsel %vm274, %v3948, 0.0
    %4031 = vadd.xlane.f32.xlu0 %v4030
    %v4032 = vpop.xlane.xlu0 %4031
    %v4033 = vsel %vm274, %v3949, 0.0
    %4034 = vadd.xlane.f32.xlu0 %v4033
    %v4035 = vpop.xlane.xlu0 %4034
    %v4036 = vsel %vm274, %v3950, 0.0
    %4037 = vadd.xlane.f32.xlu0 %v4036
    %v4038 = vpop.xlane.xlu0 %4037
    %v4039 = vsel %vm274, %v3951, 0.0
    %4040 = vadd.xlane.f32.xlu0 %v4039
    %v4041 = vpop.xlane.xlu0 %4040
    %v4042 = vsel %vm274, %v3952, 0.0
    %4043 = vadd.xlane.f32.xlu0 %v4042
    %v4044 = vpop.xlane.xlu0 %4043
    %v4045 = vsel %vm274, %v3953, 0.0
    %4046 = vadd.xlane.f32.xlu0 %v4045
    %v4047 = vpop.xlane.xlu0 %4046
    %v4048 = vsel %vm274, %v3954, 0.0
    %4049 = vadd.xlane.f32.xlu0 %v4048
    %v4050 = vpop.xlane.xlu0 %4049
    %v4051 = vadd.f32 %v3957, %v203
    %v4052 = vadd.f32 %v3960, %v204
    %v4053 = vadd.f32 %v3963, %v205
    %v4054 = vadd.f32 %v3966, %v206
    %v4055 = vadd.f32 %v3969, %v207
    %v4056 = vadd.f32 %v3972, %v208
    %v4057 = vadd.f32 %v3975, %v209
    %v4058 = vadd.f32 %v3978, %v210
    %v4059 = vadd.f32 %v3981, %v211
    %v4060 = vadd.f32 %v3984, %v212
    %v4061 = vadd.f32 %v3987, %v213
    %v4062 = vadd.f32 %v3990, %v214
    %v4063 = vadd.f32 %v3993, %v215
    %v4064 = vadd.f32 %v3996, %v216
    %v4065 = vadd.f32 %v3999, %v217
    %v4066 = vadd.f32 %v4002, %v218
    %v4067 = vadd.f32 %v4005, %v219
    %v4068 = vadd.f32 %v4008, %v220
    %v4069 = vadd.f32 %v4011, %v221
    %v4070 = vadd.f32 %v4014, %v222
    %v4071 = vadd.f32 %v4017, %v223
    %v4072 = vadd.f32 %v4020, %v224
    %v4073 = vadd.f32 %v4023, %v225
    %v4074 = vadd.f32 %v4026, %v226
    %v4075 = vadd.f32 %v4029, %v227
    %v4076 = vadd.f32 %v4032, %v228
    %v4077 = vadd.f32 %v4035, %v229
    %v4078 = vadd.f32 %v4038, %v230
    %v4079 = vadd.f32 %v4041, %v231
    %v4080 = vadd.f32 %v4044, %v232
    %v4081 = vadd.f32 %v4047, %v233
    %v4082 = vadd.f32 %v4050, %v234
    %vm4083 = vcmp.ge.f32.partialorder %v4051, 0.0
    %vm4084 = vcmp.ge.f32.partialorder %v4052, 0.0
    %vm4085 = vcmp.ge.f32.partialorder %v4053, 0.0
    %vm4086 = vcmp.ge.f32.partialorder %v4054, 0.0
    %vm4087 = vcmp.ge.f32.partialorder %v4055, 0.0
    %vm4088 = vcmp.ge.f32.partialorder %v4056, 0.0
    %vm4089 = vcmp.ge.f32.partialorder %v4057, 0.0
    %vm4090 = vcmp.ge.f32.partialorder %v4058, 0.0
    %vm4091 = vcmp.ge.f32.partialorder %v4059, 0.0
    %vm4092 = vcmp.ge.f32.partialorder %v4060, 0.0
    %vm4093 = vcmp.ge.f32.partialorder %v4061, 0.0
    %vm4094 = vcmp.ge.f32.partialorder %v4062, 0.0
    %vm4095 = vcmp.ge.f32.partialorder %v4063, 0.0
    %vm4096 = vcmp.ge.f32.partialorder %v4064, 0.0
    %vm4097 = vcmp.ge.f32.partialorder %v4065, 0.0
    %vm4098 = vcmp.ge.f32.partialorder %v4066, 0.0
    %vm4099 = vcmp.ge.f32.partialorder %v4067, 0.0
    %vm4100 = vcmp.ge.f32.partialorder %v4068, 0.0
    %vm4101 = vcmp.ge.f32.partialorder %v4069, 0.0
    %vm4102 = vcmp.ge.f32.partialorder %v4070, 0.0
    %vm4103 = vcmp.ge.f32.partialorder %v4071, 0.0
    %vm4104 = vcmp.ge.f32.partialorder %v4072, 0.0
    %vm4105 = vcmp.ge.f32.partialorder %v4073, 0.0
    %vm4106 = vcmp.ge.f32.partialorder %v4074, 0.0
    %vm4107 = vcmp.ge.f32.partialorder %v4075, 0.0
    %vm4108 = vcmp.ge.f32.partialorder %v4076, 0.0
    %vm4109 = vcmp.ge.f32.partialorder %v4077, 0.0
    %vm4110 = vcmp.ge.f32.partialorder %v4078, 0.0
    %vm4111 = vcmp.ge.f32.partialorder %v4079, 0.0
    %vm4112 = vcmp.ge.f32.partialorder %v4080, 0.0
    %vm4113 = vcmp.ge.f32.partialorder %v4081, 0.0
    %vm4114 = vcmp.ge.f32.partialorder %v4082, 0.0
    %v4115 = vmul.f32 %v4051, 0.2
    %v4116 = vmul.f32 %v4052, 0.2
    %v4117 = vmul.f32 %v4053, 0.2
    %v4118 = vmul.f32 %v4054, 0.2
    %v4119 = vmul.f32 %v4055, 0.2
    %v4120 = vmul.f32 %v4056, 0.2
    %v4121 = vmul.f32 %v4057, 0.2
    %v4122 = vmul.f32 %v4058, 0.2
    %v4123 = vmul.f32 %v4059, 0.2
    %v4124 = vmul.f32 %v4060, 0.2
    %v4125 = vmul.f32 %v4061, 0.2
    %v4126 = vmul.f32 %v4062, 0.2
    %v4127 = vmul.f32 %v4063, 0.2
    %v4128 = vmul.f32 %v4064, 0.2
    %v4129 = vmul.f32 %v4065, 0.2
    %v4130 = vmul.f32 %v4066, 0.2
    %v4131 = vmul.f32 %v4067, 0.2
    %v4132 = vmul.f32 %v4068, 0.2
    %v4133 = vmul.f32 %v4069, 0.2
    %v4134 = vmul.f32 %v4070, 0.2
    %v4135 = vmul.f32 %v4071, 0.2
    %v4136 = vmul.f32 %v4072, 0.2
    %v4137 = vmul.f32 %v4073, 0.2
    %v4138 = vmul.f32 %v4074, 0.2
    %v4139 = vmul.f32 %v4075, 0.2
    %v4140 = vmul.f32 %v4076, 0.2
    %v4141 = vmul.f32 %v4077, 0.2
    %v4142 = vmul.f32 %v4078, 0.2
    %v4143 = vmul.f32 %v4079, 0.2
    %v4144 = vmul.f32 %v4080, 0.2
    %v4145 = vmul.f32 %v4081, 0.2
    %v4146 = vmul.f32 %v4082, 0.2
    %v4147 = vsel %vm4083, %v4051, %v4115
    %v4148 = vsel %vm4084, %v4052, %v4116
    %v4149 = vsel %vm4085, %v4053, %v4117
    %v4150 = vsel %vm4086, %v4054, %v4118
    %v4151 = vsel %vm4087, %v4055, %v4119
    %v4152 = vsel %vm4088, %v4056, %v4120
    %v4153 = vsel %vm4089, %v4057, %v4121
    %v4154 = vsel %vm4090, %v4058, %v4122
    %v4155 = vsel %vm4091, %v4059, %v4123
    %v4156 = vsel %vm4092, %v4060, %v4124
    %v4157 = vsel %vm4093, %v4061, %v4125
    %v4158 = vsel %vm4094, %v4062, %v4126
    %v4159 = vsel %vm4095, %v4063, %v4127
    %v4160 = vsel %vm4096, %v4064, %v4128
    %v4161 = vsel %vm4097, %v4065, %v4129
    %v4162 = vsel %vm4098, %v4066, %v4130
    %v4163 = vsel %vm4099, %v4067, %v4131
    %v4164 = vsel %vm4100, %v4068, %v4132
    %v4165 = vsel %vm4101, %v4069, %v4133
    %v4166 = vsel %vm4102, %v4070, %v4134
    %v4167 = vsel %vm4103, %v4071, %v4135
    %v4168 = vsel %vm4104, %v4072, %v4136
    %v4169 = vsel %vm4105, %v4073, %v4137
    %v4170 = vsel %vm4106, %v4074, %v4138
    %v4171 = vsel %vm4107, %v4075, %v4139
    %v4172 = vsel %vm4108, %v4076, %v4140
    %v4173 = vsel %vm4109, %v4077, %v4141
    %v4174 = vsel %vm4110, %v4078, %v4142
    %v4175 = vsel %vm4111, %v4079, %v4143
    %v4176 = vsel %vm4112, %v4080, %v4144
    %v4177 = vsel %vm4113, %v4081, %v4145
    %v4178 = vsel %vm4114, %v4082, %v4146
    %4180 = vset.pattern.permute.xlu0 2
    %4181 = vperm.xlu0 %4180, %v4147
    %v4182 = vpop.permute.xlu0 %4181
    %4185 = vset.pattern.permute.xlu0 2
    %4186 = vperm.xlu0 %4185, %v4148
    %v4187 = vpop.permute.xlu0 %4186
    %4190 = vset.pattern.permute.xlu0 2
    %4191 = vperm.xlu0 %4190, %v4149
    %v4192 = vpop.permute.xlu0 %4191
    %4195 = vset.pattern.permute.xlu0 2
    %4196 = vperm.xlu0 %4195, %v4150
    %v4197 = vpop.permute.xlu0 %4196
    %4200 = vset.pattern.permute.xlu0 2
    %4201 = vperm.xlu0 %4200, %v4151
    %v4202 = vpop.permute.xlu0 %4201
    %4205 = vset.pattern.permute.xlu0 2
    %4206 = vperm.xlu0 %4205, %v4152
    %v4207 = vpop.permute.xlu0 %4206
    %4210 = vset.pattern.permute.xlu0 2
    %4211 = vperm.xlu0 %4210, %v4153
    %v4212 = vpop.permute.xlu0 %4211
    %4215 = vset.pattern.permute.xlu0 2
    %4216 = vperm.xlu0 %4215, %v4154
    %v4217 = vpop.permute.xlu0 %4216
    %4220 = vset.pattern.permute.xlu0 2
    %4221 = vperm.xlu0 %4220, %v4155
    %v4222 = vpop.permute.xlu0 %4221
    %4225 = vset.pattern.permute.xlu0 2
    %4226 = vperm.xlu0 %4225, %v4156
    %v4227 = vpop.permute.xlu0 %4226
    %4230 = vset.pattern.permute.xlu0 2
    %4231 = vperm.xlu0 %4230, %v4157
    %v4232 = vpop.permute.xlu0 %4231
    %4235 = vset.pattern.permute.xlu0 2
    %4236 = vperm.xlu0 %4235, %v4158
    %v4237 = vpop.permute.xlu0 %4236
    %4240 = vset.pattern.permute.xlu0 2
    %4241 = vperm.xlu0 %4240, %v4159
    %v4242 = vpop.permute.xlu0 %4241
    %4245 = vset.pattern.permute.xlu0 2
    %4246 = vperm.xlu0 %4245, %v4160
    %v4247 = vpop.permute.xlu0 %4246
    %4250 = vset.pattern.permute.xlu0 2
    %4251 = vperm.xlu0 %4250, %v4161
    %v4252 = vpop.permute.xlu0 %4251
    %4255 = vset.pattern.permute.xlu0 2
    %4256 = vperm.xlu0 %4255, %v4162
    %v4257 = vpop.permute.xlu0 %4256
    %4260 = vset.pattern.permute.xlu0 2
    %4261 = vperm.xlu0 %4260, %v4163
    %v4262 = vpop.permute.xlu0 %4261
    %4265 = vset.pattern.permute.xlu0 2
    %4266 = vperm.xlu0 %4265, %v4164
    %v4267 = vpop.permute.xlu0 %4266
    %4270 = vset.pattern.permute.xlu0 2
    %4271 = vperm.xlu0 %4270, %v4165
    %v4272 = vpop.permute.xlu0 %4271
    %4275 = vset.pattern.permute.xlu0 2
    %4276 = vperm.xlu0 %4275, %v4166
    %v4277 = vpop.permute.xlu0 %4276
    %4280 = vset.pattern.permute.xlu0 2
    %4281 = vperm.xlu0 %4280, %v4167
    %v4282 = vpop.permute.xlu0 %4281
    %4285 = vset.pattern.permute.xlu0 2
    %4286 = vperm.xlu0 %4285, %v4168
    %v4287 = vpop.permute.xlu0 %4286
    %4290 = vset.pattern.permute.xlu0 2
    %4291 = vperm.xlu0 %4290, %v4169
    %v4292 = vpop.permute.xlu0 %4291
    %4295 = vset.pattern.permute.xlu0 2
    %4296 = vperm.xlu0 %4295, %v4170
    %v4297 = vpop.permute.xlu0 %4296
    %4300 = vset.pattern.permute.xlu0 2
    %4301 = vperm.xlu0 %4300, %v4171
    %v4302 = vpop.permute.xlu0 %4301
    %4305 = vset.pattern.permute.xlu0 2
    %4306 = vperm.xlu0 %4305, %v4172
    %v4307 = vpop.permute.xlu0 %4306
    %4310 = vset.pattern.permute.xlu0 2
    %4311 = vperm.xlu0 %4310, %v4173
    %v4312 = vpop.permute.xlu0 %4311
    %4315 = vset.pattern.permute.xlu0 2
    %4316 = vperm.xlu0 %4315, %v4174
    %v4317 = vpop.permute.xlu0 %4316
    %4320 = vset.pattern.permute.xlu0 2
    %4321 = vperm.xlu0 %4320, %v4175
    %v4322 = vpop.permute.xlu0 %4321
    %4325 = vset.pattern.permute.xlu0 2
    %4326 = vperm.xlu0 %4325, %v4176
    %v4327 = vpop.permute.xlu0 %4326
    %4330 = vset.pattern.permute.xlu0 2
    %4331 = vperm.xlu0 %4330, %v4177
    %v4332 = vpop.permute.xlu0 %4331
    %4335 = vset.pattern.permute.xlu0 2
    %4336 = vperm.xlu0 %4335, %v4178
    %v4337 = vpop.permute.xlu0 %4336
    %v4339 = vmul.f32 %v4182, %v1854
    %v4340 = vmul.f32 %v4187, %v1854
    %v4341 = vmul.f32 %v4192, %v1854
    %v4342 = vmul.f32 %v4197, %v1854
    %v4343 = vmul.f32 %v4202, %v1854
    %v4344 = vmul.f32 %v4207, %v1854
    %v4345 = vmul.f32 %v4212, %v1854
    %v4346 = vmul.f32 %v4217, %v1854
    %v4347 = vmul.f32 %v4222, %v1854
    %v4348 = vmul.f32 %v4227, %v1854
    %v4349 = vmul.f32 %v4232, %v1854
    %v4350 = vmul.f32 %v4237, %v1854
    %v4351 = vmul.f32 %v4242, %v1854
    %v4352 = vmul.f32 %v4247, %v1854
    %v4353 = vmul.f32 %v4252, %v1854
    %v4354 = vmul.f32 %v4257, %v1854
    %v4355 = vmul.f32 %v4262, %v1854
    %v4356 = vmul.f32 %v4267, %v1854
    %v4357 = vmul.f32 %v4272, %v1854
    %v4358 = vmul.f32 %v4277, %v1854
    %v4359 = vmul.f32 %v4282, %v1854
    %v4360 = vmul.f32 %v4287, %v1854
    %v4361 = vmul.f32 %v4292, %v1854
    %v4362 = vmul.f32 %v4297, %v1854
    %v4363 = vmul.f32 %v4302, %v1854
    %v4364 = vmul.f32 %v4307, %v1854
    %v4365 = vmul.f32 %v4312, %v1854
    %v4366 = vmul.f32 %v4317, %v1854
    %v4367 = vmul.f32 %v4322, %v1854
    %v4368 = vmul.f32 %v4327, %v1854
    %v4369 = vmul.f32 %v4332, %v1854
    %v4370 = vmul.f32 %v4337, %v1854
    %v4371 = vadd.f32 %v3891, %v4339
    %v4372 = vadd.f32 %v3892, %v4340
    %v4373 = vadd.f32 %v3893, %v4341
    %v4374 = vadd.f32 %v3894, %v4342
    %v4375 = vadd.f32 %v3895, %v4343
    %v4376 = vadd.f32 %v3896, %v4344
    %v4377 = vadd.f32 %v3897, %v4345
    %v4378 = vadd.f32 %v3898, %v4346
    %v4379 = vadd.f32 %v3899, %v4347
    %v4380 = vadd.f32 %v3900, %v4348
    %v4381 = vadd.f32 %v3901, %v4349
    %v4382 = vadd.f32 %v3902, %v4350
    %v4383 = vadd.f32 %v3903, %v4351
    %v4384 = vadd.f32 %v3904, %v4352
    %v4385 = vadd.f32 %v3905, %v4353
    %v4386 = vadd.f32 %v3906, %v4354
    %v4387 = vadd.f32 %v3907, %v4355
    %v4388 = vadd.f32 %v3908, %v4356
    %v4389 = vadd.f32 %v3909, %v4357
    %v4390 = vadd.f32 %v3910, %v4358
    %v4391 = vadd.f32 %v3911, %v4359
    %v4392 = vadd.f32 %v3912, %v4360
    %v4393 = vadd.f32 %v3913, %v4361
    %v4394 = vadd.f32 %v3914, %v4362
    %v4395 = vadd.f32 %v3915, %v4363
    %v4396 = vadd.f32 %v3916, %v4364
    %v4397 = vadd.f32 %v3917, %v4365
    %v4398 = vadd.f32 %v3918, %v4366
    %v4399 = vadd.f32 %v3919, %v4367
    %v4400 = vadd.f32 %v3920, %v4368
    %v4401 = vadd.f32 %v3921, %v4369
    %v4402 = vadd.f32 %v3922, %v4370
    %v4403 = vmul.f32 %v2962, %v1920
    %v4404 = vmul.f32 %v2962, %v1922
    %v4405 = vmul.f32 %v2962, %v1924
    %v4406 = vmul.f32 %v2962, %v1926
    %v4407 = vmul.f32 %v2962, %v1928
    %v4408 = vmul.f32 %v2962, %v1930
    %v4409 = vmul.f32 %v2962, %v1932
    %v4410 = vmul.f32 %v2962, %v1934
    %v4411 = vmul.f32 %v2962, %v1936
    %v4412 = vmul.f32 %v2962, %v1938
    %v4413 = vmul.f32 %v2962, %v1940
    %v4414 = vmul.f32 %v2962, %v1942
    %v4415 = vmul.f32 %v2962, %v1944
    %v4416 = vmul.f32 %v2962, %v1946
    %v4417 = vmul.f32 %v2962, %v1948
    %v4418 = vmul.f32 %v2962, %v1950
    %v4419 = vmul.f32 %v2962, %v1952
    %v4420 = vmul.f32 %v2962, %v1954
    %v4421 = vmul.f32 %v2962, %v1956
    %v4422 = vmul.f32 %v2962, %v1958
    %v4423 = vmul.f32 %v2962, %v1960
    %v4424 = vmul.f32 %v2962, %v1962
    %v4425 = vmul.f32 %v2962, %v1964
    %v4426 = vmul.f32 %v2962, %v1966
    %v4427 = vmul.f32 %v2962, %v1968
    %v4428 = vmul.f32 %v2962, %v1970
    %v4429 = vmul.f32 %v2962, %v1972
    %v4430 = vmul.f32 %v2962, %v1974
    %v4431 = vmul.f32 %v2962, %v1976
    %v4432 = vmul.f32 %v2962, %v1978
    %v4433 = vmul.f32 %v2962, %v1980
    %v4434 = vmul.f32 %v2962, %v1982
    %v4435 = vsel %vm274, %v4403, 0.0
    %4436 = vadd.xlane.f32.xlu0 %v4435
    %v4437 = vpop.xlane.xlu0 %4436
    %v4438 = vsel %vm274, %v4404, 0.0
    %4439 = vadd.xlane.f32.xlu0 %v4438
    %v4440 = vpop.xlane.xlu0 %4439
    %v4441 = vsel %vm274, %v4405, 0.0
    %4442 = vadd.xlane.f32.xlu0 %v4441
    %v4443 = vpop.xlane.xlu0 %4442
    %v4444 = vsel %vm274, %v4406, 0.0
    %4445 = vadd.xlane.f32.xlu0 %v4444
    %v4446 = vpop.xlane.xlu0 %4445
    %v4447 = vsel %vm274, %v4407, 0.0
    %4448 = vadd.xlane.f32.xlu0 %v4447
    %v4449 = vpop.xlane.xlu0 %4448
    %v4450 = vsel %vm274, %v4408, 0.0
    %4451 = vadd.xlane.f32.xlu0 %v4450
    %v4452 = vpop.xlane.xlu0 %4451
    %v4453 = vsel %vm274, %v4409, 0.0
    %4454 = vadd.xlane.f32.xlu0 %v4453
    %v4455 = vpop.xlane.xlu0 %4454
    %v4456 = vsel %vm274, %v4410, 0.0
    %4457 = vadd.xlane.f32.xlu0 %v4456
    %v4458 = vpop.xlane.xlu0 %4457
    %v4459 = vsel %vm274, %v4411, 0.0
    %4460 = vadd.xlane.f32.xlu0 %v4459
    %v4461 = vpop.xlane.xlu0 %4460
    %v4462 = vsel %vm274, %v4412, 0.0
    %4463 = vadd.xlane.f32.xlu0 %v4462
    %v4464 = vpop.xlane.xlu0 %4463
    %v4465 = vsel %vm274, %v4413, 0.0
    %4466 = vadd.xlane.f32.xlu0 %v4465
    %v4467 = vpop.xlane.xlu0 %4466
    %v4468 = vsel %vm274, %v4414, 0.0
    %4469 = vadd.xlane.f32.xlu0 %v4468
    %v4470 = vpop.xlane.xlu0 %4469
    %v4471 = vsel %vm274, %v4415, 0.0
    %4472 = vadd.xlane.f32.xlu0 %v4471
    %v4473 = vpop.xlane.xlu0 %4472
    %v4474 = vsel %vm274, %v4416, 0.0
    %4475 = vadd.xlane.f32.xlu0 %v4474
    %v4476 = vpop.xlane.xlu0 %4475
    %v4477 = vsel %vm274, %v4417, 0.0
    %4478 = vadd.xlane.f32.xlu0 %v4477
    %v4479 = vpop.xlane.xlu0 %4478
    %v4480 = vsel %vm274, %v4418, 0.0
    %4481 = vadd.xlane.f32.xlu0 %v4480
    %v4482 = vpop.xlane.xlu0 %4481
    %v4483 = vsel %vm274, %v4419, 0.0
    %4484 = vadd.xlane.f32.xlu0 %v4483
    %v4485 = vpop.xlane.xlu0 %4484
    %v4486 = vsel %vm274, %v4420, 0.0
    %4487 = vadd.xlane.f32.xlu0 %v4486
    %v4488 = vpop.xlane.xlu0 %4487
    %v4489 = vsel %vm274, %v4421, 0.0
    %4490 = vadd.xlane.f32.xlu0 %v4489
    %v4491 = vpop.xlane.xlu0 %4490
    %v4492 = vsel %vm274, %v4422, 0.0
    %4493 = vadd.xlane.f32.xlu0 %v4492
    %v4494 = vpop.xlane.xlu0 %4493
    %v4495 = vsel %vm274, %v4423, 0.0
    %4496 = vadd.xlane.f32.xlu0 %v4495
    %v4497 = vpop.xlane.xlu0 %4496
    %v4498 = vsel %vm274, %v4424, 0.0
    %4499 = vadd.xlane.f32.xlu0 %v4498
    %v4500 = vpop.xlane.xlu0 %4499
    %v4501 = vsel %vm274, %v4425, 0.0
    %4502 = vadd.xlane.f32.xlu0 %v4501
    %v4503 = vpop.xlane.xlu0 %4502
    %v4504 = vsel %vm274, %v4426, 0.0
    %4505 = vadd.xlane.f32.xlu0 %v4504
    %v4506 = vpop.xlane.xlu0 %4505
    %v4507 = vsel %vm274, %v4427, 0.0
    %4508 = vadd.xlane.f32.xlu0 %v4507
    %v4509 = vpop.xlane.xlu0 %4508
    %v4510 = vsel %vm274, %v4428, 0.0
    %4511 = vadd.xlane.f32.xlu0 %v4510
    %v4512 = vpop.xlane.xlu0 %4511
    %v4513 = vsel %vm274, %v4429, 0.0
    %4514 = vadd.xlane.f32.xlu0 %v4513
    %v4515 = vpop.xlane.xlu0 %4514
    %v4516 = vsel %vm274, %v4430, 0.0
    %4517 = vadd.xlane.f32.xlu0 %v4516
    %v4518 = vpop.xlane.xlu0 %4517
    %v4519 = vsel %vm274, %v4431, 0.0
    %4520 = vadd.xlane.f32.xlu0 %v4519
    %v4521 = vpop.xlane.xlu0 %4520
    %v4522 = vsel %vm274, %v4432, 0.0
    %4523 = vadd.xlane.f32.xlu0 %v4522
    %v4524 = vpop.xlane.xlu0 %4523
    %v4525 = vsel %vm274, %v4433, 0.0
    %4526 = vadd.xlane.f32.xlu0 %v4525
    %v4527 = vpop.xlane.xlu0 %4526
    %v4528 = vsel %vm274, %v4434, 0.0
    %4529 = vadd.xlane.f32.xlu0 %v4528
    %v4530 = vpop.xlane.xlu0 %4529
    %v4531 = vadd.f32 %v4437, %v203
    %v4532 = vadd.f32 %v4440, %v204
    %v4533 = vadd.f32 %v4443, %v205
    %v4534 = vadd.f32 %v4446, %v206
    %v4535 = vadd.f32 %v4449, %v207
    %v4536 = vadd.f32 %v4452, %v208
    %v4537 = vadd.f32 %v4455, %v209
    %v4538 = vadd.f32 %v4458, %v210
    %v4539 = vadd.f32 %v4461, %v211
    %v4540 = vadd.f32 %v4464, %v212
    %v4541 = vadd.f32 %v4467, %v213
    %v4542 = vadd.f32 %v4470, %v214
    %v4543 = vadd.f32 %v4473, %v215
    %v4544 = vadd.f32 %v4476, %v216
    %v4545 = vadd.f32 %v4479, %v217
    %v4546 = vadd.f32 %v4482, %v218
    %v4547 = vadd.f32 %v4485, %v219
    %v4548 = vadd.f32 %v4488, %v220
    %v4549 = vadd.f32 %v4491, %v221
    %v4550 = vadd.f32 %v4494, %v222
    %v4551 = vadd.f32 %v4497, %v223
    %v4552 = vadd.f32 %v4500, %v224
    %v4553 = vadd.f32 %v4503, %v225
    %v4554 = vadd.f32 %v4506, %v226
    %v4555 = vadd.f32 %v4509, %v227
    %v4556 = vadd.f32 %v4512, %v228
    %v4557 = vadd.f32 %v4515, %v229
    %v4558 = vadd.f32 %v4518, %v230
    %v4559 = vadd.f32 %v4521, %v231
    %v4560 = vadd.f32 %v4524, %v232
    %v4561 = vadd.f32 %v4527, %v233
    %v4562 = vadd.f32 %v4530, %v234
    %vm4563 = vcmp.ge.f32.partialorder %v4531, 0.0
    %vm4564 = vcmp.ge.f32.partialorder %v4532, 0.0
    %vm4565 = vcmp.ge.f32.partialorder %v4533, 0.0
    %vm4566 = vcmp.ge.f32.partialorder %v4534, 0.0
    %vm4567 = vcmp.ge.f32.partialorder %v4535, 0.0
    %vm4568 = vcmp.ge.f32.partialorder %v4536, 0.0
    %vm4569 = vcmp.ge.f32.partialorder %v4537, 0.0
    %vm4570 = vcmp.ge.f32.partialorder %v4538, 0.0
    %vm4571 = vcmp.ge.f32.partialorder %v4539, 0.0
    %vm4572 = vcmp.ge.f32.partialorder %v4540, 0.0
    %vm4573 = vcmp.ge.f32.partialorder %v4541, 0.0
    %vm4574 = vcmp.ge.f32.partialorder %v4542, 0.0
    %vm4575 = vcmp.ge.f32.partialorder %v4543, 0.0
    %vm4576 = vcmp.ge.f32.partialorder %v4544, 0.0
    %vm4577 = vcmp.ge.f32.partialorder %v4545, 0.0
    %vm4578 = vcmp.ge.f32.partialorder %v4546, 0.0
    %vm4579 = vcmp.ge.f32.partialorder %v4547, 0.0
    %vm4580 = vcmp.ge.f32.partialorder %v4548, 0.0
    %vm4581 = vcmp.ge.f32.partialorder %v4549, 0.0
    %vm4582 = vcmp.ge.f32.partialorder %v4550, 0.0
    %vm4583 = vcmp.ge.f32.partialorder %v4551, 0.0
    %vm4584 = vcmp.ge.f32.partialorder %v4552, 0.0
    %vm4585 = vcmp.ge.f32.partialorder %v4553, 0.0
    %vm4586 = vcmp.ge.f32.partialorder %v4554, 0.0
    %vm4587 = vcmp.ge.f32.partialorder %v4555, 0.0
    %vm4588 = vcmp.ge.f32.partialorder %v4556, 0.0
    %vm4589 = vcmp.ge.f32.partialorder %v4557, 0.0
    %vm4590 = vcmp.ge.f32.partialorder %v4558, 0.0
    %vm4591 = vcmp.ge.f32.partialorder %v4559, 0.0
    %vm4592 = vcmp.ge.f32.partialorder %v4560, 0.0
    %vm4593 = vcmp.ge.f32.partialorder %v4561, 0.0
    %vm4594 = vcmp.ge.f32.partialorder %v4562, 0.0
    %v4595 = vmul.f32 %v4531, 0.2
    %v4596 = vmul.f32 %v4532, 0.2
    %v4597 = vmul.f32 %v4533, 0.2
    %v4598 = vmul.f32 %v4534, 0.2
    %v4599 = vmul.f32 %v4535, 0.2
    %v4600 = vmul.f32 %v4536, 0.2
    %v4601 = vmul.f32 %v4537, 0.2
    %v4602 = vmul.f32 %v4538, 0.2
    %v4603 = vmul.f32 %v4539, 0.2
    %v4604 = vmul.f32 %v4540, 0.2
    %v4605 = vmul.f32 %v4541, 0.2
    %v4606 = vmul.f32 %v4542, 0.2
    %v4607 = vmul.f32 %v4543, 0.2
    %v4608 = vmul.f32 %v4544, 0.2
    %v4609 = vmul.f32 %v4545, 0.2
    %v4610 = vmul.f32 %v4546, 0.2
    %v4611 = vmul.f32 %v4547, 0.2
    %v4612 = vmul.f32 %v4548, 0.2
    %v4613 = vmul.f32 %v4549, 0.2
    %v4614 = vmul.f32 %v4550, 0.2
    %v4615 = vmul.f32 %v4551, 0.2
    %v4616 = vmul.f32 %v4552, 0.2
    %v4617 = vmul.f32 %v4553, 0.2
    %v4618 = vmul.f32 %v4554, 0.2
    %v4619 = vmul.f32 %v4555, 0.2
    %v4620 = vmul.f32 %v4556, 0.2
    %v4621 = vmul.f32 %v4557, 0.2
    %v4622 = vmul.f32 %v4558, 0.2
    %v4623 = vmul.f32 %v4559, 0.2
    %v4624 = vmul.f32 %v4560, 0.2
    %v4625 = vmul.f32 %v4561, 0.2
    %v4626 = vmul.f32 %v4562, 0.2
    %v4627 = vsel %vm4563, %v4531, %v4595
    %v4628 = vsel %vm4564, %v4532, %v4596
    %v4629 = vsel %vm4565, %v4533, %v4597
    %v4630 = vsel %vm4566, %v4534, %v4598
    %v4631 = vsel %vm4567, %v4535, %v4599
    %v4632 = vsel %vm4568, %v4536, %v4600
    %v4633 = vsel %vm4569, %v4537, %v4601
    %v4634 = vsel %vm4570, %v4538, %v4602
    %v4635 = vsel %vm4571, %v4539, %v4603
    %v4636 = vsel %vm4572, %v4540, %v4604
    %v4637 = vsel %vm4573, %v4541, %v4605
    %v4638 = vsel %vm4574, %v4542, %v4606
    %v4639 = vsel %vm4575, %v4543, %v4607
    %v4640 = vsel %vm4576, %v4544, %v4608
    %v4641 = vsel %vm4577, %v4545, %v4609
    %v4642 = vsel %vm4578, %v4546, %v4610
    %v4643 = vsel %vm4579, %v4547, %v4611
    %v4644 = vsel %vm4580, %v4548, %v4612
    %v4645 = vsel %vm4581, %v4549, %v4613
    %v4646 = vsel %vm4582, %v4550, %v4614
    %v4647 = vsel %vm4583, %v4551, %v4615
    %v4648 = vsel %vm4584, %v4552, %v4616
    %v4649 = vsel %vm4585, %v4553, %v4617
    %v4650 = vsel %vm4586, %v4554, %v4618
    %v4651 = vsel %vm4587, %v4555, %v4619
    %v4652 = vsel %vm4588, %v4556, %v4620
    %v4653 = vsel %vm4589, %v4557, %v4621
    %v4654 = vsel %vm4590, %v4558, %v4622
    %v4655 = vsel %vm4591, %v4559, %v4623
    %v4656 = vsel %vm4592, %v4560, %v4624
    %v4657 = vsel %vm4593, %v4561, %v4625
    %v4658 = vsel %vm4594, %v4562, %v4626
    %4660 = vset.pattern.permute.xlu0 3
    %4661 = vperm.xlu0 %4660, %v4627
    %v4662 = vpop.permute.xlu0 %4661
    %4665 = vset.pattern.permute.xlu0 3
    %4666 = vperm.xlu0 %4665, %v4628
    %v4667 = vpop.permute.xlu0 %4666
    %4670 = vset.pattern.permute.xlu0 3
    %4671 = vperm.xlu0 %4670, %v4629
    %v4672 = vpop.permute.xlu0 %4671
    %4675 = vset.pattern.permute.xlu0 3
    %4676 = vperm.xlu0 %4675, %v4630
    %v4677 = vpop.permute.xlu0 %4676
    %4680 = vset.pattern.permute.xlu0 3
    %4681 = vperm.xlu0 %4680, %v4631
    %v4682 = vpop.permute.xlu0 %4681
    %4685 = vset.pattern.permute.xlu0 3
    %4686 = vperm.xlu0 %4685, %v4632
    %v4687 = vpop.permute.xlu0 %4686
    %4690 = vset.pattern.permute.xlu0 3
    %4691 = vperm.xlu0 %4690, %v4633
    %v4692 = vpop.permute.xlu0 %4691
    %4695 = vset.pattern.permute.xlu0 3
    %4696 = vperm.xlu0 %4695, %v4634
    %v4697 = vpop.permute.xlu0 %4696
    %4700 = vset.pattern.permute.xlu0 3
    %4701 = vperm.xlu0 %4700, %v4635
    %v4702 = vpop.permute.xlu0 %4701
    %4705 = vset.pattern.permute.xlu0 3
    %4706 = vperm.xlu0 %4705, %v4636
    %v4707 = vpop.permute.xlu0 %4706
    %4710 = vset.pattern.permute.xlu0 3
    %4711 = vperm.xlu0 %4710, %v4637
    %v4712 = vpop.permute.xlu0 %4711
    %4715 = vset.pattern.permute.xlu0 3
    %4716 = vperm.xlu0 %4715, %v4638
    %v4717 = vpop.permute.xlu0 %4716
    %4720 = vset.pattern.permute.xlu0 3
    %4721 = vperm.xlu0 %4720, %v4639
    %v4722 = vpop.permute.xlu0 %4721
    %4725 = vset.pattern.permute.xlu0 3
    %4726 = vperm.xlu0 %4725, %v4640
    %v4727 = vpop.permute.xlu0 %4726
    %4730 = vset.pattern.permute.xlu0 3
    %4731 = vperm.xlu0 %4730, %v4641
    %v4732 = vpop.permute.xlu0 %4731
    %4735 = vset.pattern.permute.xlu0 3
    %4736 = vperm.xlu0 %4735, %v4642
    %v4737 = vpop.permute.xlu0 %4736
    %4740 = vset.pattern.permute.xlu0 3
    %4741 = vperm.xlu0 %4740, %v4643
    %v4742 = vpop.permute.xlu0 %4741
    %4745 = vset.pattern.permute.xlu0 3
    %4746 = vperm.xlu0 %4745, %v4644
    %v4747 = vpop.permute.xlu0 %4746
    %4750 = vset.pattern.permute.xlu0 3
    %4751 = vperm.xlu0 %4750, %v4645
    %v4752 = vpop.permute.xlu0 %4751
    %4755 = vset.pattern.permute.xlu0 3
    %4756 = vperm.xlu0 %4755, %v4646
    %v4757 = vpop.permute.xlu0 %4756
    %4760 = vset.pattern.permute.xlu0 3
    %4761 = vperm.xlu0 %4760, %v4647
    %v4762 = vpop.permute.xlu0 %4761
    %4765 = vset.pattern.permute.xlu0 3
    %4766 = vperm.xlu0 %4765, %v4648
    %v4767 = vpop.permute.xlu0 %4766
    %4770 = vset.pattern.permute.xlu0 3
    %4771 = vperm.xlu0 %4770, %v4649
    %v4772 = vpop.permute.xlu0 %4771
    %4775 = vset.pattern.permute.xlu0 3
    %4776 = vperm.xlu0 %4775, %v4650
    %v4777 = vpop.permute.xlu0 %4776
    %4780 = vset.pattern.permute.xlu0 3
    %4781 = vperm.xlu0 %4780, %v4651
    %v4782 = vpop.permute.xlu0 %4781
    %4785 = vset.pattern.permute.xlu0 3
    %4786 = vperm.xlu0 %4785, %v4652
    %v4787 = vpop.permute.xlu0 %4786
    %4790 = vset.pattern.permute.xlu0 3
    %4791 = vperm.xlu0 %4790, %v4653
    %v4792 = vpop.permute.xlu0 %4791
    %4795 = vset.pattern.permute.xlu0 3
    %4796 = vperm.xlu0 %4795, %v4654
    %v4797 = vpop.permute.xlu0 %4796
    %4800 = vset.pattern.permute.xlu0 3
    %4801 = vperm.xlu0 %4800, %v4655
    %v4802 = vpop.permute.xlu0 %4801
    %4805 = vset.pattern.permute.xlu0 3
    %4806 = vperm.xlu0 %4805, %v4656
    %v4807 = vpop.permute.xlu0 %4806
    %4810 = vset.pattern.permute.xlu0 3
    %4811 = vperm.xlu0 %4810, %v4657
    %v4812 = vpop.permute.xlu0 %4811
    %4815 = vset.pattern.permute.xlu0 3
    %4816 = vperm.xlu0 %4815, %v4658
    %v4817 = vpop.permute.xlu0 %4816
    %v4819 = vmul.f32 %v4662, %v2434
    %v4820 = vmul.f32 %v4667, %v2434
    %v4821 = vmul.f32 %v4672, %v2434
    %v4822 = vmul.f32 %v4677, %v2434
    %v4823 = vmul.f32 %v4682, %v2434
    %v4824 = vmul.f32 %v4687, %v2434
    %v4825 = vmul.f32 %v4692, %v2434
    %v4826 = vmul.f32 %v4697, %v2434
    %v4827 = vmul.f32 %v4702, %v2434
    %v4828 = vmul.f32 %v4707, %v2434
    %v4829 = vmul.f32 %v4712, %v2434
    %v4830 = vmul.f32 %v4717, %v2434
    %v4831 = vmul.f32 %v4722, %v2434
    %v4832 = vmul.f32 %v4727, %v2434
    %v4833 = vmul.f32 %v4732, %v2434
    %v4834 = vmul.f32 %v4737, %v2434
    %v4835 = vmul.f32 %v4742, %v2434
    %v4836 = vmul.f32 %v4747, %v2434
    %v4837 = vmul.f32 %v4752, %v2434
    %v4838 = vmul.f32 %v4757, %v2434
    %v4839 = vmul.f32 %v4762, %v2434
    %v4840 = vmul.f32 %v4767, %v2434
    %v4841 = vmul.f32 %v4772, %v2434
    %v4842 = vmul.f32 %v4777, %v2434
    %v4843 = vmul.f32 %v4782, %v2434
    %v4844 = vmul.f32 %v4787, %v2434
    %v4845 = vmul.f32 %v4792, %v2434
    %v4846 = vmul.f32 %v4797, %v2434
    %v4847 = vmul.f32 %v4802, %v2434
    %v4848 = vmul.f32 %v4807, %v2434
    %v4849 = vmul.f32 %v4812, %v2434
    %v4850 = vmul.f32 %v4817, %v2434
    %v4851 = vadd.f32 %v4371, %v4819
    %v4852 = vadd.f32 %v4372, %v4820
    %v4853 = vadd.f32 %v4373, %v4821
    %v4854 = vadd.f32 %v4374, %v4822
    %v4855 = vadd.f32 %v4375, %v4823
    %v4856 = vadd.f32 %v4376, %v4824
    %v4857 = vadd.f32 %v4377, %v4825
    %v4858 = vadd.f32 %v4378, %v4826
    %v4859 = vadd.f32 %v4379, %v4827
    %v4860 = vadd.f32 %v4380, %v4828
    %v4861 = vadd.f32 %v4381, %v4829
    %v4862 = vadd.f32 %v4382, %v4830
    %v4863 = vadd.f32 %v4383, %v4831
    %v4864 = vadd.f32 %v4384, %v4832
    %v4865 = vadd.f32 %v4385, %v4833
    %v4866 = vadd.f32 %v4386, %v4834
    %v4867 = vadd.f32 %v4387, %v4835
    %v4868 = vadd.f32 %v4388, %v4836
    %v4869 = vadd.f32 %v4389, %v4837
    %v4870 = vadd.f32 %v4390, %v4838
    %v4871 = vadd.f32 %v4391, %v4839
    %v4872 = vadd.f32 %v4392, %v4840
    %v4873 = vadd.f32 %v4393, %v4841
    %v4874 = vadd.f32 %v4394, %v4842
    %v4875 = vadd.f32 %v4395, %v4843
    %v4876 = vadd.f32 %v4396, %v4844
    %v4877 = vadd.f32 %v4397, %v4845
    %v4878 = vadd.f32 %v4398, %v4846
    %v4879 = vadd.f32 %v4399, %v4847
    %v4880 = vadd.f32 %v4400, %v4848
    %v4881 = vadd.f32 %v4401, %v4849
    %v4882 = vadd.f32 %v4402, %v4850
    %v4883 = vld [vmem:[%s1 + $0x80] sm:$0xf]
    %v4884 = vld [vmem:[%s1 + $0x84] sm:$0xf]
    %v4885 = vld [vmem:[%s1 + $0x88] sm:$0xf]
    %v4886 = vld [vmem:[%s1 + $0x8c] sm:$0xf]
    %v4887 = vld [vmem:[%s1 + $0x90] sm:$0xf]
    %v4888 = vld [vmem:[%s1 + $0x94] sm:$0xf]
    %v4889 = vld [vmem:[%s1 + $0x98] sm:$0xf]
    %v4890 = vld [vmem:[%s1 + $0x9c] sm:$0xf]
    %v4891 = vld [vmem:[%s1 + $0xa0] sm:$0xf]
    %v4892 = vld [vmem:[%s1 + $0xa4] sm:$0xf]
    %v4893 = vld [vmem:[%s1 + $0xa8] sm:$0xf]
    %v4894 = vld [vmem:[%s1 + $0xac] sm:$0xf]
    %v4895 = vld [vmem:[%s1 + $0xb0] sm:$0xf]
    %v4896 = vld [vmem:[%s1 + $0xb4] sm:$0xf]
    %v4897 = vld [vmem:[%s1 + $0xb8] sm:$0xf]
    %v4898 = vld [vmem:[%s1 + $0xbc] sm:$0xf]
    %v4899 = vld [vmem:[%s1 + $0xc0] sm:$0xf]
    %v4900 = vld [vmem:[%s1 + $0xc4] sm:$0xf]
    %v4901 = vld [vmem:[%s1 + $0xc8] sm:$0xf]
    %v4902 = vld [vmem:[%s1 + $0xcc] sm:$0xf]
    %v4903 = vld [vmem:[%s1 + $0xd0] sm:$0xf]
    %v4904 = vld [vmem:[%s1 + $0xd4] sm:$0xf]
    %v4905 = vld [vmem:[%s1 + $0xd8] sm:$0xf]
    %v4906 = vld [vmem:[%s1 + $0xdc] sm:$0xf]
    %v4907 = vld [vmem:[%s1 + $0xe0] sm:$0xf]
    %v4908 = vld [vmem:[%s1 + $0xe4] sm:$0xf]
    %v4909 = vld [vmem:[%s1 + $0xe8] sm:$0xf]
    %v4910 = vld [vmem:[%s1 + $0xec] sm:$0xf]
    %v4911 = vld [vmem:[%s1 + $0xf0] sm:$0xf]
    %v4912 = vld [vmem:[%s1 + $0xf4] sm:$0xf]
    %v4913 = vld [vmem:[%s1 + $0xf8] sm:$0xf]
    %v4914 = vld [vmem:[%s1 + $0xfc] sm:$0xf]
    %v4947 = vunpack.c.l.b16 %v4883
    %v4948 = vunpack.c.l.b16 %v4884
    %v4949 = vunpack.c.l.b16 %v4885
    %v4950 = vunpack.c.l.b16 %v4886
    %v4951 = vunpack.c.l.b16 %v4887
    %v4952 = vunpack.c.l.b16 %v4888
    %v4953 = vunpack.c.l.b16 %v4889
    %v4954 = vunpack.c.l.b16 %v4890
    %v4955 = vunpack.c.l.b16 %v4891
    %v4956 = vunpack.c.l.b16 %v4892
    %v4957 = vunpack.c.l.b16 %v4893
    %v4958 = vunpack.c.l.b16 %v4894
    %v4959 = vunpack.c.l.b16 %v4895
    %v4960 = vunpack.c.l.b16 %v4896
    %v4961 = vunpack.c.l.b16 %v4897
    %v4962 = vunpack.c.l.b16 %v4898
    %v4963 = vunpack.c.l.b16 %v4899
    %v4964 = vunpack.c.l.b16 %v4900
    %v4965 = vunpack.c.l.b16 %v4901
    %v4966 = vunpack.c.l.b16 %v4902
    %v4967 = vunpack.c.l.b16 %v4903
    %v4968 = vunpack.c.l.b16 %v4904
    %v4969 = vunpack.c.l.b16 %v4905
    %v4970 = vunpack.c.l.b16 %v4906
    %v4971 = vunpack.c.l.b16 %v4907
    %v4972 = vunpack.c.l.b16 %v4908
    %v4973 = vunpack.c.l.b16 %v4909
    %v4974 = vunpack.c.l.b16 %v4910
    %v4975 = vunpack.c.l.b16 %v4911
    %v4976 = vunpack.c.l.b16 %v4912
    %v4977 = vunpack.c.l.b16 %v4913
    %v4978 = vunpack.c.l.b16 %v4914
    %v4979 = vpack.c.b16 %v4948, %v4947
    %v4980 = vpack.c.b16 %v4950, %v4949
    %v4981 = vpack.c.b16 %v4952, %v4951
    %v4982 = vpack.c.b16 %v4954, %v4953
    %v4983 = vpack.c.b16 %v4956, %v4955
    %v4984 = vpack.c.b16 %v4958, %v4957
    %v4985 = vpack.c.b16 %v4960, %v4959
    %v4986 = vpack.c.b16 %v4962, %v4961
    %v4987 = vpack.c.b16 %v4964, %v4963
    %v4988 = vpack.c.b16 %v4966, %v4965
    %v4989 = vpack.c.b16 %v4968, %v4967
    %v4990 = vpack.c.b16 %v4970, %v4969
    %v4991 = vpack.c.b16 %v4972, %v4971
    %v4992 = vpack.c.b16 %v4974, %v4973
    %v4993 = vpack.c.b16 %v4976, %v4975
    %v4994 = vpack.c.b16 %v4978, %v4977
    %v4996 = vsel %vm2611, %v4979, 0
    %v4999 = vsel %vm2611, %v4980, 0
    %v5002 = vsel %vm2611, %v4981, 0
    %v5005 = vsel %vm2611, %v4982, 0
    %v5008 = vsel %vm2611, %v4983, 0
    %v5011 = vsel %vm2611, %v4984, 0
    %v5014 = vsel %vm2611, %v4985, 0
    %v5017 = vsel %vm2611, %v4986, 0
    %v5020 = vsel %vm2611, %v4987, 0
    %v5023 = vsel %vm2611, %v4988, 0
    %v5026 = vsel %vm2611, %v4989, 0
    %v5029 = vsel %vm2611, %v4990, 0
    %v5032 = vsel %vm2611, %v4991, 0
    %v5035 = vsel %vm2611, %v4992, 0
    %v5038 = vsel %vm2611, %v4993, 0
    %v5041 = vsel %vm2611, %v4994, 0
    %5043 = vmatprep.subr.bf16.mxu0 0
    %5044 = vmatpush1.bf16.msra.mxu0 %v2662
    %5045 = vmatprep.subr.bf16.mxu0 0
    %5046 = vmatpush1.bf16.msra.mxu0 0
    %5047 = vmatprep.subr.bf16.mxu0 0
    %5048 = vmatpush1.bf16.msra.mxu0 0
    %5049 = vmatprep.subr.bf16.mxu0 0
    %5050 = vmatpush1.bf16.msra.mxu0 0
    %5051 = vmatprep.subr.bf16.mxu0 0
    %5052 = vmatpush1.bf16.msra.mxu0 0
    %5053 = vmatprep.subr.bf16.mxu0 0
    %5054 = vmatpush1.bf16.msra.mxu0 0
    %5055 = vmatprep.subr.bf16.mxu0 0
    %5056 = vmatpush1.bf16.msra.mxu0 0
    %5057 = vmatprep.subr.bf16.mxu0 0
    %5058 = vmatpush1.bf16.msra.mxu0 0
    %5059 = vmatprep.subr.bf16.mxu0 0
    %5060 = vmatpush1.bf16.msra.mxu0 0
    %5061 = vmatprep.subr.bf16.mxu0 0
    %5062 = vmatpush1.bf16.msra.mxu0 0
    %5063 = vmatprep.subr.bf16.mxu0 0
    %5064 = vmatpush1.bf16.msra.mxu0 0
    %5065 = vmatprep.subr.bf16.mxu0 0
    %5066 = vmatpush1.bf16.msra.mxu0 0
    %5067 = vmatprep.subr.bf16.mxu0 0
    %5068 = vmatpush1.bf16.msra.mxu0 0
    %5069 = vmatprep.subr.bf16.mxu0 0
    %5070 = vmatpush1.bf16.msra.mxu0 0
    %5071 = vmatprep.subr.bf16.mxu0 0
    %5072 = vmatpush1.bf16.msra.mxu0 0
    %5073 = vmatprep.subr.bf16.mxu0 0
    %5074 = vmatpush1.bf16.msra.mxu0 0
    %5075 = vmatprep.mubr.bf16.mxu0 0
    %5076 = vmatmul.mubr.bf16.gmra.mrb[0].mxu0 %v4996
    %v5077 = vpop.f32.mrb[0].mxu0
    %v5078 = vadd.f32 %v4851, %v5077
    %v5079 = vpop.f32.mrb[0].mxu0
    %v5080 = vpop.f32.mrb[0].mxu0
    %v5081 = vadd.f32 %v4852, %v5080
    %v5082 = vpop.f32.mrb[0].mxu0
    %5083 = vmatprep.mubr.bf16.mxu0 0
    %5084 = vmatmul.mubr.bf16.gmra.mrb[0].mxu0 %v4999
    %v5085 = vpop.f32.mrb[0].mxu0
    %v5086 = vadd.f32 %v4853, %v5085
    %v5087 = vpop.f32.mrb[0].mxu0
    %v5088 = vpop.f32.mrb[0].mxu0
    %v5089 = vadd.f32 %v4854, %v5088
    %v5090 = vpop.f32.mrb[0].mxu0
    %5091 = vmatprep.mubr.bf16.mxu0 0
    %5092 = vmatmul.mubr.bf16.gmra.mrb[0].mxu0 %v5002
    %v5093 = vpop.f32.mrb[0].mxu0
    %v5094 = vadd.f32 %v4855, %v5093
    %v5095 = vpop.f32.mrb[0].mxu0
    %v5096 = vpop.f32.mrb[0].mxu0
    %v5097 = vadd.f32 %v4856, %v5096
    %v5098 = vpop.f32.mrb[0].mxu0
    %5099 = vmatprep.mubr.bf16.mxu0 0
    %5100 = vmatmul.mubr.bf16.gmra.mrb[0].mxu0 %v5005
    %v5101 = vpop.f32.mrb[0].mxu0
    %v5102 = vadd.f32 %v4857, %v5101
    %v5103 = vpop.f32.mrb[0].mxu0
    %v5104 = vpop.f32.mrb[0].mxu0
    %v5105 = vadd.f32 %v4858, %v5104
    %v5106 = vpop.f32.mrb[0].mxu0
    %5107 = vmatprep.mubr.bf16.mxu0 0
    %5108 = vmatmul.mubr.bf16.gmra.mrb[0].mxu0 %v5008
    %v5109 = vpop.f32.mrb[0].mxu0
    %v5110 = vadd.f32 %v4859, %v5109
    %v5111 = vpop.f32.mrb[0].mxu0
    %v5112 = vpop.f32.mrb[0].mxu0
    %v5113 = vadd.f32 %v4860, %v5112
    %v5114 = vpop.f32.mrb[0].mxu0
    %5115 = vmatprep.mubr.bf16.mxu0 0
    %5116 = vmatmul.mubr.bf16.gmra.mrb[0].mxu0 %v5011
    %v5117 = vpop.f32.mrb[0].mxu0
    %v5118 = vadd.f32 %v4861, %v5117
    %v5119 = vpop.f32.mrb[0].mxu0
    %v5120 = vpop.f32.mrb[0].mxu0
    %v5121 = vadd.f32 %v4862, %v5120
    %v5122 = vpop.f32.mrb[0].mxu0
    %5123 = vmatprep.mubr.bf16.mxu0 0
    %5124 = vmatmul.mubr.bf16.gmra.mrb[0].mxu0 %v5014
    %v5125 = vpop.f32.mrb[0].mxu0
    %v5126 = vadd.f32 %v4863, %v5125
    %v5127 = vpop.f32.mrb[0].mxu0
    %v5128 = vpop.f32.mrb[0].mxu0
    %v5129 = vadd.f32 %v4864, %v5128
    %v5130 = vpop.f32.mrb[0].mxu0
    %5131 = vmatprep.mubr.bf16.mxu0 0
    %5132 = vmatmul.mubr.bf16.gmra.mrb[0].mxu0 %v5017
    %v5133 = vpop.f32.mrb[0].mxu0
    %v5134 = vadd.f32 %v4865, %v5133
    %v5135 = vpop.f32.mrb[0].mxu0
    %v5136 = vpop.f32.mrb[0].mxu0
    %v5137 = vadd.f32 %v4866, %v5136
    %v5138 = vpop.f32.mrb[0].mxu0
    %5139 = vmatprep.mubr.bf16.mxu0 0
    %5140 = vmatmul.mubr.bf16.gmra.mrb[0].mxu0 %v5020
    %v5141 = vpop.f32.mrb[0].mxu0
    %v5142 = vadd.f32 %v4867, %v5141
    %v5143 = vpop.f32.mrb[0].mxu0
    %v5144 = vpop.f32.mrb[0].mxu0
    %v5145 = vadd.f32 %v4868, %v5144
    %v5146 = vpop.f32.mrb[0].mxu0
    %5147 = vmatprep.mubr.bf16.mxu0 0
    %5148 = vmatmul.mubr.bf16.gmra.mrb[0].mxu0 %v5023
    %v5149 = vpop.f32.mrb[0].mxu0
    %v5150 = vadd.f32 %v4869, %v5149
    %v5151 = vpop.f32.mrb[0].mxu0
    %v5152 = vpop.f32.mrb[0].mxu0
    %v5153 = vadd.f32 %v4870, %v5152
    %v5154 = vpop.f32.mrb[0].mxu0
    %5155 = vmatprep.mubr.bf16.mxu0 0
    %5156 = vmatmul.mubr.bf16.gmra.mrb[0].mxu0 %v5026
    %v5157 = vpop.f32.mrb[0].mxu0
    %v5158 = vadd.f32 %v4871, %v5157
    %v5159 = vpop.f32.mrb[0].mxu0
    %v5160 = vpop.f32.mrb[0].mxu0
    %v5161 = vadd.f32 %v4872, %v5160
    %v5162 = vpop.f32.mrb[0].mxu0
    %5163 = vmatprep.mubr.bf16.mxu0 0
    %5164 = vmatmul.mubr.bf16.gmra.mrb[0].mxu0 %v5029
    %v5165 = vpop.f32.mrb[0].mxu0
    %v5166 = vadd.f32 %v4873, %v5165
    %v5167 = vpop.f32.mrb[0].mxu0
    %v5168 = vpop.f32.mrb[0].mxu0
    %v5169 = vadd.f32 %v4874, %v5168
    %v5170 = vpop.f32.mrb[0].mxu0
    %5171 = vmatprep.mubr.bf16.mxu0 0
    %5172 = vmatmul.mubr.bf16.gmra.mrb[0].mxu0 %v5032
    %v5173 = vpop.f32.mrb[0].mxu0
    %v5174 = vadd.f32 %v4875, %v5173
    %v5175 = vpop.f32.mrb[0].mxu0
    %v5176 = vpop.f32.mrb[0].mxu0
    %v5177 = vadd.f32 %v4876, %v5176
    %v5178 = vpop.f32.mrb[0].mxu0
    %5179 = vmatprep.mubr.bf16.mxu0 0
    %5180 = vmatmul.mubr.bf16.gmra.mrb[0].mxu0 %v5035
    %v5181 = vpop.f32.mrb[0].mxu0
    %v5182 = vadd.f32 %v4877, %v5181
    %v5183 = vpop.f32.mrb[0].mxu0
    %v5184 = vpop.f32.mrb[0].mxu0
    %v5185 = vadd.f32 %v4878, %v5184
    %v5186 = vpop.f32.mrb[0].mxu0
    %5187 = vmatprep.mubr.bf16.mxu0 0
    %5188 = vmatmul.mubr.bf16.gmra.mrb[0].mxu0 %v5038
    %v5189 = vpop.f32.mrb[0].mxu0
    %v5190 = vadd.f32 %v4879, %v5189
    %v5191 = vpop.f32.mrb[0].mxu0
    %v5192 = vpop.f32.mrb[0].mxu0
    %v5193 = vadd.f32 %v4880, %v5192
    %v5194 = vpop.f32.mrb[0].mxu0
    %5195 = vmatprep.mubr.bf16.mxu0 0
    %5196 = vmatmul.mubr.bf16.gmra.mrb[0].mxu0 %v5041
    %v5197 = vpop.f32.mrb[0].mxu0
    %v5198 = vadd.f32 %v4881, %v5197
    %v5199 = vpop.f32.mrb[0].mxu0
    %v5200 = vpop.f32.mrb[0].mxu0
    %v5201 = vadd.f32 %v4882, %v5200
    %v5202 = vpop.f32.mrb[0].mxu0
    %5203 = vdwg.mxu0
    %v5204 = vadd.f32 %v5078, %v2829
    %v5205 = vadd.f32 %v5081, %v2829
    %v5206 = vadd.f32 %v5086, %v2829
    %v5207 = vadd.f32 %v5089, %v2829
    %v5208 = vadd.f32 %v5094, %v2829
    %v5209 = vadd.f32 %v5097, %v2829
    %v5210 = vadd.f32 %v5102, %v2829
    %v5211 = vadd.f32 %v5105, %v2829
    %v5212 = vadd.f32 %v5110, %v2829
    %v5213 = vadd.f32 %v5113, %v2829
    %v5214 = vadd.f32 %v5118, %v2829
    %v5215 = vadd.f32 %v5121, %v2829
    %v5216 = vadd.f32 %v5126, %v2829
    %v5217 = vadd.f32 %v5129, %v2829
    %v5218 = vadd.f32 %v5134, %v2829
    %v5219 = vadd.f32 %v5137, %v2829
    %v5220 = vadd.f32 %v5142, %v2829
    %v5221 = vadd.f32 %v5145, %v2829
    %v5222 = vadd.f32 %v5150, %v2829
    %v5223 = vadd.f32 %v5153, %v2829
    %v5224 = vadd.f32 %v5158, %v2829
    %v5225 = vadd.f32 %v5161, %v2829
    %v5226 = vadd.f32 %v5166, %v2829
    %v5227 = vadd.f32 %v5169, %v2829
    %v5228 = vadd.f32 %v5174, %v2829
    %v5229 = vadd.f32 %v5177, %v2829
    %v5230 = vadd.f32 %v5182, %v2829
    %v5231 = vadd.f32 %v5185, %v2829
    %v5232 = vadd.f32 %v5190, %v2829
    %v5233 = vadd.f32 %v5193, %v2829
    %v5234 = vadd.f32 %v5198, %v2829
    %v5235 = vadd.f32 %v5201, %v2829
    %vm5236 = vcmp.ge.f32.partialorder %v5204, 0.0
    %vm5237 = vcmp.ge.f32.partialorder %v5205, 0.0
    %vm5238 = vcmp.ge.f32.partialorder %v5206, 0.0
    %vm5239 = vcmp.ge.f32.partialorder %v5207, 0.0
    %vm5240 = vcmp.ge.f32.partialorder %v5208, 0.0
    %vm5241 = vcmp.ge.f32.partialorder %v5209, 0.0
    %vm5242 = vcmp.ge.f32.partialorder %v5210, 0.0
    %vm5243 = vcmp.ge.f32.partialorder %v5211, 0.0
    %vm5244 = vcmp.ge.f32.partialorder %v5212, 0.0
    %vm5245 = vcmp.ge.f32.partialorder %v5213, 0.0
    %vm5246 = vcmp.ge.f32.partialorder %v5214, 0.0
    %vm5247 = vcmp.ge.f32.partialorder %v5215, 0.0
    %vm5248 = vcmp.ge.f32.partialorder %v5216, 0.0
    %vm5249 = vcmp.ge.f32.partialorder %v5217, 0.0
    %vm5250 = vcmp.ge.f32.partialorder %v5218, 0.0
    %vm5251 = vcmp.ge.f32.partialorder %v5219, 0.0
    %vm5252 = vcmp.ge.f32.partialorder %v5220, 0.0
    %vm5253 = vcmp.ge.f32.partialorder %v5221, 0.0
    %vm5254 = vcmp.ge.f32.partialorder %v5222, 0.0
    %vm5255 = vcmp.ge.f32.partialorder %v5223, 0.0
    %vm5256 = vcmp.ge.f32.partialorder %v5224, 0.0
    %vm5257 = vcmp.ge.f32.partialorder %v5225, 0.0
    %vm5258 = vcmp.ge.f32.partialorder %v5226, 0.0
    %vm5259 = vcmp.ge.f32.partialorder %v5227, 0.0
    %vm5260 = vcmp.ge.f32.partialorder %v5228, 0.0
    %vm5261 = vcmp.ge.f32.partialorder %v5229, 0.0
    %vm5262 = vcmp.ge.f32.partialorder %v5230, 0.0
    %vm5263 = vcmp.ge.f32.partialorder %v5231, 0.0
    %vm5264 = vcmp.ge.f32.partialorder %v5232, 0.0
    %vm5265 = vcmp.ge.f32.partialorder %v5233, 0.0
    %vm5266 = vcmp.ge.f32.partialorder %v5234, 0.0
    %vm5267 = vcmp.ge.f32.partialorder %v5235, 0.0
    %v5268 = vmul.f32 %v5204, 0.2
    %v5269 = vmul.f32 %v5205, 0.2
    %v5270 = vmul.f32 %v5206, 0.2
    %v5271 = vmul.f32 %v5207, 0.2
    %v5272 = vmul.f32 %v5208, 0.2
    %v5273 = vmul.f32 %v5209, 0.2
    %v5274 = vmul.f32 %v5210, 0.2
    %v5275 = vmul.f32 %v5211, 0.2
    %v5276 = vmul.f32 %v5212, 0.2
    %v5277 = vmul.f32 %v5213, 0.2
    %v5278 = vmul.f32 %v5214, 0.2
    %v5279 = vmul.f32 %v5215, 0.2
    %v5280 = vmul.f32 %v5216, 0.2
    %v5281 = vmul.f32 %v5217, 0.2
    %v5282 = vmul.f32 %v5218, 0.2
    %v5283 = vmul.f32 %v5219, 0.2
    %v5284 = vmul.f32 %v5220, 0.2
    %v5285 = vmul.f32 %v5221, 0.2
    %v5286 = vmul.f32 %v5222, 0.2
    %v5287 = vmul.f32 %v5223, 0.2
    %v5288 = vmul.f32 %v5224, 0.2
    %v5289 = vmul.f32 %v5225, 0.2
    %v5290 = vmul.f32 %v5226, 0.2
    %v5291 = vmul.f32 %v5227, 0.2
    %v5292 = vmul.f32 %v5228, 0.2
    %v5293 = vmul.f32 %v5229, 0.2
    %v5294 = vmul.f32 %v5230, 0.2
    %v5295 = vmul.f32 %v5231, 0.2
    %v5296 = vmul.f32 %v5232, 0.2
    %v5297 = vmul.f32 %v5233, 0.2
    %v5298 = vmul.f32 %v5234, 0.2
    %v5299 = vmul.f32 %v5235, 0.2
    %v5300 = vsel %vm5236, %v5204, %v5268
    %v5301 = vsel %vm5237, %v5205, %v5269
    %v5302 = vsel %vm5238, %v5206, %v5270
    %v5303 = vsel %vm5239, %v5207, %v5271
    %v5304 = vsel %vm5240, %v5208, %v5272
    %v5305 = vsel %vm5241, %v5209, %v5273
    %v5306 = vsel %vm5242, %v5210, %v5274
    %v5307 = vsel %vm5243, %v5211, %v5275
    %v5308 = vsel %vm5244, %v5212, %v5276
    %v5309 = vsel %vm5245, %v5213, %v5277
    %v5310 = vsel %vm5246, %v5214, %v5278
    %v5311 = vsel %vm5247, %v5215, %v5279
    %v5312 = vsel %vm5248, %v5216, %v5280
    %v5313 = vsel %vm5249, %v5217, %v5281
    %v5314 = vsel %vm5250, %v5218, %v5282
    %v5315 = vsel %vm5251, %v5219, %v5283
    %v5316 = vsel %vm5252, %v5220, %v5284
    %v5317 = vsel %vm5253, %v5221, %v5285
    %v5318 = vsel %vm5254, %v5222, %v5286
    %v5319 = vsel %vm5255, %v5223, %v5287
    %v5320 = vsel %vm5256, %v5224, %v5288
    %v5321 = vsel %vm5257, %v5225, %v5289
    %v5322 = vsel %vm5258, %v5226, %v5290
    %v5323 = vsel %vm5259, %v5227, %v5291
    %v5324 = vsel %vm5260, %v5228, %v5292
    %v5325 = vsel %vm5261, %v5229, %v5293
    %v5326 = vsel %vm5262, %v5230, %v5294
    %v5327 = vsel %vm5263, %v5231, %v5295
    %v5328 = vsel %vm5264, %v5232, %v5296
    %v5329 = vsel %vm5265, %v5233, %v5297
    %v5330 = vsel %vm5266, %v5234, %v5298
    %v5331 = vsel %vm5267, %v5235, %v5299
    %v5332 = vpack.c.bf16 %v2928, %v2927
    %v5333 = vpack.c.bf16 %v2930, %v2929
    %v5334 = vpack.c.bf16 %v2932, %v2931
    %v5335 = vpack.c.bf16 %v2934, %v2933
    %v5336 = vpack.c.bf16 %v2936, %v2935
    %v5337 = vpack.c.bf16 %v2938, %v2937
    %v5338 = vpack.c.bf16 %v2940, %v2939
    %v5339 = vpack.c.bf16 %v2942, %v2941
    %v5340 = vpack.c.bf16 %v2944, %v2943
    %v5341 = vpack.c.bf16 %v2946, %v2945
    %v5342 = vpack.c.bf16 %v2948, %v2947
    %v5343 = vpack.c.bf16 %v2950, %v2949
    %v5344 = vpack.c.bf16 %v2952, %v2951
    %v5345 = vpack.c.bf16 %v2954, %v2953
    %v5346 = vpack.c.bf16 %v2956, %v2955
    %v5347 = vpack.c.bf16 %v2958, %v2957
    %v5348 = vpack.c.bf16 %v5301, %v5300
    %v5349 = vpack.c.bf16 %v5303, %v5302
    %v5350 = vpack.c.bf16 %v5305, %v5304
    %v5351 = vpack.c.bf16 %v5307, %v5306
    %v5352 = vpack.c.bf16 %v5309, %v5308
    %v5353 = vpack.c.bf16 %v5311, %v5310
    %v5354 = vpack.c.bf16 %v5313, %v5312
    %v5355 = vpack.c.bf16 %v5315, %v5314
    %v5356 = vpack.c.bf16 %v5317, %v5316
    %v5357 = vpack.c.bf16 %v5319, %v5318
    %v5358 = vpack.c.bf16 %v5321, %v5320
    %v5359 = vpack.c.bf16 %v5323, %v5322
    %v5360 = vpack.c.bf16 %v5325, %v5324
    %v5361 = vpack.c.bf16 %v5327, %v5326
    %v5362 = vpack.c.bf16 %v5329, %v5328
    %v5363 = vpack.c.bf16 %v5331, %v5330
    %v5364 = vld [vmem:[%s7] sm:$0xff]
    %v5365 = vld [vmem:[%s7 + $0x8] sm:$0xff]
    %v5366 = vld [vmem:[%s7 + $0x10] sm:$0xff]
    %v5367 = vld [vmem:[%s7 + $0x18] sm:$0xff]
    %v5368 = vld [vmem:[%s7 + $0x20] sm:$0xff]
    %v5369 = vld [vmem:[%s7 + $0x28] sm:$0xff]
    %v5370 = vld [vmem:[%s7 + $0x30] sm:$0xff]
    %v5371 = vld [vmem:[%s7 + $0x38] sm:$0xff]
    %v5372 = vld [vmem:[%s7 + $0x40] sm:$0xff]
    %v5373 = vld [vmem:[%s7 + $0x48] sm:$0xff]
    %v5374 = vld [vmem:[%s7 + $0x50] sm:$0xff]
    %v5375 = vld [vmem:[%s7 + $0x58] sm:$0xff]
    %v5376 = vld [vmem:[%s7 + $0x60] sm:$0xff]
    %v5377 = vld [vmem:[%s7 + $0x68] sm:$0xff]
    %v5378 = vld [vmem:[%s7 + $0x70] sm:$0xff]
    %v5379 = vld [vmem:[%s7 + $0x78] sm:$0xff]
    %v5380 = vld [vmem:[%s7 + $0x80] sm:$0xff]
    %v5381 = vld [vmem:[%s7 + $0x88] sm:$0xff]
    %v5382 = vld [vmem:[%s7 + $0x90] sm:$0xff]
    %v5383 = vld [vmem:[%s7 + $0x98] sm:$0xff]
    %v5384 = vld [vmem:[%s7 + $0xa0] sm:$0xff]
    %v5385 = vld [vmem:[%s7 + $0xa8] sm:$0xff]
    %v5386 = vld [vmem:[%s7 + $0xb0] sm:$0xff]
    %v5387 = vld [vmem:[%s7 + $0xb8] sm:$0xff]
    %v5388 = vld [vmem:[%s7 + $0xc0] sm:$0xff]
    %v5389 = vld [vmem:[%s7 + $0xc8] sm:$0xff]
    %v5390 = vld [vmem:[%s7 + $0xd0] sm:$0xff]
    %v5391 = vld [vmem:[%s7 + $0xd8] sm:$0xff]
    %v5392 = vld [vmem:[%s7 + $0xe0] sm:$0xff]
    %v5393 = vld [vmem:[%s7 + $0xe8] sm:$0xff]
    %v5394 = vld [vmem:[%s7 + $0xf0] sm:$0xff]
    %v5395 = vld [vmem:[%s7 + $0xf8] sm:$0xff]
    %v5396 = vld [vmem:[%s8] sm:$0xf]
    %v5397 = vld [vmem:[%s8 + $0x4] sm:$0xf]
    %v5398 = vld [vmem:[%s8 + $0x8] sm:$0xf]
    %v5399 = vld [vmem:[%s8 + $0xc] sm:$0xf]
    %v5432 = vunpack.c.l.b16 %v5364
    %v5433 = vunpack.c.h.b16 %v5364
    %v5434 = vunpack.c.l.b16 %v5365
    %v5435 = vunpack.c.h.b16 %v5365
    %v5436 = vunpack.c.l.b16 %v5366
    %v5437 = vunpack.c.h.b16 %v5366
    %v5438 = vunpack.c.l.b16 %v5367
    %v5439 = vunpack.c.h.b16 %v5367
    %v5440 = vunpack.c.l.b16 %v5368
    %v5441 = vunpack.c.h.b16 %v5368
    %v5442 = vunpack.c.l.b16 %v5369
    %v5443 = vunpack.c.h.b16 %v5369
    %v5444 = vunpack.c.l.b16 %v5370
    %v5445 = vunpack.c.h.b16 %v5370
    %v5446 = vunpack.c.l.b16 %v5371
    %v5447 = vunpack.c.h.b16 %v5371
    %v5448 = vunpack.c.l.b16 %v5372
    %v5449 = vunpack.c.h.b16 %v5372
    %v5450 = vunpack.c.l.b16 %v5373
    %v5451 = vunpack.c.h.b16 %v5373
    %v5452 = vunpack.c.l.b16 %v5374
    %v5453 = vunpack.c.h.b16 %v5374
    %v5454 = vunpack.c.l.b16 %v5375
    %v5455 = vunpack.c.h.b16 %v5375
    %v5456 = vunpack.c.l.b16 %v5376
    %v5457 = vunpack.c.h.b16 %v5376
    %v5458 = vunpack.c.l.b16 %v5377
    %v5459 = vunpack.c.h.b16 %v5377
    %v5460 = vunpack.c.l.b16 %v5378
    %v5461 = vunpack.c.h.b16 %v5378
    %v5462 = vunpack.c.l.b16 %v5379
    %v5463 = vunpack.c.h.b16 %v5379
    %v5464 = vunpack.c.l.b16 %v5380
    %v5465 = vunpack.c.h.b16 %v5380
    %v5466 = vunpack.c.l.b16 %v5381
    %v5467 = vunpack.c.h.b16 %v5381
    %v5468 = vunpack.c.l.b16 %v5382
    %v5469 = vunpack.c.h.b16 %v5382
    %v5470 = vunpack.c.l.b16 %v5383
    %v5471 = vunpack.c.h.b16 %v5383
    %v5472 = vunpack.c.l.b16 %v5384
    %v5473 = vunpack.c.h.b16 %v5384
    %v5474 = vunpack.c.l.b16 %v5385
    %v5475 = vunpack.c.h.b16 %v5385
    %v5476 = vunpack.c.l.b16 %v5386
    %v5477 = vunpack.c.h.b16 %v5386
    %v5478 = vunpack.c.l.b16 %v5387
    %v5479 = vunpack.c.h.b16 %v5387
    %v5480 = vunpack.c.l.b16 %v5388
    %v5481 = vunpack.c.h.b16 %v5388
    %v5482 = vunpack.c.l.b16 %v5389
    %v5483 = vunpack.c.h.b16 %v5389
    %v5484 = vunpack.c.l.b16 %v5390
    %v5485 = vunpack.c.h.b16 %v5390
    %v5486 = vunpack.c.l.b16 %v5391
    %v5487 = vunpack.c.h.b16 %v5391
    %v5488 = vunpack.c.l.b16 %v5392
    %v5489 = vunpack.c.h.b16 %v5392
    %v5490 = vunpack.c.l.b16 %v5393
    %v5491 = vunpack.c.h.b16 %v5393
    %v5492 = vunpack.c.l.b16 %v5394
    %v5493 = vunpack.c.h.b16 %v5394
    %v5494 = vunpack.c.l.b16 %v5395
    %v5495 = vunpack.c.h.b16 %v5395
    %v5496 = vpack.c.b16 %v5436, %v5432
    %v5497 = vpack.c.b16 %v5437, %v5433
    %v5498 = vpack.c.b16 %v5438, %v5434
    %v5499 = vpack.c.b16 %v5439, %v5435
    %v5500 = vpack.c.b16 %v5444, %v5440
    %v5501 = vpack.c.b16 %v5445, %v5441
    %v5502 = vpack.c.b16 %v5446, %v5442
    %v5503 = vpack.c.b16 %v5447, %v5443
    %v5504 = vpack.c.b16 %v5452, %v5448
    %v5505 = vpack.c.b16 %v5453, %v5449
    %v5506 = vpack.c.b16 %v5454, %v5450
    %v5507 = vpack.c.b16 %v5455, %v5451
    %v5508 = vpack.c.b16 %v5460, %v5456
    %v5509 = vpack.c.b16 %v5461, %v5457
    %v5510 = vpack.c.b16 %v5462, %v5458
    %v5511 = vpack.c.b16 %v5463, %v5459
    %v5512 = vpack.c.b16 %v5468, %v5464
    %v5513 = vpack.c.b16 %v5469, %v5465
    %v5514 = vpack.c.b16 %v5470, %v5466
    %v5515 = vpack.c.b16 %v5471, %v5467
    %v5516 = vpack.c.b16 %v5476, %v5472
    %v5517 = vpack.c.b16 %v5477, %v5473
    %v5518 = vpack.c.b16 %v5478, %v5474
    %v5519 = vpack.c.b16 %v5479, %v5475
    %v5520 = vpack.c.b16 %v5484, %v5480
    %v5521 = vpack.c.b16 %v5485, %v5481
    %v5522 = vpack.c.b16 %v5486, %v5482
    %v5523 = vpack.c.b16 %v5487, %v5483
    %v5524 = vpack.c.b16 %v5492, %v5488
    %v5525 = vpack.c.b16 %v5493, %v5489
    %v5526 = vpack.c.b16 %v5494, %v5490
    %v5527 = vpack.c.b16 %v5495, %v5491
    %5560 = vmatprep.subr.bf16.mxu0 0
    %5561 = vmatpush1.bf16.msra.mxu0 %v5332
    %5562 = vmatprep.subr.bf16.mxu0 0
    %5563 = vmatpush1.bf16.msra.mxu0 %v5333
    %5564 = vmatprep.subr.bf16.mxu0 0
    %5565 = vmatpush1.bf16.msra.mxu0 %v5334
    %5566 = vmatprep.subr.bf16.mxu0 0
    %5567 = vmatpush1.bf16.msra.mxu0 %v5335
    %5568 = vmatprep.subr.bf16.mxu0 0
    %5569 = vmatpush1.bf16.msra.mxu0 %v5336
    %5570 = vmatprep.subr.bf16.mxu0 0
    %5571 = vmatpush1.bf16.msra.mxu0 %v5337
    %5572 = vmatprep.subr.bf16.mxu0 0
    %5573 = vmatpush1.bf16.msra.mxu0 %v5338
    %5574 = vmatprep.subr.bf16.mxu0 0
    %5575 = vmatpush1.bf16.msra.mxu0 %v5339
    %5576 = vmatprep.subr.bf16.mxu0 0
    %5577 = vmatpush1.bf16.msra.mxu0 %v5340
    %5578 = vmatprep.subr.bf16.mxu0 0
    %5579 = vmatpush1.bf16.msra.mxu0 %v5341
    %5580 = vmatprep.subr.bf16.mxu0 0
    %5581 = vmatpush1.bf16.msra.mxu0 %v5342
    %5582 = vmatprep.subr.bf16.mxu0 0
    %5583 = vmatpush1.bf16.msra.mxu0 %v5343
    %5584 = vmatprep.subr.bf16.mxu0 0
    %5585 = vmatpush1.bf16.msra.mxu0 %v5344
    %5586 = vmatprep.subr.bf16.mxu0 0
    %5587 = vmatpush1.bf16.msra.mxu0 %v5345
    %5588 = vmatprep.subr.bf16.mxu0 0
    %5589 = vmatpush1.bf16.msra.mxu0 %v5346
    %5590 = vmatprep.subr.bf16.mxu0 0
    %5591 = vmatpush1.bf16.msra.mxu0 %v5347
    %5592 = vmatprep.mubr.bf16.mxu0 %v5497
    %5593 = vmatmul.mubr.bf16.gmra.mrb[0].mxu0 %v5496
    %v5594 = vpop.f32.mrb[0].mxu0
    %v5595 = vadd.f32 0.0, %v5594
    %v5596 = vpop.f32.mrb[0].mxu0
    %v5597 = vpop.f32.mrb[0].mxu0
    %v5598 = vadd.f32 0.0, %v5597
    %v5599 = vpop.f32.mrb[0].mxu0
    %5600 = vmatprep.mubr.bf16.mxu0 %v5501
    %5601 = vmatmul.mubr.bf16.gmra.mrb[0].mxu0 %v5500
    %v5602 = vpop.f32.mrb[0].mxu0
    %v5603 = vadd.f32 0.0, %v5602
    %v5604 = vpop.f32.mrb[0].mxu0
    %v5605 = vpop.f32.mrb[0].mxu0
    %v5606 = vadd.f32 0.0, %v5605
    %v5607 = vpop.f32.mrb[0].mxu0
    %5608 = vmatprep.mubr.bf16.mxu0 %v5505
    %5609 = vmatmul.mubr.bf16.gmra.mrb[0].mxu0 %v5504
    %v5610 = vpop.f32.mrb[0].mxu0
    %v5611 = vadd.f32 0.0, %v5610
    %v5612 = vpop.f32.mrb[0].mxu0
    %v5613 = vpop.f32.mrb[0].mxu0
    %v5614 = vadd.f32 0.0, %v5613
    %v5615 = vpop.f32.mrb[0].mxu0
    %5616 = vmatprep.mubr.bf16.mxu0 %v5509
    %5617 = vmatmul.mubr.bf16.gmra.mrb[0].mxu0 %v5508
    %v5618 = vpop.f32.mrb[0].mxu0
    %v5619 = vadd.f32 0.0, %v5618
    %v5620 = vpop.f32.mrb[0].mxu0
    %v5621 = vpop.f32.mrb[0].mxu0
    %v5622 = vadd.f32 0.0, %v5621
    %v5623 = vpop.f32.mrb[0].mxu0
    %5624 = vmatprep.mubr.bf16.mxu0 %v5513
    %5625 = vmatmul.mubr.bf16.gmra.mrb[0].mxu0 %v5512
    %v5626 = vpop.f32.mrb[0].mxu0
    %v5627 = vadd.f32 0.0, %v5626
    %v5628 = vpop.f32.mrb[0].mxu0
    %v5629 = vpop.f32.mrb[0].mxu0
    %v5630 = vadd.f32 0.0, %v5629
    %v5631 = vpop.f32.mrb[0].mxu0
    %5632 = vmatprep.mubr.bf16.mxu0 %v5517
    %5633 = vmatmul.mubr.bf16.gmra.mrb[0].mxu0 %v5516
    %v5634 = vpop.f32.mrb[0].mxu0
    %v5635 = vadd.f32 0.0, %v5634
    %v5636 = vpop.f32.mrb[0].mxu0
    %v5637 = vpop.f32.mrb[0].mxu0
    %v5638 = vadd.f32 0.0, %v5637
    %v5639 = vpop.f32.mrb[0].mxu0
    %5640 = vmatprep.mubr.bf16.mxu0 %v5521
    %5641 = vmatmul.mubr.bf16.gmra.mrb[0].mxu0 %v5520
    %v5642 = vpop.f32.mrb[0].mxu0
    %v5643 = vadd.f32 0.0, %v5642
    %v5644 = vpop.f32.mrb[0].mxu0
    %v5645 = vpop.f32.mrb[0].mxu0
    %v5646 = vadd.f32 0.0, %v5645
    %v5647 = vpop.f32.mrb[0].mxu0
    %5648 = vmatprep.mubr.bf16.mxu0 %v5525
    %5649 = vmatmul.mubr.bf16.gmra.mrb[0].mxu0 %v5524
    %v5650 = vpop.f32.mrb[0].mxu0
    %v5651 = vadd.f32 0.0, %v5650
    %v5652 = vpop.f32.mrb[0].mxu0
    %v5653 = vpop.f32.mrb[0].mxu0
    %v5654 = vadd.f32 0.0, %v5653
    %v5655 = vpop.f32.mrb[0].mxu0
    %5656 = vdwg.mxu0
    %5657 = vmatprep.subr.bf16.mxu0 0
    %5658 = vmatpush1.bf16.msra.mxu0 %v5348
    %5659 = vmatprep.subr.bf16.mxu0 0
    %5660 = vmatpush1.bf16.msra.mxu0 %v5349
    %5661 = vmatprep.subr.bf16.mxu0 0
    %5662 = vmatpush1.bf16.msra.mxu0 %v5350
    %5663 = vmatprep.subr.bf16.mxu0 0
    %5664 = vmatpush1.bf16.msra.mxu0 %v5351
    %5665 = vmatprep.subr.bf16.mxu0 0
    %5666 = vmatpush1.bf16.msra.mxu0 %v5352
    %5667 = vmatprep.subr.bf16.mxu0 0
    %5668 = vmatpush1.bf16.msra.mxu0 %v5353
    %5669 = vmatprep.subr.bf16.mxu0 0
    %5670 = vmatpush1.bf16.msra.mxu0 %v5354
    %5671 = vmatprep.subr.bf16.mxu0 0
    %5672 = vmatpush1.bf16.msra.mxu0 %v5355
    %5673 = vmatprep.subr.bf16.mxu0 0
    %5674 = vmatpush1.bf16.msra.mxu0 %v5356
    %5675 = vmatprep.subr.bf16.mxu0 0
    %5676 = vmatpush1.bf16.msra.mxu0 %v5357
    %5677 = vmatprep.subr.bf16.mxu0 0
    %5678 = vmatpush1.bf16.msra.mxu0 %v5358
    %5679 = vmatprep.subr.bf16.mxu0 0
    %5680 = vmatpush1.bf16.msra.mxu0 %v5359
    %5681 = vmatprep.subr.bf16.mxu0 0
    %5682 = vmatpush1.bf16.msra.mxu0 %v5360
    %5683 = vmatprep.subr.bf16.mxu0 0
    %5684 = vmatpush1.bf16.msra.mxu0 %v5361
    %5685 = vmatprep.subr.bf16.mxu0 0
    %5686 = vmatpush1.bf16.msra.mxu0 %v5362
    %5687 = vmatprep.subr.bf16.mxu0 0
    %5688 = vmatpush1.bf16.msra.mxu0 %v5363
    %5689 = vmatprep.mubr.bf16.mxu0 %v5499
    %5690 = vmatmul.mubr.bf16.gmra.mrb[0].mxu0 %v5498
    %v5691 = vpop.f32.mrb[0].mxu0
    %v5692 = vadd.f32 %v5595, %v5691
    %v5693 = vpop.f32.mrb[0].mxu0
    %v5694 = vpop.f32.mrb[0].mxu0
    %v5695 = vadd.f32 %v5598, %v5694
    %v5696 = vpop.f32.mrb[0].mxu0
    %5697 = vmatprep.mubr.bf16.mxu0 %v5503
    %5698 = vmatmul.mubr.bf16.gmra.mrb[0].mxu0 %v5502
    %v5699 = vpop.f32.mrb[0].mxu0
    %v5700 = vadd.f32 %v5603, %v5699
    %v5701 = vpop.f32.mrb[0].mxu0
    %v5702 = vpop.f32.mrb[0].mxu0
    %v5703 = vadd.f32 %v5606, %v5702
    %v5704 = vpop.f32.mrb[0].mxu0
    %5705 = vmatprep.mubr.bf16.mxu0 %v5507
    %5706 = vmatmul.mubr.bf16.gmra.mrb[0].mxu0 %v5506
    %v5707 = vpop.f32.mrb[0].mxu0
    %v5708 = vadd.f32 %v5611, %v5707
    %v5709 = vpop.f32.mrb[0].mxu0
    %v5710 = vpop.f32.mrb[0].mxu0
    %v5711 = vadd.f32 %v5614, %v5710
    %v5712 = vpop.f32.mrb[0].mxu0
    %5713 = vmatprep.mubr.bf16.mxu0 %v5511
    %5714 = vmatmul.mubr.bf16.gmra.mrb[0].mxu0 %v5510
    %v5715 = vpop.f32.mrb[0].mxu0
    %v5716 = vadd.f32 %v5619, %v5715
    %v5717 = vpop.f32.mrb[0].mxu0
    %v5718 = vpop.f32.mrb[0].mxu0
    %v5719 = vadd.f32 %v5622, %v5718
    %v5720 = vpop.f32.mrb[0].mxu0
    %5721 = vmatprep.mubr.bf16.mxu0 %v5515
    %5722 = vmatmul.mubr.bf16.gmra.mrb[0].mxu0 %v5514
    %v5723 = vpop.f32.mrb[0].mxu0
    %v5724 = vadd.f32 %v5627, %v5723
    %v5725 = vpop.f32.mrb[0].mxu0
    %v5726 = vpop.f32.mrb[0].mxu0
    %v5727 = vadd.f32 %v5630, %v5726
    %v5728 = vpop.f32.mrb[0].mxu0
    %5729 = vmatprep.mubr.bf16.mxu0 %v5519
    %5730 = vmatmul.mubr.bf16.gmra.mrb[0].mxu0 %v5518
    %v5731 = vpop.f32.mrb[0].mxu0
    %v5732 = vadd.f32 %v5635, %v5731
    %v5733 = vpop.f32.mrb[0].mxu0
    %v5734 = vpop.f32.mrb[0].mxu0
    %v5735 = vadd.f32 %v5638, %v5734
    %v5736 = vpop.f32.mrb[0].mxu0
    %5737 = vmatprep.mubr.bf16.mxu0 %v5523
    %5738 = vmatmul.mubr.bf16.gmra.mrb[0].mxu0 %v5522
    %v5739 = vpop.f32.mrb[0].mxu0
    %v5740 = vadd.f32 %v5643, %v5739
    %v5741 = vpop.f32.mrb[0].mxu0
    %v5742 = vpop.f32.mrb[0].mxu0
    %v5743 = vadd.f32 %v5646, %v5742
    %v5744 = vpop.f32.mrb[0].mxu0
    %5745 = vmatprep.mubr.bf16.mxu0 %v5527
    %5746 = vmatmul.mubr.bf16.gmra.mrb[0].mxu0 %v5526
    %v5747 = vpop.f32.mrb[0].mxu0
    %v5748 = vadd.f32 %v5651, %v5747
    %v5749 = vpop.f32.mrb[0].mxu0
    %v5750 = vpop.f32.mrb[0].mxu0
    %v5751 = vadd.f32 %v5654, %v5750
    %v5752 = vpop.f32.mrb[0].mxu0
    %5753 = vdwg.mxu0
    %v5754 = vpack.c.bf16 %v5695, %v5692
    %v5755 = vpack.c.bf16 %v5703, %v5700
    %v5756 = vpack.c.bf16 %v5711, %v5708
    %v5757 = vpack.c.bf16 %v5719, %v5716
    %v5758 = vpack.c.bf16 %v5727, %v5724
    %v5759 = vpack.c.bf16 %v5735, %v5732
    %v5760 = vpack.c.bf16 %v5743, %v5740
    %v5761 = vpack.c.bf16 %v5751, %v5748
    %v5762 = vld [vmem:[%s7 + $0x100] sm:$0xff]
    %v5763 = vld [vmem:[%s7 + $0x108] sm:$0xff]
    %v5764 = vld [vmem:[%s7 + $0x110] sm:$0xff]
    %v5765 = vld [vmem:[%s7 + $0x118] sm:$0xff]
    %v5766 = vld [vmem:[%s7 + $0x120] sm:$0xff]
    %v5767 = vld [vmem:[%s7 + $0x128] sm:$0xff]
    %v5768 = vld [vmem:[%s7 + $0x130] sm:$0xff]
    %v5769 = vld [vmem:[%s7 + $0x138] sm:$0xff]
    %v5770 = vld [vmem:[%s7 + $0x140] sm:$0xff]
    %v5771 = vld [vmem:[%s7 + $0x148] sm:$0xff]
    %v5772 = vld [vmem:[%s7 + $0x150] sm:$0xff]
    %v5773 = vld [vmem:[%s7 + $0x158] sm:$0xff]
    %v5774 = vld [vmem:[%s7 + $0x160] sm:$0xff]
    %v5775 = vld [vmem:[%s7 + $0x168] sm:$0xff]
    %v5776 = vld [vmem:[%s7 + $0x170] sm:$0xff]
    %v5777 = vld [vmem:[%s7 + $0x178] sm:$0xff]
    %v5778 = vld [vmem:[%s7 + $0x180] sm:$0xff]
    %v5779 = vld [vmem:[%s7 + $0x188] sm:$0xff]
    %v5780 = vld [vmem:[%s7 + $0x190] sm:$0xff]
    %v5781 = vld [vmem:[%s7 + $0x198] sm:$0xff]
    %v5782 = vld [vmem:[%s7 + $0x1a0] sm:$0xff]
    %v5783 = vld [vmem:[%s7 + $0x1a8] sm:$0xff]
    %v5784 = vld [vmem:[%s7 + $0x1b0] sm:$0xff]
    %v5785 = vld [vmem:[%s7 + $0x1b8] sm:$0xff]
    %v5786 = vld [vmem:[%s7 + $0x1c0] sm:$0xff]
    %v5787 = vld [vmem:[%s7 + $0x1c8] sm:$0xff]
    %v5788 = vld [vmem:[%s7 + $0x1d0] sm:$0xff]
    %v5789 = vld [vmem:[%s7 + $0x1d8] sm:$0xff]
    %v5790 = vld [vmem:[%s7 + $0x1e0] sm:$0xff]
    %v5791 = vld [vmem:[%s7 + $0x1e8] sm:$0xff]
    %v5792 = vld [vmem:[%s7 + $0x1f0] sm:$0xff]
    %v5793 = vld [vmem:[%s7 + $0x1f8] sm:$0xff]
    %v5794 = vld [vmem:[%s8 + $0x10] sm:$0xf]
    %v5795 = vld [vmem:[%s8 + $0x14] sm:$0xf]
    %v5796 = vld [vmem:[%s8 + $0x18] sm:$0xf]
    %v5797 = vld [vmem:[%s8 + $0x1c] sm:$0xf]
    %v5830 = vunpack.c.l.b16 %v5762
    %v5831 = vunpack.c.h.b16 %v5762
    %v5832 = vunpack.c.l.b16 %v5763
    %v5833 = vunpack.c.h.b16 %v5763
    %v5834 = vunpack.c.l.b16 %v5764
    %v5835 = vunpack.c.h.b16 %v5764
    %v5836 = vunpack.c.l.b16 %v5765
    %v5837 = vunpack.c.h.b16 %v5765
    %v5838 = vunpack.c.l.b16 %v5766
    %v5839 = vunpack.c.h.b16 %v5766
    %v5840 = vunpack.c.l.b16 %v5767
    %v5841 = vunpack.c.h.b16 %v5767
    %v5842 = vunpack.c.l.b16 %v5768
    %v5843 = vunpack.c.h.b16 %v5768
    %v5844 = vunpack.c.l.b16 %v5769
    %v5845 = vunpack.c.h.b16 %v5769
    %v5846 = vunpack.c.l.b16 %v5770
    %v5847 = vunpack.c.h.b16 %v5770
    %v5848 = vunpack.c.l.b16 %v5771
    %v5849 = vunpack.c.h.b16 %v5771
    %v5850 = vunpack.c.l.b16 %v5772
    %v5851 = vunpack.c.h.b16 %v5772
    %v5852 = vunpack.c.l.b16 %v5773
    %v5853 = vunpack.c.h.b16 %v5773
    %v5854 = vunpack.c.l.b16 %v5774
    %v5855 = vunpack.c.h.b16 %v5774
    %v5856 = vunpack.c.l.b16 %v5775
    %v5857 = vunpack.c.h.b16 %v5775
    %v5858 = vunpack.c.l.b16 %v5776
    %v5859 = vunpack.c.h.b16 %v5776
    %v5860 = vunpack.c.l.b16 %v5777
    %v5861 = vunpack.c.h.b16 %v5777
    %v5862 = vunpack.c.l.b16 %v5778
    %v5863 = vunpack.c.h.b16 %v5778
    %v5864 = vunpack.c.l.b16 %v5779
    %v5865 = vunpack.c.h.b16 %v5779
    %v5866 = vunpack.c.l.b16 %v5780
    %v5867 = vunpack.c.h.b16 %v5780
    %v5868 = vunpack.c.l.b16 %v5781
    %v5869 = vunpack.c.h.b16 %v5781
    %v5870 = vunpack.c.l.b16 %v5782
    %v5871 = vunpack.c.h.b16 %v5782
    %v5872 = vunpack.c.l.b16 %v5783
    %v5873 = vunpack.c.h.b16 %v5783
    %v5874 = vunpack.c.l.b16 %v5784
    %v5875 = vunpack.c.h.b16 %v5784
    %v5876 = vunpack.c.l.b16 %v5785
    %v5877 = vunpack.c.h.b16 %v5785
    %v5878 = vunpack.c.l.b16 %v5786
    %v5879 = vunpack.c.h.b16 %v5786
    %v5880 = vunpack.c.l.b16 %v5787
    %v5881 = vunpack.c.h.b16 %v5787
    %v5882 = vunpack.c.l.b16 %v5788
    %v5883 = vunpack.c.h.b16 %v5788
    %v5884 = vunpack.c.l.b16 %v5789
    %v5885 = vunpack.c.h.b16 %v5789
    %v5886 = vunpack.c.l.b16 %v5790
    %v5887 = vunpack.c.h.b16 %v5790
    %v5888 = vunpack.c.l.b16 %v5791
    %v5889 = vunpack.c.h.b16 %v5791
    %v5890 = vunpack.c.l.b16 %v5792
    %v5891 = vunpack.c.h.b16 %v5792
    %v5892 = vunpack.c.l.b16 %v5793
    %v5893 = vunpack.c.h.b16 %v5793
    %v5894 = vpack.c.b16 %v5834, %v5830
    %v5895 = vpack.c.b16 %v5835, %v5831
    %v5896 = vpack.c.b16 %v5836, %v5832
    %v5897 = vpack.c.b16 %v5837, %v5833
    %v5898 = vpack.c.b16 %v5842, %v5838
    %v5899 = vpack.c.b16 %v5843, %v5839
    %v5900 = vpack.c.b16 %v5844, %v5840
    %v5901 = vpack.c.b16 %v5845, %v5841
    %v5902 = vpack.c.b16 %v5850, %v5846
    %v5903 = vpack.c.b16 %v5851, %v5847
    %v5904 = vpack.c.b16 %v5852, %v5848
    %v5905 = vpack.c.b16 %v5853, %v5849
    %v5906 = vpack.c.b16 %v5858, %v5854
    %v5907 = vpack.c.b16 %v5859, %v5855
    %v5908 = vpack.c.b16 %v5860, %v5856
    %v5909 = vpack.c.b16 %v5861, %v5857
    %v5910 = vpack.c.b16 %v5866, %v5862
    %v5911 = vpack.c.b16 %v5867, %v5863
    %v5912 = vpack.c.b16 %v5868, %v5864
    %v5913 = vpack.c.b16 %v5869, %v5865
    %v5914 = vpack.c.b16 %v5874, %v5870
    %v5915 = vpack.c.b16 %v5875, %v5871
    %v5916 = vpack.c.b16 %v5876, %v5872
    %v5917 = vpack.c.b16 %v5877, %v5873
    %v5918 = vpack.c.b16 %v5882, %v5878
    %v5919 = vpack.c.b16 %v5883, %v5879
    %v5920 = vpack.c.b16 %v5884, %v5880
    %v5921 = vpack.c.b16 %v5885, %v5881
    %v5922 = vpack.c.b16 %v5890, %v5886
    %v5923 = vpack.c.b16 %v5891, %v5887
    %v5924 = vpack.c.b16 %v5892, %v5888
    %v5925 = vpack.c.b16 %v5893, %v5889
    %5958 = vmatprep.subr.bf16.mxu0 0
    %5959 = vmatpush1.bf16.msra.mxu0 %v5332
    %5960 = vmatprep.subr.bf16.mxu0 0
    %5961 = vmatpush1.bf16.msra.mxu0 %v5333
    %5962 = vmatprep.subr.bf16.mxu0 0
    %5963 = vmatpush1.bf16.msra.mxu0 %v5334
    %5964 = vmatprep.subr.bf16.mxu0 0
    %5965 = vmatpush1.bf16.msra.mxu0 %v5335
    %5966 = vmatprep.subr.bf16.mxu0 0
    %5967 = vmatpush1.bf16.msra.mxu0 %v5336
    %5968 = vmatprep.subr.bf16.mxu0 0
    %5969 = vmatpush1.bf16.msra.mxu0 %v5337
    %5970 = vmatprep.subr.bf16.mxu0 0
    %5971 = vmatpush1.bf16.msra.mxu0 %v5338
    %5972 = vmatprep.subr.bf16.mxu0 0
    %5973 = vmatpush1.bf16.msra.mxu0 %v5339
    %5974 = vmatprep.subr.bf16.mxu0 0
    %5975 = vmatpush1.bf16.msra.mxu0 %v5340
    %5976 = vmatprep.subr.bf16.mxu0 0
    %5977 = vmatpush1.bf16.msra.mxu0 %v5341
    %5978 = vmatprep.subr.bf16.mxu0 0
    %5979 = vmatpush1.bf16.msra.mxu0 %v5342
    %5980 = vmatprep.subr.bf16.mxu0 0
    %5981 = vmatpush1.bf16.msra.mxu0 %v5343
    %5982 = vmatprep.subr.bf16.mxu0 0
    %5983 = vmatpush1.bf16.msra.mxu0 %v5344
    %5984 = vmatprep.subr.bf16.mxu0 0
    %5985 = vmatpush1.bf16.msra.mxu0 %v5345
    %5986 = vmatprep.subr.bf16.mxu0 0
    %5987 = vmatpush1.bf16.msra.mxu0 %v5346
    %5988 = vmatprep.subr.bf16.mxu0 0
    %5989 = vmatpush1.bf16.msra.mxu0 %v5347
    %5990 = vmatprep.mubr.bf16.mxu0 %v5895
    %5991 = vmatmul.mubr.bf16.gmra.mrb[0].mxu0 %v5894
    %v5992 = vpop.f32.mrb[0].mxu0
    %v5993 = vadd.f32 0.0, %v5992
    %v5994 = vpop.f32.mrb[0].mxu0
    %v5995 = vpop.f32.mrb[0].mxu0
    %v5996 = vadd.f32 0.0, %v5995
    %v5997 = vpop.f32.mrb[0].mxu0
    %5998 = vmatprep.mubr.bf16.mxu0 %v5899
    %5999 = vmatmul.mubr.bf16.gmra.mrb[0].mxu0 %v5898
    %v6000 = vpop.f32.mrb[0].mxu0
    %v6001 = vadd.f32 0.0, %v6000
    %v6002 = vpop.f32.mrb[0].mxu0
    %v6003 = vpop.f32.mrb[0].mxu0
    %v6004 = vadd.f32 0.0, %v6003
    %v6005 = vpop.f32.mrb[0].mxu0
    %6006 = vmatprep.mubr.bf16.mxu0 %v5903
    %6007 = vmatmul.mubr.bf16.gmra.mrb[0].mxu0 %v5902
    %v6008 = vpop.f32.mrb[0].mxu0
    %v6009 = vadd.f32 0.0, %v6008
    %v6010 = vpop.f32.mrb[0].mxu0
    %v6011 = vpop.f32.mrb[0].mxu0
    %v6012 = vadd.f32 0.0, %v6011
    %v6013 = vpop.f32.mrb[0].mxu0
    %6014 = vmatprep.mubr.bf16.mxu0 %v5907
    %6015 = vmatmul.mubr.bf16.gmra.mrb[0].mxu0 %v5906
    %v6016 = vpop.f32.mrb[0].mxu0
    %v6017 = vadd.f32 0.0, %v6016
    %v6018 = vpop.f32.mrb[0].mxu0
    %v6019 = vpop.f32.mrb[0].mxu0
    %v6020 = vadd.f32 0.0, %v6019
    %v6021 = vpop.f32.mrb[0].mxu0
    %6022 = vmatprep.mubr.bf16.mxu0 %v5911
    %6023 = vmatmul.mubr.bf16.gmra.mrb[0].mxu0 %v5910
    %v6024 = vpop.f32.mrb[0].mxu0
    %v6025 = vadd.f32 0.0, %v6024
    %v6026 = vpop.f32.mrb[0].mxu0
    %v6027 = vpop.f32.mrb[0].mxu0
    %v6028 = vadd.f32 0.0, %v6027
    %v6029 = vpop.f32.mrb[0].mxu0
    %6030 = vmatprep.mubr.bf16.mxu0 %v5915
    %6031 = vmatmul.mubr.bf16.gmra.mrb[0].mxu0 %v5914
    %v6032 = vpop.f32.mrb[0].mxu0
    %v6033 = vadd.f32 0.0, %v6032
    %v6034 = vpop.f32.mrb[0].mxu0
    %v6035 = vpop.f32.mrb[0].mxu0
    %v6036 = vadd.f32 0.0, %v6035
    %v6037 = vpop.f32.mrb[0].mxu0
    %6038 = vmatprep.mubr.bf16.mxu0 %v5919
    %6039 = vmatmul.mubr.bf16.gmra.mrb[0].mxu0 %v5918
    %v6040 = vpop.f32.mrb[0].mxu0
    %v6041 = vadd.f32 0.0, %v6040
    %v6042 = vpop.f32.mrb[0].mxu0
    %v6043 = vpop.f32.mrb[0].mxu0
    %v6044 = vadd.f32 0.0, %v6043
    %v6045 = vpop.f32.mrb[0].mxu0
    %6046 = vmatprep.mubr.bf16.mxu0 %v5923
    %6047 = vmatmul.mubr.bf16.gmra.mrb[0].mxu0 %v5922
    %v6048 = vpop.f32.mrb[0].mxu0
    %v6049 = vadd.f32 0.0, %v6048
    %v6050 = vpop.f32.mrb[0].mxu0
    %v6051 = vpop.f32.mrb[0].mxu0
    %v6052 = vadd.f32 0.0, %v6051
    %v6053 = vpop.f32.mrb[0].mxu0
    %6054 = vdwg.mxu0
    %6055 = vmatprep.subr.bf16.mxu0 0
    %6056 = vmatpush1.bf16.msra.mxu0 %v5348
    %6057 = vmatprep.subr.bf16.mxu0 0
    %6058 = vmatpush1.bf16.msra.mxu0 %v5349
    %6059 = vmatprep.subr.bf16.mxu0 0
    %6060 = vmatpush1.bf16.msra.mxu0 %v5350
    %6061 = vmatprep.subr.bf16.mxu0 0
    %6062 = vmatpush1.bf16.msra.mxu0 %v5351
    %6063 = vmatprep.subr.bf16.mxu0 0
    %6064 = vmatpush1.bf16.msra.mxu0 %v5352
    %6065 = vmatprep.subr.bf16.mxu0 0
    %6066 = vmatpush1.bf16.msra.mxu0 %v5353
    %6067 = vmatprep.subr.bf16.mxu0 0
    %6068 = vmatpush1.bf16.msra.mxu0 %v5354
    %6069 = vmatprep.subr.bf16.mxu0 0
    %6070 = vmatpush1.bf16.msra.mxu0 %v5355
    %6071 = vmatprep.subr.bf16.mxu0 0
    %6072 = vmatpush1.bf16.msra.mxu0 %v5356
    %6073 = vmatprep.subr.bf16.mxu0 0
    %6074 = vmatpush1.bf16.msra.mxu0 %v5357
    %6075 = vmatprep.subr.bf16.mxu0 0
    %6076 = vmatpush1.bf16.msra.mxu0 %v5358
    %6077 = vmatprep.subr.bf16.mxu0 0
    %6078 = vmatpush1.bf16.msra.mxu0 %v5359
    %6079 = vmatprep.subr.bf16.mxu0 0
    %6080 = vmatpush1.bf16.msra.mxu0 %v5360
    %6081 = vmatprep.subr.bf16.mxu0 0
    %6082 = vmatpush1.bf16.msra.mxu0 %v5361
    %6083 = vmatprep.subr.bf16.mxu0 0
    %6084 = vmatpush1.bf16.msra.mxu0 %v5362
    %6085 = vmatprep.subr.bf16.mxu0 0
    %6086 = vmatpush1.bf16.msra.mxu0 %v5363
    %6087 = vmatprep.mubr.bf16.mxu0 %v5897
    %6088 = vmatmul.mubr.bf16.gmra.mrb[0].mxu0 %v5896
    %v6089 = vpop.f32.mrb[0].mxu0
    %v6090 = vadd.f32 %v5993, %v6089
    %v6091 = vpop.f32.mrb[0].mxu0
    %v6092 = vpop.f32.mrb[0].mxu0
    %v6093 = vadd.f32 %v5996, %v6092
    %v6094 = vpop.f32.mrb[0].mxu0
    %6095 = vmatprep.mubr.bf16.mxu0 %v5901
    %6096 = vmatmul.mubr.bf16.gmra.mrb[0].mxu0 %v5900
    %v6097 = vpop.f32.mrb[0].mxu0
    %v6098 = vadd.f32 %v6001, %v6097
    %v6099 = vpop.f32.mrb[0].mxu0
    %v6100 = vpop.f32.mrb[0].mxu0
    %v6101 = vadd.f32 %v6004, %v6100
    %v6102 = vpop.f32.mrb[0].mxu0
    %6103 = vmatprep.mubr.bf16.mxu0 %v5905
    %6104 = vmatmul.mubr.bf16.gmra.mrb[0].mxu0 %v5904
    %v6105 = vpop.f32.mrb[0].mxu0
    %v6106 = vadd.f32 %v6009, %v6105
    %v6107 = vpop.f32.mrb[0].mxu0
    %v6108 = vpop.f32.mrb[0].mxu0
    %v6109 = vadd.f32 %v6012, %v6108
    %v6110 = vpop.f32.mrb[0].mxu0
    %6111 = vmatprep.mubr.bf16.mxu0 %v5909
    %6112 = vmatmul.mubr.bf16.gmra.mrb[0].mxu0 %v5908
    %v6113 = vpop.f32.mrb[0].mxu0
    %v6114 = vadd.f32 %v6017, %v6113
    %v6115 = vpop.f32.mrb[0].mxu0
    %v6116 = vpop.f32.mrb[0].mxu0
    %v6117 = vadd.f32 %v6020, %v6116
    %v6118 = vpop.f32.mrb[0].mxu0
    %6119 = vmatprep.mubr.bf16.mxu0 %v5913
    %6120 = vmatmul.mubr.bf16.gmra.mrb[0].mxu0 %v5912
    %v6121 = vpop.f32.mrb[0].mxu0
    %v6122 = vadd.f32 %v6025, %v6121
    %v6123 = vpop.f32.mrb[0].mxu0
    %v6124 = vpop.f32.mrb[0].mxu0
    %v6125 = vadd.f32 %v6028, %v6124
    %v6126 = vpop.f32.mrb[0].mxu0
    %6127 = vmatprep.mubr.bf16.mxu0 %v5917
    %6128 = vmatmul.mubr.bf16.gmra.mrb[0].mxu0 %v5916
    %v6129 = vpop.f32.mrb[0].mxu0
    %v6130 = vadd.f32 %v6033, %v6129
    %v6131 = vpop.f32.mrb[0].mxu0
    %v6132 = vpop.f32.mrb[0].mxu0
    %v6133 = vadd.f32 %v6036, %v6132
    %v6134 = vpop.f32.mrb[0].mxu0
    %6135 = vmatprep.mubr.bf16.mxu0 %v5921
    %6136 = vmatmul.mubr.bf16.gmra.mrb[0].mxu0 %v5920
    %v6137 = vpop.f32.mrb[0].mxu0
    %v6138 = vadd.f32 %v6041, %v6137
    %v6139 = vpop.f32.mrb[0].mxu0
    %v6140 = vpop.f32.mrb[0].mxu0
    %v6141 = vadd.f32 %v6044, %v6140
    %v6142 = vpop.f32.mrb[0].mxu0
    %6143 = vmatprep.mubr.bf16.mxu0 %v5925
    %6144 = vmatmul.mubr.bf16.gmra.mrb[0].mxu0 %v5924
    %v6145 = vpop.f32.mrb[0].mxu0
    %v6146 = vadd.f32 %v6049, %v6145
    %v6147 = vpop.f32.mrb[0].mxu0
    %v6148 = vpop.f32.mrb[0].mxu0
    %v6149 = vadd.f32 %v6052, %v6148
    %v6150 = vpop.f32.mrb[0].mxu0
    %6151 = vdwg.mxu0
    %v6152 = vpack.c.bf16 %v6093, %v6090
    %v6153 = vpack.c.bf16 %v6101, %v6098
    %v6154 = vpack.c.bf16 %v6109, %v6106
    %v6155 = vpack.c.bf16 %v6117, %v6114
    %v6156 = vpack.c.bf16 %v6125, %v6122
    %v6157 = vpack.c.bf16 %v6133, %v6130
    %v6158 = vpack.c.bf16 %v6141, %v6138
    %v6159 = vpack.c.bf16 %v6149, %v6146
    %v6164 = vunpack.c.l.b16 %v5794
    %v6165 = vunpack.c.l.b16 %v5795
    %v6166 = vunpack.c.l.b16 %v5796
    %v6167 = vunpack.c.l.b16 %v5797
    %v6168 = vpack.c.b16 %v6165, %v6164
    %v6169 = vpack.c.b16 %v6167, %v6166
    %vm6172 = vcmask 261120
    %v6174 = vsel %vm6172, %v6152, 0
    %v6177 = vsel %vm6172, %v6153, 0
    %v6180 = vsel %vm6172, %v6154, 0
    %v6183 = vsel %vm6172, %v6155, 0
    %v6186 = vsel %vm6172, %v6156, 0
    %v6189 = vsel %vm6172, %v6157, 0
    %v6192 = vsel %vm6172, %v6158, 0
    %v6195 = vsel %vm6172, %v6159, 0
    %6197 = vmatprep.subr.bf16.mxu0 0
    %6198 = vmatpush1.bf16.msra.mxu0 %v6168
    %6199 = vmatprep.subr.bf16.mxu0 0
    %6200 = vmatpush1.bf16.msra.mxu0 %v6169
    %6201 = vmatprep.subr.bf16.mxu0 0
    %6202 = vmatpush1.bf16.msra.mxu0 0
    %6203 = vmatprep.subr.bf16.mxu0 0
    %6204 = vmatpush1.bf16.msra.mxu0 0
    %6205 = vmatprep.subr.bf16.mxu0 0
    %6206 = vmatpush1.bf16.msra.mxu0 0
    %6207 = vmatprep.subr.bf16.mxu0 0
    %6208 = vmatpush1.bf16.msra.mxu0 0
    %6209 = vmatprep.subr.bf16.mxu0 0
    %6210 = vmatpush1.bf16.msra.mxu0 0
    %6211 = vmatprep.subr.bf16.mxu0 0
    %6212 = vmatpush1.bf16.msra.mxu0 0
    %6213 = vmatprep.subr.bf16.mxu0 0
    %6214 = vmatpush1.bf16.msra.mxu0 0
    %6215 = vmatprep.subr.bf16.mxu0 0
    %6216 = vmatpush1.bf16.msra.mxu0 0
    %6217 = vmatprep.subr.bf16.mxu0 0
    %6218 = vmatpush1.bf16.msra.mxu0 0
    %6219 = vmatprep.subr.bf16.mxu0 0
    %6220 = vmatpush1.bf16.msra.mxu0 0
    %6221 = vmatprep.subr.bf16.mxu0 0
    %6222 = vmatpush1.bf16.msra.mxu0 0
    %6223 = vmatprep.subr.bf16.mxu0 0
    %6224 = vmatpush1.bf16.msra.mxu0 0
    %6225 = vmatprep.subr.bf16.mxu0 0
    %6226 = vmatpush1.bf16.msra.mxu0 0
    %6227 = vmatprep.subr.bf16.mxu0 0
    %6228 = vmatpush1.bf16.msra.mxu0 0
    %6229 = vmatprep.mubr.bf16.mxu0 0
    %6230 = vmatmul.mubr.bf16.gmra.mrb[0].mxu0 %v6174
    %v6231 = vpop.f32.mrb[0].mxu0
    %v6232 = vadd.f32 0.0, %v6231
    %v6233 = vpop.f32.mrb[0].mxu0
    %v6234 = vpop.f32.mrb[0].mxu0
    %v6235 = vadd.f32 0.0, %v6234
    %v6236 = vpop.f32.mrb[0].mxu0
    %6237 = vmatprep.mubr.bf16.mxu0 0
    %6238 = vmatmul.mubr.bf16.gmra.mrb[0].mxu0 %v6177
    %v6239 = vpop.f32.mrb[0].mxu0
    %v6240 = vadd.f32 0.0, %v6239
    %v6241 = vpop.f32.mrb[0].mxu0
    %v6242 = vpop.f32.mrb[0].mxu0
    %v6243 = vadd.f32 0.0, %v6242
    %v6244 = vpop.f32.mrb[0].mxu0
    %6245 = vmatprep.mubr.bf16.mxu0 0
    %6246 = vmatmul.mubr.bf16.gmra.mrb[0].mxu0 %v6180
    %v6247 = vpop.f32.mrb[0].mxu0
    %v6248 = vadd.f32 0.0, %v6247
    %v6249 = vpop.f32.mrb[0].mxu0
    %v6250 = vpop.f32.mrb[0].mxu0
    %v6251 = vadd.f32 0.0, %v6250
    %v6252 = vpop.f32.mrb[0].mxu0
    %6253 = vmatprep.mubr.bf16.mxu0 0
    %6254 = vmatmul.mubr.bf16.gmra.mrb[0].mxu0 %v6183
    %v6255 = vpop.f32.mrb[0].mxu0
    %v6256 = vadd.f32 0.0, %v6255
    %v6257 = vpop.f32.mrb[0].mxu0
    %v6258 = vpop.f32.mrb[0].mxu0
    %v6259 = vadd.f32 0.0, %v6258
    %v6260 = vpop.f32.mrb[0].mxu0
    %6261 = vmatprep.mubr.bf16.mxu0 0
    %6262 = vmatmul.mubr.bf16.gmra.mrb[0].mxu0 %v6186
    %v6263 = vpop.f32.mrb[0].mxu0
    %v6264 = vadd.f32 0.0, %v6263
    %v6265 = vpop.f32.mrb[0].mxu0
    %v6266 = vpop.f32.mrb[0].mxu0
    %v6267 = vadd.f32 0.0, %v6266
    %v6268 = vpop.f32.mrb[0].mxu0
    %6269 = vmatprep.mubr.bf16.mxu0 0
    %6270 = vmatmul.mubr.bf16.gmra.mrb[0].mxu0 %v6189
    %v6271 = vpop.f32.mrb[0].mxu0
    %v6272 = vadd.f32 0.0, %v6271
    %v6273 = vpop.f32.mrb[0].mxu0
    %v6274 = vpop.f32.mrb[0].mxu0
    %v6275 = vadd.f32 0.0, %v6274
    %v6276 = vpop.f32.mrb[0].mxu0
    %6277 = vmatprep.mubr.bf16.mxu0 0
    %6278 = vmatmul.mubr.bf16.gmra.mrb[0].mxu0 %v6192
    %v6279 = vpop.f32.mrb[0].mxu0
    %v6280 = vadd.f32 0.0, %v6279
    %v6281 = vpop.f32.mrb[0].mxu0
    %v6282 = vpop.f32.mrb[0].mxu0
    %v6283 = vadd.f32 0.0, %v6282
    %v6284 = vpop.f32.mrb[0].mxu0
    %6285 = vmatprep.mubr.bf16.mxu0 0
    %6286 = vmatmul.mubr.bf16.gmra.mrb[0].mxu0 %v6195
    %v6287 = vpop.f32.mrb[0].mxu0
    %v6288 = vadd.f32 0.0, %v6287
    %v6289 = vpop.f32.mrb[0].mxu0
    %v6290 = vpop.f32.mrb[0].mxu0
    %v6291 = vadd.f32 0.0, %v6290
    %v6292 = vpop.f32.mrb[0].mxu0
    %6293 = vdwg.mxu0
    %v6298 = vunpack.c.l.b16 %v5396
    %v6299 = vunpack.c.l.b16 %v5397
    %v6300 = vunpack.c.l.b16 %v5398
    %v6301 = vunpack.c.l.b16 %v5399
    %v6302 = vpack.c.b16 %v6299, %v6298
    %v6303 = vpack.c.b16 %v6301, %v6300
    %v6307 = vsel %vm6172, %v5754, 0
    %v6310 = vsel %vm6172, %v5755, 0
    %v6313 = vsel %vm6172, %v5756, 0
    %v6316 = vsel %vm6172, %v5757, 0
    %v6319 = vsel %vm6172, %v5758, 0
    %v6322 = vsel %vm6172, %v5759, 0
    %v6325 = vsel %vm6172, %v5760, 0
    %v6328 = vsel %vm6172, %v5761, 0
    %6330 = vmatprep.subr.bf16.mxu0 0
    %6331 = vmatpush1.bf16.msra.mxu0 %v6302
    %6332 = vmatprep.subr.bf16.mxu0 0
    %6333 = vmatpush1.bf16.msra.mxu0 %v6303
    %6334 = vmatprep.subr.bf16.mxu0 0
    %6335 = vmatpush1.bf16.msra.mxu0 0
    %6336 = vmatprep.subr.bf16.mxu0 0
    %6337 = vmatpush1.bf16.msra.mxu0 0
    %6338 = vmatprep.subr.bf16.mxu0 0
    %6339 = vmatpush1.bf16.msra.mxu0 0
    %6340 = vmatprep.subr.bf16.mxu0 0
    %6341 = vmatpush1.bf16.msra.mxu0 0
    %6342 = vmatprep.subr.bf16.mxu0 0
    %6343 = vmatpush1.bf16.msra.mxu0 0
    %6344 = vmatprep.subr.bf16.mxu0 0
    %6345 = vmatpush1.bf16.msra.mxu0 0
    %6346 = vmatprep.subr.bf16.mxu0 0
    %6347 = vmatpush1.bf16.msra.mxu0 0
    %6348 = vmatprep.subr.bf16.mxu0 0
    %6349 = vmatpush1.bf16.msra.mxu0 0
    %6350 = vmatprep.subr.bf16.mxu0 0
    %6351 = vmatpush1.bf16.msra.mxu0 0
    %6352 = vmatprep.subr.bf16.mxu0 0
    %6353 = vmatpush1.bf16.msra.mxu0 0
    %6354 = vmatprep.subr.bf16.mxu0 0
    %6355 = vmatpush1.bf16.msra.mxu0 0
    %6356 = vmatprep.subr.bf16.mxu0 0
    %6357 = vmatpush1.bf16.msra.mxu0 0
    %6358 = vmatprep.subr.bf16.mxu0 0
    %6359 = vmatpush1.bf16.msra.mxu0 0
    %6360 = vmatprep.subr.bf16.mxu0 0
    %6361 = vmatpush1.bf16.msra.mxu0 0
    %6362 = vmatprep.mubr.bf16.mxu0 0
    %6363 = vmatmul.mubr.bf16.gmra.mrb[0].mxu0 %v6307
    %v6364 = vpop.f32.mrb[0].mxu0
    %v6365 = vadd.f32 %v6232, %v6364
    %v6366 = vpop.f32.mrb[0].mxu0
    %v6367 = vpop.f32.mrb[0].mxu0
    %v6368 = vadd.f32 %v6235, %v6367
    %v6369 = vpop.f32.mrb[0].mxu0
    %6370 = vmatprep.mubr.bf16.mxu0 0
    %6371 = vmatmul.mubr.bf16.gmra.mrb[0].mxu0 %v6310
    %v6372 = vpop.f32.mrb[0].mxu0
    %v6373 = vadd.f32 %v6240, %v6372
    %v6374 = vpop.f32.mrb[0].mxu0
    %v6375 = vpop.f32.mrb[0].mxu0
    %v6376 = vadd.f32 %v6243, %v6375
    %v6377 = vpop.f32.mrb[0].mxu0
    %6378 = vmatprep.mubr.bf16.mxu0 0
    %6379 = vmatmul.mubr.bf16.gmra.mrb[0].mxu0 %v6313
    %v6380 = vpop.f32.mrb[0].mxu0
    %v6381 = vadd.f32 %v6248, %v6380
    %v6382 = vpop.f32.mrb[0].mxu0
    %v6383 = vpop.f32.mrb[0].mxu0
    %v6384 = vadd.f32 %v6251, %v6383
    %v6385 = vpop.f32.mrb[0].mxu0
    %6386 = vmatprep.mubr.bf16.mxu0 0
    %6387 = vmatmul.mubr.bf16.gmra.mrb[0].mxu0 %v6316
    %v6388 = vpop.f32.mrb[0].mxu0
    %v6389 = vadd.f32 %v6256, %v6388
    %v6390 = vpop.f32.mrb[0].mxu0
    %v6391 = vpop.f32.mrb[0].mxu0
    %v6392 = vadd.f32 %v6259, %v6391
    %v6393 = vpop.f32.mrb[0].mxu0
    %6394 = vmatprep.mubr.bf16.mxu0 0
    %6395 = vmatmul.mubr.bf16.gmra.mrb[0].mxu0 %v6319
    %v6396 = vpop.f32.mrb[0].mxu0
    %v6397 = vadd.f32 %v6264, %v6396
    %v6398 = vpop.f32.mrb[0].mxu0
    %v6399 = vpop.f32.mrb[0].mxu0
    %v6400 = vadd.f32 %v6267, %v6399
    %v6401 = vpop.f32.mrb[0].mxu0
    %6402 = vmatprep.mubr.bf16.mxu0 0
    %6403 = vmatmul.mubr.bf16.gmra.mrb[0].mxu0 %v6322
    %v6404 = vpop.f32.mrb[0].mxu0
    %v6405 = vadd.f32 %v6272, %v6404
    %v6406 = vpop.f32.mrb[0].mxu0
    %v6407 = vpop.f32.mrb[0].mxu0
    %v6408 = vadd.f32 %v6275, %v6407
    %v6409 = vpop.f32.mrb[0].mxu0
    %6410 = vmatprep.mubr.bf16.mxu0 0
    %6411 = vmatmul.mubr.bf16.gmra.mrb[0].mxu0 %v6325
    %v6412 = vpop.f32.mrb[0].mxu0
    %v6413 = vadd.f32 %v6280, %v6412
    %v6414 = vpop.f32.mrb[0].mxu0
    %v6415 = vpop.f32.mrb[0].mxu0
    %v6416 = vadd.f32 %v6283, %v6415
    %v6417 = vpop.f32.mrb[0].mxu0
    %6418 = vmatprep.mubr.bf16.mxu0 0
    %6419 = vmatmul.mubr.bf16.gmra.mrb[0].mxu0 %v6328
    %v6420 = vpop.f32.mrb[0].mxu0
    %v6421 = vadd.f32 %v6288, %v6420
    %v6422 = vpop.f32.mrb[0].mxu0
    %v6423 = vpop.f32.mrb[0].mxu0
    %v6424 = vadd.f32 %v6291, %v6423
    %v6425 = vpop.f32.mrb[0].mxu0
    %6426 = vdwg.mxu0
    %v6427 = vld [vmem:[%s7 + $0x200] sm:$0xff]
    %v6428 = vld [vmem:[%s7 + $0x208] sm:$0xff]
    %v6429 = vld [vmem:[%s7 + $0x210] sm:$0xff]
    %v6430 = vld [vmem:[%s7 + $0x218] sm:$0xff]
    %v6431 = vld [vmem:[%s7 + $0x220] sm:$0xff]
    %v6432 = vld [vmem:[%s7 + $0x228] sm:$0xff]
    %v6433 = vld [vmem:[%s7 + $0x230] sm:$0xff]
    %v6434 = vld [vmem:[%s7 + $0x238] sm:$0xff]
    %v6435 = vld [vmem:[%s7 + $0x240] sm:$0xff]
    %v6436 = vld [vmem:[%s7 + $0x248] sm:$0xff]
    %v6437 = vld [vmem:[%s7 + $0x250] sm:$0xff]
    %v6438 = vld [vmem:[%s7 + $0x258] sm:$0xff]
    %v6439 = vld [vmem:[%s7 + $0x260] sm:$0xff]
    %v6440 = vld [vmem:[%s7 + $0x268] sm:$0xff]
    %v6441 = vld [vmem:[%s7 + $0x270] sm:$0xff]
    %v6442 = vld [vmem:[%s7 + $0x278] sm:$0xff]
    %v6443 = vld [vmem:[%s7 + $0x280] sm:$0xff]
    %v6444 = vld [vmem:[%s7 + $0x288] sm:$0xff]
    %v6445 = vld [vmem:[%s7 + $0x290] sm:$0xff]
    %v6446 = vld [vmem:[%s7 + $0x298] sm:$0xff]
    %v6447 = vld [vmem:[%s7 + $0x2a0] sm:$0xff]
    %v6448 = vld [vmem:[%s7 + $0x2a8] sm:$0xff]
    %v6449 = vld [vmem:[%s7 + $0x2b0] sm:$0xff]
    %v6450 = vld [vmem:[%s7 + $0x2b8] sm:$0xff]
    %v6451 = vld [vmem:[%s7 + $0x2c0] sm:$0xff]
    %v6452 = vld [vmem:[%s7 + $0x2c8] sm:$0xff]
    %v6453 = vld [vmem:[%s7 + $0x2d0] sm:$0xff]
    %v6454 = vld [vmem:[%s7 + $0x2d8] sm:$0xff]
    %v6455 = vld [vmem:[%s7 + $0x2e0] sm:$0xff]
    %v6456 = vld [vmem:[%s7 + $0x2e8] sm:$0xff]
    %v6457 = vld [vmem:[%s7 + $0x2f0] sm:$0xff]
    %v6458 = vld [vmem:[%s7 + $0x2f8] sm:$0xff]
    %v6459 = vld [vmem:[%s8 + $0x20] sm:$0xf]
    %v6460 = vld [vmem:[%s8 + $0x24] sm:$0xf]
    %v6461 = vld [vmem:[%s8 + $0x28] sm:$0xf]
    %v6462 = vld [vmem:[%s8 + $0x2c] sm:$0xf]
    %v6495 = vunpack.c.l.b16 %v6427
    %v6496 = vunpack.c.h.b16 %v6427
    %v6497 = vunpack.c.l.b16 %v6428
    %v6498 = vunpack.c.h.b16 %v6428
    %v6499 = vunpack.c.l.b16 %v6429
    %v6500 = vunpack.c.h.b16 %v6429
    %v6501 = vunpack.c.l.b16 %v6430
    %v6502 = vunpack.c.h.b16 %v6430
    %v6503 = vunpack.c.l.b16 %v6431
    %v6504 = vunpack.c.h.b16 %v6431
    %v6505 = vunpack.c.l.b16 %v6432
    %v6506 = vunpack.c.h.b16 %v6432
    %v6507 = vunpack.c.l.b16 %v6433
    %v6508 = vunpack.c.h.b16 %v6433
    %v6509 = vunpack.c.l.b16 %v6434
    %v6510 = vunpack.c.h.b16 %v6434
    %v6511 = vunpack.c.l.b16 %v6435
    %v6512 = vunpack.c.h.b16 %v6435
    %v6513 = vunpack.c.l.b16 %v6436
    %v6514 = vunpack.c.h.b16 %v6436
    %v6515 = vunpack.c.l.b16 %v6437
    %v6516 = vunpack.c.h.b16 %v6437
    %v6517 = vunpack.c.l.b16 %v6438
    %v6518 = vunpack.c.h.b16 %v6438
    %v6519 = vunpack.c.l.b16 %v6439
    %v6520 = vunpack.c.h.b16 %v6439
    %v6521 = vunpack.c.l.b16 %v6440
    %v6522 = vunpack.c.h.b16 %v6440
    %v6523 = vunpack.c.l.b16 %v6441
    %v6524 = vunpack.c.h.b16 %v6441
    %v6525 = vunpack.c.l.b16 %v6442
    %v6526 = vunpack.c.h.b16 %v6442
    %v6527 = vunpack.c.l.b16 %v6443
    %v6528 = vunpack.c.h.b16 %v6443
    %v6529 = vunpack.c.l.b16 %v6444
    %v6530 = vunpack.c.h.b16 %v6444
    %v6531 = vunpack.c.l.b16 %v6445
    %v6532 = vunpack.c.h.b16 %v6445
    %v6533 = vunpack.c.l.b16 %v6446
    %v6534 = vunpack.c.h.b16 %v6446
    %v6535 = vunpack.c.l.b16 %v6447
    %v6536 = vunpack.c.h.b16 %v6447
    %v6537 = vunpack.c.l.b16 %v6448
    %v6538 = vunpack.c.h.b16 %v6448
    %v6539 = vunpack.c.l.b16 %v6449
    %v6540 = vunpack.c.h.b16 %v6449
    %v6541 = vunpack.c.l.b16 %v6450
    %v6542 = vunpack.c.h.b16 %v6450
    %v6543 = vunpack.c.l.b16 %v6451
    %v6544 = vunpack.c.h.b16 %v6451
    %v6545 = vunpack.c.l.b16 %v6452
    %v6546 = vunpack.c.h.b16 %v6452
    %v6547 = vunpack.c.l.b16 %v6453
    %v6548 = vunpack.c.h.b16 %v6453
    %v6549 = vunpack.c.l.b16 %v6454
    %v6550 = vunpack.c.h.b16 %v6454
    %v6551 = vunpack.c.l.b16 %v6455
    %v6552 = vunpack.c.h.b16 %v6455
    %v6553 = vunpack.c.l.b16 %v6456
    %v6554 = vunpack.c.h.b16 %v6456
    %v6555 = vunpack.c.l.b16 %v6457
    %v6556 = vunpack.c.h.b16 %v6457
    %v6557 = vunpack.c.l.b16 %v6458
    %v6558 = vunpack.c.h.b16 %v6458
    %v6559 = vpack.c.b16 %v6499, %v6495
    %v6560 = vpack.c.b16 %v6500, %v6496
    %v6561 = vpack.c.b16 %v6501, %v6497
    %v6562 = vpack.c.b16 %v6502, %v6498
    %v6563 = vpack.c.b16 %v6507, %v6503
    %v6564 = vpack.c.b16 %v6508, %v6504
    %v6565 = vpack.c.b16 %v6509, %v6505
    %v6566 = vpack.c.b16 %v6510, %v6506
    %v6567 = vpack.c.b16 %v6515, %v6511
    %v6568 = vpack.c.b16 %v6516, %v6512
    %v6569 = vpack.c.b16 %v6517, %v6513
    %v6570 = vpack.c.b16 %v6518, %v6514
    %v6571 = vpack.c.b16 %v6523, %v6519
    %v6572 = vpack.c.b16 %v6524, %v6520
    %v6573 = vpack.c.b16 %v6525, %v6521
    %v6574 = vpack.c.b16 %v6526, %v6522
    %v6575 = vpack.c.b16 %v6531, %v6527
    %v6576 = vpack.c.b16 %v6532, %v6528
    %v6577 = vpack.c.b16 %v6533, %v6529
    %v6578 = vpack.c.b16 %v6534, %v6530
    %v6579 = vpack.c.b16 %v6539, %v6535
    %v6580 = vpack.c.b16 %v6540, %v6536
    %v6581 = vpack.c.b16 %v6541, %v6537
    %v6582 = vpack.c.b16 %v6542, %v6538
    %v6583 = vpack.c.b16 %v6547, %v6543
    %v6584 = vpack.c.b16 %v6548, %v6544
    %v6585 = vpack.c.b16 %v6549, %v6545
    %v6586 = vpack.c.b16 %v6550, %v6546
    %v6587 = vpack.c.b16 %v6555, %v6551
    %v6588 = vpack.c.b16 %v6556, %v6552
    %v6589 = vpack.c.b16 %v6557, %v6553
    %v6590 = vpack.c.b16 %v6558, %v6554
    %6623 = vmatprep.subr.bf16.mxu0 0
    %6624 = vmatpush1.bf16.msra.mxu0 %v5332
    %6625 = vmatprep.subr.bf16.mxu0 0
    %6626 = vmatpush1.bf16.msra.mxu0 %v5333
    %6627 = vmatprep.subr.bf16.mxu0 0
    %6628 = vmatpush1.bf16.msra.mxu0 %v5334
    %6629 = vmatprep.subr.bf16.mxu0 0
    %6630 = vmatpush1.bf16.msra.mxu0 %v5335
    %6631 = vmatprep.subr.bf16.mxu0 0
    %6632 = vmatpush1.bf16.msra.mxu0 %v5336
    %6633 = vmatprep.subr.bf16.mxu0 0
    %6634 = vmatpush1.bf16.msra.mxu0 %v5337
    %6635 = vmatprep.subr.bf16.mxu0 0
    %6636 = vmatpush1.bf16.msra.mxu0 %v5338
    %6637 = vmatprep.subr.bf16.mxu0 0
    %6638 = vmatpush1.bf16.msra.mxu0 %v5339
    %6639 = vmatprep.subr.bf16.mxu0 0
    %6640 = vmatpush1.bf16.msra.mxu0 %v5340
    %6641 = vmatprep.subr.bf16.mxu0 0
    %6642 = vmatpush1.bf16.msra.mxu0 %v5341
    %6643 = vmatprep.subr.bf16.mxu0 0
    %6644 = vmatpush1.bf16.msra.mxu0 %v5342
    %6645 = vmatprep.subr.bf16.mxu0 0
    %6646 = vmatpush1.bf16.msra.mxu0 %v5343
    %6647 = vmatprep.subr.bf16.mxu0 0
    %6648 = vmatpush1.bf16.msra.mxu0 %v5344
    %6649 = vmatprep.subr.bf16.mxu0 0
    %6650 = vmatpush1.bf16.msra.mxu0 %v5345
    %6651 = vmatprep.subr.bf16.mxu0 0
    %6652 = vmatpush1.bf16.msra.mxu0 %v5346
    %6653 = vmatprep.subr.bf16.mxu0 0
    %6654 = vmatpush1.bf16.msra.mxu0 %v5347
    %6655 = vmatprep.mubr.bf16.mxu0 %v6560
    %6656 = vmatmul.mubr.bf16.gmra.mrb[0].mxu0 %v6559
    %v6657 = vpop.f32.mrb[0].mxu0
    %v6658 = vadd.f32 0.0, %v6657
    %v6659 = vpop.f32.mrb[0].mxu0
    %v6660 = vpop.f32.mrb[0].mxu0
    %v6661 = vadd.f32 0.0, %v6660
    %v6662 = vpop.f32.mrb[0].mxu0
    %6663 = vmatprep.mubr.bf16.mxu0 %v6564
    %6664 = vmatmul.mubr.bf16.gmra.mrb[0].mxu0 %v6563
    %v6665 = vpop.f32.mrb[0].mxu0
    %v6666 = vadd.f32 0.0, %v6665
    %v6667 = vpop.f32.mrb[0].mxu0
    %v6668 = vpop.f32.mrb[0].mxu0
    %v6669 = vadd.f32 0.0, %v6668
    %v6670 = vpop.f32.mrb[0].mxu0
    %6671 = vmatprep.mubr.bf16.mxu0 %v6568
    %6672 = vmatmul.mubr.bf16.gmra.mrb[0].mxu0 %v6567
    %v6673 = vpop.f32.mrb[0].mxu0
    %v6674 = vadd.f32 0.0, %v6673
    %v6675 = vpop.f32.mrb[0].mxu0
    %v6676 = vpop.f32.mrb[0].mxu0
    %v6677 = vadd.f32 0.0, %v6676
    %v6678 = vpop.f32.mrb[0].mxu0
    %6679 = vmatprep.mubr.bf16.mxu0 %v6572
    %6680 = vmatmul.mubr.bf16.gmra.mrb[0].mxu0 %v6571
    %v6681 = vpop.f32.mrb[0].mxu0
    %v6682 = vadd.f32 0.0, %v6681
    %v6683 = vpop.f32.mrb[0].mxu0
    %v6684 = vpop.f32.mrb[0].mxu0
    %v6685 = vadd.f32 0.0, %v6684
    %v6686 = vpop.f32.mrb[0].mxu0
    %6687 = vmatprep.mubr.bf16.mxu0 %v6576
    %6688 = vmatmul.mubr.bf16.gmra.mrb[0].mxu0 %v6575
    %v6689 = vpop.f32.mrb[0].mxu0
    %v6690 = vadd.f32 0.0, %v6689
    %v6691 = vpop.f32.mrb[0].mxu0
    %v6692 = vpop.f32.mrb[0].mxu0
    %v6693 = vadd.f32 0.0, %v6692
    %v6694 = vpop.f32.mrb[0].mxu0
    %6695 = vmatprep.mubr.bf16.mxu0 %v6580
    %6696 = vmatmul.mubr.bf16.gmra.mrb[0].mxu0 %v6579
    %v6697 = vpop.f32.mrb[0].mxu0
    %v6698 = vadd.f32 0.0, %v6697
    %v6699 = vpop.f32.mrb[0].mxu0
    %v6700 = vpop.f32.mrb[0].mxu0
    %v6701 = vadd.f32 0.0, %v6700
    %v6702 = vpop.f32.mrb[0].mxu0
    %6703 = vmatprep.mubr.bf16.mxu0 %v6584
    %6704 = vmatmul.mubr.bf16.gmra.mrb[0].mxu0 %v6583
    %v6705 = vpop.f32.mrb[0].mxu0
    %v6706 = vadd.f32 0.0, %v6705
    %v6707 = vpop.f32.mrb[0].mxu0
    %v6708 = vpop.f32.mrb[0].mxu0
    %v6709 = vadd.f32 0.0, %v6708
    %v6710 = vpop.f32.mrb[0].mxu0
    %6711 = vmatprep.mubr.bf16.mxu0 %v6588
    %6712 = vmatmul.mubr.bf16.gmra.mrb[0].mxu0 %v6587
    %v6713 = vpop.f32.mrb[0].mxu0
    %v6714 = vadd.f32 0.0, %v6713
    %v6715 = vpop.f32.mrb[0].mxu0
    %v6716 = vpop.f32.mrb[0].mxu0
    %v6717 = vadd.f32 0.0, %v6716
    %v6718 = vpop.f32.mrb[0].mxu0
    %6719 = vdwg.mxu0
    %6720 = vmatprep.subr.bf16.mxu0 0
    %6721 = vmatpush1.bf16.msra.mxu0 %v5348
    %6722 = vmatprep.subr.bf16.mxu0 0
    %6723 = vmatpush1.bf16.msra.mxu0 %v5349
    %6724 = vmatprep.subr.bf16.mxu0 0
    %6725 = vmatpush1.bf16.msra.mxu0 %v5350
    %6726 = vmatprep.subr.bf16.mxu0 0
    %6727 = vmatpush1.bf16.msra.mxu0 %v5351
    %6728 = vmatprep.subr.bf16.mxu0 0
    %6729 = vmatpush1.bf16.msra.mxu0 %v5352
    %6730 = vmatprep.subr.bf16.mxu0 0
    %6731 = vmatpush1.bf16.msra.mxu0 %v5353
    %6732 = vmatprep.subr.bf16.mxu0 0
    %6733 = vmatpush1.bf16.msra.mxu0 %v5354
    %6734 = vmatprep.subr.bf16.mxu0 0
    %6735 = vmatpush1.bf16.msra.mxu0 %v5355
    %6736 = vmatprep.subr.bf16.mxu0 0
    %6737 = vmatpush1.bf16.msra.mxu0 %v5356
    %6738 = vmatprep.subr.bf16.mxu0 0
    %6739 = vmatpush1.bf16.msra.mxu0 %v5357
    %6740 = vmatprep.subr.bf16.mxu0 0
    %6741 = vmatpush1.bf16.msra.mxu0 %v5358
    %6742 = vmatprep.subr.bf16.mxu0 0
    %6743 = vmatpush1.bf16.msra.mxu0 %v5359
    %6744 = vmatprep.subr.bf16.mxu0 0
    %6745 = vmatpush1.bf16.msra.mxu0 %v5360
    %6746 = vmatprep.subr.bf16.mxu0 0
    %6747 = vmatpush1.bf16.msra.mxu0 %v5361
    %6748 = vmatprep.subr.bf16.mxu0 0
    %6749 = vmatpush1.bf16.msra.mxu0 %v5362
    %6750 = vmatprep.subr.bf16.mxu0 0
    %6751 = vmatpush1.bf16.msra.mxu0 %v5363
    %6752 = vmatprep.mubr.bf16.mxu0 %v6562
    %6753 = vmatmul.mubr.bf16.gmra.mrb[0].mxu0 %v6561
    %v6754 = vpop.f32.mrb[0].mxu0
    %v6755 = vadd.f32 %v6658, %v6754
    %v6756 = vpop.f32.mrb[0].mxu0
    %v6757 = vpop.f32.mrb[0].mxu0
    %v6758 = vadd.f32 %v6661, %v6757
    %v6759 = vpop.f32.mrb[0].mxu0
    %6760 = vmatprep.mubr.bf16.mxu0 %v6566
    %6761 = vmatmul.mubr.bf16.gmra.mrb[0].mxu0 %v6565
    %v6762 = vpop.f32.mrb[0].mxu0
    %v6763 = vadd.f32 %v6666, %v6762
    %v6764 = vpop.f32.mrb[0].mxu0
    %v6765 = vpop.f32.mrb[0].mxu0
    %v6766 = vadd.f32 %v6669, %v6765
    %v6767 = vpop.f32.mrb[0].mxu0
    %6768 = vmatprep.mubr.bf16.mxu0 %v6570
    %6769 = vmatmul.mubr.bf16.gmra.mrb[0].mxu0 %v6569
    %v6770 = vpop.f32.mrb[0].mxu0
    %v6771 = vadd.f32 %v6674, %v6770
    %v6772 = vpop.f32.mrb[0].mxu0
    %v6773 = vpop.f32.mrb[0].mxu0
    %v6774 = vadd.f32 %v6677, %v6773
    %v6775 = vpop.f32.mrb[0].mxu0
    %6776 = vmatprep.mubr.bf16.mxu0 %v6574
    %6777 = vmatmul.mubr.bf16.gmra.mrb[0].mxu0 %v6573
    %v6778 = vpop.f32.mrb[0].mxu0
    %v6779 = vadd.f32 %v6682, %v6778
    %v6780 = vpop.f32.mrb[0].mxu0
    %v6781 = vpop.f32.mrb[0].mxu0
    %v6782 = vadd.f32 %v6685, %v6781
    %v6783 = vpop.f32.mrb[0].mxu0
    %6784 = vmatprep.mubr.bf16.mxu0 %v6578
    %6785 = vmatmul.mubr.bf16.gmra.mrb[0].mxu0 %v6577
    %v6786 = vpop.f32.mrb[0].mxu0
    %v6787 = vadd.f32 %v6690, %v6786
    %v6788 = vpop.f32.mrb[0].mxu0
    %v6789 = vpop.f32.mrb[0].mxu0
    %v6790 = vadd.f32 %v6693, %v6789
    %v6791 = vpop.f32.mrb[0].mxu0
    %6792 = vmatprep.mubr.bf16.mxu0 %v6582
    %6793 = vmatmul.mubr.bf16.gmra.mrb[0].mxu0 %v6581
    %v6794 = vpop.f32.mrb[0].mxu0
    %v6795 = vadd.f32 %v6698, %v6794
    %v6796 = vpop.f32.mrb[0].mxu0
    %v6797 = vpop.f32.mrb[0].mxu0
    %v6798 = vadd.f32 %v6701, %v6797
    %v6799 = vpop.f32.mrb[0].mxu0
    %6800 = vmatprep.mubr.bf16.mxu0 %v6586
    %6801 = vmatmul.mubr.bf16.gmra.mrb[0].mxu0 %v6585
    %v6802 = vpop.f32.mrb[0].mxu0
    %v6803 = vadd.f32 %v6706, %v6802
    %v6804 = vpop.f32.mrb[0].mxu0
    %v6805 = vpop.f32.mrb[0].mxu0
    %v6806 = vadd.f32 %v6709, %v6805
    %v6807 = vpop.f32.mrb[0].mxu0
    %6808 = vmatprep.mubr.bf16.mxu0 %v6590
    %6809 = vmatmul.mubr.bf16.gmra.mrb[0].mxu0 %v6589
    %v6810 = vpop.f32.mrb[0].mxu0
    %v6811 = vadd.f32 %v6714, %v6810
    %v6812 = vpop.f32.mrb[0].mxu0
    %v6813 = vpop.f32.mrb[0].mxu0
    %v6814 = vadd.f32 %v6717, %v6813
    %v6815 = vpop.f32.mrb[0].mxu0
    %6816 = vdwg.mxu0
    %v6817 = vpack.c.bf16 %v6758, %v6755
    %v6818 = vpack.c.bf16 %v6766, %v6763
    %v6819 = vpack.c.bf16 %v6774, %v6771
    %v6820 = vpack.c.bf16 %v6782, %v6779
    %v6821 = vpack.c.bf16 %v6790, %v6787
    %v6822 = vpack.c.bf16 %v6798, %v6795
    %v6823 = vpack.c.bf16 %v6806, %v6803
    %v6824 = vpack.c.bf16 %v6814, %v6811
    %v6829 = vunpack.c.l.b16 %v6459
    %v6830 = vunpack.c.l.b16 %v6460
    %v6831 = vunpack.c.l.b16 %v6461
    %v6832 = vunpack.c.l.b16 %v6462
    %v6833 = vpack.c.b16 %v6830, %v6829
    %v6834 = vpack.c.b16 %v6832, %v6831
    %v6838 = vsel %vm6172, %v6817, 0
    %v6841 = vsel %vm6172, %v6818, 0
    %v6844 = vsel %vm6172, %v6819, 0
    %v6847 = vsel %vm6172, %v6820, 0
    %v6850 = vsel %vm6172, %v6821, 0
    %v6853 = vsel %vm6172, %v6822, 0
    %v6856 = vsel %vm6172, %v6823, 0
    %v6859 = vsel %vm6172, %v6824, 0
    %6861 = vmatprep.subr.bf16.mxu0 0
    %6862 = vmatpush1.bf16.msra.mxu0 %v6833
    %6863 = vmatprep.subr.bf16.mxu0 0
    %6864 = vmatpush1.bf16.msra.mxu0 %v6834
    %6865 = vmatprep.subr.bf16.mxu0 0
    %6866 = vmatpush1.bf16.msra.mxu0 0
    %6867 = vmatprep.subr.bf16.mxu0 0
    %6868 = vmatpush1.bf16.msra.mxu0 0
    %6869 = vmatprep.subr.bf16.mxu0 0
    %6870 = vmatpush1.bf16.msra.mxu0 0
    %6871 = vmatprep.subr.bf16.mxu0 0
    %6872 = vmatpush1.bf16.msra.mxu0 0
    %6873 = vmatprep.subr.bf16.mxu0 0
    %6874 = vmatpush1.bf16.msra.mxu0 0
    %6875 = vmatprep.subr.bf16.mxu0 0
    %6876 = vmatpush1.bf16.msra.mxu0 0
    %6877 = vmatprep.subr.bf16.mxu0 0
    %6878 = vmatpush1.bf16.msra.mxu0 0
    %6879 = vmatprep.subr.bf16.mxu0 0
    %6880 = vmatpush1.bf16.msra.mxu0 0
    %6881 = vmatprep.subr.bf16.mxu0 0
    %6882 = vmatpush1.bf16.msra.mxu0 0
    %6883 = vmatprep.subr.bf16.mxu0 0
    %6884 = vmatpush1.bf16.msra.mxu0 0
    %6885 = vmatprep.subr.bf16.mxu0 0
    %6886 = vmatpush1.bf16.msra.mxu0 0
    %6887 = vmatprep.subr.bf16.mxu0 0
    %6888 = vmatpush1.bf16.msra.mxu0 0
    %6889 = vmatprep.subr.bf16.mxu0 0
    %6890 = vmatpush1.bf16.msra.mxu0 0
    %6891 = vmatprep.subr.bf16.mxu0 0
    %6892 = vmatpush1.bf16.msra.mxu0 0
    %6893 = vmatprep.mubr.bf16.mxu0 0
    %6894 = vmatmul.mubr.bf16.gmra.mrb[0].mxu0 %v6838
    %v6895 = vpop.f32.mrb[0].mxu0
    %v6896 = vadd.f32 0.0, %v6895
    %v6897 = vpop.f32.mrb[0].mxu0
    %v6898 = vpop.f32.mrb[0].mxu0
    %v6899 = vadd.f32 0.0, %v6898
    %v6900 = vpop.f32.mrb[0].mxu0
    %6901 = vmatprep.mubr.bf16.mxu0 0
    %6902 = vmatmul.mubr.bf16.gmra.mrb[0].mxu0 %v6841
    %v6903 = vpop.f32.mrb[0].mxu0
    %v6904 = vadd.f32 0.0, %v6903
    %v6905 = vpop.f32.mrb[0].mxu0
    %v6906 = vpop.f32.mrb[0].mxu0
    %v6907 = vadd.f32 0.0, %v6906
    %v6908 = vpop.f32.mrb[0].mxu0
    %6909 = vmatprep.mubr.bf16.mxu0 0
    %6910 = vmatmul.mubr.bf16.gmra.mrb[0].mxu0 %v6844
    %v6911 = vpop.f32.mrb[0].mxu0
    %v6912 = vadd.f32 0.0, %v6911
    %v6913 = vpop.f32.mrb[0].mxu0
    %v6914 = vpop.f32.mrb[0].mxu0
    %v6915 = vadd.f32 0.0, %v6914
    %v6916 = vpop.f32.mrb[0].mxu0
    %6917 = vmatprep.mubr.bf16.mxu0 0
    %6918 = vmatmul.mubr.bf16.gmra.mrb[0].mxu0 %v6847
    %v6919 = vpop.f32.mrb[0].mxu0
    %v6920 = vadd.f32 0.0, %v6919
    %v6921 = vpop.f32.mrb[0].mxu0
    %v6922 = vpop.f32.mrb[0].mxu0
    %v6923 = vadd.f32 0.0, %v6922
    %v6924 = vpop.f32.mrb[0].mxu0
    %6925 = vmatprep.mubr.bf16.mxu0 0
    %6926 = vmatmul.mubr.bf16.gmra.mrb[0].mxu0 %v6850
    %v6927 = vpop.f32.mrb[0].mxu0
    %v6928 = vadd.f32 0.0, %v6927
    %v6929 = vpop.f32.mrb[0].mxu0
    %v6930 = vpop.f32.mrb[0].mxu0
    %v6931 = vadd.f32 0.0, %v6930
    %v6932 = vpop.f32.mrb[0].mxu0
    %6933 = vmatprep.mubr.bf16.mxu0 0
    %6934 = vmatmul.mubr.bf16.gmra.mrb[0].mxu0 %v6853
    %v6935 = vpop.f32.mrb[0].mxu0
    %v6936 = vadd.f32 0.0, %v6935
    %v6937 = vpop.f32.mrb[0].mxu0
    %v6938 = vpop.f32.mrb[0].mxu0
    %v6939 = vadd.f32 0.0, %v6938
    %v6940 = vpop.f32.mrb[0].mxu0
    %6941 = vmatprep.mubr.bf16.mxu0 0
    %6942 = vmatmul.mubr.bf16.gmra.mrb[0].mxu0 %v6856
    %v6943 = vpop.f32.mrb[0].mxu0
    %v6944 = vadd.f32 0.0, %v6943
    %v6945 = vpop.f32.mrb[0].mxu0
    %v6946 = vpop.f32.mrb[0].mxu0
    %v6947 = vadd.f32 0.0, %v6946
    %v6948 = vpop.f32.mrb[0].mxu0
    %6949 = vmatprep.mubr.bf16.mxu0 0
    %6950 = vmatmul.mubr.bf16.gmra.mrb[0].mxu0 %v6859
    %v6951 = vpop.f32.mrb[0].mxu0
    %v6952 = vadd.f32 0.0, %v6951
    %v6953 = vpop.f32.mrb[0].mxu0
    %v6954 = vpop.f32.mrb[0].mxu0
    %v6955 = vadd.f32 0.0, %v6954
    %v6956 = vpop.f32.mrb[0].mxu0
    %6957 = vdwg.mxu0
    %v6958 = vadd.f32 %v6365, %v6896
    %v6959 = vadd.f32 %v6368, %v6899
    %v6960 = vadd.f32 %v6373, %v6904
    %v6961 = vadd.f32 %v6376, %v6907
    %v6962 = vadd.f32 %v6381, %v6912
    %v6963 = vadd.f32 %v6384, %v6915
    %v6964 = vadd.f32 %v6389, %v6920
    %v6965 = vadd.f32 %v6392, %v6923
    %v6966 = vadd.f32 %v6397, %v6928
    %v6967 = vadd.f32 %v6400, %v6931
    %v6968 = vadd.f32 %v6405, %v6936
    %v6969 = vadd.f32 %v6408, %v6939
    %v6970 = vadd.f32 %v6413, %v6944
    %v6971 = vadd.f32 %v6416, %v6947
    %v6972 = vadd.f32 %v6421, %v6952
    %v6973 = vadd.f32 %v6424, %v6955
    %v6974 = vld [vmem:[%s7 + $0x300] sm:$0xff]
    %v6975 = vld [vmem:[%s7 + $0x308] sm:$0xff]
    %v6976 = vld [vmem:[%s7 + $0x310] sm:$0xff]
    %v6977 = vld [vmem:[%s7 + $0x318] sm:$0xff]
    %v6978 = vld [vmem:[%s7 + $0x320] sm:$0xff]
    %v6979 = vld [vmem:[%s7 + $0x328] sm:$0xff]
    %v6980 = vld [vmem:[%s7 + $0x330] sm:$0xff]
    %v6981 = vld [vmem:[%s7 + $0x338] sm:$0xff]
    %v6982 = vld [vmem:[%s7 + $0x340] sm:$0xff]
    %v6983 = vld [vmem:[%s7 + $0x348] sm:$0xff]
    %v6984 = vld [vmem:[%s7 + $0x350] sm:$0xff]
    %v6985 = vld [vmem:[%s7 + $0x358] sm:$0xff]
    %v6986 = vld [vmem:[%s7 + $0x360] sm:$0xff]
    %v6987 = vld [vmem:[%s7 + $0x368] sm:$0xff]
    %v6988 = vld [vmem:[%s7 + $0x370] sm:$0xff]
    %v6989 = vld [vmem:[%s7 + $0x378] sm:$0xff]
    %v6990 = vld [vmem:[%s7 + $0x380] sm:$0xff]
    %v6991 = vld [vmem:[%s7 + $0x388] sm:$0xff]
    %v6992 = vld [vmem:[%s7 + $0x390] sm:$0xff]
    %v6993 = vld [vmem:[%s7 + $0x398] sm:$0xff]
    %v6994 = vld [vmem:[%s7 + $0x3a0] sm:$0xff]
    %v6995 = vld [vmem:[%s7 + $0x3a8] sm:$0xff]
    %v6996 = vld [vmem:[%s7 + $0x3b0] sm:$0xff]
    %v6997 = vld [vmem:[%s7 + $0x3b8] sm:$0xff]
    %v6998 = vld [vmem:[%s7 + $0x3c0] sm:$0xff]
    %v6999 = vld [vmem:[%s7 + $0x3c8] sm:$0xff]
    %v7000 = vld [vmem:[%s7 + $0x3d0] sm:$0xff]
    %v7001 = vld [vmem:[%s7 + $0x3d8] sm:$0xff]
    %v7002 = vld [vmem:[%s7 + $0x3e0] sm:$0xff]
    %v7003 = vld [vmem:[%s7 + $0x3e8] sm:$0xff]
    %v7004 = vld [vmem:[%s7 + $0x3f0] sm:$0xff]
    %v7005 = vld [vmem:[%s7 + $0x3f8] sm:$0xff]
    %v7006 = vld [vmem:[%s8 + $0x30] sm:$0xf]
    %v7007 = vld [vmem:[%s8 + $0x34] sm:$0xf]
    %v7008 = vld [vmem:[%s8 + $0x38] sm:$0xf]
    %v7009 = vld [vmem:[%s8 + $0x3c] sm:$0xf]
    %v7042 = vunpack.c.l.b16 %v6974
    %v7043 = vunpack.c.h.b16 %v6974
    %v7044 = vunpack.c.l.b16 %v6975
    %v7045 = vunpack.c.h.b16 %v6975
    %v7046 = vunpack.c.l.b16 %v6976
    %v7047 = vunpack.c.h.b16 %v6976
    %v7048 = vunpack.c.l.b16 %v6977
    %v7049 = vunpack.c.h.b16 %v6977
    %v7050 = vunpack.c.l.b16 %v6978
    %v7051 = vunpack.c.h.b16 %v6978
    %v7052 = vunpack.c.l.b16 %v6979
    %v7053 = vunpack.c.h.b16 %v6979
    %v7054 = vunpack.c.l.b16 %v6980
    %v7055 = vunpack.c.h.b16 %v6980
    %v7056 = vunpack.c.l.b16 %v6981
    %v7057 = vunpack.c.h.b16 %v6981
    %v7058 = vunpack.c.l.b16 %v6982
    %v7059 = vunpack.c.h.b16 %v6982
    %v7060 = vunpack.c.l.b16 %v6983
    %v7061 = vunpack.c.h.b16 %v6983
    %v7062 = vunpack.c.l.b16 %v6984
    %v7063 = vunpack.c.h.b16 %v6984
    %v7064 = vunpack.c.l.b16 %v6985
    %v7065 = vunpack.c.h.b16 %v6985
    %v7066 = vunpack.c.l.b16 %v6986
    %v7067 = vunpack.c.h.b16 %v6986
    %v7068 = vunpack.c.l.b16 %v6987
    %v7069 = vunpack.c.h.b16 %v6987
    %v7070 = vunpack.c.l.b16 %v6988
    %v7071 = vunpack.c.h.b16 %v6988
    %v7072 = vunpack.c.l.b16 %v6989
    %v7073 = vunpack.c.h.b16 %v6989
    %v7074 = vunpack.c.l.b16 %v6990
    %v7075 = vunpack.c.h.b16 %v6990
    %v7076 = vunpack.c.l.b16 %v6991
    %v7077 = vunpack.c.h.b16 %v6991
    %v7078 = vunpack.c.l.b16 %v6992
    %v7079 = vunpack.c.h.b16 %v6992
    %v7080 = vunpack.c.l.b16 %v6993
    %v7081 = vunpack.c.h.b16 %v6993
    %v7082 = vunpack.c.l.b16 %v6994
    %v7083 = vunpack.c.h.b16 %v6994
    %v7084 = vunpack.c.l.b16 %v6995
    %v7085 = vunpack.c.h.b16 %v6995
    %v7086 = vunpack.c.l.b16 %v6996
    %v7087 = vunpack.c.h.b16 %v6996
    %v7088 = vunpack.c.l.b16 %v6997
    %v7089 = vunpack.c.h.b16 %v6997
    %v7090 = vunpack.c.l.b16 %v6998
    %v7091 = vunpack.c.h.b16 %v6998
    %v7092 = vunpack.c.l.b16 %v6999
    %v7093 = vunpack.c.h.b16 %v6999
    %v7094 = vunpack.c.l.b16 %v7000
    %v7095 = vunpack.c.h.b16 %v7000
    %v7096 = vunpack.c.l.b16 %v7001
    %v7097 = vunpack.c.h.b16 %v7001
    %v7098 = vunpack.c.l.b16 %v7002
    %v7099 = vunpack.c.h.b16 %v7002
    %v7100 = vunpack.c.l.b16 %v7003
    %v7101 = vunpack.c.h.b16 %v7003
    %v7102 = vunpack.c.l.b16 %v7004
    %v7103 = vunpack.c.h.b16 %v7004
    %v7104 = vunpack.c.l.b16 %v7005
    %v7105 = vunpack.c.h.b16 %v7005
    %v7106 = vpack.c.b16 %v7046, %v7042
    %v7107 = vpack.c.b16 %v7047, %v7043
    %v7108 = vpack.c.b16 %v7048, %v7044
    %v7109 = vpack.c.b16 %v7049, %v7045
    %v7110 = vpack.c.b16 %v7054, %v7050
    %v7111 = vpack.c.b16 %v7055, %v7051
    %v7112 = vpack.c.b16 %v7056, %v7052
    %v7113 = vpack.c.b16 %v7057, %v7053
    %v7114 = vpack.c.b16 %v7062, %v7058
    %v7115 = vpack.c.b16 %v7063, %v7059
    %v7116 = vpack.c.b16 %v7064, %v7060
    %v7117 = vpack.c.b16 %v7065, %v7061
    %v7118 = vpack.c.b16 %v7070, %v7066
    %v7119 = vpack.c.b16 %v7071, %v7067
    %v7120 = vpack.c.b16 %v7072, %v7068
    %v7121 = vpack.c.b16 %v7073, %v7069
    %v7122 = vpack.c.b16 %v7078, %v7074
    %v7123 = vpack.c.b16 %v7079, %v7075
    %v7124 = vpack.c.b16 %v7080, %v7076
    %v7125 = vpack.c.b16 %v7081, %v7077
    %v7126 = vpack.c.b16 %v7086, %v7082
    %v7127 = vpack.c.b16 %v7087, %v7083
    %v7128 = vpack.c.b16 %v7088, %v7084
    %v7129 = vpack.c.b16 %v7089, %v7085
    %v7130 = vpack.c.b16 %v7094, %v7090
    %v7131 = vpack.c.b16 %v7095, %v7091
    %v7132 = vpack.c.b16 %v7096, %v7092
    %v7133 = vpack.c.b16 %v7097, %v7093
    %v7134 = vpack.c.b16 %v7102, %v7098
    %v7135 = vpack.c.b16 %v7103, %v7099
    %v7136 = vpack.c.b16 %v7104, %v7100
    %v7137 = vpack.c.b16 %v7105, %v7101
    %7170 = vmatprep.subr.bf16.mxu0 0
    %7171 = vmatpush1.bf16.msra.mxu0 %v5332
    %7172 = vmatprep.subr.bf16.mxu0 0
    %7173 = vmatpush1.bf16.msra.mxu0 %v5333
    %7174 = vmatprep.subr.bf16.mxu0 0
    %7175 = vmatpush1.bf16.msra.mxu0 %v5334
    %7176 = vmatprep.subr.bf16.mxu0 0
    %7177 = vmatpush1.bf16.msra.mxu0 %v5335
    %7178 = vmatprep.subr.bf16.mxu0 0
    %7179 = vmatpush1.bf16.msra.mxu0 %v5336
    %7180 = vmatprep.subr.bf16.mxu0 0
    %7181 = vmatpush1.bf16.msra.mxu0 %v5337
    %7182 = vmatprep.subr.bf16.mxu0 0
    %7183 = vmatpush1.bf16.msra.mxu0 %v5338
    %7184 = vmatprep.subr.bf16.mxu0 0
    %7185 = vmatpush1.bf16.msra.mxu0 %v5339
    %7186 = vmatprep.subr.bf16.mxu0 0
    %7187 = vmatpush1.bf16.msra.mxu0 %v5340
    %7188 = vmatprep.subr.bf16.mxu0 0
    %7189 = vmatpush1.bf16.msra.mxu0 %v5341
    %7190 = vmatprep.subr.bf16.mxu0 0
    %7191 = vmatpush1.bf16.msra.mxu0 %v5342
    %7192 = vmatprep.subr.bf16.mxu0 0
    %7193 = vmatpush1.bf16.msra.mxu0 %v5343
    %7194 = vmatprep.subr.bf16.mxu0 0
    %7195 = vmatpush1.bf16.msra.mxu0 %v5344
    %7196 = vmatprep.subr.bf16.mxu0 0
    %7197 = vmatpush1.bf16.msra.mxu0 %v5345
    %7198 = vmatprep.subr.bf16.mxu0 0
    %7199 = vmatpush1.bf16.msra.mxu0 %v5346
    %7200 = vmatprep.subr.bf16.mxu0 0
    %7201 = vmatpush1.bf16.msra.mxu0 %v5347
    %7202 = vmatprep.mubr.bf16.mxu0 %v7107
    %7203 = vmatmul.mubr.bf16.gmra.mrb[0].mxu0 %v7106
    %v7204 = vpop.f32.mrb[0].mxu0
    %v7205 = vadd.f32 0.0, %v7204
    %v7206 = vpop.f32.mrb[0].mxu0
    %v7207 = vpop.f32.mrb[0].mxu0
    %v7208 = vadd.f32 0.0, %v7207
    %v7209 = vpop.f32.mrb[0].mxu0
    %7210 = vmatprep.mubr.bf16.mxu0 %v7111
    %7211 = vmatmul.mubr.bf16.gmra.mrb[0].mxu0 %v7110
    %v7212 = vpop.f32.mrb[0].mxu0
    %v7213 = vadd.f32 0.0, %v7212
    %v7214 = vpop.f32.mrb[0].mxu0
    %v7215 = vpop.f32.mrb[0].mxu0
    %v7216 = vadd.f32 0.0, %v7215
    %v7217 = vpop.f32.mrb[0].mxu0
    %7218 = vmatprep.mubr.bf16.mxu0 %v7115
    %7219 = vmatmul.mubr.bf16.gmra.mrb[0].mxu0 %v7114
    %v7220 = vpop.f32.mrb[0].mxu0
    %v7221 = vadd.f32 0.0, %v7220
    %v7222 = vpop.f32.mrb[0].mxu0
    %v7223 = vpop.f32.mrb[0].mxu0
    %v7224 = vadd.f32 0.0, %v7223
    %v7225 = vpop.f32.mrb[0].mxu0
    %7226 = vmatprep.mubr.bf16.mxu0 %v7119
    %7227 = vmatmul.mubr.bf16.gmra.mrb[0].mxu0 %v7118
    %v7228 = vpop.f32.mrb[0].mxu0
    %v7229 = vadd.f32 0.0, %v7228
    %v7230 = vpop.f32.mrb[0].mxu0
    %v7231 = vpop.f32.mrb[0].mxu0
    %v7232 = vadd.f32 0.0, %v7231
    %v7233 = vpop.f32.mrb[0].mxu0
    %7234 = vmatprep.mubr.bf16.mxu0 %v7123
    %7235 = vmatmul.mubr.bf16.gmra.mrb[0].mxu0 %v7122
    %v7236 = vpop.f32.mrb[0].mxu0
    %v7237 = vadd.f32 0.0, %v7236
    %v7238 = vpop.f32.mrb[0].mxu0
    %v7239 = vpop.f32.mrb[0].mxu0
    %v7240 = vadd.f32 0.0, %v7239
    %v7241 = vpop.f32.mrb[0].mxu0
    %7242 = vmatprep.mubr.bf16.mxu0 %v7127
    %7243 = vmatmul.mubr.bf16.gmra.mrb[0].mxu0 %v7126
    %v7244 = vpop.f32.mrb[0].mxu0
    %v7245 = vadd.f32 0.0, %v7244
    %v7246 = vpop.f32.mrb[0].mxu0
    %v7247 = vpop.f32.mrb[0].mxu0
    %v7248 = vadd.f32 0.0, %v7247
    %v7249 = vpop.f32.mrb[0].mxu0
    %7250 = vmatprep.mubr.bf16.mxu0 %v7131
    %7251 = vmatmul.mubr.bf16.gmra.mrb[0].mxu0 %v7130
    %v7252 = vpop.f32.mrb[0].mxu0
    %v7253 = vadd.f32 0.0, %v7252
    %v7254 = vpop.f32.mrb[0].mxu0
    %v7255 = vpop.f32.mrb[0].mxu0
    %v7256 = vadd.f32 0.0, %v7255
    %v7257 = vpop.f32.mrb[0].mxu0
    %7258 = vmatprep.mubr.bf16.mxu0 %v7135
    %7259 = vmatmul.mubr.bf16.gmra.mrb[0].mxu0 %v7134
    %v7260 = vpop.f32.mrb[0].mxu0
    %v7261 = vadd.f32 0.0, %v7260
    %v7262 = vpop.f32.mrb[0].mxu0
    %v7263 = vpop.f32.mrb[0].mxu0
    %v7264 = vadd.f32 0.0, %v7263
    %v7265 = vpop.f32.mrb[0].mxu0
    %7266 = vdwg.mxu0
    %7267 = vmatprep.subr.bf16.mxu0 0
    %7268 = vmatpush1.bf16.msra.mxu0 %v5348
    %7269 = vmatprep.subr.bf16.mxu0 0
    %7270 = vmatpush1.bf16.msra.mxu0 %v5349
    %7271 = vmatprep.subr.bf16.mxu0 0
    %7272 = vmatpush1.bf16.msra.mxu0 %v5350
    %7273 = vmatprep.subr.bf16.mxu0 0
    %7274 = vmatpush1.bf16.msra.mxu0 %v5351
    %7275 = vmatprep.subr.bf16.mxu0 0
    %7276 = vmatpush1.bf16.msra.mxu0 %v5352
    %7277 = vmatprep.subr.bf16.mxu0 0
    %7278 = vmatpush1.bf16.msra.mxu0 %v5353
    %7279 = vmatprep.subr.bf16.mxu0 0
    %7280 = vmatpush1.bf16.msra.mxu0 %v5354
    %7281 = vmatprep.subr.bf16.mxu0 0
    %7282 = vmatpush1.bf16.msra.mxu0 %v5355
    %7283 = vmatprep.subr.bf16.mxu0 0
    %7284 = vmatpush1.bf16.msra.mxu0 %v5356
    %7285 = vmatprep.subr.bf16.mxu0 0
    %7286 = vmatpush1.bf16.msra.mxu0 %v5357
    %7287 = vmatprep.subr.bf16.mxu0 0
    %7288 = vmatpush1.bf16.msra.mxu0 %v5358
    %7289 = vmatprep.subr.bf16.mxu0 0
    %7290 = vmatpush1.bf16.msra.mxu0 %v5359
    %7291 = vmatprep.subr.bf16.mxu0 0
    %7292 = vmatpush1.bf16.msra.mxu0 %v5360
    %7293 = vmatprep.subr.bf16.mxu0 0
    %7294 = vmatpush1.bf16.msra.mxu0 %v5361
    %7295 = vmatprep.subr.bf16.mxu0 0
    %7296 = vmatpush1.bf16.msra.mxu0 %v5362
    %7297 = vmatprep.subr.bf16.mxu0 0
    %7298 = vmatpush1.bf16.msra.mxu0 %v5363
    %7299 = vmatprep.mubr.bf16.mxu0 %v7109
    %7300 = vmatmul.mubr.bf16.gmra.mrb[0].mxu0 %v7108
    %v7301 = vpop.f32.mrb[0].mxu0
    %v7302 = vadd.f32 %v7205, %v7301
    %v7303 = vpop.f32.mrb[0].mxu0
    %v7304 = vpop.f32.mrb[0].mxu0
    %v7305 = vadd.f32 %v7208, %v7304
    %v7306 = vpop.f32.mrb[0].mxu0
    %7307 = vmatprep.mubr.bf16.mxu0 %v7113
    %7308 = vmatmul.mubr.bf16.gmra.mrb[0].mxu0 %v7112
    %v7309 = vpop.f32.mrb[0].mxu0
    %v7310 = vadd.f32 %v7213, %v7309
    %v7311 = vpop.f32.mrb[0].mxu0
    %v7312 = vpop.f32.mrb[0].mxu0
    %v7313 = vadd.f32 %v7216, %v7312
    %v7314 = vpop.f32.mrb[0].mxu0
    %7315 = vmatprep.mubr.bf16.mxu0 %v7117
    %7316 = vmatmul.mubr.bf16.gmra.mrb[0].mxu0 %v7116
    %v7317 = vpop.f32.mrb[0].mxu0
    %v7318 = vadd.f32 %v7221, %v7317
    %v7319 = vpop.f32.mrb[0].mxu0
    %v7320 = vpop.f32.mrb[0].mxu0
    %v7321 = vadd.f32 %v7224, %v7320
    %v7322 = vpop.f32.mrb[0].mxu0
    %7323 = vmatprep.mubr.bf16.mxu0 %v7121
    %7324 = vmatmul.mubr.bf16.gmra.mrb[0].mxu0 %v7120
    %v7325 = vpop.f32.mrb[0].mxu0
    %v7326 = vadd.f32 %v7229, %v7325
    %v7327 = vpop.f32.mrb[0].mxu0
    %v7328 = vpop.f32.mrb[0].mxu0
    %v7329 = vadd.f32 %v7232, %v7328
    %v7330 = vpop.f32.mrb[0].mxu0
    %7331 = vmatprep.mubr.bf16.mxu0 %v7125
    %7332 = vmatmul.mubr.bf16.gmra.mrb[0].mxu0 %v7124
    %v7333 = vpop.f32.mrb[0].mxu0
    %v7334 = vadd.f32 %v7237, %v7333
    %v7335 = vpop.f32.mrb[0].mxu0
    %v7336 = vpop.f32.mrb[0].mxu0
    %v7337 = vadd.f32 %v7240, %v7336
    %v7338 = vpop.f32.mrb[0].mxu0
    %7339 = vmatprep.mubr.bf16.mxu0 %v7129
    %7340 = vmatmul.mubr.bf16.gmra.mrb[0].mxu0 %v7128
    %v7341 = vpop.f32.mrb[0].mxu0
    %v7342 = vadd.f32 %v7245, %v7341
    %v7343 = vpop.f32.mrb[0].mxu0
    %v7344 = vpop.f32.mrb[0].mxu0
    %v7345 = vadd.f32 %v7248, %v7344
    %v7346 = vpop.f32.mrb[0].mxu0
    %7347 = vmatprep.mubr.bf16.mxu0 %v7133
    %7348 = vmatmul.mubr.bf16.gmra.mrb[0].mxu0 %v7132
    %v7349 = vpop.f32.mrb[0].mxu0
    %v7350 = vadd.f32 %v7253, %v7349
    %v7351 = vpop.f32.mrb[0].mxu0
    %v7352 = vpop.f32.mrb[0].mxu0
    %v7353 = vadd.f32 %v7256, %v7352
    %v7354 = vpop.f32.mrb[0].mxu0
    %7355 = vmatprep.mubr.bf16.mxu0 %v7137
    %7356 = vmatmul.mubr.bf16.gmra.mrb[0].mxu0 %v7136
    %v7357 = vpop.f32.mrb[0].mxu0
    %v7358 = vadd.f32 %v7261, %v7357
    %v7359 = vpop.f32.mrb[0].mxu0
    %v7360 = vpop.f32.mrb[0].mxu0
    %v7361 = vadd.f32 %v7264, %v7360
    %v7362 = vpop.f32.mrb[0].mxu0
    %7363 = vdwg.mxu0
    %v7364 = vpack.c.bf16 %v7305, %v7302
    %v7365 = vpack.c.bf16 %v7313, %v7310
    %v7366 = vpack.c.bf16 %v7321, %v7318
    %v7367 = vpack.c.bf16 %v7329, %v7326
    %v7368 = vpack.c.bf16 %v7337, %v7334
    %v7369 = vpack.c.bf16 %v7345, %v7342
    %v7370 = vpack.c.bf16 %v7353, %v7350
    %v7371 = vpack.c.bf16 %v7361, %v7358
    %v7376 = vunpack.c.l.b16 %v7006
    %v7377 = vunpack.c.l.b16 %v7007
    %v7378 = vunpack.c.l.b16 %v7008
    %v7379 = vunpack.c.l.b16 %v7009
    %v7380 = vpack.c.b16 %v7377, %v7376
    %v7381 = vpack.c.b16 %v7379, %v7378
    %v7385 = vsel %vm6172, %v7364, 0
    %v7388 = vsel %vm6172, %v7365, 0
    %v7391 = vsel %vm6172, %v7366, 0
    %v7394 = vsel %vm6172, %v7367, 0
    %v7397 = vsel %vm6172, %v7368, 0
    %v7400 = vsel %vm6172, %v7369, 0
    %v7403 = vsel %vm6172, %v7370, 0
    %v7406 = vsel %vm6172, %v7371, 0
    %7408 = vmatprep.subr.bf16.mxu0 0
    %7409 = vmatpush1.bf16.msra.mxu0 %v7380
    %7410 = vmatprep.subr.bf16.mxu0 0
    %7411 = vmatpush1.bf16.msra.mxu0 %v7381
    %7412 = vmatprep.subr.bf16.mxu0 0
    %7413 = vmatpush1.bf16.msra.mxu0 0
    %7414 = vmatprep.subr.bf16.mxu0 0
    %7415 = vmatpush1.bf16.msra.mxu0 0
    %7416 = vmatprep.subr.bf16.mxu0 0
    %7417 = vmatpush1.bf16.msra.mxu0 0
    %7418 = vmatprep.subr.bf16.mxu0 0
    %7419 = vmatpush1.bf16.msra.mxu0 0
    %7420 = vmatprep.subr.bf16.mxu0 0
    %7421 = vmatpush1.bf16.msra.mxu0 0
    %7422 = vmatprep.subr.bf16.mxu0 0
    %7423 = vmatpush1.bf16.msra.mxu0 0
    %7424 = vmatprep.subr.bf16.mxu0 0
    %7425 = vmatpush1.bf16.msra.mxu0 0
    %7426 = vmatprep.subr.bf16.mxu0 0
    %7427 = vmatpush1.bf16.msra.mxu0 0
    %7428 = vmatprep.subr.bf16.mxu0 0
    %7429 = vmatpush1.bf16.msra.mxu0 0
    %7430 = vmatprep.subr.bf16.mxu0 0
    %7431 = vmatpush1.bf16.msra.mxu0 0
    %7432 = vmatprep.subr.bf16.mxu0 0
    %7433 = vmatpush1.bf16.msra.mxu0 0
    %7434 = vmatprep.subr.bf16.mxu0 0
    %7435 = vmatpush1.bf16.msra.mxu0 0
    %7436 = vmatprep.subr.bf16.mxu0 0
    %7437 = vmatpush1.bf16.msra.mxu0 0
    %7438 = vmatprep.subr.bf16.mxu0 0
    %7439 = vmatpush1.bf16.msra.mxu0 0
    %7440 = vmatprep.mubr.bf16.mxu0 0
    %7441 = vmatmul.mubr.bf16.gmra.mrb[0].mxu0 %v7385
    %v7442 = vpop.f32.mrb[0].mxu0
    %v7443 = vadd.f32 0.0, %v7442
    %v7444 = vpop.f32.mrb[0].mxu0
    %v7445 = vpop.f32.mrb[0].mxu0
    %v7446 = vadd.f32 0.0, %v7445
    %v7447 = vpop.f32.mrb[0].mxu0
    %7448 = vmatprep.mubr.bf16.mxu0 0
    %7449 = vmatmul.mubr.bf16.gmra.mrb[0].mxu0 %v7388
    %v7450 = vpop.f32.mrb[0].mxu0
    %v7451 = vadd.f32 0.0, %v7450
    %v7452 = vpop.f32.mrb[0].mxu0
    %v7453 = vpop.f32.mrb[0].mxu0
    %v7454 = vadd.f32 0.0, %v7453
    %v7455 = vpop.f32.mrb[0].mxu0
    %7456 = vmatprep.mubr.bf16.mxu0 0
    %7457 = vmatmul.mubr.bf16.gmra.mrb[0].mxu0 %v7391
    %v7458 = vpop.f32.mrb[0].mxu0
    %v7459 = vadd.f32 0.0, %v7458
    %v7460 = vpop.f32.mrb[0].mxu0
    %v7461 = vpop.f32.mrb[0].mxu0
    %v7462 = vadd.f32 0.0, %v7461
    %v7463 = vpop.f32.mrb[0].mxu0
    %7464 = vmatprep.mubr.bf16.mxu0 0
    %7465 = vmatmul.mubr.bf16.gmra.mrb[0].mxu0 %v7394
    %v7466 = vpop.f32.mrb[0].mxu0
    %v7467 = vadd.f32 0.0, %v7466
    %v7468 = vpop.f32.mrb[0].mxu0
    %v7469 = vpop.f32.mrb[0].mxu0
    %v7470 = vadd.f32 0.0, %v7469
    %v7471 = vpop.f32.mrb[0].mxu0
    %7472 = vmatprep.mubr.bf16.mxu0 0
    %7473 = vmatmul.mubr.bf16.gmra.mrb[0].mxu0 %v7397
    %v7474 = vpop.f32.mrb[0].mxu0
    %v7475 = vadd.f32 0.0, %v7474
    %v7476 = vpop.f32.mrb[0].mxu0
    %v7477 = vpop.f32.mrb[0].mxu0
    %v7478 = vadd.f32 0.0, %v7477
    %v7479 = vpop.f32.mrb[0].mxu0
    %7480 = vmatprep.mubr.bf16.mxu0 0
    %7481 = vmatmul.mubr.bf16.gmra.mrb[0].mxu0 %v7400
    %v7482 = vpop.f32.mrb[0].mxu0
    %v7483 = vadd.f32 0.0, %v7482
    %v7484 = vpop.f32.mrb[0].mxu0
    %v7485 = vpop.f32.mrb[0].mxu0
    %v7486 = vadd.f32 0.0, %v7485
    %v7487 = vpop.f32.mrb[0].mxu0
    %7488 = vmatprep.mubr.bf16.mxu0 0
    %7489 = vmatmul.mubr.bf16.gmra.mrb[0].mxu0 %v7403
    %v7490 = vpop.f32.mrb[0].mxu0
    %v7491 = vadd.f32 0.0, %v7490
    %v7492 = vpop.f32.mrb[0].mxu0
    %v7493 = vpop.f32.mrb[0].mxu0
    %v7494 = vadd.f32 0.0, %v7493
    %v7495 = vpop.f32.mrb[0].mxu0
    %7496 = vmatprep.mubr.bf16.mxu0 0
    %7497 = vmatmul.mubr.bf16.gmra.mrb[0].mxu0 %v7406
    %v7498 = vpop.f32.mrb[0].mxu0
    %v7499 = vadd.f32 0.0, %v7498
    %v7500 = vpop.f32.mrb[0].mxu0
    %v7501 = vpop.f32.mrb[0].mxu0
    %v7502 = vadd.f32 0.0, %v7501
    %v7503 = vpop.f32.mrb[0].mxu0
    %7504 = vdwg.mxu0
    %v7505 = vadd.f32 %v6958, %v7443
    %v7506 = vadd.f32 %v6959, %v7446
    %v7507 = vadd.f32 %v6960, %v7451
    %v7508 = vadd.f32 %v6961, %v7454
    %v7509 = vadd.f32 %v6962, %v7459
    %v7510 = vadd.f32 %v6963, %v7462
    %v7511 = vadd.f32 %v6964, %v7467
    %v7512 = vadd.f32 %v6965, %v7470
    %v7513 = vadd.f32 %v6966, %v7475
    %v7514 = vadd.f32 %v6967, %v7478
    %v7515 = vadd.f32 %v6968, %v7483
    %v7516 = vadd.f32 %v6969, %v7486
    %v7517 = vadd.f32 %v6970, %v7491
    %v7518 = vadd.f32 %v6971, %v7494
    %v7519 = vadd.f32 %v6972, %v7499
    %v7520 = vadd.f32 %v6973, %v7502
    %v7521 = vld [vmem:[#allocation5] sm:$0x1]
    %v7523 = vlaneseq
    %v7524 = vshrl.u32 %v7523, 7
    %v7525 = vsub.s32 0, %v7524
    %v7526 = vrot.slane %v7521, %v7525
    %v7528 = vadd.f32 %v7505, %v7526
    %v7529 = vadd.f32 %v7506, %v7526
    %v7530 = vadd.f32 %v7507, %v7526
    %v7531 = vadd.f32 %v7508, %v7526
    %v7532 = vadd.f32 %v7509, %v7526
    %v7533 = vadd.f32 %v7510, %v7526
    %v7534 = vadd.f32 %v7511, %v7526
    %v7535 = vadd.f32 %v7512, %v7526
    %v7536 = vadd.f32 %v7513, %v7526
    %v7537 = vadd.f32 %v7514, %v7526
    %v7538 = vadd.f32 %v7515, %v7526
    %v7539 = vadd.f32 %v7516, %v7526
    %v7540 = vadd.f32 %v7517, %v7526
    %v7541 = vadd.f32 %v7518, %v7526
    %v7542 = vadd.f32 %v7519, %v7526
    %v7543 = vadd.f32 %v7520, %v7526
    %vm7544 = vcmp.ge.f32.partialorder %v7528, 0.0
    %vm7545 = vcmp.ge.f32.partialorder %v7529, 0.0
    %vm7546 = vcmp.ge.f32.partialorder %v7530, 0.0
    %vm7547 = vcmp.ge.f32.partialorder %v7531, 0.0
    %vm7548 = vcmp.ge.f32.partialorder %v7532, 0.0
    %vm7549 = vcmp.ge.f32.partialorder %v7533, 0.0
    %vm7550 = vcmp.ge.f32.partialorder %v7534, 0.0
    %vm7551 = vcmp.ge.f32.partialorder %v7535, 0.0
    %vm7552 = vcmp.ge.f32.partialorder %v7536, 0.0
    %vm7553 = vcmp.ge.f32.partialorder %v7537, 0.0
    %vm7554 = vcmp.ge.f32.partialorder %v7538, 0.0
    %vm7555 = vcmp.ge.f32.partialorder %v7539, 0.0
    %vm7556 = vcmp.ge.f32.partialorder %v7540, 0.0
    %vm7557 = vcmp.ge.f32.partialorder %v7541, 0.0
    %vm7558 = vcmp.ge.f32.partialorder %v7542, 0.0
    %vm7559 = vcmp.ge.f32.partialorder %v7543, 0.0
    %v7560 = vmul.f32 %v7528, 0.2
    %v7561 = vmul.f32 %v7529, 0.2
    %v7562 = vmul.f32 %v7530, 0.2
    %v7563 = vmul.f32 %v7531, 0.2
    %v7564 = vmul.f32 %v7532, 0.2
    %v7565 = vmul.f32 %v7533, 0.2
    %v7566 = vmul.f32 %v7534, 0.2
    %v7567 = vmul.f32 %v7535, 0.2
    %v7568 = vmul.f32 %v7536, 0.2
    %v7569 = vmul.f32 %v7537, 0.2
    %v7570 = vmul.f32 %v7538, 0.2
    %v7571 = vmul.f32 %v7539, 0.2
    %v7572 = vmul.f32 %v7540, 0.2
    %v7573 = vmul.f32 %v7541, 0.2
    %v7574 = vmul.f32 %v7542, 0.2
    %v7575 = vmul.f32 %v7543, 0.2
    %v7576 = vsel %vm7544, %v7528, %v7560
    %v7577 = vsel %vm7545, %v7529, %v7561
    %v7578 = vsel %vm7546, %v7530, %v7562
    %v7579 = vsel %vm7547, %v7531, %v7563
    %v7580 = vsel %vm7548, %v7532, %v7564
    %v7581 = vsel %vm7549, %v7533, %v7565
    %v7582 = vsel %vm7550, %v7534, %v7566
    %v7583 = vsel %vm7551, %v7535, %v7567
    %v7584 = vsel %vm7552, %v7536, %v7568
    %v7585 = vsel %vm7553, %v7537, %v7569
    %v7586 = vsel %vm7554, %v7538, %v7570
    %v7587 = vsel %vm7555, %v7539, %v7571
    %v7588 = vsel %vm7556, %v7540, %v7572
    %v7589 = vsel %vm7557, %v7541, %v7573
    %v7590 = vsel %vm7558, %v7542, %v7574
    %v7591 = vsel %vm7559, %v7543, %v7575
    %v7592 = vpack.c.bf16 %v7577, %v7576
    %v7593 = vpack.c.bf16 %v7579, %v7578
    %v7594 = vpack.c.bf16 %v7581, %v7580
    %v7595 = vpack.c.bf16 %v7583, %v7582
    %v7596 = vpack.c.bf16 %v7585, %v7584
    %v7597 = vpack.c.bf16 %v7587, %v7586
    %v7598 = vpack.c.bf16 %v7589, %v7588
    %v7599 = vpack.c.bf16 %v7591, %v7590
    %v7600 = vld [vmem:[%s10] sm:$0xf]
    %v7601 = vld [vmem:[%s10 + $0x4] sm:$0xf]
    %v7602 = vld [vmem:[%s10 + $0x8] sm:$0xf]
    %v7603 = vld [vmem:[%s10 + $0xc] sm:$0xf]
    %v7604 = vld [vmem:[%s11] sm:$0xf]
    %v7605 = vld [vmem:[%s11 + $0x4] sm:$0xf]
    %v7606 = vld [vmem:[%s11 + $0x8] sm:$0xf]
    %v7607 = vld [vmem:[%s11 + $0xc] sm:$0xf]
    %v7608 = vld [vmem:[%s11 + $0x10] sm:$0xf]
    %v7609 = vld [vmem:[%s11 + $0x14] sm:$0xf]
    %v7610 = vld [vmem:[%s11 + $0x18] sm:$0xf]
    %v7611 = vld [vmem:[%s11 + $0x1c] sm:$0xf]
    %v7616 = vunpack.c.l.b16 %v7600
    %v7617 = vunpack.c.l.b16 %v7601
    %v7618 = vunpack.c.l.b16 %v7602
    %v7619 = vunpack.c.l.b16 %v7603
    %v7620 = vpack.c.b16 %v7617, %v7616
    %v7621 = vpack.c.b16 %v7619, %v7618
    %7624 = vmatprep.subr.bf16.mxu0 0
    %7625 = vmatpush1.bf16.msra.mxu0 %v7592
    %7626 = vmatprep.subr.bf16.mxu0 0
    %7627 = vmatpush1.bf16.msra.mxu0 %v7593
    %7628 = vmatprep.subr.bf16.mxu0 0
    %7629 = vmatpush1.bf16.msra.mxu0 %v7594
    %7630 = vmatprep.subr.bf16.mxu0 0
    %7631 = vmatpush1.bf16.msra.mxu0 %v7595
    %7632 = vmatprep.subr.bf16.mxu0 0
    %7633 = vmatpush1.bf16.msra.mxu0 %v7596
    %7634 = vmatprep.subr.bf16.mxu0 0
    %7635 = vmatpush1.bf16.msra.mxu0 %v7597
    %7636 = vmatprep.subr.bf16.mxu0 0
    %7637 = vmatpush1.bf16.msra.mxu0 %v7598
    %7638 = vmatprep.subr.bf16.mxu0 0
    %7639 = vmatpush1.bf16.msra.mxu0 %v7599
    %7640 = vmatprep.subr.bf16.mxu0 0
    %7641 = vmatpush1.bf16.msra.mxu0 0
    %7642 = vmatprep.subr.bf16.mxu0 0
    %7643 = vmatpush1.bf16.msra.mxu0 0
    %7644 = vmatprep.subr.bf16.mxu0 0
    %7645 = vmatpush1.bf16.msra.mxu0 0
    %7646 = vmatprep.subr.bf16.mxu0 0
    %7647 = vmatpush1.bf16.msra.mxu0 0
    %7648 = vmatprep.subr.bf16.mxu0 0
    %7649 = vmatpush1.bf16.msra.mxu0 0
    %7650 = vmatprep.subr.bf16.mxu0 0
    %7651 = vmatpush1.bf16.msra.mxu0 0
    %7652 = vmatprep.subr.bf16.mxu0 0
    %7653 = vmatpush1.bf16.msra.mxu0 0
    %7654 = vmatprep.subr.bf16.mxu0 0
    %7655 = vmatpush1.bf16.msra.mxu0 0
    %7656 = vmatprep.mubr.bf16.mxu0 0
    %7657 = vmatmul.mubr.bf16.gmra.mrb[0].mxu0 %v7620
    %v7658 = vpop.f32.mrb[0].mxu0
    %v7659 = vadd.f32 0.0, %v7658
    %v7660 = vpop.f32.mrb[0].mxu0
    %v7661 = vpop.f32.mrb[0].mxu0
    %v7662 = vadd.f32 0.0, %v7661
    %v7663 = vpop.f32.mrb[0].mxu0
    %7664 = vmatprep.mubr.bf16.mxu0 0
    %7665 = vmatmul.mubr.bf16.gmra.mrb[0].mxu0 %v7621
    %v7666 = vpop.f32.mrb[0].mxu0
    %v7667 = vadd.f32 0.0, %v7666
    %v7668 = vpop.f32.mrb[0].mxu0
    %v7669 = vpop.f32.mrb[0].mxu0
    %v7670 = vadd.f32 0.0, %v7669
    %v7671 = vpop.f32.mrb[0].mxu0
    %7672 = vdwg.mxu0
    %v7673 = vpack.c.bf16 %v7662, %v7659
    %v7674 = vpack.c.bf16 %v7670, %v7667
    %v7675 = vld [vmem:[%s10 + $0x10] sm:$0xf]
    %v7676 = vld [vmem:[%s10 + $0x14] sm:$0xf]
    %v7677 = vld [vmem:[%s10 + $0x18] sm:$0xf]
    %v7678 = vld [vmem:[%s10 + $0x1c] sm:$0xf]
    %v7679 = vld [vmem:[%s11 + $0x20] sm:$0xf]
    %v7680 = vld [vmem:[%s11 + $0x24] sm:$0xf]
    %v7681 = vld [vmem:[%s11 + $0x28] sm:$0xf]
    %v7682 = vld [vmem:[%s11 + $0x2c] sm:$0xf]
    %v7683 = vld [vmem:[%s11 + $0x30] sm:$0xf]
    %v7684 = vld [vmem:[%s11 + $0x34] sm:$0xf]
    %v7685 = vld [vmem:[%s11 + $0x38] sm:$0xf]
    %v7686 = vld [vmem:[%s11 + $0x3c] sm:$0xf]
    %v7691 = vunpack.c.l.b16 %v7675
    %v7692 = vunpack.c.l.b16 %v7676
    %v7693 = vunpack.c.l.b16 %v7677
    %v7694 = vunpack.c.l.b16 %v7678
    %v7695 = vpack.c.b16 %v7692, %v7691
    %v7696 = vpack.c.b16 %v7694, %v7693
    %7699 = vmatprep.subr.bf16.mxu0 0
    %7700 = vmatpush1.bf16.msra.mxu0 %v7592
    %7701 = vmatprep.subr.bf16.mxu0 0
    %7702 = vmatpush1.bf16.msra.mxu0 %v7593
    %7703 = vmatprep.subr.bf16.mxu0 0
    %7704 = vmatpush1.bf16.msra.mxu0 %v7594
    %7705 = vmatprep.subr.bf16.mxu0 0
    %7706 = vmatpush1.bf16.msra.mxu0 %v7595
    %7707 = vmatprep.subr.bf16.mxu0 0
    %7708 = vmatpush1.bf16.msra.mxu0 %v7596
    %7709 = vmatprep.subr.bf16.mxu0 0
    %7710 = vmatpush1.bf16.msra.mxu0 %v7597
    %7711 = vmatprep.subr.bf16.mxu0 0
    %7712 = vmatpush1.bf16.msra.mxu0 %v7598
    %7713 = vmatprep.subr.bf16.mxu0 0
    %7714 = vmatpush1.bf16.msra.mxu0 %v7599
    %7715 = vmatprep.subr.bf16.mxu0 0
    %7716 = vmatpush1.bf16.msra.mxu0 0
    %7717 = vmatprep.subr.bf16.mxu0 0
    %7718 = vmatpush1.bf16.msra.mxu0 0
    %7719 = vmatprep.subr.bf16.mxu0 0
    %7720 = vmatpush1.bf16.msra.mxu0 0
    %7721 = vmatprep.subr.bf16.mxu0 0
    %7722 = vmatpush1.bf16.msra.mxu0 0
    %7723 = vmatprep.subr.bf16.mxu0 0
    %7724 = vmatpush1.bf16.msra.mxu0 0
    %7725 = vmatprep.subr.bf16.mxu0 0
    %7726 = vmatpush1.bf16.msra.mxu0 0
    %7727 = vmatprep.subr.bf16.mxu0 0
    %7728 = vmatpush1.bf16.msra.mxu0 0
    %7729 = vmatprep.subr.bf16.mxu0 0
    %7730 = vmatpush1.bf16.msra.mxu0 0
    %7731 = vmatprep.mubr.bf16.mxu0 0
    %7732 = vmatmul.mubr.bf16.gmra.mrb[0].mxu0 %v7695
    %v7733 = vpop.f32.mrb[0].mxu0
    %v7734 = vadd.f32 0.0, %v7733
    %v7735 = vpop.f32.mrb[0].mxu0
    %v7736 = vpop.f32.mrb[0].mxu0
    %v7737 = vadd.f32 0.0, %v7736
    %v7738 = vpop.f32.mrb[0].mxu0
    %7739 = vmatprep.mubr.bf16.mxu0 0
    %7740 = vmatmul.mubr.bf16.gmra.mrb[0].mxu0 %v7696
    %v7741 = vpop.f32.mrb[0].mxu0
    %v7742 = vadd.f32 0.0, %v7741
    %v7743 = vpop.f32.mrb[0].mxu0
    %v7744 = vpop.f32.mrb[0].mxu0
    %v7745 = vadd.f32 0.0, %v7744
    %v7746 = vpop.f32.mrb[0].mxu0
    %7747 = vdwg.mxu0
    %v7748 = vpack.c.bf16 %v7737, %v7734
    %v7749 = vpack.c.bf16 %v7745, %v7742
    %v7758 = vunpack.c.l.b16 %v7679
    %v7759 = vunpack.c.l.b16 %v7680
    %v7760 = vunpack.c.l.b16 %v7681
    %v7761 = vunpack.c.l.b16 %v7682
    %v7762 = vunpack.c.l.b16 %v7683
    %v7763 = vunpack.c.l.b16 %v7684
    %v7764 = vunpack.c.l.b16 %v7685
    %v7765 = vunpack.c.l.b16 %v7686
    %v7766 = vpack.c.b16 %v7759, %v7758
    %v7767 = vpack.c.b16 %v7761, %v7760
    %v7768 = vpack.c.b16 %v7763, %v7762
    %v7769 = vpack.c.b16 %v7765, %v7764
    %vm7774 = vcmask 523264
    %v7776 = vsel %vm7774, %v7748, 0
    %v7779 = vsel %vm7774, %v7749, 0
    %7781 = vmatprep.subr.bf16.mxu0 0
    %7782 = vmatpush1.bf16.msra.mxu0 %v7766
    %7783 = vmatprep.subr.bf16.mxu0 0
    %7784 = vmatpush1.bf16.msra.mxu0 %v7767
    %7785 = vmatprep.subr.bf16.mxu0 0
    %7786 = vmatpush1.bf16.msra.mxu0 %v7768
    %7787 = vmatprep.subr.bf16.mxu0 0
    %7788 = vmatpush1.bf16.msra.mxu0 %v7769
    %7789 = vmatprep.subr.bf16.mxu0 0
    %7790 = vmatpush1.bf16.msra.mxu0 0
    %7791 = vmatprep.subr.bf16.mxu0 0
    %7792 = vmatpush1.bf16.msra.mxu0 0
    %7793 = vmatprep.subr.bf16.mxu0 0
    %7794 = vmatpush1.bf16.msra.mxu0 0
    %7795 = vmatprep.subr.bf16.mxu0 0
    %7796 = vmatpush1.bf16.msra.mxu0 0
    %7797 = vmatprep.subr.bf16.mxu0 0
    %7798 = vmatpush1.bf16.msra.mxu0 0
    %7799 = vmatprep.subr.bf16.mxu0 0
    %7800 = vmatpush1.bf16.msra.mxu0 0
    %7801 = vmatprep.subr.bf16.mxu0 0
    %7802 = vmatpush1.bf16.msra.mxu0 0
    %7803 = vmatprep.subr.bf16.mxu0 0
    %7804 = vmatpush1.bf16.msra.mxu0 0
    %7805 = vmatprep.subr.bf16.mxu0 0
    %7806 = vmatpush1.bf16.msra.mxu0 0
    %7807 = vmatprep.subr.bf16.mxu0 0
    %7808 = vmatpush1.bf16.msra.mxu0 0
    %7809 = vmatprep.subr.bf16.mxu0 0
    %7810 = vmatpush1.bf16.msra.mxu0 0
    %7811 = vmatprep.subr.bf16.mxu0 0
    %7812 = vmatpush1.bf16.msra.mxu0 0
    %7813 = vmatprep.mubr.bf16.mxu0 0
    %7814 = vmatmul.mubr.bf16.gmra.mrb[0].mxu0 %v7776
    %v7815 = vpop.f32.mrb[0].mxu0
    %v7816 = vadd.f32 0.0, %v7815
    %v7817 = vpop.f32.mrb[0].mxu0
    %v7818 = vpop.f32.mrb[0].mxu0
    %v7819 = vadd.f32 0.0, %v7818
    %v7820 = vpop.f32.mrb[0].mxu0
    %7821 = vmatprep.mubr.bf16.mxu0 0
    %7822 = vmatmul.mubr.bf16.gmra.mrb[0].mxu0 %v7779
    %v7823 = vpop.f32.mrb[0].mxu0
    %v7824 = vadd.f32 0.0, %v7823
    %v7825 = vpop.f32.mrb[0].mxu0
    %v7826 = vpop.f32.mrb[0].mxu0
    %v7827 = vadd.f32 0.0, %v7826
    %v7828 = vpop.f32.mrb[0].mxu0
    %7829 = vdwg.mxu0
    %v7838 = vunpack.c.l.b16 %v7604
    %v7839 = vunpack.c.l.b16 %v7605
    %v7840 = vunpack.c.l.b16 %v7606
    %v7841 = vunpack.c.l.b16 %v7607
    %v7842 = vunpack.c.l.b16 %v7608
    %v7843 = vunpack.c.l.b16 %v7609
    %v7844 = vunpack.c.l.b16 %v7610
    %v7845 = vunpack.c.l.b16 %v7611
    %v7846 = vpack.c.b16 %v7839, %v7838
    %v7847 = vpack.c.b16 %v7841, %v7840
    %v7848 = vpack.c.b16 %v7843, %v7842
    %v7849 = vpack.c.b16 %v7845, %v7844
    %v7855 = vsel %vm7774, %v7673, 0
    %v7858 = vsel %vm7774, %v7674, 0
    %7860 = vmatprep.subr.bf16.mxu0 0
    %7861 = vmatpush1.bf16.msra.mxu0 %v7846
    %7862 = vmatprep.subr.bf16.mxu0 0
    %7863 = vmatpush1.bf16.msra.mxu0 %v7847
    %7864 = vmatprep.subr.bf16.mxu0 0
    %7865 = vmatpush1.bf16.msra.mxu0 %v7848
    %7866 = vmatprep.subr.bf16.mxu0 0
    %7867 = vmatpush1.bf16.msra.mxu0 %v7849
    %7868 = vmatprep.subr.bf16.mxu0 0
    %7869 = vmatpush1.bf16.msra.mxu0 0
    %7870 = vmatprep.subr.bf16.mxu0 0
    %7871 = vmatpush1.bf16.msra.mxu0 0
    %7872 = vmatprep.subr.bf16.mxu0 0
    %7873 = vmatpush1.bf16.msra.mxu0 0
    %7874 = vmatprep.subr.bf16.mxu0 0
    %7875 = vmatpush1.bf16.msra.mxu0 0
    %7876 = vmatprep.subr.bf16.mxu0 0
    %7877 = vmatpush1.bf16.msra.mxu0 0
    %7878 = vmatprep.subr.bf16.mxu0 0
    %7879 = vmatpush1.bf16.msra.mxu0 0
    %7880 = vmatprep.subr.bf16.mxu0 0
    %7881 = vmatpush1.bf16.msra.mxu0 0
    %7882 = vmatprep.subr.bf16.mxu0 0
    %7883 = vmatpush1.bf16.msra.mxu0 0
    %7884 = vmatprep.subr.bf16.mxu0 0
    %7885 = vmatpush1.bf16.msra.mxu0 0
    %7886 = vmatprep.subr.bf16.mxu0 0
    %7887 = vmatpush1.bf16.msra.mxu0 0
    %7888 = vmatprep.subr.bf16.mxu0 0
    %7889 = vmatpush1.bf16.msra.mxu0 0
    %7890 = vmatprep.subr.bf16.mxu0 0
    %7891 = vmatpush1.bf16.msra.mxu0 0
    %7892 = vmatprep.mubr.bf16.mxu0 0
    %7893 = vmatmul.mubr.bf16.gmra.mrb[0].mxu0 %v7855
    %v7894 = vpop.f32.mrb[0].mxu0
    %v7895 = vadd.f32 %v7816, %v7894
    %v7896 = vpop.f32.mrb[0].mxu0
    %v7897 = vpop.f32.mrb[0].mxu0
    %v7898 = vadd.f32 %v7819, %v7897
    %v7899 = vpop.f32.mrb[0].mxu0
    %7900 = vmatprep.mubr.bf16.mxu0 0
    %7901 = vmatmul.mubr.bf16.gmra.mrb[0].mxu0 %v7858
    %v7902 = vpop.f32.mrb[0].mxu0
    %v7903 = vadd.f32 %v7824, %v7902
    %v7904 = vpop.f32.mrb[0].mxu0
    %v7905 = vpop.f32.mrb[0].mxu0
    %v7906 = vadd.f32 %v7827, %v7905
    %v7907 = vpop.f32.mrb[0].mxu0
    %7908 = vdwg.mxu0
    %v7909 = vld [vmem:[%s10 + $0x20] sm:$0xf]
    %v7910 = vld [vmem:[%s10 + $0x24] sm:$0xf]
    %v7911 = vld [vmem:[%s10 + $0x28] sm:$0xf]
    %v7912 = vld [vmem:[%s10 + $0x2c] sm:$0xf]
    %v7913 = vld [vmem:[%s11 + $0x40] sm:$0xf]
    %v7914 = vld [vmem:[%s11 + $0x44] sm:$0xf]
    %v7915 = vld [vmem:[%s11 + $0x48] sm:$0xf]
    %v7916 = vld [vmem:[%s11 + $0x4c] sm:$0xf]
    %v7917 = vld [vmem:[%s11 + $0x50] sm:$0xf]
    %v7918 = vld [vmem:[%s11 + $0x54] sm:$0xf]
    %v7919 = vld [vmem:[%s11 + $0x58] sm:$0xf]
    %v7920 = vld [vmem:[%s11 + $0x5c] sm:$0xf]
    %v7925 = vunpack.c.l.b16 %v7909
    %v7926 = vunpack.c.l.b16 %v7910
    %v7927 = vunpack.c.l.b16 %v7911
    %v7928 = vunpack.c.l.b16 %v7912
    %v7929 = vpack.c.b16 %v7926, %v7925
    %v7930 = vpack.c.b16 %v7928, %v7927
    %7933 = vmatprep.subr.bf16.mxu0 0
    %7934 = vmatpush1.bf16.msra.mxu0 %v7592
    %7935 = vmatprep.subr.bf16.mxu0 0
    %7936 = vmatpush1.bf16.msra.mxu0 %v7593
    %7937 = vmatprep.subr.bf16.mxu0 0
    %7938 = vmatpush1.bf16.msra.mxu0 %v7594
    %7939 = vmatprep.subr.bf16.mxu0 0
    %7940 = vmatpush1.bf16.msra.mxu0 %v7595
    %7941 = vmatprep.subr.bf16.mxu0 0
    %7942 = vmatpush1.bf16.msra.mxu0 %v7596
    %7943 = vmatprep.subr.bf16.mxu0 0
    %7944 = vmatpush1.bf16.msra.mxu0 %v7597
    %7945 = vmatprep.subr.bf16.mxu0 0
    %7946 = vmatpush1.bf16.msra.mxu0 %v7598
    %7947 = vmatprep.subr.bf16.mxu0 0
    %7948 = vmatpush1.bf16.msra.mxu0 %v7599
    %7949 = vmatprep.subr.bf16.mxu0 0
    %7950 = vmatpush1.bf16.msra.mxu0 0
    %7951 = vmatprep.subr.bf16.mxu0 0
    %7952 = vmatpush1.bf16.msra.mxu0 0
    %7953 = vmatprep.subr.bf16.mxu0 0
    %7954 = vmatpush1.bf16.msra.mxu0 0
    %7955 = vmatprep.subr.bf16.mxu0 0
    %7956 = vmatpush1.bf16.msra.mxu0 0
    %7957 = vmatprep.subr.bf16.mxu0 0
    %7958 = vmatpush1.bf16.msra.mxu0 0
    %7959 = vmatprep.subr.bf16.mxu0 0
    %7960 = vmatpush1.bf16.msra.mxu0 0
    %7961 = vmatprep.subr.bf16.mxu0 0
    %7962 = vmatpush1.bf16.msra.mxu0 0
    %7963 = vmatprep.subr.bf16.mxu0 0
    %7964 = vmatpush1.bf16.msra.mxu0 0
    %7965 = vmatprep.mubr.bf16.mxu0 0
    %7966 = vmatmul.mubr.bf16.gmra.mrb[0].mxu0 %v7929
    %v7967 = vpop.f32.mrb[0].mxu0
    %v7968 = vadd.f32 0.0, %v7967
    %v7969 = vpop.f32.mrb[0].mxu0
    %v7970 = vpop.f32.mrb[0].mxu0
    %v7971 = vadd.f32 0.0, %v7970
    %v7972 = vpop.f32.mrb[0].mxu0
    %7973 = vmatprep.mubr.bf16.mxu0 0
    %7974 = vmatmul.mubr.bf16.gmra.mrb[0].mxu0 %v7930
    %v7975 = vpop.f32.mrb[0].mxu0
    %v7976 = vadd.f32 0.0, %v7975
    %v7977 = vpop.f32.mrb[0].mxu0
    %v7978 = vpop.f32.mrb[0].mxu0
    %v7979 = vadd.f32 0.0, %v7978
    %v7980 = vpop.f32.mrb[0].mxu0
    %7981 = vdwg.mxu0
    %v7982 = vpack.c.bf16 %v7971, %v7968
    %v7983 = vpack.c.bf16 %v7979, %v7976
    %v7992 = vunpack.c.l.b16 %v7913
    %v7993 = vunpack.c.l.b16 %v7914
    %v7994 = vunpack.c.l.b16 %v7915
    %v7995 = vunpack.c.l.b16 %v7916
    %v7996 = vunpack.c.l.b16 %v7917
    %v7997 = vunpack.c.l.b16 %v7918
    %v7998 = vunpack.c.l.b16 %v7919
    %v7999 = vunpack.c.l.b16 %v7920
    %v8000 = vpack.c.b16 %v7993, %v7992
    %v8001 = vpack.c.b16 %v7995, %v7994
    %v8002 = vpack.c.b16 %v7997, %v7996
    %v8003 = vpack.c.b16 %v7999, %v7998
    %v8009 = vsel %vm7774, %v7982, 0
    %v8012 = vsel %vm7774, %v7983, 0
    %8014 = vmatprep.subr.bf16.mxu0 0
    %8015 = vmatpush1.bf16.msra.mxu0 %v8000
    %8016 = vmatprep.subr.bf16.mxu0 0
    %8017 = vmatpush1.bf16.msra.mxu0 %v8001
    %8018 = vmatprep.subr.bf16.mxu0 0
    %8019 = vmatpush1.bf16.msra.mxu0 %v8002
    %8020 = vmatprep.subr.bf16.mxu0 0
    %8021 = vmatpush1.bf16.msra.mxu0 %v8003
    %8022 = vmatprep.subr.bf16.mxu0 0
    %8023 = vmatpush1.bf16.msra.mxu0 0
    %8024 = vmatprep.subr.bf16.mxu0 0
    %8025 = vmatpush1.bf16.msra.mxu0 0
    %8026 = vmatprep.subr.bf16.mxu0 0
    %8027 = vmatpush1.bf16.msra.mxu0 0
    %8028 = vmatprep.subr.bf16.mxu0 0
    %8029 = vmatpush1.bf16.msra.mxu0 0
    %8030 = vmatprep.subr.bf16.mxu0 0
    %8031 = vmatpush1.bf16.msra.mxu0 0
    %8032 = vmatprep.subr.bf16.mxu0 0
    %8033 = vmatpush1.bf16.msra.mxu0 0
    %8034 = vmatprep.subr.bf16.mxu0 0
    %8035 = vmatpush1.bf16.msra.mxu0 0
    %8036 = vmatprep.subr.bf16.mxu0 0
    %8037 = vmatpush1.bf16.msra.mxu0 0
    %8038 = vmatprep.subr.bf16.mxu0 0
    %8039 = vmatpush1.bf16.msra.mxu0 0
    %8040 = vmatprep.subr.bf16.mxu0 0
    %8041 = vmatpush1.bf16.msra.mxu0 0
    %8042 = vmatprep.subr.bf16.mxu0 0
    %8043 = vmatpush1.bf16.msra.mxu0 0
    %8044 = vmatprep.subr.bf16.mxu0 0
    %8045 = vmatpush1.bf16.msra.mxu0 0
    %8046 = vmatprep.mubr.bf16.mxu0 0
    %8047 = vmatmul.mubr.bf16.gmra.mrb[0].mxu0 %v8009
    %v8048 = vpop.f32.mrb[0].mxu0
    %v8049 = vadd.f32 0.0, %v8048
    %v8050 = vpop.f32.mrb[0].mxu0
    %v8051 = vpop.f32.mrb[0].mxu0
    %v8052 = vadd.f32 0.0, %v8051
    %v8053 = vpop.f32.mrb[0].mxu0
    %8054 = vmatprep.mubr.bf16.mxu0 0
    %8055 = vmatmul.mubr.bf16.gmra.mrb[0].mxu0 %v8012
    %v8056 = vpop.f32.mrb[0].mxu0
    %v8057 = vadd.f32 0.0, %v8056
    %v8058 = vpop.f32.mrb[0].mxu0
    %v8059 = vpop.f32.mrb[0].mxu0
    %v8060 = vadd.f32 0.0, %v8059
    %v8061 = vpop.f32.mrb[0].mxu0
    %8062 = vdwg.mxu0
    %v8063 = vadd.f32 %v7895, %v8049
    %v8064 = vadd.f32 %v7898, %v8052
    %v8065 = vadd.f32 %v7903, %v8057
    %v8066 = vadd.f32 %v7906, %v8060
    %v8067 = vld [vmem:[%s10 + $0x30] sm:$0xf]
    %v8068 = vld [vmem:[%s10 + $0x34] sm:$0xf]
    %v8069 = vld [vmem:[%s10 + $0x38] sm:$0xf]
    %v8070 = vld [vmem:[%s10 + $0x3c] sm:$0xf]
    %v8071 = vld [vmem:[%s11 + $0x60] sm:$0xf]
    %v8072 = vld [vmem:[%s11 + $0x64] sm:$0xf]
    %v8073 = vld [vmem:[%s11 + $0x68] sm:$0xf]
    %v8074 = vld [vmem:[%s11 + $0x6c] sm:$0xf]
    %v8075 = vld [vmem:[%s11 + $0x70] sm:$0xf]
    %v8076 = vld [vmem:[%s11 + $0x74] sm:$0xf]
    %v8077 = vld [vmem:[%s11 + $0x78] sm:$0xf]
    %v8078 = vld [vmem:[%s11 + $0x7c] sm:$0xf]
    %v8083 = vunpack.c.l.b16 %v8067
    %v8084 = vunpack.c.l.b16 %v8068
    %v8085 = vunpack.c.l.b16 %v8069
    %v8086 = vunpack.c.l.b16 %v8070
    %v8087 = vpack.c.b16 %v8084, %v8083
    %v8088 = vpack.c.b16 %v8086, %v8085
    %8091 = vmatprep.subr.bf16.mxu0 0
    %8092 = vmatpush1.bf16.msra.mxu0 %v7592
    %8093 = vmatprep.subr.bf16.mxu0 0
    %8094 = vmatpush1.bf16.msra.mxu0 %v7593
    %8095 = vmatprep.subr.bf16.mxu0 0
    %8096 = vmatpush1.bf16.msra.mxu0 %v7594
    %8097 = vmatprep.subr.bf16.mxu0 0
    %8098 = vmatpush1.bf16.msra.mxu0 %v7595
    %8099 = vmatprep.subr.bf16.mxu0 0
    %8100 = vmatpush1.bf16.msra.mxu0 %v7596
    %8101 = vmatprep.subr.bf16.mxu0 0
    %8102 = vmatpush1.bf16.msra.mxu0 %v7597
    %8103 = vmatprep.subr.bf16.mxu0 0
    %8104 = vmatpush1.bf16.msra.mxu0 %v7598
    %8105 = vmatprep.subr.bf16.mxu0 0
    %8106 = vmatpush1.bf16.msra.mxu0 %v7599
    %8107 = vmatprep.subr.bf16.mxu0 0
    %8108 = vmatpush1.bf16.msra.mxu0 0
    %8109 = vmatprep.subr.bf16.mxu0 0
    %8110 = vmatpush1.bf16.msra.mxu0 0
    %8111 = vmatprep.subr.bf16.mxu0 0
    %8112 = vmatpush1.bf16.msra.mxu0 0
    %8113 = vmatprep.subr.bf16.mxu0 0
    %8114 = vmatpush1.bf16.msra.mxu0 0
    %8115 = vmatprep.subr.bf16.mxu0 0
    %8116 = vmatpush1.bf16.msra.mxu0 0
    %8117 = vmatprep.subr.bf16.mxu0 0
    %8118 = vmatpush1.bf16.msra.mxu0 0
    %8119 = vmatprep.subr.bf16.mxu0 0
    %8120 = vmatpush1.bf16.msra.mxu0 0
    %8121 = vmatprep.subr.bf16.mxu0 0
    %8122 = vmatpush1.bf16.msra.mxu0 0
    %8123 = vmatprep.mubr.bf16.mxu0 0
    %8124 = vmatmul.mubr.bf16.gmra.mrb[0].mxu0 %v8087
    %v8125 = vpop.f32.mrb[0].mxu0
    %v8126 = vadd.f32 0.0, %v8125
    %v8127 = vpop.f32.mrb[0].mxu0
    %v8128 = vpop.f32.mrb[0].mxu0
    %v8129 = vadd.f32 0.0, %v8128
    %v8130 = vpop.f32.mrb[0].mxu0
    %8131 = vmatprep.mubr.bf16.mxu0 0
    %8132 = vmatmul.mubr.bf16.gmra.mrb[0].mxu0 %v8088
    %v8133 = vpop.f32.mrb[0].mxu0
    %v8134 = vadd.f32 0.0, %v8133
    %v8135 = vpop.f32.mrb[0].mxu0
    %v8136 = vpop.f32.mrb[0].mxu0
    %v8137 = vadd.f32 0.0, %v8136
    %v8138 = vpop.f32.mrb[0].mxu0
    %8139 = vdwg.mxu0
    %v8140 = vpack.c.bf16 %v8129, %v8126
    %v8141 = vpack.c.bf16 %v8137, %v8134
    %v8150 = vunpack.c.l.b16 %v8071
    %v8151 = vunpack.c.l.b16 %v8072
    %v8152 = vunpack.c.l.b16 %v8073
    %v8153 = vunpack.c.l.b16 %v8074
    %v8154 = vunpack.c.l.b16 %v8075
    %v8155 = vunpack.c.l.b16 %v8076
    %v8156 = vunpack.c.l.b16 %v8077
    %v8157 = vunpack.c.l.b16 %v8078
    %v8158 = vpack.c.b16 %v8151, %v8150
    %v8159 = vpack.c.b16 %v8153, %v8152
    %v8160 = vpack.c.b16 %v8155, %v8154
    %v8161 = vpack.c.b16 %v8157, %v8156
    %v8167 = vsel %vm7774, %v8140, 0
    %v8170 = vsel %vm7774, %v8141, 0
    %8172 = vmatprep.subr.bf16.mxu0 0
    %8173 = vmatpush1.bf16.msra.mxu0 %v8158
    %8174 = vmatprep.subr.bf16.mxu0 0
    %8175 = vmatpush1.bf16.msra.mxu0 %v8159
    %8176 = vmatprep.subr.bf16.mxu0 0
    %8177 = vmatpush1.bf16.msra.mxu0 %v8160
    %8178 = vmatprep.subr.bf16.mxu0 0
    %8179 = vmatpush1.bf16.msra.mxu0 %v8161
    %8180 = vmatprep.subr.bf16.mxu0 0
    %8181 = vmatpush1.bf16.msra.mxu0 0
    %8182 = vmatprep.subr.bf16.mxu0 0
    %8183 = vmatpush1.bf16.msra.mxu0 0
    %8184 = vmatprep.subr.bf16.mxu0 0
    %8185 = vmatpush1.bf16.msra.mxu0 0
    %8186 = vmatprep.subr.bf16.mxu0 0
    %8187 = vmatpush1.bf16.msra.mxu0 0
    %8188 = vmatprep.subr.bf16.mxu0 0
    %8189 = vmatpush1.bf16.msra.mxu0 0
    %8190 = vmatprep.subr.bf16.mxu0 0
    %8191 = vmatpush1.bf16.msra.mxu0 0
    %8192 = vmatprep.subr.bf16.mxu0 0
    %8193 = vmatpush1.bf16.msra.mxu0 0
    %8194 = vmatprep.subr.bf16.mxu0 0
    %8195 = vmatpush1.bf16.msra.mxu0 0
    %8196 = vmatprep.subr.bf16.mxu0 0
    %8197 = vmatpush1.bf16.msra.mxu0 0
    %8198 = vmatprep.subr.bf16.mxu0 0
    %8199 = vmatpush1.bf16.msra.mxu0 0
    %8200 = vmatprep.subr.bf16.mxu0 0
    %8201 = vmatpush1.bf16.msra.mxu0 0
    %8202 = vmatprep.subr.bf16.mxu0 0
    %8203 = vmatpush1.bf16.msra.mxu0 0
    %8204 = vmatprep.mubr.bf16.mxu0 0
    %8205 = vmatmul.mubr.bf16.gmra.mrb[0].mxu0 %v8167
    %v8206 = vpop.f32.mrb[0].mxu0
    %v8207 = vadd.f32 0.0, %v8206
    %v8208 = vpop.f32.mrb[0].mxu0
    %v8209 = vpop.f32.mrb[0].mxu0
    %v8210 = vadd.f32 0.0, %v8209
    %v8211 = vpop.f32.mrb[0].mxu0
    %8212 = vmatprep.mubr.bf16.mxu0 0
    %8213 = vmatmul.mubr.bf16.gmra.mrb[0].mxu0 %v8170
    %v8214 = vpop.f32.mrb[0].mxu0
    %v8215 = vadd.f32 0.0, %v8214
    %v8216 = vpop.f32.mrb[0].mxu0
    %v8217 = vpop.f32.mrb[0].mxu0
    %v8218 = vadd.f32 0.0, %v8217
    %v8219 = vpop.f32.mrb[0].mxu0
    %8220 = vdwg.mxu0
    %v8221 = vadd.f32 %v8063, %v8207
    %v8222 = vadd.f32 %v8064, %v8210
    %v8223 = vadd.f32 %v8065, %v8215
    %v8224 = vadd.f32 %v8066, %v8218
    %v8225 = vld [vmem:[#allocation7] sm:$0x1]
    %v8227 = vlaneseq
    %v8228 = vshrl.u32 %v8227, 7
    %v8229 = vsub.s32 0, %v8228
    %v8230 = vrot.slane %v8225, %v8229
    %v8232 = vadd.f32 %v8221, %v8230
    %v8233 = vadd.f32 %v8222, %v8230
    %v8234 = vadd.f32 %v8223, %v8230
    %v8235 = vadd.f32 %v8224, %v8230
    %vm8236 = vcmp.ge.f32.partialorder %v8232, 0.0
    %vm8237 = vcmp.ge.f32.partialorder %v8233, 0.0
    %vm8238 = vcmp.ge.f32.partialorder %v8234, 0.0
    %vm8239 = vcmp.ge.f32.partialorder %v8235, 0.0
    %v8240 = vmul.f32 %v8232, 0.2
    %v8241 = vmul.f32 %v8233, 0.2
    %v8242 = vmul.f32 %v8234, 0.2
    %v8243 = vmul.f32 %v8235, 0.2
    %v8244 = vsel %vm8236, %v8232, %v8240
    %v8245 = vsel %vm8237, %v8233, %v8241
    %v8246 = vsel %vm8238, %v8234, %v8242
    %v8247 = vsel %vm8239, %v8235, %v8243
    %v8248 = vpack.c.bf16 %v8245, %v8244
    %v8249 = vpack.c.bf16 %v8247, %v8246
    %v8250 = vld [vmem:[#allocation8] sm:$0xf]
    %v8251 = vld [vmem:[#allocation10] sm:$0xff]
    %v8252 = vld [vmem:[#allocation10 + $0x8] sm:$0xff]
    %v8253 = vld [vmem:[#allocation10 + $0x10] sm:$0xff]
    %v8254 = vld [vmem:[#allocation10 + $0x18] sm:$0xff]
    %v8255 = vld [vmem:[#allocation10 + $0x20] sm:$0xff]
    %v8256 = vld [vmem:[#allocation10 + $0x28] sm:$0xff]
    %v8257 = vld [vmem:[#allocation10 + $0x30] sm:$0xff]
    %v8258 = vld [vmem:[#allocation10 + $0x38] sm:$0xff]
    %v8259 = vld [vmem:[#allocation10 + $0x40] sm:$0xff]
    %v8260 = vld [vmem:[#allocation10 + $0x48] sm:$0xff]
    %v8261 = vld [vmem:[#allocation10 + $0x50] sm:$0xff]
    %v8262 = vld [vmem:[#allocation10 + $0x58] sm:$0xff]
    %v8263 = vld [vmem:[#allocation10 + $0x60] sm:$0xff]
    %v8264 = vld [vmem:[#allocation10 + $0x68] sm:$0xff]
    %v8265 = vld [vmem:[#allocation10 + $0x70] sm:$0xff]
    %v8266 = vld [vmem:[#allocation10 + $0x78] sm:$0xff]
    %v8268 = vsel %vm6172, %v8250, 0
    %8270 = vmatprep.subr.bf16.mxu0 0
    %8271 = vmatpush1.bf16.msra.mxu0 %v8248
    %8272 = vmatprep.subr.bf16.mxu0 0
    %8273 = vmatpush1.bf16.msra.mxu0 %v8249
    %8274 = vmatprep.subr.bf16.mxu0 0
    %8275 = vmatpush1.bf16.msra.mxu0 0
    %8276 = vmatprep.subr.bf16.mxu0 0
    %8277 = vmatpush1.bf16.msra.mxu0 0
    %8278 = vmatprep.subr.bf16.mxu0 0
    %8279 = vmatpush1.bf16.msra.mxu0 0
    %8280 = vmatprep.subr.bf16.mxu0 0
    %8281 = vmatpush1.bf16.msra.mxu0 0
    %8282 = vmatprep.subr.bf16.mxu0 0
    %8283 = vmatpush1.bf16.msra.mxu0 0
    %8284 = vmatprep.subr.bf16.mxu0 0
    %8285 = vmatpush1.bf16.msra.mxu0 0
    %8286 = vmatprep.subr.bf16.mxu0 0
    %8287 = vmatpush1.bf16.msra.mxu0 0
    %8288 = vmatprep.subr.bf16.mxu0 0
    %8289 = vmatpush1.bf16.msra.mxu0 0
    %8290 = vmatprep.subr.bf16.mxu0 0
    %8291 = vmatpush1.bf16.msra.mxu0 0
    %8292 = vmatprep.subr.bf16.mxu0 0
    %8293 = vmatpush1.bf16.msra.mxu0 0
    %8294 = vmatprep.subr.bf16.mxu0 0
    %8295 = vmatpush1.bf16.msra.mxu0 0
    %8296 = vmatprep.subr.bf16.mxu0 0
    %8297 = vmatpush1.bf16.msra.mxu0 0
    %8298 = vmatprep.subr.bf16.mxu0 0
    %8299 = vmatpush1.bf16.msra.mxu0 0
    %8300 = vmatprep.subr.bf16.mxu0 0
    %8301 = vmatpush1.bf16.msra.mxu0 0
    %8302 = vmatprep.mubr.bf16.mxu0 0
    %8303 = vmatmul.mubr.bf16.gmra.mrb[0].mxu0 %v8268
    %v8304 = vpop.f32.mrb[0].mxu0
    %v8305 = vadd.f32 0.0, %v8304
    %v8306 = vpop.f32.mrb[0].mxu0
    %v8307 = vpop.f32.mrb[0].mxu0
    %v8308 = vpop.f32.mrb[0].mxu0
    %8309 = vdwg.mxu0
    %v8310 = vpack.c.bf16 %v8305, %v8305
    %v8311 = vld [vmem:[#allocation8 + $0x4] sm:$0xf]
    %v8312 = vld [vmem:[#allocation10 + $0x80] sm:$0xff]
    %v8313 = vld [vmem:[#allocation10 + $0x88] sm:$0xff]
    %v8314 = vld [vmem:[#allocation10 + $0x90] sm:$0xff]
    %v8315 = vld [vmem:[#allocation10 + $0x98] sm:$0xff]
    %v8316 = vld [vmem:[#allocation10 + $0xa0] sm:$0xff]
    %v8317 = vld [vmem:[#allocation10 + $0xa8] sm:$0xff]
    %v8318 = vld [vmem:[#allocation10 + $0xb0] sm:$0xff]
    %v8319 = vld [vmem:[#allocation10 + $0xb8] sm:$0xff]
    %v8320 = vld [vmem:[#allocation10 + $0xc0] sm:$0xff]
    %v8321 = vld [vmem:[#allocation10 + $0xc8] sm:$0xff]
    %v8322 = vld [vmem:[#allocation10 + $0xd0] sm:$0xff]
    %v8323 = vld [vmem:[#allocation10 + $0xd8] sm:$0xff]
    %v8324 = vld [vmem:[#allocation10 + $0xe0] sm:$0xff]
    %v8325 = vld [vmem:[#allocation10 + $0xe8] sm:$0xff]
    %v8326 = vld [vmem:[#allocation10 + $0xf0] sm:$0xff]
    %v8327 = vld [vmem:[#allocation10 + $0xf8] sm:$0xff]
    %v8329 = vsel %vm6172, %v8311, 0
    %8331 = vmatprep.subr.bf16.mxu0 0
    %8332 = vmatpush1.bf16.msra.mxu0 %v8248
    %8333 = vmatprep.subr.bf16.mxu0 0
    %8334 = vmatpush1.bf16.msra.mxu0 %v8249
    %8335 = vmatprep.subr.bf16.mxu0 0
    %8336 = vmatpush1.bf16.msra.mxu0 0
    %8337 = vmatprep.subr.bf16.mxu0 0
    %8338 = vmatpush1.bf16.msra.mxu0 0
    %8339 = vmatprep.subr.bf16.mxu0 0
    %8340 = vmatpush1.bf16.msra.mxu0 0
    %8341 = vmatprep.subr.bf16.mxu0 0
    %8342 = vmatpush1.bf16.msra.mxu0 0
    %8343 = vmatprep.subr.bf16.mxu0 0
    %8344 = vmatpush1.bf16.msra.mxu0 0
    %8345 = vmatprep.subr.bf16.mxu0 0
    %8346 = vmatpush1.bf16.msra.mxu0 0
    %8347 = vmatprep.subr.bf16.mxu0 0
    %8348 = vmatpush1.bf16.msra.mxu0 0
    %8349 = vmatprep.subr.bf16.mxu0 0
    %8350 = vmatpush1.bf16.msra.mxu0 0
    %8351 = vmatprep.subr.bf16.mxu0 0
    %8352 = vmatpush1.bf16.msra.mxu0 0
    %8353 = vmatprep.subr.bf16.mxu0 0
    %8354 = vmatpush1.bf16.msra.mxu0 0
    %8355 = vmatprep.subr.bf16.mxu0 0
    %8356 = vmatpush1.bf16.msra.mxu0 0
    %8357 = vmatprep.subr.bf16.mxu0 0
    %8358 = vmatpush1.bf16.msra.mxu0 0
    %8359 = vmatprep.subr.bf16.mxu0 0
    %8360 = vmatpush1.bf16.msra.mxu0 0
    %8361 = vmatprep.subr.bf16.mxu0 0
    %8362 = vmatpush1.bf16.msra.mxu0 0
    %8363 = vmatprep.mubr.bf16.mxu0 0
    %8364 = vmatmul.mubr.bf16.gmra.mrb[0].mxu0 %v8329
    %v8365 = vpop.f32.mrb[0].mxu0
    %v8366 = vadd.f32 0.0, %v8365
    %v8367 = vpop.f32.mrb[0].mxu0
    %v8368 = vpop.f32.mrb[0].mxu0
    %v8369 = vpop.f32.mrb[0].mxu0
    %8370 = vdwg.mxu0
    %v8371 = vpack.c.bf16 %v8366, %v8366
    %v8388 = vunpack.c.l.b16 %v8312
    %v8389 = vunpack.c.h.b16 %v8312
    %v8390 = vunpack.c.l.b16 %v8313
    %v8391 = vunpack.c.h.b16 %v8313
    %v8392 = vunpack.c.l.b16 %v8314
    %v8393 = vunpack.c.h.b16 %v8314
    %v8394 = vunpack.c.l.b16 %v8315
    %v8395 = vunpack.c.h.b16 %v8315
    %v8396 = vunpack.c.l.b16 %v8316
    %v8397 = vunpack.c.h.b16 %v8316
    %v8398 = vunpack.c.l.b16 %v8317
    %v8399 = vunpack.c.h.b16 %v8317
    %v8400 = vunpack.c.l.b16 %v8318
    %v8401 = vunpack.c.h.b16 %v8318
    %v8402 = vunpack.c.l.b16 %v8319
    %v8403 = vunpack.c.h.b16 %v8319
    %v8404 = vunpack.c.l.b16 %v8320
    %v8405 = vunpack.c.h.b16 %v8320
    %v8406 = vunpack.c.l.b16 %v8321
    %v8407 = vunpack.c.h.b16 %v8321
    %v8408 = vunpack.c.l.b16 %v8322
    %v8409 = vunpack.c.h.b16 %v8322
    %v8410 = vunpack.c.l.b16 %v8323
    %v8411 = vunpack.c.h.b16 %v8323
    %v8412 = vunpack.c.l.b16 %v8324
    %v8413 = vunpack.c.h.b16 %v8324
    %v8414 = vunpack.c.l.b16 %v8325
    %v8415 = vunpack.c.h.b16 %v8325
    %v8416 = vunpack.c.l.b16 %v8326
    %v8417 = vunpack.c.h.b16 %v8326
    %v8418 = vunpack.c.l.b16 %v8327
    %v8419 = vunpack.c.h.b16 %v8327
    %v8420 = vpack.c.b16 %v8390, %v8388
    %v8421 = vpack.c.b16 %v8391, %v8389
    %v8422 = vpack.c.b16 %v8394, %v8392
    %v8423 = vpack.c.b16 %v8395, %v8393
    %v8424 = vpack.c.b16 %v8398, %v8396
    %v8425 = vpack.c.b16 %v8399, %v8397
    %v8426 = vpack.c.b16 %v8402, %v8400
    %v8427 = vpack.c.b16 %v8403, %v8401
    %v8428 = vpack.c.b16 %v8406, %v8404
    %v8429 = vpack.c.b16 %v8407, %v8405
    %v8430 = vpack.c.b16 %v8410, %v8408
    %v8431 = vpack.c.b16 %v8411, %v8409
    %v8432 = vpack.c.b16 %v8414, %v8412
    %v8433 = vpack.c.b16 %v8415, %v8413
    %v8434 = vpack.c.b16 %v8418, %v8416
    %v8435 = vpack.c.b16 %v8419, %v8417
    %8452 = vmatprep.subr.bf16.mxu0 %v8421
    %8453 = vmatpush1.bf16.msra.mxu0 %v8420
    %8454 = vmatprep.subr.bf16.mxu0 %v8423
    %8455 = vmatpush1.bf16.msra.mxu0 %v8422
    %8456 = vmatprep.subr.bf16.mxu0 %v8425
    %8457 = vmatpush1.bf16.msra.mxu0 %v8424
    %8458 = vmatprep.subr.bf16.mxu0 %v8427
    %8459 = vmatpush1.bf16.msra.mxu0 %v8426
    %8460 = vmatprep.subr.bf16.mxu0 %v8429
    %8461 = vmatpush1.bf16.msra.mxu0 %v8428
    %8462 = vmatprep.subr.bf16.mxu0 %v8431
    %8463 = vmatpush1.bf16.msra.mxu0 %v8430
    %8464 = vmatprep.subr.bf16.mxu0 %v8433
    %8465 = vmatpush1.bf16.msra.mxu0 %v8432
    %8466 = vmatprep.subr.bf16.mxu0 %v8435
    %8467 = vmatpush1.bf16.msra.mxu0 %v8434
    %8468 = vmatprep.subr.bf16.mxu0 0
    %8469 = vmatpush1.bf16.msra.mxu0 0
    %8470 = vmatprep.subr.bf16.mxu0 0
    %8471 = vmatpush1.bf16.msra.mxu0 0
    %8472 = vmatprep.subr.bf16.mxu0 0
    %8473 = vmatpush1.bf16.msra.mxu0 0
    %8474 = vmatprep.subr.bf16.mxu0 0
    %8475 = vmatpush1.bf16.msra.mxu0 0
    %8476 = vmatprep.subr.bf16.mxu0 0
    %8477 = vmatpush1.bf16.msra.mxu0 0
    %8478 = vmatprep.subr.bf16.mxu0 0
    %8479 = vmatpush1.bf16.msra.mxu0 0
    %8480 = vmatprep.subr.bf16.mxu0 0
    %8481 = vmatpush1.bf16.msra.mxu0 0
    %8482 = vmatprep.subr.bf16.mxu0 0
    %8483 = vmatpush1.bf16.msra.mxu0 0
    %8484 = vmatprep.mubr.bf16.mxu0 0
    %8485 = vmatmul.mubr.bf16.gmra.mrb[0].mxu0 %v8371
    %v8486 = vpop.f32.mrb[0].mxu0
    %v8487 = vadd.f32 0.0, %v8486
    %v8488 = vpop.f32.mrb[0].mxu0
    %v8489 = vadd.f32 0.0, %v8488
    %v8490 = vpop.f32.mrb[0].mxu0
    %v8491 = vpop.f32.mrb[0].mxu0
    %8492 = vdwg.mxu0
    %v8509 = vunpack.c.l.b16 %v8251
    %v8510 = vunpack.c.h.b16 %v8251
    %v8511 = vunpack.c.l.b16 %v8252
    %v8512 = vunpack.c.h.b16 %v8252
    %v8513 = vunpack.c.l.b16 %v8253
    %v8514 = vunpack.c.h.b16 %v8253
    %v8515 = vunpack.c.l.b16 %v8254
    %v8516 = vunpack.c.h.b16 %v8254
    %v8517 = vunpack.c.l.b16 %v8255
    %v8518 = vunpack.c.h.b16 %v8255
    %v8519 = vunpack.c.l.b16 %v8256
    %v8520 = vunpack.c.h.b16 %v8256
    %v8521 = vunpack.c.l.b16 %v8257
    %v8522 = vunpack.c.h.b16 %v8257
    %v8523 = vunpack.c.l.b16 %v8258
    %v8524 = vunpack.c.h.b16 %v8258
    %v8525 = vunpack.c.l.b16 %v8259
    %v8526 = vunpack.c.h.b16 %v8259
    %v8527 = vunpack.c.l.b16 %v8260
    %v8528 = vunpack.c.h.b16 %v8260
    %v8529 = vunpack.c.l.b16 %v8261
    %v8530 = vunpack.c.h.b16 %v8261
    %v8531 = vunpack.c.l.b16 %v8262
    %v8532 = vunpack.c.h.b16 %v8262
    %v8533 = vunpack.c.l.b16 %v8263
    %v8534 = vunpack.c.h.b16 %v8263
    %v8535 = vunpack.c.l.b16 %v8264
    %v8536 = vunpack.c.h.b16 %v8264
    %v8537 = vunpack.c.l.b16 %v8265
    %v8538 = vunpack.c.h.b16 %v8265
    %v8539 = vunpack.c.l.b16 %v8266
    %v8540 = vunpack.c.h.b16 %v8266
    %v8541 = vpack.c.b16 %v8511, %v8509
    %v8542 = vpack.c.b16 %v8512, %v8510
    %v8543 = vpack.c.b16 %v8515, %v8513
    %v8544 = vpack.c.b16 %v8516, %v8514
    %v8545 = vpack.c.b16 %v8519, %v8517
    %v8546 = vpack.c.b16 %v8520, %v8518
    %v8547 = vpack.c.b16 %v8523, %v8521
    %v8548 = vpack.c.b16 %v8524, %v8522
    %v8549 = vpack.c.b16 %v8527, %v8525
    %v8550 = vpack.c.b16 %v8528, %v8526
    %v8551 = vpack.c.b16 %v8531, %v8529
    %v8552 = vpack.c.b16 %v8532, %v8530
    %v8553 = vpack.c.b16 %v8535, %v8533
    %v8554 = vpack.c.b16 %v8536, %v8534
    %v8555 = vpack.c.b16 %v8539, %v8537
    %v8556 = vpack.c.b16 %v8540, %v8538
    %8573 = vmatprep.subr.bf16.mxu0 %v8542
    %8574 = vmatpush1.bf16.msra.mxu0 %v8541
    %8575 = vmatprep.subr.bf16.mxu0 %v8544
    %8576 = vmatpush1.bf16.msra.mxu0 %v8543
    %8577 = vmatprep.subr.bf16.mxu0 %v8546
    %8578 = vmatpush1.bf16.msra.mxu0 %v8545
    %8579 = vmatprep.subr.bf16.mxu0 %v8548
    %8580 = vmatpush1.bf16.msra.mxu0 %v8547
    %8581 = vmatprep.subr.bf16.mxu0 %v8550
    %8582 = vmatpush1.bf16.msra.mxu0 %v8549
    %8583 = vmatprep.subr.bf16.mxu0 %v8552
    %8584 = vmatpush1.bf16.msra.mxu0 %v8551
    %8585 = vmatprep.subr.bf16.mxu0 %v8554
    %8586 = vmatpush1.bf16.msra.mxu0 %v8553
    %8587 = vmatprep.subr.bf16.mxu0 %v8556
    %8588 = vmatpush1.bf16.msra.mxu0 %v8555
    %8589 = vmatprep.subr.bf16.mxu0 0
    %8590 = vmatpush1.bf16.msra.mxu0 0
    %8591 = vmatprep.subr.bf16.mxu0 0
    %8592 = vmatpush1.bf16.msra.mxu0 0
    %8593 = vmatprep.subr.bf16.mxu0 0
    %8594 = vmatpush1.bf16.msra.mxu0 0
    %8595 = vmatprep.subr.bf16.mxu0 0
    %8596 = vmatpush1.bf16.msra.mxu0 0
    %8597 = vmatprep.subr.bf16.mxu0 0
    %8598 = vmatpush1.bf16.msra.mxu0 0
    %8599 = vmatprep.subr.bf16.mxu0 0
    %8600 = vmatpush1.bf16.msra.mxu0 0
    %8601 = vmatprep.subr.bf16.mxu0 0
    %8602 = vmatpush1.bf16.msra.mxu0 0
    %8603 = vmatprep.subr.bf16.mxu0 0
    %8604 = vmatpush1.bf16.msra.mxu0 0
    %8605 = vmatprep.mubr.bf16.mxu0 0
    %8606 = vmatmul.mubr.bf16.gmra.mrb[0].mxu0 %v8310
    %v8607 = vpop.f32.mrb[0].mxu0
    %v8608 = vadd.f32 %v8487, %v8607
    %v8609 = vpop.f32.mrb[0].mxu0
    %v8610 = vadd.f32 %v8489, %v8609
    %v8611 = vpop.f32.mrb[0].mxu0
    %v8612 = vpop.f32.mrb[0].mxu0
    %8613 = vdwg.mxu0
    %v8614 = vld [vmem:[#allocation8 + $0x8] sm:$0xf]
    %v8615 = vld [vmem:[#allocation10 + $0x100] sm:$0xff]
    %v8616 = vld [vmem:[#allocation10 + $0x108] sm:$0xff]
    %v8617 = vld [vmem:[#allocation10 + $0x110] sm:$0xff]
    %v8618 = vld [vmem:[#allocation10 + $0x118] sm:$0xff]
    %v8619 = vld [vmem:[#allocation10 + $0x120] sm:$0xff]
    %v8620 = vld [vmem:[#allocation10 + $0x128] sm:$0xff]
    %v8621 = vld [vmem:[#allocation10 + $0x130] sm:$0xff]
    %v8622 = vld [vmem:[#allocation10 + $0x138] sm:$0xff]
    %v8623 = vld [vmem:[#allocation10 + $0x140] sm:$0xff]
    %v8624 = vld [vmem:[#allocation10 + $0x148] sm:$0xff]
    %v8625 = vld [vmem:[#allocation10 + $0x150] sm:$0xff]
    %v8626 = vld [vmem:[#allocation10 + $0x158] sm:$0xff]
    %v8627 = vld [vmem:[#allocation10 + $0x160] sm:$0xff]
    %v8628 = vld [vmem:[#allocation10 + $0x168] sm:$0xff]
    %v8629 = vld [vmem:[#allocation10 + $0x170] sm:$0xff]
    %v8630 = vld [vmem:[#allocation10 + $0x178] sm:$0xff]
    %v8632 = vsel %vm6172, %v8614, 0
    %8634 = vmatprep.subr.bf16.mxu0 0
    %8635 = vmatpush1.bf16.msra.mxu0 %v8248
    %8636 = vmatprep.subr.bf16.mxu0 0
    %8637 = vmatpush1.bf16.msra.mxu0 %v8249
    %8638 = vmatprep.subr.bf16.mxu0 0
    %8639 = vmatpush1.bf16.msra.mxu0 0
    %8640 = vmatprep.subr.bf16.mxu0 0
    %8641 = vmatpush1.bf16.msra.mxu0 0
    %8642 = vmatprep.subr.bf16.mxu0 0
    %8643 = vmatpush1.bf16.msra.mxu0 0
    %8644 = vmatprep.subr.bf16.mxu0 0
    %8645 = vmatpush1.bf16.msra.mxu0 0
    %8646 = vmatprep.subr.bf16.mxu0 0
    %8647 = vmatpush1.bf16.msra.mxu0 0
    %8648 = vmatprep.subr.bf16.mxu0 0
    %8649 = vmatpush1.bf16.msra.mxu0 0
    %8650 = vmatprep.subr.bf16.mxu0 0
    %8651 = vmatpush1.bf16.msra.mxu0 0
    %8652 = vmatprep.subr.bf16.mxu0 0
    %8653 = vmatpush1.bf16.msra.mxu0 0
    %8654 = vmatprep.subr.bf16.mxu0 0
    %8655 = vmatpush1.bf16.msra.mxu0 0
    %8656 = vmatprep.subr.bf16.mxu0 0
    %8657 = vmatpush1.bf16.msra.mxu0 0
    %8658 = vmatprep.subr.bf16.mxu0 0
    %8659 = vmatpush1.bf16.msra.mxu0 0
    %8660 = vmatprep.subr.bf16.mxu0 0
    %8661 = vmatpush1.bf16.msra.mxu0 0
    %8662 = vmatprep.subr.bf16.mxu0 0
    %8663 = vmatpush1.bf16.msra.mxu0 0
    %8664 = vmatprep.subr.bf16.mxu0 0
    %8665 = vmatpush1.bf16.msra.mxu0 0
    %8666 = vmatprep.mubr.bf16.mxu0 0
    %8667 = vmatmul.mubr.bf16.gmra.mrb[0].mxu0 %v8632
    %v8668 = vpop.f32.mrb[0].mxu0
    %v8669 = vadd.f32 0.0, %v8668
    %v8670 = vpop.f32.mrb[0].mxu0
    %v8671 = vpop.f32.mrb[0].mxu0
    %v8672 = vpop.f32.mrb[0].mxu0
    %8673 = vdwg.mxu0
    %v8674 = vpack.c.bf16 %v8669, %v8669
    %v8691 = vunpack.c.l.b16 %v8615
    %v8692 = vunpack.c.h.b16 %v8615
    %v8693 = vunpack.c.l.b16 %v8616
    %v8694 = vunpack.c.h.b16 %v8616
    %v8695 = vunpack.c.l.b16 %v8617
    %v8696 = vunpack.c.h.b16 %v8617
    %v8697 = vunpack.c.l.b16 %v8618
    %v8698 = vunpack.c.h.b16 %v8618
    %v8699 = vunpack.c.l.b16 %v8619
    %v8700 = vunpack.c.h.b16 %v8619
    %v8701 = vunpack.c.l.b16 %v8620
    %v8702 = vunpack.c.h.b16 %v8620
    %v8703 = vunpack.c.l.b16 %v8621
    %v8704 = vunpack.c.h.b16 %v8621
    %v8705 = vunpack.c.l.b16 %v8622
    %v8706 = vunpack.c.h.b16 %v8622
    %v8707 = vunpack.c.l.b16 %v8623
    %v8708 = vunpack.c.h.b16 %v8623
    %v8709 = vunpack.c.l.b16 %v8624
    %v8710 = vunpack.c.h.b16 %v8624
    %v8711 = vunpack.c.l.b16 %v8625
    %v8712 = vunpack.c.h.b16 %v8625
    %v8713 = vunpack.c.l.b16 %v8626
    %v8714 = vunpack.c.h.b16 %v8626
    %v8715 = vunpack.c.l.b16 %v8627
    %v8716 = vunpack.c.h.b16 %v8627
    %v8717 = vunpack.c.l.b16 %v8628
    %v8718 = vunpack.c.h.b16 %v8628
    %v8719 = vunpack.c.l.b16 %v8629
    %v8720 = vunpack.c.h.b16 %v8629
    %v8721 = vunpack.c.l.b16 %v8630
    %v8722 = vunpack.c.h.b16 %v8630
    %v8723 = vpack.c.b16 %v8693, %v8691
    %v8724 = vpack.c.b16 %v8694, %v8692
    %v8725 = vpack.c.b16 %v8697, %v8695
    %v8726 = vpack.c.b16 %v8698, %v8696
    %v8727 = vpack.c.b16 %v8701, %v8699
    %v8728 = vpack.c.b16 %v8702, %v8700
    %v8729 = vpack.c.b16 %v8705, %v8703
    %v8730 = vpack.c.b16 %v8706, %v8704
    %v8731 = vpack.c.b16 %v8709, %v8707
    %v8732 = vpack.c.b16 %v8710, %v8708
    %v8733 = vpack.c.b16 %v8713, %v8711
    %v8734 = vpack.c.b16 %v8714, %v8712
    %v8735 = vpack.c.b16 %v8717, %v8715
    %v8736 = vpack.c.b16 %v8718, %v8716
    %v8737 = vpack.c.b16 %v8721, %v8719
    %v8738 = vpack.c.b16 %v8722, %v8720
    %8755 = vmatprep.subr.bf16.mxu0 %v8724
    %8756 = vmatpush1.bf16.msra.mxu0 %v8723
    %8757 = vmatprep.subr.bf16.mxu0 %v8726
    %8758 = vmatpush1.bf16.msra.mxu0 %v8725
    %8759 = vmatprep.subr.bf16.mxu0 %v8728
    %8760 = vmatpush1.bf16.msra.mxu0 %v8727
    %8761 = vmatprep.subr.bf16.mxu0 %v8730
    %8762 = vmatpush1.bf16.msra.mxu0 %v8729
    %8763 = vmatprep.subr.bf16.mxu0 %v8732
    %8764 = vmatpush1.bf16.msra.mxu0 %v8731
    %8765 = vmatprep.subr.bf16.mxu0 %v8734
    %8766 = vmatpush1.bf16.msra.mxu0 %v8733
    %8767 = vmatprep.subr.bf16.mxu0 %v8736
    %8768 = vmatpush1.bf16.msra.mxu0 %v8735
    %8769 = vmatprep.subr.bf16.mxu0 %v8738
    %8770 = vmatpush1.bf16.msra.mxu0 %v8737
    %8771 = vmatprep.subr.bf16.mxu0 0
    %8772 = vmatpush1.bf16.msra.mxu0 0
    %8773 = vmatprep.subr.bf16.mxu0 0
    %8774 = vmatpush1.bf16.msra.mxu0 0
    %8775 = vmatprep.subr.bf16.mxu0 0
    %8776 = vmatpush1.bf16.msra.mxu0 0
    %8777 = vmatprep.subr.bf16.mxu0 0
    %8778 = vmatpush1.bf16.msra.mxu0 0
    %8779 = vmatprep.subr.bf16.mxu0 0
    %8780 = vmatpush1.bf16.msra.mxu0 0
    %8781 = vmatprep.subr.bf16.mxu0 0
    %8782 = vmatpush1.bf16.msra.mxu0 0
    %8783 = vmatprep.subr.bf16.mxu0 0
    %8784 = vmatpush1.bf16.msra.mxu0 0
    %8785 = vmatprep.subr.bf16.mxu0 0
    %8786 = vmatpush1.bf16.msra.mxu0 0
    %8787 = vmatprep.mubr.bf16.mxu0 0
    %8788 = vmatmul.mubr.bf16.gmra.mrb[0].mxu0 %v8674
    %v8789 = vpop.f32.mrb[0].mxu0
    %v8790 = vadd.f32 0.0, %v8789
    %v8791 = vpop.f32.mrb[0].mxu0
    %v8792 = vadd.f32 0.0, %v8791
    %v8793 = vpop.f32.mrb[0].mxu0
    %v8794 = vpop.f32.mrb[0].mxu0
    %8795 = vdwg.mxu0
    %v8796 = vadd.f32 %v8608, %v8790
    %v8797 = vadd.f32 %v8610, %v8792
    %v8798 = vld [vmem:[#allocation8 + $0xc] sm:$0xf]
    %v8799 = vld [vmem:[#allocation10 + $0x180] sm:$0xff]
    %v8800 = vld [vmem:[#allocation10 + $0x188] sm:$0xff]
    %v8801 = vld [vmem:[#allocation10 + $0x190] sm:$0xff]
    %v8802 = vld [vmem:[#allocation10 + $0x198] sm:$0xff]
    %v8803 = vld [vmem:[#allocation10 + $0x1a0] sm:$0xff]
    %v8804 = vld [vmem:[#allocation10 + $0x1a8] sm:$0xff]
    %v8805 = vld [vmem:[#allocation10 + $0x1b0] sm:$0xff]
    %v8806 = vld [vmem:[#allocation10 + $0x1b8] sm:$0xff]
    %v8807 = vld [vmem:[#allocation10 + $0x1c0] sm:$0xff]
    %v8808 = vld [vmem:[#allocation10 + $0x1c8] sm:$0xff]
    %v8809 = vld [vmem:[#allocation10 + $0x1d0] sm:$0xff]
    %v8810 = vld [vmem:[#allocation10 + $0x1d8] sm:$0xff]
    %v8811 = vld [vmem:[#allocation10 + $0x1e0] sm:$0xff]
    %v8812 = vld [vmem:[#allocation10 + $0x1e8] sm:$0xff]
    %v8813 = vld [vmem:[#allocation10 + $0x1f0] sm:$0xff]
    %v8814 = vld [vmem:[#allocation10 + $0x1f8] sm:$0xff]
    %v8816 = vsel %vm6172, %v8798, 0
    %8818 = vmatprep.subr.bf16.mxu0 0
    %8819 = vmatpush1.bf16.msra.mxu0 %v8248
    %8820 = vmatprep.subr.bf16.mxu0 0
    %8821 = vmatpush1.bf16.msra.mxu0 %v8249
    %8822 = vmatprep.subr.bf16.mxu0 0
    %8823 = vmatpush1.bf16.msra.mxu0 0
    %8824 = vmatprep.subr.bf16.mxu0 0
    %8825 = vmatpush1.bf16.msra.mxu0 0
    %8826 = vmatprep.subr.bf16.mxu0 0
    %8827 = vmatpush1.bf16.msra.mxu0 0
    %8828 = vmatprep.subr.bf16.mxu0 0
    %8829 = vmatpush1.bf16.msra.mxu0 0
    %8830 = vmatprep.subr.bf16.mxu0 0
    %8831 = vmatpush1.bf16.msra.mxu0 0
    %8832 = vmatprep.subr.bf16.mxu0 0
    %8833 = vmatpush1.bf16.msra.mxu0 0
    %8834 = vmatprep.subr.bf16.mxu0 0
    %8835 = vmatpush1.bf16.msra.mxu0 0
    %8836 = vmatprep.subr.bf16.mxu0 0
    %8837 = vmatpush1.bf16.msra.mxu0 0
    %8838 = vmatprep.subr.bf16.mxu0 0
    %8839 = vmatpush1.bf16.msra.mxu0 0
    %8840 = vmatprep.subr.bf16.mxu0 0
    %8841 = vmatpush1.bf16.msra.mxu0 0
    %8842 = vmatprep.subr.bf16.mxu0 0
    %8843 = vmatpush1.bf16.msra.mxu0 0
    %8844 = vmatprep.subr.bf16.mxu0 0
    %8845 = vmatpush1.bf16.msra.mxu0 0
    %8846 = vmatprep.subr.bf16.mxu0 0
    %8847 = vmatpush1.bf16.msra.mxu0 0
    %8848 = vmatprep.subr.bf16.mxu0 0
    %8849 = vmatpush1.bf16.msra.mxu0 0
    %8850 = vmatprep.mubr.bf16.mxu0 0
    %8851 = vmatmul.mubr.bf16.gmra.mrb[0].mxu0 %v8816
    %v8852 = vpop.f32.mrb[0].mxu0
    %v8853 = vadd.f32 0.0, %v8852
    %v8854 = vpop.f32.mrb[0].mxu0
    %v8855 = vpop.f32.mrb[0].mxu0
    %v8856 = vpop.f32.mrb[0].mxu0
    %8857 = vdwg.mxu0
    %v8858 = vpack.c.bf16 %v8853, %v8853
    %v8875 = vunpack.c.l.b16 %v8799
    %v8876 = vunpack.c.h.b16 %v8799
    %v8877 = vunpack.c.l.b16 %v8800
    %v8878 = vunpack.c.h.b16 %v8800
    %v8879 = vunpack.c.l.b16 %v8801
    %v8880 = vunpack.c.h.b16 %v8801
    %v8881 = vunpack.c.l.b16 %v8802
    %v8882 = vunpack.c.h.b16 %v8802
    %v8883 = vunpack.c.l.b16 %v8803
    %v8884 = vunpack.c.h.b16 %v8803
    %v8885 = vunpack.c.l.b16 %v8804
    %v8886 = vunpack.c.h.b16 %v8804
    %v8887 = vunpack.c.l.b16 %v8805
    %v8888 = vunpack.c.h.b16 %v8805
    %v8889 = vunpack.c.l.b16 %v8806
    %v8890 = vunpack.c.h.b16 %v8806
    %v8891 = vunpack.c.l.b16 %v8807
    %v8892 = vunpack.c.h.b16 %v8807
    %v8893 = vunpack.c.l.b16 %v8808
    %v8894 = vunpack.c.h.b16 %v8808
    %v8895 = vunpack.c.l.b16 %v8809
    %v8896 = vunpack.c.h.b16 %v8809
    %v8897 = vunpack.c.l.b16 %v8810
    %v8898 = vunpack.c.h.b16 %v8810
    %v8899 = vunpack.c.l.b16 %v8811
    %v8900 = vunpack.c.h.b16 %v8811
    %v8901 = vunpack.c.l.b16 %v8812
    %v8902 = vunpack.c.h.b16 %v8812
    %v8903 = vunpack.c.l.b16 %v8813
    %v8904 = vunpack.c.h.b16 %v8813
    %v8905 = vunpack.c.l.b16 %v8814
    %v8906 = vunpack.c.h.b16 %v8814
    %v8907 = vpack.c.b16 %v8877, %v8875
    %v8908 = vpack.c.b16 %v8878, %v8876
    %v8909 = vpack.c.b16 %v8881, %v8879
    %v8910 = vpack.c.b16 %v8882, %v8880
    %v8911 = vpack.c.b16 %v8885, %v8883
    %v8912 = vpack.c.b16 %v8886, %v8884
    %v8913 = vpack.c.b16 %v8889, %v8887
    %v8914 = vpack.c.b16 %v8890, %v8888
    %v8915 = vpack.c.b16 %v8893, %v8891
    %v8916 = vpack.c.b16 %v8894, %v8892
    %v8917 = vpack.c.b16 %v8897, %v8895
    %v8918 = vpack.c.b16 %v8898, %v8896
    %v8919 = vpack.c.b16 %v8901, %v8899
    %v8920 = vpack.c.b16 %v8902, %v8900
    %v8921 = vpack.c.b16 %v8905, %v8903
    %v8922 = vpack.c.b16 %v8906, %v8904
    %8939 = vmatprep.subr.bf16.mxu0 %v8908
    %8940 = vmatpush1.bf16.msra.mxu0 %v8907
    %8941 = vmatprep.subr.bf16.mxu0 %v8910
    %8942 = vmatpush1.bf16.msra.mxu0 %v8909
    %8943 = vmatprep.subr.bf16.mxu0 %v8912
    %8944 = vmatpush1.bf16.msra.mxu0 %v8911
    %8945 = vmatprep.subr.bf16.mxu0 %v8914
    %8946 = vmatpush1.bf16.msra.mxu0 %v8913
    %8947 = vmatprep.subr.bf16.mxu0 %v8916
    %8948 = vmatpush1.bf16.msra.mxu0 %v8915
    %8949 = vmatprep.subr.bf16.mxu0 %v8918
    %8950 = vmatpush1.bf16.msra.mxu0 %v8917
    %8951 = vmatprep.subr.bf16.mxu0 %v8920
    %8952 = vmatpush1.bf16.msra.mxu0 %v8919
    %8953 = vmatprep.subr.bf16.mxu0 %v8922
    %8954 = vmatpush1.bf16.msra.mxu0 %v8921
    %8955 = vmatprep.subr.bf16.mxu0 0
    %8956 = vmatpush1.bf16.msra.mxu0 0
    %8957 = vmatprep.subr.bf16.mxu0 0
    %8958 = vmatpush1.bf16.msra.mxu0 0
    %8959 = vmatprep.subr.bf16.mxu0 0
    %8960 = vmatpush1.bf16.msra.mxu0 0
    %8961 = vmatprep.subr.bf16.mxu0 0
    %8962 = vmatpush1.bf16.msra.mxu0 0
    %8963 = vmatprep.subr.bf16.mxu0 0
    %8964 = vmatpush1.bf16.msra.mxu0 0
    %8965 = vmatprep.subr.bf16.mxu0 0
    %8966 = vmatpush1.bf16.msra.mxu0 0
    %8967 = vmatprep.subr.bf16.mxu0 0
    %8968 = vmatpush1.bf16.msra.mxu0 0
    %8969 = vmatprep.subr.bf16.mxu0 0
    %8970 = vmatpush1.bf16.msra.mxu0 0
    %8971 = vmatprep.mubr.bf16.mxu0 0
    %8972 = vmatmul.mubr.bf16.gmra.mrb[0].mxu0 %v8858
    %v8973 = vpop.f32.mrb[0].mxu0
    %v8974 = vadd.f32 0.0, %v8973
    %v8975 = vpop.f32.mrb[0].mxu0
    %v8976 = vadd.f32 0.0, %v8975
    %v8977 = vpop.f32.mrb[0].mxu0
    %v8978 = vpop.f32.mrb[0].mxu0
    %8979 = vdwg.mxu0
    %v8980 = vadd.f32 %v8796, %v8974
    %v8981 = vadd.f32 %v8797, %v8976
    %v8982 = vld [vmem:[#allocation11] sm:$0x3]
    %v8984 = vlaneseq
    %v8985 = vshrl.u32 %v8984, 7
    %v8986 = vsub.s32 0, %v8985
    %v8987 = vrot.slane %v8982, %v8986
    %v8988 = vlaneseq
    %v8989 = vshrl.u32 %v8988, 7
    %v8990 = vsub.s32 1, %v8989
    %v8991 = vrot.slane %v8982, %v8990
    %v8994 = vadd.f32 %v8980, %v8987
    %v8995 = vadd.f32 %v8981, %v8991
    %vm8996 = vcmp.ge.f32.partialorder %v8994, 0.0
    %vm8997 = vcmp.ge.f32.partialorder %v8995, 0.0
    %v8998 = vmul.f32 %v8994, 0.2
    %v8999 = vmul.f32 %v8995, 0.2
    %v9000 = vsel %vm8996, %v8994, %v8998
    %v9001 = vsel %vm8997, %v8995, %v8999
    %v9002 = vpack.c.bf16 %v9000, %v9000
    %v9003 = vpack.c.bf16 %v9001, %v9001
    %v9004 = vld [vmem:[%s16] sm:$0x1]
    %v9005 = vld [vmem:[#allocation13] sm:$0xff]
    %v9006 = vld [vmem:[#allocation13 + $0x8] sm:$0xff]
    %v9007 = vld [vmem:[#allocation13 + $0x10] sm:$0xff]
    %v9008 = vld [vmem:[#allocation13 + $0x18] sm:$0xff]
    %v9009 = vld [vmem:[#allocation13 + $0x20] sm:$0xff]
    %v9010 = vld [vmem:[#allocation13 + $0x28] sm:$0xff]
    %v9011 = vld [vmem:[#allocation13 + $0x30] sm:$0xff]
    %v9012 = vld [vmem:[#allocation13 + $0x38] sm:$0xff]
    %v9013 = vld [vmem:[#allocation13 + $0x40] sm:$0xff]
    %v9014 = vld [vmem:[#allocation13 + $0x48] sm:$0xff]
    %v9015 = vld [vmem:[#allocation13 + $0x50] sm:$0xff]
    %v9016 = vld [vmem:[#allocation13 + $0x58] sm:$0xff]
    %v9017 = vld [vmem:[#allocation13 + $0x60] sm:$0xff]
    %v9018 = vld [vmem:[#allocation13 + $0x68] sm:$0xff]
    %v9019 = vld [vmem:[#allocation13 + $0x70] sm:$0xff]
    %v9020 = vld [vmem:[#allocation13 + $0x78] sm:$0xff]
    %v9021 = vld [vmem:[#allocation13 + $0x80] sm:$0xff]
    %v9022 = vld [vmem:[#allocation13 + $0x88] sm:$0xff]
    %v9023 = vld [vmem:[#allocation13 + $0x90] sm:$0xff]
    %v9024 = vld [vmem:[#allocation13 + $0x98] sm:$0xff]
    %v9025 = vld [vmem:[#allocation13 + $0xa0] sm:$0xff]
    %v9026 = vld [vmem:[#allocation13 + $0xa8] sm:$0xff]
    %v9027 = vld [vmem:[#allocation13 + $0xb0] sm:$0xff]
    %v9028 = vld [vmem:[#allocation13 + $0xb8] sm:$0xff]
    %v9029 = vld [vmem:[#allocation13 + $0xc0] sm:$0xff]
    %v9030 = vld [vmem:[#allocation13 + $0xc8] sm:$0xff]
    %v9031 = vld [vmem:[#allocation13 + $0xd0] sm:$0xff]
    %v9032 = vld [vmem:[#allocation13 + $0xd8] sm:$0xff]
    %v9033 = vld [vmem:[#allocation13 + $0xe0] sm:$0xff]
    %v9034 = vld [vmem:[#allocation13 + $0xe8] sm:$0xff]
    %v9035 = vld [vmem:[#allocation13 + $0xf0] sm:$0xff]
    %v9036 = vld [vmem:[#allocation13 + $0xf8] sm:$0xff]
    %v9037 = vld [vmem:[#allocation13 + $0x100] sm:$0xff]
    %v9038 = vld [vmem:[#allocation13 + $0x108] sm:$0xff]
    %v9039 = vld [vmem:[#allocation13 + $0x110] sm:$0xff]
    %v9040 = vld [vmem:[#allocation13 + $0x118] sm:$0xff]
    %v9041 = vld [vmem:[#allocation13 + $0x120] sm:$0xff]
    %v9042 = vld [vmem:[#allocation13 + $0x128] sm:$0xff]
    %v9043 = vld [vmem:[#allocation13 + $0x130] sm:$0xff]
    %v9044 = vld [vmem:[#allocation13 + $0x138] sm:$0xff]
    %v9045 = vld [vmem:[#allocation13 + $0x140] sm:$0xff]
    %v9046 = vld [vmem:[#allocation13 + $0x148] sm:$0xff]
    %v9047 = vld [vmem:[#allocation13 + $0x150] sm:$0xff]
    %v9048 = vld [vmem:[#allocation13 + $0x158] sm:$0xff]
    %v9049 = vld [vmem:[#allocation13 + $0x160] sm:$0xff]
    %v9050 = vld [vmem:[#allocation13 + $0x168] sm:$0xff]
    %v9051 = vld [vmem:[#allocation13 + $0x170] sm:$0xff]
    %v9052 = vld [vmem:[#allocation13 + $0x178] sm:$0xff]
    %v9053 = vld [vmem:[#allocation13 + $0x180] sm:$0xff]
    %v9054 = vld [vmem:[#allocation13 + $0x188] sm:$0xff]
    %v9055 = vld [vmem:[#allocation13 + $0x190] sm:$0xff]
    %v9056 = vld [vmem:[#allocation13 + $0x198] sm:$0xff]
    %v9057 = vld [vmem:[#allocation13 + $0x1a0] sm:$0xff]
    %v9058 = vld [vmem:[#allocation13 + $0x1a8] sm:$0xff]
    %v9059 = vld [vmem:[#allocation13 + $0x1b0] sm:$0xff]
    %v9060 = vld [vmem:[#allocation13 + $0x1b8] sm:$0xff]
    %v9061 = vld [vmem:[#allocation13 + $0x1c0] sm:$0xff]
    %v9062 = vld [vmem:[#allocation13 + $0x1c8] sm:$0xff]
    %v9063 = vld [vmem:[#allocation13 + $0x1d0] sm:$0xff]
    %v9064 = vld [vmem:[#allocation13 + $0x1d8] sm:$0xff]
    %v9065 = vld [vmem:[#allocation13 + $0x1e0] sm:$0xff]
    %v9066 = vld [vmem:[#allocation13 + $0x1e8] sm:$0xff]
    %v9067 = vld [vmem:[#allocation13 + $0x1f0] sm:$0xff]
    %v9068 = vld [vmem:[#allocation13 + $0x1f8] sm:$0xff]
    %vm9069 = vcmask 64512
    %v9071 = vsel %vm9069, %v9004, 0
    %vm9073 = vcmask 1043456
    %v9075 = vsel %vm9073, %v9002, 0
    %v9078 = vsel %vm9073, %v9003, 0
    %9080 = vmatprep.subr.bf16.mxu0 %v9078
    %9081 = vmatpush1.bf16.msra.mxu0 %v9075
    %9082 = vmatprep.subr.bf16.mxu0 0
    %9083 = vmatpush1.bf16.msra.mxu0 0
    %9084 = vmatprep.subr.bf16.mxu0 0
    %9085 = vmatpush1.bf16.msra.mxu0 0
    %9086 = vmatprep.subr.bf16.mxu0 0
    %9087 = vmatpush1.bf16.msra.mxu0 0
    %9088 = vmatprep.subr.bf16.mxu0 0
    %9089 = vmatpush1.bf16.msra.mxu0 0
    %9090 = vmatprep.subr.bf16.mxu0 0
    %9091 = vmatpush1.bf16.msra.mxu0 0
    %9092 = vmatprep.subr.bf16.mxu0 0
    %9093 = vmatpush1.bf16.msra.mxu0 0
    %9094 = vmatprep.subr.bf16.mxu0 0
    %9095 = vmatpush1.bf16.msra.mxu0 0
    %9096 = vmatprep.subr.bf16.mxu0 0
    %9097 = vmatpush1.bf16.msra.mxu0 0
    %9098 = vmatprep.subr.bf16.mxu0 0
    %9099 = vmatpush1.bf16.msra.mxu0 0
    %9100 = vmatprep.subr.bf16.mxu0 0
    %9101 = vmatpush1.bf16.msra.mxu0 0
    %9102 = vmatprep.subr.bf16.mxu0 0
    %9103 = vmatpush1.bf16.msra.mxu0 0
    %9104 = vmatprep.subr.bf16.mxu0 0
    %9105 = vmatpush1.bf16.msra.mxu0 0
    %9106 = vmatprep.subr.bf16.mxu0 0
    %9107 = vmatpush1.bf16.msra.mxu0 0
    %9108 = vmatprep.subr.bf16.mxu0 0
    %9109 = vmatpush1.bf16.msra.mxu0 0
    %9110 = vmatprep.subr.bf16.mxu0 0
    %9111 = vmatpush1.bf16.msra.mxu0 0
    %9112 = vmatprep.mubr.bf16.mxu0 0
    %9113 = vmatmul.mubr.bf16.gmra.mrb[0].mxu0 %v9071
    %v9114 = vpop.f32.mrb[0].mxu0
    %v9115 = vadd.f32 0.0, %v9114
    %v9116 = vpop.f32.mrb[0].mxu0
    %v9117 = vadd.f32 0.0, %v9116
    %v9118 = vpop.f32.mrb[0].mxu0
    %v9119 = vpop.f32.mrb[0].mxu0
    %9120 = vdwg.mxu0
    %v9121 = vpack.c.bf16 %v9115, %v9115
    %v9122 = vpack.c.bf16 %v9117, %v9117
    %v9123 = vld [vmem:[%s16] sm:$0x2]
    %v9124 = vld [vmem:[#allocation13 + $0x200] sm:$0xff]
    %v9125 = vld [vmem:[#allocation13 + $0x208] sm:$0xff]
    %v9126 = vld [vmem:[#allocation13 + $0x210] sm:$0xff]
    %v9127 = vld [vmem:[#allocation13 + $0x218] sm:$0xff]
    %v9128 = vld [vmem:[#allocation13 + $0x220] sm:$0xff]
    %v9129 = vld [vmem:[#allocation13 + $0x228] sm:$0xff]
    %v9130 = vld [vmem:[#allocation13 + $0x230] sm:$0xff]
    %v9131 = vld [vmem:[#allocation13 + $0x238] sm:$0xff]
    %v9132 = vld [vmem:[#allocation13 + $0x240] sm:$0xff]
    %v9133 = vld [vmem:[#allocation13 + $0x248] sm:$0xff]
    %v9134 = vld [vmem:[#allocation13 + $0x250] sm:$0xff]
    %v9135 = vld [vmem:[#allocation13 + $0x258] sm:$0xff]
    %v9136 = vld [vmem:[#allocation13 + $0x260] sm:$0xff]
    %v9137 = vld [vmem:[#allocation13 + $0x268] sm:$0xff]
    %v9138 = vld [vmem:[#allocation13 + $0x270] sm:$0xff]
    %v9139 = vld [vmem:[#allocation13 + $0x278] sm:$0xff]
    %v9140 = vld [vmem:[#allocation13 + $0x280] sm:$0xff]
    %v9141 = vld [vmem:[#allocation13 + $0x288] sm:$0xff]
    %v9142 = vld [vmem:[#allocation13 + $0x290] sm:$0xff]
    %v9143 = vld [vmem:[#allocation13 + $0x298] sm:$0xff]
    %v9144 = vld [vmem:[#allocation13 + $0x2a0] sm:$0xff]
    %v9145 = vld [vmem:[#allocation13 + $0x2a8] sm:$0xff]
    %v9146 = vld [vmem:[#allocation13 + $0x2b0] sm:$0xff]
    %v9147 = vld [vmem:[#allocation13 + $0x2b8] sm:$0xff]
    %v9148 = vld [vmem:[#allocation13 + $0x2c0] sm:$0xff]
    %v9149 = vld [vmem:[#allocation13 + $0x2c8] sm:$0xff]
    %v9150 = vld [vmem:[#allocation13 + $0x2d0] sm:$0xff]
    %v9151 = vld [vmem:[#allocation13 + $0x2d8] sm:$0xff]
    %v9152 = vld [vmem:[#allocation13 + $0x2e0] sm:$0xff]
    %v9153 = vld [vmem:[#allocation13 + $0x2e8] sm:$0xff]
    %v9154 = vld [vmem:[#allocation13 + $0x2f0] sm:$0xff]
    %v9155 = vld [vmem:[#allocation13 + $0x2f8] sm:$0xff]
    %v9156 = vld [vmem:[#allocation13 + $0x300] sm:$0xff]
    %v9157 = vld [vmem:[#allocation13 + $0x308] sm:$0xff]
    %v9158 = vld [vmem:[#allocation13 + $0x310] sm:$0xff]
    %v9159 = vld [vmem:[#allocation13 + $0x318] sm:$0xff]
    %v9160 = vld [vmem:[#allocation13 + $0x320] sm:$0xff]
    %v9161 = vld [vmem:[#allocation13 + $0x328] sm:$0xff]
    %v9162 = vld [vmem:[#allocation13 + $0x330] sm:$0xff]
    %v9163 = vld [vmem:[#allocation13 + $0x338] sm:$0xff]
    %v9164 = vld [vmem:[#allocation13 + $0x340] sm:$0xff]
    %v9165 = vld [vmem:[#allocation13 + $0x348] sm:$0xff]
    %v9166 = vld [vmem:[#allocation13 + $0x350] sm:$0xff]
    %v9167 = vld [vmem:[#allocation13 + $0x358] sm:$0xff]
    %v9168 = vld [vmem:[#allocation13 + $0x360] sm:$0xff]
    %v9169 = vld [vmem:[#allocation13 + $0x368] sm:$0xff]
    %v9170 = vld [vmem:[#allocation13 + $0x370] sm:$0xff]
    %v9171 = vld [vmem:[#allocation13 + $0x378] sm:$0xff]
    %v9172 = vld [vmem:[#allocation13 + $0x380] sm:$0xff]
    %v9173 = vld [vmem:[#allocation13 + $0x388] sm:$0xff]
    %v9174 = vld [vmem:[#allocation13 + $0x390] sm:$0xff]
    %v9175 = vld [vmem:[#allocation13 + $0x398] sm:$0xff]
    %v9176 = vld [vmem:[#allocation13 + $0x3a0] sm:$0xff]
    %v9177 = vld [vmem:[#allocation13 + $0x3a8] sm:$0xff]
    %v9178 = vld [vmem:[#allocation13 + $0x3b0] sm:$0xff]
    %v9179 = vld [vmem:[#allocation13 + $0x3b8] sm:$0xff]
    %v9180 = vld [vmem:[#allocation13 + $0x3c0] sm:$0xff]
    %v9181 = vld [vmem:[#allocation13 + $0x3c8] sm:$0xff]
    %v9182 = vld [vmem:[#allocation13 + $0x3d0] sm:$0xff]
    %v9183 = vld [vmem:[#allocation13 + $0x3d8] sm:$0xff]
    %v9184 = vld [vmem:[#allocation13 + $0x3e0] sm:$0xff]
    %v9185 = vld [vmem:[#allocation13 + $0x3e8] sm:$0xff]
    %v9186 = vld [vmem:[#allocation13 + $0x3f0] sm:$0xff]
    %v9187 = vld [vmem:[#allocation13 + $0x3f8] sm:$0xff]
    %v9189 = vunpack.c.l.b16 %v9123
    %v9190 = vpack.c.b16 %v9189, %v9189
    %v9191 = vrot.slane %v9190, 1
    %v9193 = vsel %vm9069, %v9191, 0
    %9195 = vmatprep.subr.bf16.mxu0 %v9078
    %9196 = vmatpush1.bf16.msra.mxu0 %v9075
    %9197 = vmatprep.subr.bf16.mxu0 0
    %9198 = vmatpush1.bf16.msra.mxu0 0
    %9199 = vmatprep.subr.bf16.mxu0 0
    %9200 = vmatpush1.bf16.msra.mxu0 0
    %9201 = vmatprep.subr.bf16.mxu0 0
    %9202 = vmatpush1.bf16.msra.mxu0 0
    %9203 = vmatprep.subr.bf16.mxu0 0
    %9204 = vmatpush1.bf16.msra.mxu0 0
    %9205 = vmatprep.subr.bf16.mxu0 0
    %9206 = vmatpush1.bf16.msra.mxu0 0
    %9207 = vmatprep.subr.bf16.mxu0 0
    %9208 = vmatpush1.bf16.msra.mxu0 0
    %9209 = vmatprep.subr.bf16.mxu0 0
    %9210 = vmatpush1.bf16.msra.mxu0 0
    %9211 = vmatprep.subr.bf16.mxu0 0
    %9212 = vmatpush1.bf16.msra.mxu0 0
    %9213 = vmatprep.subr.bf16.mxu0 0
    %9214 = vmatpush1.bf16.msra.mxu0 0
    %9215 = vmatprep.subr.bf16.mxu0 0
    %9216 = vmatpush1.bf16.msra.mxu0 0
    %9217 = vmatprep.subr.bf16.mxu0 0
    %9218 = vmatpush1.bf16.msra.mxu0 0
    %9219 = vmatprep.subr.bf16.mxu0 0
    %9220 = vmatpush1.bf16.msra.mxu0 0
    %9221 = vmatprep.subr.bf16.mxu0 0
    %9222 = vmatpush1.bf16.msra.mxu0 0
    %9223 = vmatprep.subr.bf16.mxu0 0
    %9224 = vmatpush1.bf16.msra.mxu0 0
    %9225 = vmatprep.subr.bf16.mxu0 0
    %9226 = vmatpush1.bf16.msra.mxu0 0
    %9227 = vmatprep.mubr.bf16.mxu0 0
    %9228 = vmatmul.mubr.bf16.gmra.mrb[0].mxu0 %v9193
    %v9229 = vpop.f32.mrb[0].mxu0
    %v9230 = vadd.f32 0.0, %v9229
    %v9231 = vpop.f32.mrb[0].mxu0
    %v9232 = vadd.f32 0.0, %v9231
    %v9233 = vpop.f32.mrb[0].mxu0
    %v9234 = vpop.f32.mrb[0].mxu0
    %9235 = vdwg.mxu0
    %v9236 = vpack.c.bf16 %v9230, %v9230
    %v9237 = vpack.c.bf16 %v9232, %v9232
    %v9302 = vunpack.c.l.b16 %v9124
    %v9303 = vunpack.c.h.b16 %v9124
    %v9304 = vunpack.c.l.b16 %v9125
    %v9305 = vunpack.c.h.b16 %v9125
    %v9306 = vunpack.c.l.b16 %v9126
    %v9307 = vunpack.c.h.b16 %v9126
    %v9308 = vunpack.c.l.b16 %v9127
    %v9309 = vunpack.c.h.b16 %v9127
    %v9310 = vunpack.c.l.b16 %v9128
    %v9311 = vunpack.c.h.b16 %v9128
    %v9312 = vunpack.c.l.b16 %v9129
    %v9313 = vunpack.c.h.b16 %v9129
    %v9314 = vunpack.c.l.b16 %v9130
    %v9315 = vunpack.c.h.b16 %v9130
    %v9316 = vunpack.c.l.b16 %v9131
    %v9317 = vunpack.c.h.b16 %v9131
    %v9318 = vunpack.c.l.b16 %v9132
    %v9319 = vunpack.c.h.b16 %v9132
    %v9320 = vunpack.c.l.b16 %v9133
    %v9321 = vunpack.c.h.b16 %v9133
    %v9322 = vunpack.c.l.b16 %v9134
    %v9323 = vunpack.c.h.b16 %v9134
    %v9324 = vunpack.c.l.b16 %v9135
    %v9325 = vunpack.c.h.b16 %v9135
    %v9326 = vunpack.c.l.b16 %v9136
    %v9327 = vunpack.c.h.b16 %v9136
    %v9328 = vunpack.c.l.b16 %v9137
    %v9329 = vunpack.c.h.b16 %v9137
    %v9330 = vunpack.c.l.b16 %v9138
    %v9331 = vunpack.c.h.b16 %v9138
    %v9332 = vunpack.c.l.b16 %v9139
    %v9333 = vunpack.c.h.b16 %v9139
    %v9334 = vunpack.c.l.b16 %v9140
    %v9335 = vunpack.c.h.b16 %v9140
    %v9336 = vunpack.c.l.b16 %v9141
    %v9337 = vunpack.c.h.b16 %v9141
    %v9338 = vunpack.c.l.b16 %v9142
    %v9339 = vunpack.c.h.b16 %v9142
    %v9340 = vunpack.c.l.b16 %v9143
    %v9341 = vunpack.c.h.b16 %v9143
    %v9342 = vunpack.c.l.b16 %v9144
    %v9343 = vunpack.c.h.b16 %v9144
    %v9344 = vunpack.c.l.b16 %v9145
    %v9345 = vunpack.c.h.b16 %v9145
    %v9346 = vunpack.c.l.b16 %v9146
    %v9347 = vunpack.c.h.b16 %v9146
    %v9348 = vunpack.c.l.b16 %v9147
    %v9349 = vunpack.c.h.b16 %v9147
    %v9350 = vunpack.c.l.b16 %v9148
    %v9351 = vunpack.c.h.b16 %v9148
    %v9352 = vunpack.c.l.b16 %v9149
    %v9353 = vunpack.c.h.b16 %v9149
    %v9354 = vunpack.c.l.b16 %v9150
    %v9355 = vunpack.c.h.b16 %v9150
    %v9356 = vunpack.c.l.b16 %v9151
    %v9357 = vunpack.c.h.b16 %v9151
    %v9358 = vunpack.c.l.b16 %v9152
    %v9359 = vunpack.c.h.b16 %v9152
    %v9360 = vunpack.c.l.b16 %v9153
    %v9361 = vunpack.c.h.b16 %v9153
    %v9362 = vunpack.c.l.b16 %v9154
    %v9363 = vunpack.c.h.b16 %v9154
    %v9364 = vunpack.c.l.b16 %v9155
    %v9365 = vunpack.c.h.b16 %v9155
    %v9366 = vunpack.c.l.b16 %v9156
    %v9367 = vunpack.c.h.b16 %v9156
    %v9368 = vunpack.c.l.b16 %v9157
    %v9369 = vunpack.c.h.b16 %v9157
    %v9370 = vunpack.c.l.b16 %v9158
    %v9371 = vunpack.c.h.b16 %v9158
    %v9372 = vunpack.c.l.b16 %v9159
    %v9373 = vunpack.c.h.b16 %v9159
    %v9374 = vunpack.c.l.b16 %v9160
    %v9375 = vunpack.c.h.b16 %v9160
    %v9376 = vunpack.c.l.b16 %v9161
    %v9377 = vunpack.c.h.b16 %v9161
    %v9378 = vunpack.c.l.b16 %v9162
    %v9379 = vunpack.c.h.b16 %v9162
    %v9380 = vunpack.c.l.b16 %v9163
    %v9381 = vunpack.c.h.b16 %v9163
    %v9382 = vunpack.c.l.b16 %v9164
    %v9383 = vunpack.c.h.b16 %v9164
    %v9384 = vunpack.c.l.b16 %v9165
    %v9385 = vunpack.c.h.b16 %v9165
    %v9386 = vunpack.c.l.b16 %v9166
    %v9387 = vunpack.c.h.b16 %v9166
    %v9388 = vunpack.c.l.b16 %v9167
    %v9389 = vunpack.c.h.b16 %v9167
    %v9390 = vunpack.c.l.b16 %v9168
    %v9391 = vunpack.c.h.b16 %v9168
    %v9392 = vunpack.c.l.b16 %v9169
    %v9393 = vunpack.c.h.b16 %v9169
    %v9394 = vunpack.c.l.b16 %v9170
    %v9395 = vunpack.c.h.b16 %v9170
    %v9396 = vunpack.c.l.b16 %v9171
    %v9397 = vunpack.c.h.b16 %v9171
    %v9398 = vunpack.c.l.b16 %v9172
    %v9399 = vunpack.c.h.b16 %v9172
    %v9400 = vunpack.c.l.b16 %v9173
    %v9401 = vunpack.c.h.b16 %v9173
    %v9402 = vunpack.c.l.b16 %v9174
    %v9403 = vunpack.c.h.b16 %v9174
    %v9404 = vunpack.c.l.b16 %v9175
    %v9405 = vunpack.c.h.b16 %v9175
    %v9406 = vunpack.c.l.b16 %v9176
    %v9407 = vunpack.c.h.b16 %v9176
    %v9408 = vunpack.c.l.b16 %v9177
    %v9409 = vunpack.c.h.b16 %v9177
    %v9410 = vunpack.c.l.b16 %v9178
    %v9411 = vunpack.c.h.b16 %v9178
    %v9412 = vunpack.c.l.b16 %v9179
    %v9413 = vunpack.c.h.b16 %v9179
    %v9414 = vunpack.c.l.b16 %v9180
    %v9415 = vunpack.c.h.b16 %v9180
    %v9416 = vunpack.c.l.b16 %v9181
    %v9417 = vunpack.c.h.b16 %v9181
    %v9418 = vunpack.c.l.b16 %v9182
    %v9419 = vunpack.c.h.b16 %v9182
    %v9420 = vunpack.c.l.b16 %v9183
    %v9421 = vunpack.c.h.b16 %v9183
    %v9422 = vunpack.c.l.b16 %v9184
    %v9423 = vunpack.c.h.b16 %v9184
    %v9424 = vunpack.c.l.b16 %v9185
    %v9425 = vunpack.c.h.b16 %v9185
    %v9426 = vunpack.c.l.b16 %v9186
    %v9427 = vunpack.c.h.b16 %v9186
    %v9428 = vunpack.c.l.b16 %v9187
    %v9429 = vunpack.c.h.b16 %v9187
    %v9430 = vpack.c.b16 %v9306, %v9302
    %v9431 = vpack.c.b16 %v9307, %v9303
    %v9432 = vpack.c.b16 %v9308, %v9304
    %v9433 = vpack.c.b16 %v9309, %v9305
    %v9434 = vpack.c.b16 %v9314, %v9310
    %v9435 = vpack.c.b16 %v9315, %v9311
    %v9436 = vpack.c.b16 %v9316, %v9312
    %v9437 = vpack.c.b16 %v9317, %v9313
    %v9438 = vpack.c.b16 %v9322, %v9318
    %v9439 = vpack.c.b16 %v9323, %v9319
    %v9440 = vpack.c.b16 %v9324, %v9320
    %v9441 = vpack.c.b16 %v9325, %v9321
    %v9442 = vpack.c.b16 %v9330, %v9326
    %v9443 = vpack.c.b16 %v9331, %v9327
    %v9444 = vpack.c.b16 %v9332, %v9328
    %v9445 = vpack.c.b16 %v9333, %v9329
    %v9446 = vpack.c.b16 %v9338, %v9334
    %v9447 = vpack.c.b16 %v9339, %v9335
    %v9448 = vpack.c.b16 %v9340, %v9336
    %v9449 = vpack.c.b16 %v9341, %v9337
    %v9450 = vpack.c.b16 %v9346, %v9342
    %v9451 = vpack.c.b16 %v9347, %v9343
    %v9452 = vpack.c.b16 %v9348, %v9344
    %v9453 = vpack.c.b16 %v9349, %v9345
    %v9454 = vpack.c.b16 %v9354, %v9350
    %v9455 = vpack.c.b16 %v9355, %v9351
    %v9456 = vpack.c.b16 %v9356, %v9352
    %v9457 = vpack.c.b16 %v9357, %v9353
    %v9458 = vpack.c.b16 %v9362, %v9358
    %v9459 = vpack.c.b16 %v9363, %v9359
    %v9460 = vpack.c.b16 %v9364, %v9360
    %v9461 = vpack.c.b16 %v9365, %v9361
    %v9462 = vpack.c.b16 %v9370, %v9366
    %v9463 = vpack.c.b16 %v9371, %v9367
    %v9464 = vpack.c.b16 %v9372, %v9368
    %v9465 = vpack.c.b16 %v9373, %v9369
    %v9466 = vpack.c.b16 %v9378, %v9374
    %v9467 = vpack.c.b16 %v9379, %v9375
    %v9468 = vpack.c.b16 %v9380, %v9376
    %v9469 = vpack.c.b16 %v9381, %v9377
    %v9470 = vpack.c.b16 %v9386, %v9382
    %v9471 = vpack.c.b16 %v9387, %v9383
    %v9472 = vpack.c.b16 %v9388, %v9384
    %v9473 = vpack.c.b16 %v9389, %v9385
    %v9474 = vpack.c.b16 %v9394, %v9390
    %v9475 = vpack.c.b16 %v9395, %v9391
    %v9476 = vpack.c.b16 %v9396, %v9392
    %v9477 = vpack.c.b16 %v9397, %v9393
    %v9478 = vpack.c.b16 %v9402, %v9398
    %v9479 = vpack.c.b16 %v9403, %v9399
    %v9480 = vpack.c.b16 %v9404, %v9400
    %v9481 = vpack.c.b16 %v9405, %v9401
    %v9482 = vpack.c.b16 %v9410, %v9406
    %v9483 = vpack.c.b16 %v9411, %v9407
    %v9484 = vpack.c.b16 %v9412, %v9408
    %v9485 = vpack.c.b16 %v9413, %v9409
    %v9486 = vpack.c.b16 %v9418, %v9414
    %v9487 = vpack.c.b16 %v9419, %v9415
    %v9488 = vpack.c.b16 %v9420, %v9416
    %v9489 = vpack.c.b16 %v9421, %v9417
    %v9490 = vpack.c.b16 %v9426, %v9422
    %v9491 = vpack.c.b16 %v9427, %v9423
    %v9492 = vpack.c.b16 %v9428, %v9424
    %v9493 = vpack.c.b16 %v9429, %v9425
    %9558 = vmatprep.subr.bf16.mxu0 %v9431
    %9559 = vmatpush1.bf16.msra.mxu0 %v9430
    %9560 = vmatprep.subr.bf16.mxu0 %v9435
    %9561 = vmatpush1.bf16.msra.mxu0 %v9434
    %9562 = vmatprep.subr.bf16.mxu0 %v9439
    %9563 = vmatpush1.bf16.msra.mxu0 %v9438
    %9564 = vmatprep.subr.bf16.mxu0 %v9443
    %9565 = vmatpush1.bf16.msra.mxu0 %v9442
    %9566 = vmatprep.subr.bf16.mxu0 %v9447
    %9567 = vmatpush1.bf16.msra.mxu0 %v9446
    %9568 = vmatprep.subr.bf16.mxu0 %v9451
    %9569 = vmatpush1.bf16.msra.mxu0 %v9450
    %9570 = vmatprep.subr.bf16.mxu0 %v9455
    %9571 = vmatpush1.bf16.msra.mxu0 %v9454
    %9572 = vmatprep.subr.bf16.mxu0 %v9459
    %9573 = vmatpush1.bf16.msra.mxu0 %v9458
    %9574 = vmatprep.subr.bf16.mxu0 %v9463
    %9575 = vmatpush1.bf16.msra.mxu0 %v9462
    %9576 = vmatprep.subr.bf16.mxu0 %v9467
    %9577 = vmatpush1.bf16.msra.mxu0 %v9466
    %9578 = vmatprep.subr.bf16.mxu0 %v9471
    %9579 = vmatpush1.bf16.msra.mxu0 %v9470
    %9580 = vmatprep.subr.bf16.mxu0 %v9475
    %9581 = vmatpush1.bf16.msra.mxu0 %v9474
    %9582 = vmatprep.subr.bf16.mxu0 %v9479
    %9583 = vmatpush1.bf16.msra.mxu0 %v9478
    %9584 = vmatprep.subr.bf16.mxu0 %v9483
    %9585 = vmatpush1.bf16.msra.mxu0 %v9482
    %9586 = vmatprep.subr.bf16.mxu0 %v9487
    %9587 = vmatpush1.bf16.msra.mxu0 %v9486
    %9588 = vmatprep.subr.bf16.mxu0 %v9491
    %9589 = vmatpush1.bf16.msra.mxu0 %v9490
    %9590 = vmatprep.mubr.bf16.mxu0 %v9237
    %9591 = vmatmul.mubr.bf16.gmra.mrb[0].mxu0 %v9236
    %v9592 = vpop.f32.mrb[0].mxu0
    %v9593 = vadd.f32 0.0, %v9592
    %v9594 = vpop.f32.mrb[0].mxu0
    %v9595 = vadd.f32 0.0, %v9594
    %v9596 = vpop.f32.mrb[0].mxu0
    %v9597 = vpop.f32.mrb[0].mxu0
    %9598 = vdwg.mxu0
    %9599 = vmatprep.subr.bf16.mxu0 %v9433
    %9600 = vmatpush1.bf16.msra.mxu0 %v9432
    %9601 = vmatprep.subr.bf16.mxu0 %v9437
    %9602 = vmatpush1.bf16.msra.mxu0 %v9436
    %9603 = vmatprep.subr.bf16.mxu0 %v9441
    %9604 = vmatpush1.bf16.msra.mxu0 %v9440
    %9605 = vmatprep.subr.bf16.mxu0 %v9445
    %9606 = vmatpush1.bf16.msra.mxu0 %v9444
    %9607 = vmatprep.subr.bf16.mxu0 %v9449
    %9608 = vmatpush1.bf16.msra.mxu0 %v9448
    %9609 = vmatprep.subr.bf16.mxu0 %v9453
    %9610 = vmatpush1.bf16.msra.mxu0 %v9452
    %9611 = vmatprep.subr.bf16.mxu0 %v9457
    %9612 = vmatpush1.bf16.msra.mxu0 %v9456
    %9613 = vmatprep.subr.bf16.mxu0 %v9461
    %9614 = vmatpush1.bf16.msra.mxu0 %v9460
    %9615 = vmatprep.subr.bf16.mxu0 %v9465
    %9616 = vmatpush1.bf16.msra.mxu0 %v9464
    %9617 = vmatprep.subr.bf16.mxu0 %v9469
    %9618 = vmatpush1.bf16.msra.mxu0 %v9468
    %9619 = vmatprep.subr.bf16.mxu0 %v9473
    %9620 = vmatpush1.bf16.msra.mxu0 %v9472
    %9621 = vmatprep.subr.bf16.mxu0 %v9477
    %9622 = vmatpush1.bf16.msra.mxu0 %v9476
    %9623 = vmatprep.subr.bf16.mxu0 %v9481
    %9624 = vmatpush1.bf16.msra.mxu0 %v9480
    %9625 = vmatprep.subr.bf16.mxu0 %v9485
    %9626 = vmatpush1.bf16.msra.mxu0 %v9484
    %9627 = vmatprep.subr.bf16.mxu0 %v9489
    %9628 = vmatpush1.bf16.msra.mxu0 %v9488
    %9629 = vmatprep.subr.bf16.mxu0 %v9493
    %9630 = vmatpush1.bf16.msra.mxu0 %v9492
    %9631 = vmatprep.mubr.bf16.mxu0 %v9237
    %9632 = vmatmul.mubr.bf16.gmra.mrb[0].mxu0 %v9236
    %v9633 = vpop.f32.mrb[0].mxu0
    %v9634 = vadd.f32 0.0, %v9633
    %v9635 = vpop.f32.mrb[0].mxu0
    %v9636 = vadd.f32 0.0, %v9635
    %v9637 = vpop.f32.mrb[0].mxu0
    %v9638 = vpop.f32.mrb[0].mxu0
    %9639 = vdwg.mxu0
    %v9704 = vunpack.c.l.b16 %v9005
    %v9705 = vunpack.c.h.b16 %v9005
    %v9706 = vunpack.c.l.b16 %v9006
    %v9707 = vunpack.c.h.b16 %v9006
    %v9708 = vunpack.c.l.b16 %v9007
    %v9709 = vunpack.c.h.b16 %v9007
    %v9710 = vunpack.c.l.b16 %v9008
    %v9711 = vunpack.c.h.b16 %v9008
    %v9712 = vunpack.c.l.b16 %v9009
    %v9713 = vunpack.c.h.b16 %v9009
    %v9714 = vunpack.c.l.b16 %v9010
    %v9715 = vunpack.c.h.b16 %v9010
    %v9716 = vunpack.c.l.b16 %v9011
    %v9717 = vunpack.c.h.b16 %v9011
    %v9718 = vunpack.c.l.b16 %v9012
    %v9719 = vunpack.c.h.b16 %v9012
    %v9720 = vunpack.c.l.b16 %v9013
    %v9721 = vunpack.c.h.b16 %v9013
    %v9722 = vunpack.c.l.b16 %v9014
    %v9723 = vunpack.c.h.b16 %v9014
    %v9724 = vunpack.c.l.b16 %v9015
    %v9725 = vunpack.c.h.b16 %v9015
    %v9726 = vunpack.c.l.b16 %v9016
    %v9727 = vunpack.c.h.b16 %v9016
    %v9728 = vunpack.c.l.b16 %v9017
    %v9729 = vunpack.c.h.b16 %v9017
    %v9730 = vunpack.c.l.b16 %v9018
    %v9731 = vunpack.c.h.b16 %v9018
    %v9732 = vunpack.c.l.b16 %v9019
    %v9733 = vunpack.c.h.b16 %v9019
    %v9734 = vunpack.c.l.b16 %v9020
    %v9735 = vunpack.c.h.b16 %v9020
    %v9736 = vunpack.c.l.b16 %v9021
    %v9737 = vunpack.c.h.b16 %v9021
    %v9738 = vunpack.c.l.b16 %v9022
    %v9739 = vunpack.c.h.b16 %v9022
    %v9740 = vunpack.c.l.b16 %v9023
    %v9741 = vunpack.c.h.b16 %v9023
    %v9742 = vunpack.c.l.b16 %v9024
    %v9743 = vunpack.c.h.b16 %v9024
    %v9744 = vunpack.c.l.b16 %v9025
    %v9745 = vunpack.c.h.b16 %v9025
    %v9746 = vunpack.c.l.b16 %v9026
    %v9747 = vunpack.c.h.b16 %v9026
    %v9748 = vunpack.c.l.b16 %v9027
    %v9749 = vunpack.c.h.b16 %v9027
    %v9750 = vunpack.c.l.b16 %v9028
    %v9751 = vunpack.c.h.b16 %v9028
    %v9752 = vunpack.c.l.b16 %v9029
    %v9753 = vunpack.c.h.b16 %v9029
    %v9754 = vunpack.c.l.b16 %v9030
    %v9755 = vunpack.c.h.b16 %v9030
    %v9756 = vunpack.c.l.b16 %v9031
    %v9757 = vunpack.c.h.b16 %v9031
    %v9758 = vunpack.c.l.b16 %v9032
    %v9759 = vunpack.c.h.b16 %v9032
    %v9760 = vunpack.c.l.b16 %v9033
    %v9761 = vunpack.c.h.b16 %v9033
    %v9762 = vunpack.c.l.b16 %v9034
    %v9763 = vunpack.c.h.b16 %v9034
    %v9764 = vunpack.c.l.b16 %v9035
    %v9765 = vunpack.c.h.b16 %v9035
    %v9766 = vunpack.c.l.b16 %v9036
    %v9767 = vunpack.c.h.b16 %v9036
    %v9768 = vunpack.c.l.b16 %v9037
    %v9769 = vunpack.c.h.b16 %v9037
    %v9770 = vunpack.c.l.b16 %v9038
    %v9771 = vunpack.c.h.b16 %v9038
    %v9772 = vunpack.c.l.b16 %v9039
    %v9773 = vunpack.c.h.b16 %v9039
    %v9774 = vunpack.c.l.b16 %v9040
    %v9775 = vunpack.c.h.b16 %v9040
    %v9776 = vunpack.c.l.b16 %v9041
    %v9777 = vunpack.c.h.b16 %v9041
    %v9778 = vunpack.c.l.b16 %v9042
    %v9779 = vunpack.c.h.b16 %v9042
    %v9780 = vunpack.c.l.b16 %v9043
    %v9781 = vunpack.c.h.b16 %v9043
    %v9782 = vunpack.c.l.b16 %v9044
    %v9783 = vunpack.c.h.b16 %v9044
    %v9784 = vunpack.c.l.b16 %v9045
    %v9785 = vunpack.c.h.b16 %v9045
    %v9786 = vunpack.c.l.b16 %v9046
    %v9787 = vunpack.c.h.b16 %v9046
    %v9788 = vunpack.c.l.b16 %v9047
    %v9789 = vunpack.c.h.b16 %v9047
    %v9790 = vunpack.c.l.b16 %v9048
    %v9791 = vunpack.c.h.b16 %v9048
    %v9792 = vunpack.c.l.b16 %v9049
    %v9793 = vunpack.c.h.b16 %v9049
    %v9794 = vunpack.c.l.b16 %v9050
    %v9795 = vunpack.c.h.b16 %v9050
    %v9796 = vunpack.c.l.b16 %v9051
    %v9797 = vunpack.c.h.b16 %v9051
    %v9798 = vunpack.c.l.b16 %v9052
    %v9799 = vunpack.c.h.b16 %v9052
    %v9800 = vunpack.c.l.b16 %v9053
    %v9801 = vunpack.c.h.b16 %v9053
    %v9802 = vunpack.c.l.b16 %v9054
    %v9803 = vunpack.c.h.b16 %v9054
    %v9804 = vunpack.c.l.b16 %v9055
    %v9805 = vunpack.c.h.b16 %v9055
    %v9806 = vunpack.c.l.b16 %v9056
    %v9807 = vunpack.c.h.b16 %v9056
    %v9808 = vunpack.c.l.b16 %v9057
    %v9809 = vunpack.c.h.b16 %v9057
    %v9810 = vunpack.c.l.b16 %v9058
    %v9811 = vunpack.c.h.b16 %v9058
    %v9812 = vunpack.c.l.b16 %v9059
    %v9813 = vunpack.c.h.b16 %v9059
    %v9814 = vunpack.c.l.b16 %v9060
    %v9815 = vunpack.c.h.b16 %v9060
    %v9816 = vunpack.c.l.b16 %v9061
    %v9817 = vunpack.c.h.b16 %v9061
    %v9818 = vunpack.c.l.b16 %v9062
    %v9819 = vunpack.c.h.b16 %v9062
    %v9820 = vunpack.c.l.b16 %v9063
    %v9821 = vunpack.c.h.b16 %v9063
    %v9822 = vunpack.c.l.b16 %v9064
    %v9823 = vunpack.c.h.b16 %v9064
    %v9824 = vunpack.c.l.b16 %v9065
    %v9825 = vunpack.c.h.b16 %v9065
    %v9826 = vunpack.c.l.b16 %v9066
    %v9827 = vunpack.c.h.b16 %v9066
    %v9828 = vunpack.c.l.b16 %v9067
    %v9829 = vunpack.c.h.b16 %v9067
    %v9830 = vunpack.c.l.b16 %v9068
    %v9831 = vunpack.c.h.b16 %v9068
    %v9832 = vpack.c.b16 %v9708, %v9704
    %v9833 = vpack.c.b16 %v9709, %v9705
    %v9834 = vpack.c.b16 %v9710, %v9706
    %v9835 = vpack.c.b16 %v9711, %v9707
    %v9836 = vpack.c.b16 %v9716, %v9712
    %v9837 = vpack.c.b16 %v9717, %v9713
    %v9838 = vpack.c.b16 %v9718, %v9714
    %v9839 = vpack.c.b16 %v9719, %v9715
    %v9840 = vpack.c.b16 %v9724, %v9720
    %v9841 = vpack.c.b16 %v9725, %v9721
    %v9842 = vpack.c.b16 %v9726, %v9722
    %v9843 = vpack.c.b16 %v9727, %v9723
    %v9844 = vpack.c.b16 %v9732, %v9728
    %v9845 = vpack.c.b16 %v9733, %v9729
    %v9846 = vpack.c.b16 %v9734, %v9730
    %v9847 = vpack.c.b16 %v9735, %v9731
    %v9848 = vpack.c.b16 %v9740, %v9736
    %v9849 = vpack.c.b16 %v9741, %v9737
    %v9850 = vpack.c.b16 %v9742, %v9738
    %v9851 = vpack.c.b16 %v9743, %v9739
    %v9852 = vpack.c.b16 %v9748, %v9744
    %v9853 = vpack.c.b16 %v9749, %v9745
    %v9854 = vpack.c.b16 %v9750, %v9746
    %v9855 = vpack.c.b16 %v9751, %v9747
    %v9856 = vpack.c.b16 %v9756, %v9752
    %v9857 = vpack.c.b16 %v9757, %v9753
    %v9858 = vpack.c.b16 %v9758, %v9754
    %v9859 = vpack.c.b16 %v9759, %v9755
    %v9860 = vpack.c.b16 %v9764, %v9760
    %v9861 = vpack.c.b16 %v9765, %v9761
    %v9862 = vpack.c.b16 %v9766, %v9762
    %v9863 = vpack.c.b16 %v9767, %v9763
    %v9864 = vpack.c.b16 %v9772, %v9768
    %v9865 = vpack.c.b16 %v9773, %v9769
    %v9866 = vpack.c.b16 %v9774, %v9770
    %v9867 = vpack.c.b16 %v9775, %v9771
    %v9868 = vpack.c.b16 %v9780, %v9776
    %v9869 = vpack.c.b16 %v9781, %v9777
    %v9870 = vpack.c.b16 %v9782, %v9778
    %v9871 = vpack.c.b16 %v9783, %v9779
    %v9872 = vpack.c.b16 %v9788, %v9784
    %v9873 = vpack.c.b16 %v9789, %v9785
    %v9874 = vpack.c.b16 %v9790, %v9786
    %v9875 = vpack.c.b16 %v9791, %v9787
    %v9876 = vpack.c.b16 %v9796, %v9792
    %v9877 = vpack.c.b16 %v9797, %v9793
    %v9878 = vpack.c.b16 %v9798, %v9794
    %v9879 = vpack.c.b16 %v9799, %v9795
    %v9880 = vpack.c.b16 %v9804, %v9800
    %v9881 = vpack.c.b16 %v9805, %v9801
    %v9882 = vpack.c.b16 %v9806, %v9802
    %v9883 = vpack.c.b16 %v9807, %v9803
    %v9884 = vpack.c.b16 %v9812, %v9808
    %v9885 = vpack.c.b16 %v9813, %v9809
    %v9886 = vpack.c.b16 %v9814, %v9810
    %v9887 = vpack.c.b16 %v9815, %v9811
    %v9888 = vpack.c.b16 %v9820, %v9816
    %v9889 = vpack.c.b16 %v9821, %v9817
    %v9890 = vpack.c.b16 %v9822, %v9818
    %v9891 = vpack.c.b16 %v9823, %v9819
    %v9892 = vpack.c.b16 %v9828, %v9824
    %v9893 = vpack.c.b16 %v9829, %v9825
    %v9894 = vpack.c.b16 %v9830, %v9826
    %v9895 = vpack.c.b16 %v9831, %v9827
    %9960 = vmatprep.subr.bf16.mxu0 %v9833
    %9961 = vmatpush1.bf16.msra.mxu0 %v9832
    %9962 = vmatprep.subr.bf16.mxu0 %v9837
    %9963 = vmatpush1.bf16.msra.mxu0 %v9836
    %9964 = vmatprep.subr.bf16.mxu0 %v9841
    %9965 = vmatpush1.bf16.msra.mxu0 %v9840
    %9966 = vmatprep.subr.bf16.mxu0 %v9845
    %9967 = vmatpush1.bf16.msra.mxu0 %v9844
    %9968 = vmatprep.subr.bf16.mxu0 %v9849
    %9969 = vmatpush1.bf16.msra.mxu0 %v9848
    %9970 = vmatprep.subr.bf16.mxu0 %v9853
    %9971 = vmatpush1.bf16.msra.mxu0 %v9852
    %9972 = vmatprep.subr.bf16.mxu0 %v9857
    %9973 = vmatpush1.bf16.msra.mxu0 %v9856
    %9974 = vmatprep.subr.bf16.mxu0 %v9861
    %9975 = vmatpush1.bf16.msra.mxu0 %v9860
    %9976 = vmatprep.subr.bf16.mxu0 %v9865
    %9977 = vmatpush1.bf16.msra.mxu0 %v9864
    %9978 = vmatprep.subr.bf16.mxu0 %v9869
    %9979 = vmatpush1.bf16.msra.mxu0 %v9868
    %9980 = vmatprep.subr.bf16.mxu0 %v9873
    %9981 = vmatpush1.bf16.msra.mxu0 %v9872
    %9982 = vmatprep.subr.bf16.mxu0 %v9877
    %9983 = vmatpush1.bf16.msra.mxu0 %v9876
    %9984 = vmatprep.subr.bf16.mxu0 %v9881
    %9985 = vmatpush1.bf16.msra.mxu0 %v9880
    %9986 = vmatprep.subr.bf16.mxu0 %v9885
    %9987 = vmatpush1.bf16.msra.mxu0 %v9884
    %9988 = vmatprep.subr.bf16.mxu0 %v9889
    %9989 = vmatpush1.bf16.msra.mxu0 %v9888
    %9990 = vmatprep.subr.bf16.mxu0 %v9893
    %9991 = vmatpush1.bf16.msra.mxu0 %v9892
    %9992 = vmatprep.mubr.bf16.mxu0 %v9122
    %9993 = vmatmul.mubr.bf16.gmra.mrb[0].mxu0 %v9121
    %v9994 = vpop.f32.mrb[0].mxu0
    %v9995 = vadd.f32 %v9593, %v9994
    %v9996 = vpop.f32.mrb[0].mxu0
    %v9997 = vadd.f32 %v9595, %v9996
    %v9998 = vpop.f32.mrb[0].mxu0
    %v9999 = vpop.f32.mrb[0].mxu0
    %10000 = vdwg.mxu0
    %10001 = vmatprep.subr.bf16.mxu0 %v9835
    %10002 = vmatpush1.bf16.msra.mxu0 %v9834
    %10003 = vmatprep.subr.bf16.mxu0 %v9839
    %10004 = vmatpush1.bf16.msra.mxu0 %v9838
    %10005 = vmatprep.subr.bf16.mxu0 %v9843
    %10006 = vmatpush1.bf16.msra.mxu0 %v9842
    %10007 = vmatprep.subr.bf16.mxu0 %v9847
    %10008 = vmatpush1.bf16.msra.mxu0 %v9846
    %10009 = vmatprep.subr.bf16.mxu0 %v9851
    %10010 = vmatpush1.bf16.msra.mxu0 %v9850
    %10011 = vmatprep.subr.bf16.mxu0 %v9855
    %10012 = vmatpush1.bf16.msra.mxu0 %v9854
    %10013 = vmatprep.subr.bf16.mxu0 %v9859
    %10014 = vmatpush1.bf16.msra.mxu0 %v9858
    %10015 = vmatprep.subr.bf16.mxu0 %v9863
    %10016 = vmatpush1.bf16.msra.mxu0 %v9862
    %10017 = vmatprep.subr.bf16.mxu0 %v9867
    %10018 = vmatpush1.bf16.msra.mxu0 %v9866
    %10019 = vmatprep.subr.bf16.mxu0 %v9871
    %10020 = vmatpush1.bf16.msra.mxu0 %v9870
    %10021 = vmatprep.subr.bf16.mxu0 %v9875
    %10022 = vmatpush1.bf16.msra.mxu0 %v9874
    %10023 = vmatprep.subr.bf16.mxu0 %v9879
    %10024 = vmatpush1.bf16.msra.mxu0 %v9878
    %10025 = vmatprep.subr.bf16.mxu0 %v9883
    %10026 = vmatpush1.bf16.msra.mxu0 %v9882
    %10027 = vmatprep.subr.bf16.mxu0 %v9887
    %10028 = vmatpush1.bf16.msra.mxu0 %v9886
    %10029 = vmatprep.subr.bf16.mxu0 %v9891
    %10030 = vmatpush1.bf16.msra.mxu0 %v9890
    %10031 = vmatprep.subr.bf16.mxu0 %v9895
    %10032 = vmatpush1.bf16.msra.mxu0 %v9894
    %10033 = vmatprep.mubr.bf16.mxu0 %v9122
    %10034 = vmatmul.mubr.bf16.gmra.mrb[0].mxu0 %v9121
    %v10035 = vpop.f32.mrb[0].mxu0
    %v10036 = vadd.f32 %v9634, %v10035
    %v10037 = vpop.f32.mrb[0].mxu0
    %v10038 = vadd.f32 %v9636, %v10037
    %v10039 = vpop.f32.mrb[0].mxu0
    %v10040 = vpop.f32.mrb[0].mxu0
    %10041 = vdwg.mxu0
    %v10042 = vld [vmem:[%s16] sm:$0x4]
    %v10043 = vld [vmem:[#allocation13 + $0x400] sm:$0xff]
    %v10044 = vld [vmem:[#allocation13 + $0x408] sm:$0xff]
    %v10045 = vld [vmem:[#allocation13 + $0x410] sm:$0xff]
    %v10046 = vld [vmem:[#allocation13 + $0x418] sm:$0xff]
    %v10047 = vld [vmem:[#allocation13 + $0x420] sm:$0xff]
    %v10048 = vld [vmem:[#allocation13 + $0x428] sm:$0xff]
    %v10049 = vld [vmem:[#allocation13 + $0x430] sm:$0xff]
    %v10050 = vld [vmem:[#allocation13 + $0x438] sm:$0xff]
    %v10051 = vld [vmem:[#allocation13 + $0x440] sm:$0xff]
    %v10052 = vld [vmem:[#allocation13 + $0x448] sm:$0xff]
    %v10053 = vld [vmem:[#allocation13 + $0x450] sm:$0xff]
    %v10054 = vld [vmem:[#allocation13 + $0x458] sm:$0xff]
    %v10055 = vld [vmem:[#allocation13 + $0x460] sm:$0xff]
    %v10056 = vld [vmem:[#allocation13 + $0x468] sm:$0xff]
    %v10057 = vld [vmem:[#allocation13 + $0x470] sm:$0xff]
    %v10058 = vld [vmem:[#allocation13 + $0x478] sm:$0xff]
    %v10059 = vld [vmem:[#allocation13 + $0x480] sm:$0xff]
    %v10060 = vld [vmem:[#allocation13 + $0x488] sm:$0xff]
    %v10061 = vld [vmem:[#allocation13 + $0x490] sm:$0xff]
    %v10062 = vld [vmem:[#allocation13 + $0x498] sm:$0xff]
    %v10063 = vld [vmem:[#allocation13 + $0x4a0] sm:$0xff]
    %v10064 = vld [vmem:[#allocation13 + $0x4a8] sm:$0xff]
    %v10065 = vld [vmem:[#allocation13 + $0x4b0] sm:$0xff]
    %v10066 = vld [vmem:[#allocation13 + $0x4b8] sm:$0xff]
    %v10067 = vld [vmem:[#allocation13 + $0x4c0] sm:$0xff]
    %v10068 = vld [vmem:[#allocation13 + $0x4c8] sm:$0xff]
    %v10069 = vld [vmem:[#allocation13 + $0x4d0] sm:$0xff]
    %v10070 = vld [vmem:[#allocation13 + $0x4d8] sm:$0xff]
    %v10071 = vld [vmem:[#allocation13 + $0x4e0] sm:$0xff]
    %v10072 = vld [vmem:[#allocation13 + $0x4e8] sm:$0xff]
    %v10073 = vld [vmem:[#allocation13 + $0x4f0] sm:$0xff]
    %v10074 = vld [vmem:[#allocation13 + $0x4f8] sm:$0xff]
    %v10075 = vld [vmem:[#allocation13 + $0x500] sm:$0xff]
    %v10076 = vld [vmem:[#allocation13 + $0x508] sm:$0xff]
    %v10077 = vld [vmem:[#allocation13 + $0x510] sm:$0xff]
    %v10078 = vld [vmem:[#allocation13 + $0x518] sm:$0xff]
    %v10079 = vld [vmem:[#allocation13 + $0x520] sm:$0xff]
    %v10080 = vld [vmem:[#allocation13 + $0x528] sm:$0xff]
    %v10081 = vld [vmem:[#allocation13 + $0x530] sm:$0xff]
    %v10082 = vld [vmem:[#allocation13 + $0x538] sm:$0xff]
    %v10083 = vld [vmem:[#allocation13 + $0x540] sm:$0xff]
    %v10084 = vld [vmem:[#allocation13 + $0x548] sm:$0xff]
    %v10085 = vld [vmem:[#allocation13 + $0x550] sm:$0xff]
    %v10086 = vld [vmem:[#allocation13 + $0x558] sm:$0xff]
    %v10087 = vld [vmem:[#allocation13 + $0x560] sm:$0xff]
    %v10088 = vld [vmem:[#allocation13 + $0x568] sm:$0xff]
    %v10089 = vld [vmem:[#allocation13 + $0x570] sm:$0xff]
    %v10090 = vld [vmem:[#allocation13 + $0x578] sm:$0xff]
    %v10091 = vld [vmem:[#allocation13 + $0x580] sm:$0xff]
    %v10092 = vld [vmem:[#allocation13 + $0x588] sm:$0xff]
    %v10093 = vld [vmem:[#allocation13 + $0x590] sm:$0xff]
    %v10094 = vld [vmem:[#allocation13 + $0x598] sm:$0xff]
    %v10095 = vld [vmem:[#allocation13 + $0x5a0] sm:$0xff]
    %v10096 = vld [vmem:[#allocation13 + $0x5a8] sm:$0xff]
    %v10097 = vld [vmem:[#allocation13 + $0x5b0] sm:$0xff]
    %v10098 = vld [vmem:[#allocation13 + $0x5b8] sm:$0xff]
    %v10099 = vld [vmem:[#allocation13 + $0x5c0] sm:$0xff]
    %v10100 = vld [vmem:[#allocation13 + $0x5c8] sm:$0xff]
    %v10101 = vld [vmem:[#allocation13 + $0x5d0] sm:$0xff]
    %v10102 = vld [vmem:[#allocation13 + $0x5d8] sm:$0xff]
    %v10103 = vld [vmem:[#allocation13 + $0x5e0] sm:$0xff]
    %v10104 = vld [vmem:[#allocation13 + $0x5e8] sm:$0xff]
    %v10105 = vld [vmem:[#allocation13 + $0x5f0] sm:$0xff]
    %v10106 = vld [vmem:[#allocation13 + $0x5f8] sm:$0xff]
    %v10108 = vunpack.c.l.b16 %v10042
    %v10109 = vpack.c.b16 %v10108, %v10108
    %v10110 = vrot.slane %v10109, 2
    %v10112 = vsel %vm9069, %v10110, 0
    %10114 = vmatprep.subr.bf16.mxu0 %v9078
    %10115 = vmatpush1.bf16.msra.mxu0 %v9075
    %10116 = vmatprep.subr.bf16.mxu0 0
    %10117 = vmatpush1.bf16.msra.mxu0 0
    %10118 = vmatprep.subr.bf16.mxu0 0
    %10119 = vmatpush1.bf16.msra.mxu0 0
    %10120 = vmatprep.subr.bf16.mxu0 0
    %10121 = vmatpush1.bf16.msra.mxu0 0
    %10122 = vmatprep.subr.bf16.mxu0 0
    %10123 = vmatpush1.bf16.msra.mxu0 0
    %10124 = vmatprep.subr.bf16.mxu0 0
    %10125 = vmatpush1.bf16.msra.mxu0 0
    %10126 = vmatprep.subr.bf16.mxu0 0
    %10127 = vmatpush1.bf16.msra.mxu0 0
    %10128 = vmatprep.subr.bf16.mxu0 0
    %10129 = vmatpush1.bf16.msra.mxu0 0
    %10130 = vmatprep.subr.bf16.mxu0 0
    %10131 = vmatpush1.bf16.msra.mxu0 0
    %10132 = vmatprep.subr.bf16.mxu0 0
    %10133 = vmatpush1.bf16.msra.mxu0 0
    %10134 = vmatprep.subr.bf16.mxu0 0
    %10135 = vmatpush1.bf16.msra.mxu0 0
    %10136 = vmatprep.subr.bf16.mxu0 0
    %10137 = vmatpush1.bf16.msra.mxu0 0
    %10138 = vmatprep.subr.bf16.mxu0 0
    %10139 = vmatpush1.bf16.msra.mxu0 0
    %10140 = vmatprep.subr.bf16.mxu0 0
    %10141 = vmatpush1.bf16.msra.mxu0 0
    %10142 = vmatprep.subr.bf16.mxu0 0
    %10143 = vmatpush1.bf16.msra.mxu0 0
    %10144 = vmatprep.subr.bf16.mxu0 0
    %10145 = vmatpush1.bf16.msra.mxu0 0
    %10146 = vmatprep.mubr.bf16.mxu0 0
    %10147 = vmatmul.mubr.bf16.gmra.mrb[0].mxu0 %v10112
    %v10148 = vpop.f32.mrb[0].mxu0
    %v10149 = vadd.f32 0.0, %v10148
    %v10150 = vpop.f32.mrb[0].mxu0
    %v10151 = vadd.f32 0.0, %v10150
    %v10152 = vpop.f32.mrb[0].mxu0
    %v10153 = vpop.f32.mrb[0].mxu0
    %10154 = vdwg.mxu0
    %v10155 = vpack.c.bf16 %v10149, %v10149
    %v10156 = vpack.c.bf16 %v10151, %v10151
    %v10221 = vunpack.c.l.b16 %v10043
    %v10222 = vunpack.c.h.b16 %v10043
    %v10223 = vunpack.c.l.b16 %v10044
    %v10224 = vunpack.c.h.b16 %v10044
    %v10225 = vunpack.c.l.b16 %v10045
    %v10226 = vunpack.c.h.b16 %v10045
    %v10227 = vunpack.c.l.b16 %v10046
    %v10228 = vunpack.c.h.b16 %v10046
    %v10229 = vunpack.c.l.b16 %v10047
    %v10230 = vunpack.c.h.b16 %v10047
    %v10231 = vunpack.c.l.b16 %v10048
    %v10232 = vunpack.c.h.b16 %v10048
    %v10233 = vunpack.c.l.b16 %v10049
    %v10234 = vunpack.c.h.b16 %v10049
    %v10235 = vunpack.c.l.b16 %v10050
    %v10236 = vunpack.c.h.b16 %v10050
    %v10237 = vunpack.c.l.b16 %v10051
    %v10238 = vunpack.c.h.b16 %v10051
    %v10239 = vunpack.c.l.b16 %v10052
    %v10240 = vunpack.c.h.b16 %v10052
    %v10241 = vunpack.c.l.b16 %v10053
    %v10242 = vunpack.c.h.b16 %v10053
    %v10243 = vunpack.c.l.b16 %v10054
    %v10244 = vunpack.c.h.b16 %v10054
    %v10245 = vunpack.c.l.b16 %v10055
    %v10246 = vunpack.c.h.b16 %v10055
    %v10247 = vunpack.c.l.b16 %v10056
    %v10248 = vunpack.c.h.b16 %v10056
    %v10249 = vunpack.c.l.b16 %v10057
    %v10250 = vunpack.c.h.b16 %v10057
    %v10251 = vunpack.c.l.b16 %v10058
    %v10252 = vunpack.c.h.b16 %v10058
    %v10253 = vunpack.c.l.b16 %v10059
    %v10254 = vunpack.c.h.b16 %v10059
    %v10255 = vunpack.c.l.b16 %v10060
    %v10256 = vunpack.c.h.b16 %v10060
    %v10257 = vunpack.c.l.b16 %v10061
    %v10258 = vunpack.c.h.b16 %v10061
    %v10259 = vunpack.c.l.b16 %v10062
    %v10260 = vunpack.c.h.b16 %v10062
    %v10261 = vunpack.c.l.b16 %v10063
    %v10262 = vunpack.c.h.b16 %v10063
    %v10263 = vunpack.c.l.b16 %v10064
    %v10264 = vunpack.c.h.b16 %v10064
    %v10265 = vunpack.c.l.b16 %v10065
    %v10266 = vunpack.c.h.b16 %v10065
    %v10267 = vunpack.c.l.b16 %v10066
    %v10268 = vunpack.c.h.b16 %v10066
    %v10269 = vunpack.c.l.b16 %v10067
    %v10270 = vunpack.c.h.b16 %v10067
    %v10271 = vunpack.c.l.b16 %v10068
    %v10272 = vunpack.c.h.b16 %v10068
    %v10273 = vunpack.c.l.b16 %v10069
    %v10274 = vunpack.c.h.b16 %v10069
    %v10275 = vunpack.c.l.b16 %v10070
    %v10276 = vunpack.c.h.b16 %v10070
    %v10277 = vunpack.c.l.b16 %v10071
    %v10278 = vunpack.c.h.b16 %v10071
    %v10279 = vunpack.c.l.b16 %v10072
    %v10280 = vunpack.c.h.b16 %v10072
    %v10281 = vunpack.c.l.b16 %v10073
    %v10282 = vunpack.c.h.b16 %v10073
    %v10283 = vunpack.c.l.b16 %v10074
    %v10284 = vunpack.c.h.b16 %v10074
    %v10285 = vunpack.c.l.b16 %v10075
    %v10286 = vunpack.c.h.b16 %v10075
    %v10287 = vunpack.c.l.b16 %v10076
    %v10288 = vunpack.c.h.b16 %v10076
    %v10289 = vunpack.c.l.b16 %v10077
    %v10290 = vunpack.c.h.b16 %v10077
    %v10291 = vunpack.c.l.b16 %v10078
    %v10292 = vunpack.c.h.b16 %v10078
    %v10293 = vunpack.c.l.b16 %v10079
    %v10294 = vunpack.c.h.b16 %v10079
    %v10295 = vunpack.c.l.b16 %v10080
    %v10296 = vunpack.c.h.b16 %v10080
    %v10297 = vunpack.c.l.b16 %v10081
    %v10298 = vunpack.c.h.b16 %v10081
    %v10299 = vunpack.c.l.b16 %v10082
    %v10300 = vunpack.c.h.b16 %v10082
    %v10301 = vunpack.c.l.b16 %v10083
    %v10302 = vunpack.c.h.b16 %v10083
    %v10303 = vunpack.c.l.b16 %v10084
    %v10304 = vunpack.c.h.b16 %v10084
    %v10305 = vunpack.c.l.b16 %v10085
    %v10306 = vunpack.c.h.b16 %v10085
    %v10307 = vunpack.c.l.b16 %v10086
    %v10308 = vunpack.c.h.b16 %v10086
    %v10309 = vunpack.c.l.b16 %v10087
    %v10310 = vunpack.c.h.b16 %v10087
    %v10311 = vunpack.c.l.b16 %v10088
    %v10312 = vunpack.c.h.b16 %v10088
    %v10313 = vunpack.c.l.b16 %v10089
    %v10314 = vunpack.c.h.b16 %v10089
    %v10315 = vunpack.c.l.b16 %v10090
    %v10316 = vunpack.c.h.b16 %v10090
    %v10317 = vunpack.c.l.b16 %v10091
    %v10318 = vunpack.c.h.b16 %v10091
    %v10319 = vunpack.c.l.b16 %v10092
    %v10320 = vunpack.c.h.b16 %v10092
    %v10321 = vunpack.c.l.b16 %v10093
    %v10322 = vunpack.c.h.b16 %v10093
    %v10323 = vunpack.c.l.b16 %v10094
    %v10324 = vunpack.c.h.b16 %v10094
    %v10325 = vunpack.c.l.b16 %v10095
    %v10326 = vunpack.c.h.b16 %v10095
    %v10327 = vunpack.c.l.b16 %v10096
    %v10328 = vunpack.c.h.b16 %v10096
    %v10329 = vunpack.c.l.b16 %v10097
    %v10330 = vunpack.c.h.b16 %v10097
    %v10331 = vunpack.c.l.b16 %v10098
    %v10332 = vunpack.c.h.b16 %v10098
    %v10333 = vunpack.c.l.b16 %v10099
    %v10334 = vunpack.c.h.b16 %v10099
    %v10335 = vunpack.c.l.b16 %v10100
    %v10336 = vunpack.c.h.b16 %v10100
    %v10337 = vunpack.c.l.b16 %v10101
    %v10338 = vunpack.c.h.b16 %v10101
    %v10339 = vunpack.c.l.b16 %v10102
    %v10340 = vunpack.c.h.b16 %v10102
    %v10341 = vunpack.c.l.b16 %v10103
    %v10342 = vunpack.c.h.b16 %v10103
    %v10343 = vunpack.c.l.b16 %v10104
    %v10344 = vunpack.c.h.b16 %v10104
    %v10345 = vunpack.c.l.b16 %v10105
    %v10346 = vunpack.c.h.b16 %v10105
    %v10347 = vunpack.c.l.b16 %v10106
    %v10348 = vunpack.c.h.b16 %v10106
    %v10349 = vpack.c.b16 %v10225, %v10221
    %v10350 = vpack.c.b16 %v10226, %v10222
    %v10351 = vpack.c.b16 %v10227, %v10223
    %v10352 = vpack.c.b16 %v10228, %v10224
    %v10353 = vpack.c.b16 %v10233, %v10229
    %v10354 = vpack.c.b16 %v10234, %v10230
    %v10355 = vpack.c.b16 %v10235, %v10231
    %v10356 = vpack.c.b16 %v10236, %v10232
    %v10357 = vpack.c.b16 %v10241, %v10237
    %v10358 = vpack.c.b16 %v10242, %v10238
    %v10359 = vpack.c.b16 %v10243, %v10239
    %v10360 = vpack.c.b16 %v10244, %v10240
    %v10361 = vpack.c.b16 %v10249, %v10245
    %v10362 = vpack.c.b16 %v10250, %v10246
    %v10363 = vpack.c.b16 %v10251, %v10247
    %v10364 = vpack.c.b16 %v10252, %v10248
    %v10365 = vpack.c.b16 %v10257, %v10253
    %v10366 = vpack.c.b16 %v10258, %v10254
    %v10367 = vpack.c.b16 %v10259, %v10255
    %v10368 = vpack.c.b16 %v10260, %v10256
    %v10369 = vpack.c.b16 %v10265, %v10261
    %v10370 = vpack.c.b16 %v10266, %v10262
    %v10371 = vpack.c.b16 %v10267, %v10263
    %v10372 = vpack.c.b16 %v10268, %v10264
    %v10373 = vpack.c.b16 %v10273, %v10269
    %v10374 = vpack.c.b16 %v10274, %v10270
    %v10375 = vpack.c.b16 %v10275, %v10271
    %v10376 = vpack.c.b16 %v10276, %v10272
    %v10377 = vpack.c.b16 %v10281, %v10277
    %v10378 = vpack.c.b16 %v10282, %v10278
    %v10379 = vpack.c.b16 %v10283, %v10279
    %v10380 = vpack.c.b16 %v10284, %v10280
    %v10381 = vpack.c.b16 %v10289, %v10285
    %v10382 = vpack.c.b16 %v10290, %v10286
    %v10383 = vpack.c.b16 %v10291, %v10287
    %v10384 = vpack.c.b16 %v10292, %v10288
    %v10385 = vpack.c.b16 %v10297, %v10293
    %v10386 = vpack.c.b16 %v10298, %v10294
    %v10387 = vpack.c.b16 %v10299, %v10295
    %v10388 = vpack.c.b16 %v10300, %v10296
    %v10389 = vpack.c.b16 %v10305, %v10301
    %v10390 = vpack.c.b16 %v10306, %v10302
    %v10391 = vpack.c.b16 %v10307, %v10303
    %v10392 = vpack.c.b16 %v10308, %v10304
    %v10393 = vpack.c.b16 %v10313, %v10309
    %v10394 = vpack.c.b16 %v10314, %v10310
    %v10395 = vpack.c.b16 %v10315, %v10311
    %v10396 = vpack.c.b16 %v10316, %v10312
    %v10397 = vpack.c.b16 %v10321, %v10317
    %v10398 = vpack.c.b16 %v10322, %v10318
    %v10399 = vpack.c.b16 %v10323, %v10319
    %v10400 = vpack.c.b16 %v10324, %v10320
    %v10401 = vpack.c.b16 %v10329, %v10325
    %v10402 = vpack.c.b16 %v10330, %v10326
    %v10403 = vpack.c.b16 %v10331, %v10327
    %v10404 = vpack.c.b16 %v10332, %v10328
    %v10405 = vpack.c.b16 %v10337, %v10333
    %v10406 = vpack.c.b16 %v10338, %v10334
    %v10407 = vpack.c.b16 %v10339, %v10335
    %v10408 = vpack.c.b16 %v10340, %v10336
    %v10409 = vpack.c.b16 %v10345, %v10341
    %v10410 = vpack.c.b16 %v10346, %v10342
    %v10411 = vpack.c.b16 %v10347, %v10343
    %v10412 = vpack.c.b16 %v10348, %v10344
    %10477 = vmatprep.subr.bf16.mxu0 %v10350
    %10478 = vmatpush1.bf16.msra.mxu0 %v10349
    %10479 = vmatprep.subr.bf16.mxu0 %v10354
    %10480 = vmatpush1.bf16.msra.mxu0 %v10353
    %10481 = vmatprep.subr.bf16.mxu0 %v10358
    %10482 = vmatpush1.bf16.msra.mxu0 %v10357
    %10483 = vmatprep.subr.bf16.mxu0 %v10362
    %10484 = vmatpush1.bf16.msra.mxu0 %v10361
    %10485 = vmatprep.subr.bf16.mxu0 %v10366
    %10486 = vmatpush1.bf16.msra.mxu0 %v10365
    %10487 = vmatprep.subr.bf16.mxu0 %v10370
    %10488 = vmatpush1.bf16.msra.mxu0 %v10369
    %10489 = vmatprep.subr.bf16.mxu0 %v10374
    %10490 = vmatpush1.bf16.msra.mxu0 %v10373
    %10491 = vmatprep.subr.bf16.mxu0 %v10378
    %10492 = vmatpush1.bf16.msra.mxu0 %v10377
    %10493 = vmatprep.subr.bf16.mxu0 %v10382
    %10494 = vmatpush1.bf16.msra.mxu0 %v10381
    %10495 = vmatprep.subr.bf16.mxu0 %v10386
    %10496 = vmatpush1.bf16.msra.mxu0 %v10385
    %10497 = vmatprep.subr.bf16.mxu0 %v10390
    %10498 = vmatpush1.bf16.msra.mxu0 %v10389
    %10499 = vmatprep.subr.bf16.mxu0 %v10394
    %10500 = vmatpush1.bf16.msra.mxu0 %v10393
    %10501 = vmatprep.subr.bf16.mxu0 %v10398
    %10502 = vmatpush1.bf16.msra.mxu0 %v10397
    %10503 = vmatprep.subr.bf16.mxu0 %v10402
    %10504 = vmatpush1.bf16.msra.mxu0 %v10401
    %10505 = vmatprep.subr.bf16.mxu0 %v10406
    %10506 = vmatpush1.bf16.msra.mxu0 %v10405
    %10507 = vmatprep.subr.bf16.mxu0 %v10410
    %10508 = vmatpush1.bf16.msra.mxu0 %v10409
    %10509 = vmatprep.mubr.bf16.mxu0 %v10156
    %10510 = vmatmul.mubr.bf16.gmra.mrb[0].mxu0 %v10155
    %v10511 = vpop.f32.mrb[0].mxu0
    %v10512 = vadd.f32 0.0, %v10511
    %v10513 = vpop.f32.mrb[0].mxu0
    %v10514 = vadd.f32 0.0, %v10513
    %v10515 = vpop.f32.mrb[0].mxu0
    %v10516 = vpop.f32.mrb[0].mxu0
    %10517 = vdwg.mxu0
    %10518 = vmatprep.subr.bf16.mxu0 %v10352
    %10519 = vmatpush1.bf16.msra.mxu0 %v10351
    %10520 = vmatprep.subr.bf16.mxu0 %v10356
    %10521 = vmatpush1.bf16.msra.mxu0 %v10355
    %10522 = vmatprep.subr.bf16.mxu0 %v10360
    %10523 = vmatpush1.bf16.msra.mxu0 %v10359
    %10524 = vmatprep.subr.bf16.mxu0 %v10364
    %10525 = vmatpush1.bf16.msra.mxu0 %v10363
    %10526 = vmatprep.subr.bf16.mxu0 %v10368
    %10527 = vmatpush1.bf16.msra.mxu0 %v10367
    %10528 = vmatprep.subr.bf16.mxu0 %v10372
    %10529 = vmatpush1.bf16.msra.mxu0 %v10371
    %10530 = vmatprep.subr.bf16.mxu0 %v10376
    %10531 = vmatpush1.bf16.msra.mxu0 %v10375
    %10532 = vmatprep.subr.bf16.mxu0 %v10380
    %10533 = vmatpush1.bf16.msra.mxu0 %v10379
    %10534 = vmatprep.subr.bf16.mxu0 %v10384
    %10535 = vmatpush1.bf16.msra.mxu0 %v10383
    %10536 = vmatprep.subr.bf16.mxu0 %v10388
    %10537 = vmatpush1.bf16.msra.mxu0 %v10387
    %10538 = vmatprep.subr.bf16.mxu0 %v10392
    %10539 = vmatpush1.bf16.msra.mxu0 %v10391
    %10540 = vmatprep.subr.bf16.mxu0 %v10396
    %10541 = vmatpush1.bf16.msra.mxu0 %v10395
    %10542 = vmatprep.subr.bf16.mxu0 %v10400
    %10543 = vmatpush1.bf16.msra.mxu0 %v10399
    %10544 = vmatprep.subr.bf16.mxu0 %v10404
    %10545 = vmatpush1.bf16.msra.mxu0 %v10403
    %10546 = vmatprep.subr.bf16.mxu0 %v10408
    %10547 = vmatpush1.bf16.msra.mxu0 %v10407
    %10548 = vmatprep.subr.bf16.mxu0 %v10412
    %10549 = vmatpush1.bf16.msra.mxu0 %v10411
    %10550 = vmatprep.mubr.bf16.mxu0 %v10156
    %10551 = vmatmul.mubr.bf16.gmra.mrb[0].mxu0 %v10155
    %v10552 = vpop.f32.mrb[0].mxu0
    %v10553 = vadd.f32 0.0, %v10552
    %v10554 = vpop.f32.mrb[0].mxu0
    %v10555 = vadd.f32 0.0, %v10554
    %v10556 = vpop.f32.mrb[0].mxu0
    %v10557 = vpop.f32.mrb[0].mxu0
    %10558 = vdwg.mxu0
    %v10559 = vadd.f32 %v9995, %v10512
    %v10560 = vadd.f32 %v9997, %v10514
    %v10561 = vadd.f32 %v10036, %v10553
    %v10562 = vadd.f32 %v10038, %v10555
    %v10563 = vld [vmem:[%s16] sm:$0x8]
    %v10564 = vld [vmem:[#allocation13 + $0x600] sm:$0xff]
    %v10565 = vld [vmem:[#allocation13 + $0x608] sm:$0xff]
    %v10566 = vld [vmem:[#allocation13 + $0x610] sm:$0xff]
    %v10567 = vld [vmem:[#allocation13 + $0x618] sm:$0xff]
    %v10568 = vld [vmem:[#allocation13 + $0x620] sm:$0xff]
    %v10569 = vld [vmem:[#allocation13 + $0x628] sm:$0xff]
    %v10570 = vld [vmem:[#allocation13 + $0x630] sm:$0xff]
    %v10571 = vld [vmem:[#allocation13 + $0x638] sm:$0xff]
    %v10572 = vld [vmem:[#allocation13 + $0x640] sm:$0xff]
    %v10573 = vld [vmem:[#allocation13 + $0x648] sm:$0xff]
    %v10574 = vld [vmem:[#allocation13 + $0x650] sm:$0xff]
    %v10575 = vld [vmem:[#allocation13 + $0x658] sm:$0xff]
    %v10576 = vld [vmem:[#allocation13 + $0x660] sm:$0xff]
    %v10577 = vld [vmem:[#allocation13 + $0x668] sm:$0xff]
    %v10578 = vld [vmem:[#allocation13 + $0x670] sm:$0xff]
    %v10579 = vld [vmem:[#allocation13 + $0x678] sm:$0xff]
    %v10580 = vld [vmem:[#allocation13 + $0x680] sm:$0xff]
    %v10581 = vld [vmem:[#allocation13 + $0x688] sm:$0xff]
    %v10582 = vld [vmem:[#allocation13 + $0x690] sm:$0xff]
    %v10583 = vld [vmem:[#allocation13 + $0x698] sm:$0xff]
    %v10584 = vld [vmem:[#allocation13 + $0x6a0] sm:$0xff]
    %v10585 = vld [vmem:[#allocation13 + $0x6a8] sm:$0xff]
    %v10586 = vld [vmem:[#allocation13 + $0x6b0] sm:$0xff]
    %v10587 = vld [vmem:[#allocation13 + $0x6b8] sm:$0xff]
    %v10588 = vld [vmem:[#allocation13 + $0x6c0] sm:$0xff]
    %v10589 = vld [vmem:[#allocation13 + $0x6c8] sm:$0xff]
    %v10590 = vld [vmem:[#allocation13 + $0x6d0] sm:$0xff]
    %v10591 = vld [vmem:[#allocation13 + $0x6d8] sm:$0xff]
    %v10592 = vld [vmem:[#allocation13 + $0x6e0] sm:$0xff]
    %v10593 = vld [vmem:[#allocation13 + $0x6e8] sm:$0xff]
    %v10594 = vld [vmem:[#allocation13 + $0x6f0] sm:$0xff]
    %v10595 = vld [vmem:[#allocation13 + $0x6f8] sm:$0xff]
    %v10596 = vld [vmem:[#allocation13 + $0x700] sm:$0xff]
    %v10597 = vld [vmem:[#allocation13 + $0x708] sm:$0xff]
    %v10598 = vld [vmem:[#allocation13 + $0x710] sm:$0xff]
    %v10599 = vld [vmem:[#allocation13 + $0x718] sm:$0xff]
    %v10600 = vld [vmem:[#allocation13 + $0x720] sm:$0xff]
    %v10601 = vld [vmem:[#allocation13 + $0x728] sm:$0xff]
    %v10602 = vld [vmem:[#allocation13 + $0x730] sm:$0xff]
    %v10603 = vld [vmem:[#allocation13 + $0x738] sm:$0xff]
    %v10604 = vld [vmem:[#allocation13 + $0x740] sm:$0xff]
    %v10605 = vld [vmem:[#allocation13 + $0x748] sm:$0xff]
    %v10606 = vld [vmem:[#allocation13 + $0x750] sm:$0xff]
    %v10607 = vld [vmem:[#allocation13 + $0x758] sm:$0xff]
    %v10608 = vld [vmem:[#allocation13 + $0x760] sm:$0xff]
    %v10609 = vld [vmem:[#allocation13 + $0x768] sm:$0xff]
    %v10610 = vld [vmem:[#allocation13 + $0x770] sm:$0xff]
    %v10611 = vld [vmem:[#allocation13 + $0x778] sm:$0xff]
    %v10612 = vld [vmem:[#allocation13 + $0x780] sm:$0xff]
    %v10613 = vld [vmem:[#allocation13 + $0x788] sm:$0xff]
    %v10614 = vld [vmem:[#allocation13 + $0x790] sm:$0xff]
    %v10615 = vld [vmem:[#allocation13 + $0x798] sm:$0xff]
    %v10616 = vld [vmem:[#allocation13 + $0x7a0] sm:$0xff]
    %v10617 = vld [vmem:[#allocation13 + $0x7a8] sm:$0xff]
    %v10618 = vld [vmem:[#allocation13 + $0x7b0] sm:$0xff]
    %v10619 = vld [vmem:[#allocation13 + $0x7b8] sm:$0xff]
    %v10620 = vld [vmem:[#allocation13 + $0x7c0] sm:$0xff]
    %v10621 = vld [vmem:[#allocation13 + $0x7c8] sm:$0xff]
    %v10622 = vld [vmem:[#allocation13 + $0x7d0] sm:$0xff]
    %v10623 = vld [vmem:[#allocation13 + $0x7d8] sm:$0xff]
    %v10624 = vld [vmem:[#allocation13 + $0x7e0] sm:$0xff]
    %v10625 = vld [vmem:[#allocation13 + $0x7e8] sm:$0xff]
    %v10626 = vld [vmem:[#allocation13 + $0x7f0] sm:$0xff]
    %v10627 = vld [vmem:[#allocation13 + $0x7f8] sm:$0xff]
    %v10629 = vunpack.c.l.b16 %v10563
    %v10630 = vpack.c.b16 %v10629, %v10629
    %v10631 = vrot.slane %v10630, 3
    %v10633 = vsel %vm9069, %v10631, 0
    %10635 = vmatprep.subr.bf16.mxu0 %v9078
    %10636 = vmatpush1.bf16.msra.mxu0 %v9075
    %10637 = vmatprep.subr.bf16.mxu0 0
    %10638 = vmatpush1.bf16.msra.mxu0 0
    %10639 = vmatprep.subr.bf16.mxu0 0
    %10640 = vmatpush1.bf16.msra.mxu0 0
    %10641 = vmatprep.subr.bf16.mxu0 0
    %10642 = vmatpush1.bf16.msra.mxu0 0
    %10643 = vmatprep.subr.bf16.mxu0 0
    %10644 = vmatpush1.bf16.msra.mxu0 0
    %10645 = vmatprep.subr.bf16.mxu0 0
    %10646 = vmatpush1.bf16.msra.mxu0 0
    %10647 = vmatprep.subr.bf16.mxu0 0
    %10648 = vmatpush1.bf16.msra.mxu0 0
    %10649 = vmatprep.subr.bf16.mxu0 0
    %10650 = vmatpush1.bf16.msra.mxu0 0
    %10651 = vmatprep.subr.bf16.mxu0 0
    %10652 = vmatpush1.bf16.msra.mxu0 0
    %10653 = vmatprep.subr.bf16.mxu0 0
    %10654 = vmatpush1.bf16.msra.mxu0 0
    %10655 = vmatprep.subr.bf16.mxu0 0
    %10656 = vmatpush1.bf16.msra.mxu0 0
    %10657 = vmatprep.subr.bf16.mxu0 0
    %10658 = vmatpush1.bf16.msra.mxu0 0
    %10659 = vmatprep.subr.bf16.mxu0 0
    %10660 = vmatpush1.bf16.msra.mxu0 0
    %10661 = vmatprep.subr.bf16.mxu0 0
    %10662 = vmatpush1.bf16.msra.mxu0 0
    %10663 = vmatprep.subr.bf16.mxu0 0
    %10664 = vmatpush1.bf16.msra.mxu0 0
    %10665 = vmatprep.subr.bf16.mxu0 0
    %10666 = vmatpush1.bf16.msra.mxu0 0
    %10667 = vmatprep.mubr.bf16.mxu0 0
    %10668 = vmatmul.mubr.bf16.gmra.mrb[0].mxu0 %v10633
    %v10669 = vpop.f32.mrb[0].mxu0
    %v10670 = vadd.f32 0.0, %v10669
    %v10671 = vpop.f32.mrb[0].mxu0
    %v10672 = vadd.f32 0.0, %v10671
    %v10673 = vpop.f32.mrb[0].mxu0
    %v10674 = vpop.f32.mrb[0].mxu0
    %10675 = vdwg.mxu0
    %v10676 = vpack.c.bf16 %v10670, %v10670
    %v10677 = vpack.c.bf16 %v10672, %v10672
    %v10742 = vunpack.c.l.b16 %v10564
    %v10743 = vunpack.c.h.b16 %v10564
    %v10744 = vunpack.c.l.b16 %v10565
    %v10745 = vunpack.c.h.b16 %v10565
    %v10746 = vunpack.c.l.b16 %v10566
    %v10747 = vunpack.c.h.b16 %v10566
    %v10748 = vunpack.c.l.b16 %v10567
    %v10749 = vunpack.c.h.b16 %v10567
    %v10750 = vunpack.c.l.b16 %v10568
    %v10751 = vunpack.c.h.b16 %v10568
    %v10752 = vunpack.c.l.b16 %v10569
    %v10753 = vunpack.c.h.b16 %v10569
    %v10754 = vunpack.c.l.b16 %v10570
    %v10755 = vunpack.c.h.b16 %v10570
    %v10756 = vunpack.c.l.b16 %v10571
    %v10757 = vunpack.c.h.b16 %v10571
    %v10758 = vunpack.c.l.b16 %v10572
    %v10759 = vunpack.c.h.b16 %v10572
    %v10760 = vunpack.c.l.b16 %v10573
    %v10761 = vunpack.c.h.b16 %v10573
    %v10762 = vunpack.c.l.b16 %v10574
    %v10763 = vunpack.c.h.b16 %v10574
    %v10764 = vunpack.c.l.b16 %v10575
    %v10765 = vunpack.c.h.b16 %v10575
    %v10766 = vunpack.c.l.b16 %v10576
    %v10767 = vunpack.c.h.b16 %v10576
    %v10768 = vunpack.c.l.b16 %v10577
    %v10769 = vunpack.c.h.b16 %v10577
    %v10770 = vunpack.c.l.b16 %v10578
    %v10771 = vunpack.c.h.b16 %v10578
    %v10772 = vunpack.c.l.b16 %v10579
    %v10773 = vunpack.c.h.b16 %v10579
    %v10774 = vunpack.c.l.b16 %v10580
    %v10775 = vunpack.c.h.b16 %v10580
    %v10776 = vunpack.c.l.b16 %v10581
    %v10777 = vunpack.c.h.b16 %v10581
    %v10778 = vunpack.c.l.b16 %v10582
    %v10779 = vunpack.c.h.b16 %v10582
    %v10780 = vunpack.c.l.b16 %v10583
    %v10781 = vunpack.c.h.b16 %v10583
    %v10782 = vunpack.c.l.b16 %v10584
    %v10783 = vunpack.c.h.b16 %v10584
    %v10784 = vunpack.c.l.b16 %v10585
    %v10785 = vunpack.c.h.b16 %v10585
    %v10786 = vunpack.c.l.b16 %v10586
    %v10787 = vunpack.c.h.b16 %v10586
    %v10788 = vunpack.c.l.b16 %v10587
    %v10789 = vunpack.c.h.b16 %v10587
    %v10790 = vunpack.c.l.b16 %v10588
    %v10791 = vunpack.c.h.b16 %v10588
    %v10792 = vunpack.c.l.b16 %v10589
    %v10793 = vunpack.c.h.b16 %v10589
    %v10794 = vunpack.c.l.b16 %v10590
    %v10795 = vunpack.c.h.b16 %v10590
    %v10796 = vunpack.c.l.b16 %v10591
    %v10797 = vunpack.c.h.b16 %v10591
    %v10798 = vunpack.c.l.b16 %v10592
    %v10799 = vunpack.c.h.b16 %v10592
    %v10800 = vunpack.c.l.b16 %v10593
    %v10801 = vunpack.c.h.b16 %v10593
    %v10802 = vunpack.c.l.b16 %v10594
    %v10803 = vunpack.c.h.b16 %v10594
    %v10804 = vunpack.c.l.b16 %v10595
    %v10805 = vunpack.c.h.b16 %v10595
    %v10806 = vunpack.c.l.b16 %v10596
    %v10807 = vunpack.c.h.b16 %v10596
    %v10808 = vunpack.c.l.b16 %v10597
    %v10809 = vunpack.c.h.b16 %v10597
    %v10810 = vunpack.c.l.b16 %v10598
    %v10811 = vunpack.c.h.b16 %v10598
    %v10812 = vunpack.c.l.b16 %v10599
    %v10813 = vunpack.c.h.b16 %v10599
    %v10814 = vunpack.c.l.b16 %v10600
    %v10815 = vunpack.c.h.b16 %v10600
    %v10816 = vunpack.c.l.b16 %v10601
    %v10817 = vunpack.c.h.b16 %v10601
    %v10818 = vunpack.c.l.b16 %v10602
    %v10819 = vunpack.c.h.b16 %v10602
    %v10820 = vunpack.c.l.b16 %v10603
    %v10821 = vunpack.c.h.b16 %v10603
    %v10822 = vunpack.c.l.b16 %v10604
    %v10823 = vunpack.c.h.b16 %v10604
    %v10824 = vunpack.c.l.b16 %v10605
    %v10825 = vunpack.c.h.b16 %v10605
    %v10826 = vunpack.c.l.b16 %v10606
    %v10827 = vunpack.c.h.b16 %v10606
    %v10828 = vunpack.c.l.b16 %v10607
    %v10829 = vunpack.c.h.b16 %v10607
    %v10830 = vunpack.c.l.b16 %v10608
    %v10831 = vunpack.c.h.b16 %v10608
    %v10832 = vunpack.c.l.b16 %v10609
    %v10833 = vunpack.c.h.b16 %v10609
    %v10834 = vunpack.c.l.b16 %v10610
    %v10835 = vunpack.c.h.b16 %v10610
    %v10836 = vunpack.c.l.b16 %v10611
    %v10837 = vunpack.c.h.b16 %v10611
    %v10838 = vunpack.c.l.b16 %v10612
    %v10839 = vunpack.c.h.b16 %v10612
    %v10840 = vunpack.c.l.b16 %v10613
    %v10841 = vunpack.c.h.b16 %v10613
    %v10842 = vunpack.c.l.b16 %v10614
    %v10843 = vunpack.c.h.b16 %v10614
    %v10844 = vunpack.c.l.b16 %v10615
    %v10845 = vunpack.c.h.b16 %v10615
    %v10846 = vunpack.c.l.b16 %v10616
    %v10847 = vunpack.c.h.b16 %v10616
    %v10848 = vunpack.c.l.b16 %v10617
    %v10849 = vunpack.c.h.b16 %v10617
    %v10850 = vunpack.c.l.b16 %v10618
    %v10851 = vunpack.c.h.b16 %v10618
    %v10852 = vunpack.c.l.b16 %v10619
    %v10853 = vunpack.c.h.b16 %v10619
    %v10854 = vunpack.c.l.b16 %v10620
    %v10855 = vunpack.c.h.b16 %v10620
    %v10856 = vunpack.c.l.b16 %v10621
    %v10857 = vunpack.c.h.b16 %v10621
    %v10858 = vunpack.c.l.b16 %v10622
    %v10859 = vunpack.c.h.b16 %v10622
    %v10860 = vunpack.c.l.b16 %v10623
    %v10861 = vunpack.c.h.b16 %v10623
    %v10862 = vunpack.c.l.b16 %v10624
    %v10863 = vunpack.c.h.b16 %v10624
    %v10864 = vunpack.c.l.b16 %v10625
    %v10865 = vunpack.c.h.b16 %v10625
    %v10866 = vunpack.c.l.b16 %v10626
    %v10867 = vunpack.c.h.b16 %v10626
    %v10868 = vunpack.c.l.b16 %v10627
    %v10869 = vunpack.c.h.b16 %v10627
    %v10870 = vpack.c.b16 %v10746, %v10742
    %v10871 = vpack.c.b16 %v10747, %v10743
    %v10872 = vpack.c.b16 %v10748, %v10744
    %v10873 = vpack.c.b16 %v10749, %v10745
    %v10874 = vpack.c.b16 %v10754, %v10750
    %v10875 = vpack.c.b16 %v10755, %v10751
    %v10876 = vpack.c.b16 %v10756, %v10752
    %v10877 = vpack.c.b16 %v10757, %v10753
    %v10878 = vpack.c.b16 %v10762, %v10758
    %v10879 = vpack.c.b16 %v10763, %v10759
    %v10880 = vpack.c.b16 %v10764, %v10760
    %v10881 = vpack.c.b16 %v10765, %v10761
    %v10882 = vpack.c.b16 %v10770, %v10766
    %v10883 = vpack.c.b16 %v10771, %v10767
    %v10884 = vpack.c.b16 %v10772, %v10768
    %v10885 = vpack.c.b16 %v10773, %v10769
    %v10886 = vpack.c.b16 %v10778, %v10774
    %v10887 = vpack.c.b16 %v10779, %v10775
    %v10888 = vpack.c.b16 %v10780, %v10776
    %v10889 = vpack.c.b16 %v10781, %v10777
    %v10890 = vpack.c.b16 %v10786, %v10782
    %v10891 = vpack.c.b16 %v10787, %v10783
    %v10892 = vpack.c.b16 %v10788, %v10784
    %v10893 = vpack.c.b16 %v10789, %v10785
    %v10894 = vpack.c.b16 %v10794, %v10790
    %v10895 = vpack.c.b16 %v10795, %v10791
    %v10896 = vpack.c.b16 %v10796, %v10792
    %v10897 = vpack.c.b16 %v10797, %v10793
    %v10898 = vpack.c.b16 %v10802, %v10798
    %v10899 = vpack.c.b16 %v10803, %v10799
    %v10900 = vpack.c.b16 %v10804, %v10800
    %v10901 = vpack.c.b16 %v10805, %v10801
    %v10902 = vpack.c.b16 %v10810, %v10806
    %v10903 = vpack.c.b16 %v10811, %v10807
    %v10904 = vpack.c.b16 %v10812, %v10808
    %v10905 = vpack.c.b16 %v10813, %v10809
    %v10906 = vpack.c.b16 %v10818, %v10814
    %v10907 = vpack.c.b16 %v10819, %v10815
    %v10908 = vpack.c.b16 %v10820, %v10816
    %v10909 = vpack.c.b16 %v10821, %v10817
    %v10910 = vpack.c.b16 %v10826, %v10822
    %v10911 = vpack.c.b16 %v10827, %v10823
    %v10912 = vpack.c.b16 %v10828, %v10824
    %v10913 = vpack.c.b16 %v10829, %v10825
    %v10914 = vpack.c.b16 %v10834, %v10830
    %v10915 = vpack.c.b16 %v10835, %v10831
    %v10916 = vpack.c.b16 %v10836, %v10832
    %v10917 = vpack.c.b16 %v10837, %v10833
    %v10918 = vpack.c.b16 %v10842, %v10838
    %v10919 = vpack.c.b16 %v10843, %v10839
    %v10920 = vpack.c.b16 %v10844, %v10840
    %v10921 = vpack.c.b16 %v10845, %v10841
    %v10922 = vpack.c.b16 %v10850, %v10846
    %v10923 = vpack.c.b16 %v10851, %v10847
    %v10924 = vpack.c.b16 %v10852, %v10848
    %v10925 = vpack.c.b16 %v10853, %v10849
    %v10926 = vpack.c.b16 %v10858, %v10854
    %v10927 = vpack.c.b16 %v10859, %v10855
    %v10928 = vpack.c.b16 %v10860, %v10856
    %v10929 = vpack.c.b16 %v10861, %v10857
    %v10930 = vpack.c.b16 %v10866, %v10862
    %v10931 = vpack.c.b16 %v10867, %v10863
    %v10932 = vpack.c.b16 %v10868, %v10864
    %v10933 = vpack.c.b16 %v10869, %v10865
    %10998 = vmatprep.subr.bf16.mxu0 %v10871
    %10999 = vmatpush1.bf16.msra.mxu0 %v10870
    %11000 = vmatprep.subr.bf16.mxu0 %v10875
    %11001 = vmatpush1.bf16.msra.mxu0 %v10874
    %11002 = vmatprep.subr.bf16.mxu0 %v10879
    %11003 = vmatpush1.bf16.msra.mxu0 %v10878
    %11004 = vmatprep.subr.bf16.mxu0 %v10883
    %11005 = vmatpush1.bf16.msra.mxu0 %v10882
    %11006 = vmatprep.subr.bf16.mxu0 %v10887
    %11007 = vmatpush1.bf16.msra.mxu0 %v10886
    %11008 = vmatprep.subr.bf16.mxu0 %v10891
    %11009 = vmatpush1.bf16.msra.mxu0 %v10890
    %11010 = vmatprep.subr.bf16.mxu0 %v10895
    %11011 = vmatpush1.bf16.msra.mxu0 %v10894
    %11012 = vmatprep.subr.bf16.mxu0 %v10899
    %11013 = vmatpush1.bf16.msra.mxu0 %v10898
    %11014 = vmatprep.subr.bf16.mxu0 %v10903
    %11015 = vmatpush1.bf16.msra.mxu0 %v10902
    %11016 = vmatprep.subr.bf16.mxu0 %v10907
    %11017 = vmatpush1.bf16.msra.mxu0 %v10906
    %11018 = vmatprep.subr.bf16.mxu0 %v10911
    %11019 = vmatpush1.bf16.msra.mxu0 %v10910
    %11020 = vmatprep.subr.bf16.mxu0 %v10915
    %11021 = vmatpush1.bf16.msra.mxu0 %v10914
    %11022 = vmatprep.subr.bf16.mxu0 %v10919
    %11023 = vmatpush1.bf16.msra.mxu0 %v10918
    %11024 = vmatprep.subr.bf16.mxu0 %v10923
    %11025 = vmatpush1.bf16.msra.mxu0 %v10922
    %11026 = vmatprep.subr.bf16.mxu0 %v10927
    %11027 = vmatpush1.bf16.msra.mxu0 %v10926
    %11028 = vmatprep.subr.bf16.mxu0 %v10931
    %11029 = vmatpush1.bf16.msra.mxu0 %v10930
    %11030 = vmatprep.mubr.bf16.mxu0 %v10677
    %11031 = vmatmul.mubr.bf16.gmra.mrb[0].mxu0 %v10676
    %v11032 = vpop.f32.mrb[0].mxu0
    %v11033 = vadd.f32 0.0, %v11032
    %v11034 = vpop.f32.mrb[0].mxu0
    %v11035 = vadd.f32 0.0, %v11034
    %v11036 = vpop.f32.mrb[0].mxu0
    %v11037 = vpop.f32.mrb[0].mxu0
    %11038 = vdwg.mxu0
    %11039 = vmatprep.subr.bf16.mxu0 %v10873
    %11040 = vmatpush1.bf16.msra.mxu0 %v10872
    %11041 = vmatprep.subr.bf16.mxu0 %v10877
    %11042 = vmatpush1.bf16.msra.mxu0 %v10876
    %11043 = vmatprep.subr.bf16.mxu0 %v10881
    %11044 = vmatpush1.bf16.msra.mxu0 %v10880
    %11045 = vmatprep.subr.bf16.mxu0 %v10885
    %11046 = vmatpush1.bf16.msra.mxu0 %v10884
    %11047 = vmatprep.subr.bf16.mxu0 %v10889
    %11048 = vmatpush1.bf16.msra.mxu0 %v10888
    %11049 = vmatprep.subr.bf16.mxu0 %v10893
    %11050 = vmatpush1.bf16.msra.mxu0 %v10892
    %11051 = vmatprep.subr.bf16.mxu0 %v10897
    %11052 = vmatpush1.bf16.msra.mxu0 %v10896
    %11053 = vmatprep.subr.bf16.mxu0 %v10901
    %11054 = vmatpush1.bf16.msra.mxu0 %v10900
    %11055 = vmatprep.subr.bf16.mxu0 %v10905
    %11056 = vmatpush1.bf16.msra.mxu0 %v10904
    %11057 = vmatprep.subr.bf16.mxu0 %v10909
    %11058 = vmatpush1.bf16.msra.mxu0 %v10908
    %11059 = vmatprep.subr.bf16.mxu0 %v10913
    %11060 = vmatpush1.bf16.msra.mxu0 %v10912
    %11061 = vmatprep.subr.bf16.mxu0 %v10917
    %11062 = vmatpush1.bf16.msra.mxu0 %v10916
    %11063 = vmatprep.subr.bf16.mxu0 %v10921
    %11064 = vmatpush1.bf16.msra.mxu0 %v10920
    %11065 = vmatprep.subr.bf16.mxu0 %v10925
    %11066 = vmatpush1.bf16.msra.mxu0 %v10924
    %11067 = vmatprep.subr.bf16.mxu0 %v10929
    %11068 = vmatpush1.bf16.msra.mxu0 %v10928
    %11069 = vmatprep.subr.bf16.mxu0 %v10933
    %11070 = vmatpush1.bf16.msra.mxu0 %v10932
    %11071 = vmatprep.mubr.bf16.mxu0 %v10677
    %11072 = vmatmul.mubr.bf16.gmra.mrb[0].mxu0 %v10676
    %v11073 = vpop.f32.mrb[0].mxu0
    %v11074 = vadd.f32 0.0, %v11073
    %v11075 = vpop.f32.mrb[0].mxu0
    %v11076 = vadd.f32 0.0, %v11075
    %v11077 = vpop.f32.mrb[0].mxu0
    %v11078 = vpop.f32.mrb[0].mxu0
    %11079 = vdwg.mxu0
    %v11080 = vadd.f32 %v10559, %v11033
    %v11081 = vadd.f32 %v10560, %v11035
    %v11082 = vadd.f32 %v10561, %v11074
    %v11083 = vadd.f32 %v10562, %v11076
    %v11084 = vld [vmem:[#allocation14] sm:$0xf]
    %v11086 = vlaneseq
    %v11087 = vshrl.u32 %v11086, 7
    %v11088 = vsub.s32 0, %v11087
    %v11089 = vrot.slane %v11084, %v11088
    %v11090 = vlaneseq
    %v11091 = vshrl.u32 %v11090, 7
    %v11092 = vsub.s32 1, %v11091
    %v11093 = vrot.slane %v11084, %v11092
    %v11094 = vlaneseq
    %v11095 = vshrl.u32 %v11094, 7
    %v11096 = vsub.s32 2, %v11095
    %v11097 = vrot.slane %v11084, %v11096
    %v11098 = vlaneseq
    %v11099 = vshrl.u32 %v11098, 7
    %v11100 = vsub.s32 3, %v11099
    %v11101 = vrot.slane %v11084, %v11100
    %v11106 = vadd.f32 %v11080, %v11089
    %v11107 = vadd.f32 %v11081, %v11093
    %v11108 = vadd.f32 %v11082, %v11097
    %v11109 = vadd.f32 %v11083, %v11101
    %vm11110 = vcmp.ge.f32.partialorder %v11106, 0.0
    %vm11111 = vcmp.ge.f32.partialorder %v11107, 0.0
    %vm11112 = vcmp.ge.f32.partialorder %v11108, 0.0
    %vm11113 = vcmp.ge.f32.partialorder %v11109, 0.0
    %v11114 = vmul.f32 %v11106, 0.2
    %v11115 = vmul.f32 %v11107, 0.2
    %v11116 = vmul.f32 %v11108, 0.2
    %v11117 = vmul.f32 %v11109, 0.2
    %v11118 = vsel %vm11110, %v11106, %v11114
    %v11119 = vsel %vm11111, %v11107, %v11115
    %v11120 = vsel %vm11112, %v11108, %v11116
    %v11121 = vsel %vm11113, %v11109, %v11117
    %v11122 = vld [vmem:[%s19] sm:$0xf]
    %v11124 = vlaneseq
    %v11125 = vshrl.u32 %v11124, 7
    %v11126 = vsub.s32 0, %v11125
    %v11127 = vrot.slane %v11122, %v11126
    %v11128 = vlaneseq
    %v11129 = vshrl.u32 %v11128, 7
    %v11130 = vsub.s32 1, %v11129
    %v11131 = vrot.slane %v11122, %v11130
    %v11132 = vlaneseq
    %v11133 = vshrl.u32 %v11132, 7
    %v11134 = vsub.s32 2, %v11133
    %v11135 = vrot.slane %v11122, %v11134
    %v11136 = vlaneseq
    %v11137 = vshrl.u32 %v11136, 7
    %v11138 = vsub.s32 3, %v11137
    %v11139 = vrot.slane %v11122, %v11138
    %v11144 = vmul.f32 %v11118, %v11127
    %v11145 = vmul.f32 %v11119, %v11131
    %v11146 = vmul.f32 %v11120, %v11135
    %v11147 = vmul.f32 %v11121, %v11139
    %v11148 = vsel %vm2660, %v11144, 0.0
    %v11149 = vsel %vm2660, %v11145, 0.0
    %v11150 = vadd.f32 %v11148, %v11149
    %v11151 = vsel %vm2660, %v11146, 0.0
    %v11152 = vadd.f32 %v11150, %v11151
    %v11153 = vsel %vm2660, %v11147, 0.0
    %v11154 = vadd.f32 %v11152, %v11153
    %11155 = vadd.xlane.f32.xlu0 %v11154
    %v11156 = vpop.xlane.xlu0 %11155
    %v11157 = vld [vmem:[#allocation2] sm:$0x1]
    %v11159 = vlaneseq
    %v11160 = vshrl.u32 %v11159, 7
    %v11161 = vsub.s32 0, %v11160
    %v11162 = vrot.slane %v11157, %v11161
    %v11164 = vadd.f32 %v11156, %v11162
    %vm11165 = vcmask 1024
    %11166 = vst.msk [vmem:[%s21] sm:$0x3] %vm11165, %v11164
    // Predicated region
    $region118: #{discriminator_forward.1} parent=1 // pred_check
      _
    $region119: #{discriminator_forward.1} parent=1 // pred_check_branch
      %11168 = sbr.rel (0) target = $region121
    $region120: #{discriminator_forward.1} parent=1 // pred_region
      _
    $region121: #{discriminator_forward.1} parent=1 // pred_fallthru
      _
    // Predicated region
    $region122: #{discriminator_forward.1} parent=1 // pred_check
      _
    $region123: #{discriminator_forward.1} parent=1 // pred_check_branch
      %11170 = sbr.rel (0) target = $region125
    $region124: #{discriminator_forward.1} parent=1 // pred_region
      _
    $region125: #{discriminator_forward.1} parent=1 // pred_fallthru
      _
    %11171 = vsyncpa [#allocation4], 1
    %11172 = vsyncpa [#allocation6], 1
    %11173 = vsyncpa [#allocation9], 1
    %11174 = vsyncpa [#allocation12], 1
    %11175 = vsyncpa [#allocation15], 1

</llo_original>
